<compile_context>
chip_gen: v6e
topology: v6e:2x2x1
jax: 0.10.0
libtpu: 0.0.40
codegen_flags: <defaults>
</compile_context>

<pallas_src>
import functools

import jax
import jax.numpy as jnp
from jax import lax
from jax.experimental import pallas as pl
from jax.experimental.pallas import tpu as pltpu

LN_EPS = 1e-5
ACT_DTYPE = jnp.bfloat16   # activation dtype in HBM between kernels
MXU_DTYPE = jnp.bfloat16   # MXU input dtype (accumulation stays f32). Set both
                           # to jnp.float32 for bit-accurate (slower) execution.


def _round_up(x, m):
    return ((x + m - 1) // m) * m


def _largest_divisor_leq(n, cap):
    d = min(n, cap)
    while n % d:
        d -= 1
    return d


def _gelu_tanh(x):
    # TODO(synk): torch.nn.GELU() defaults to the exact erf form; the tanh
    # approximation (max deviation ~1e-3) is used for robust Mosaic lowering.
    return 0.5 * x * (1.0 + jnp.tanh(0.7978845608028654 * (x + 0.044715 * x * x * x)))


# ---------------------------------------------------------------------------
# Pallas kernels
# ---------------------------------------------------------------------------

def _ln_mlp_res_kernel(x_ref, w1_ref, b1_ref, w2_ref, b2_ref, o_ref, *, eps):
    # out = x + fc2(gelu(fc1(LayerNorm(x)))); LN affine folded into w1/b1.
    x = x_ref[...].astype(jnp.float32)
    mu = jnp.mean(x, axis=-1, keepdims=True)
    xc = x - mu
    var = jnp.mean(xc * xc, axis=-1, keepdims=True)
    xhat = xc * lax.rsqrt(var + eps)
    h = jnp.dot(xhat.astype(w1_ref.dtype), w1_ref[...],
                preferred_element_type=jnp.float32) + b1_ref[...]
    h = _gelu_tanh(h)
    y = jnp.dot(h.astype(w2_ref.dtype), w2_ref[...],
                preferred_element_type=jnp.float32) + b2_ref[...]
    o_ref[...] = (x + y).astype(o_ref.dtype)


def _ln_mlp_connect_kernel(x_ref, w1_ref, b1_ref, w2_ref, b2_ref,
                           gc_ref, bc_ref, o_ref, *, eps):
    # out = connect_norm(x + fc2(gelu(fc1(LN1(x))))). The residual activation
    # itself is never needed downstream (the dwconv output REPLACES it), so only
    # the connect-LayerNormed tensor is written back; the dwconv kernel then has
    # no LN of its own (review item: fuse LN_connect into the MLP epilogue).
    x = x_ref[...].astype(jnp.float32)
    mu = jnp.mean(x, axis=-1, keepdims=True)
    xc = x - mu
    var = jnp.mean(xc * xc, axis=-1, keepdims=True)
    xhat = xc * lax.rsqrt(var + eps)                    # LN1 affine folded in w1/b1
    h = jnp.dot(xhat.astype(w1_ref.dtype), w1_ref[...],
                preferred_element_type=jnp.float32) + b1_ref[...]
    h = _gelu_tanh(h)
    y = jnp.dot(h.astype(w2_ref.dtype), w2_ref[...],
                preferred_element_type=jnp.float32) + b2_ref[...]
    xn = x + y
    mu2 = jnp.mean(xn, axis=-1, keepdims=True)
    xc2 = xn - mu2
    var2 = jnp.mean(xc2 * xc2, axis=-1, keepdims=True)
    z = xc2 * lax.rsqrt(var2 + eps) * gc_ref[...] + bc_ref[...]
    o_ref[...] = z.astype(o_ref.dtype)


def _dwconv_kernel(zt_ref, zm_ref, zb_ref, w_ref, o_ref, *, th, W):
    # Pure depthwise 3x3 (stride 1, zero pad 1); input is already LayerNormed.
    # zm: (th, W, C) row tile; zt/zb: 1-row halos (clamped at the image border by
    # the index_map and zeroed here, which realizes the zero padding exactly).
    i = pl.program_id(1)
    last = pl.num_programs(1) - 1
    zt = zt_ref[...].astype(jnp.float32) * (i > 0).astype(jnp.float32)
    zb = zb_ref[...].astype(jnp.float32) * (i < last).astype(jnp.float32)
    zm = zm_ref[...].astype(jnp.float32)
    z = jnp.concatenate([zt, zm, zb], axis=0)            # (th+2, W, C)
    c = zm.shape[-1]
    zcol = jnp.zeros((th + 2, 1, c), jnp.float32)
    zp = jnp.concatenate([zcol, z, zcol], axis=1)        # (th+2, W+2, C), in VMEM only
    acc = jnp.zeros((th, W, c), jnp.float32)
    for kh in range(3):                                  # 9 taps gathered in-kernel
        for kw in range(3):
            acc = acc + zp[kh:kh + th, kw:kw + W, :] * w_ref[kh * 3 + kw]
    o_ref[...] = acc.astype(o_ref.dtype)


def _conv3x3_s2_kernel(x_ref, w_ref, b_ref, o_ref, *, Ho, Wo, Cin):
    # x_ref: (Ho, 2, Wo, 2*Cin) space-to-depth view of one image (even/odd input
    # rows on axis 1, even/odd input columns packed along the lane axis). The 9
    # stride-2 taps are gathered here in VMEM and contracted as ONE long-K
    # (9*Cin) matmul so accumulation stays inside the MXU.
    xr = x_ref[...].astype(jnp.float32)
    E = xr[:, 0]                                    # input rows 2i    -> (Ho, Wo, 2Cin)
    O = xr[:, 1]                                    # input rows 2i+1
    zrow = jnp.zeros((1,) + O.shape[1:], jnp.float32)
    Om1 = jnp.concatenate([zrow, O[:-1]], axis=0)   # input rows 2i-1 (zero pad at top)
    taps = []
    for R in (Om1, E, O):                           # kh = 0, 1, 2
        ev = R[..., :Cin]                           # input col 2j    (kw = 1)
        od = R[..., Cin:]                           # input col 2j+1  (kw = 2)
        zcol = jnp.zeros((Ho, 1, Cin), jnp.float32)
        odm1 = jnp.concatenate([zcol, od[:, :-1]], axis=1)   # col 2j-1 (kw = 0)
        taps += [odm1, ev, od]                      # kw = 0, 1, 2
    t = jnp.concatenate(taps, axis=-1).reshape(Ho * Wo, 9 * Cin)
    acc = jnp.dot(t.astype(w_ref.dtype), w_ref[...],
                  preferred_element_type=jnp.float32) + b_ref[...]
    o_ref[...] = acc.reshape(Ho, Wo, -1).astype(o_ref.dtype)


# ---------------------------------------------------------------------------
# Wrappers
# ---------------------------------------------------------------------------

def _fold_ln_into_fc1(ln_p, mlp_p):
    # Fold LayerNorm affine into the first Linear (zero runtime cost).
    gamma, beta = ln_p
    w1, b1, w2, b2 = mlp_p
    Hd, C = w1.shape[1], w2.shape[1]
    w1f = (gamma[:, None] * w1).astype(MXU_DTYPE)
    b1f = (b1 + beta @ w1).reshape(1, Hd).astype(jnp.float32)
    w2c = w2.astype(MXU_DTYPE)
    b2r = b2.reshape(1, C).astype(jnp.float32)
    return w1f, b1f, w2c, b2r


def ln_mlp_residual(x2d, ln_p, mlp_p, *, eps=LN_EPS, tm=512):
    """out = x + fc2(gelu(fc1(LayerNorm(x)))), bf16 in / bf16 out, row-tiled."""
    M, C = x2d.shape
    w1f, b1f, w2c, b2r = _fold_ln_into_fc1(ln_p, mlp_p)
    Hd = w1f.shape[1]
    # TODO(synk): raise tm to 1024 on v5e/v6e (128 MiB VMEM) and drop to 256 plus
    # pl.Buffered(1) on the constant weight specs / explicit vmem_limit_bytes on
    # v7x when C/Hd grow (32 MiB default scoped VMEM).
    tm = min(tm, _round_up(M, 16))
    Mp = pl.cdiv(M, tm) * tm
    xp = jnp.pad(x2d, ((0, Mp - M), (0, 0))) if Mp != M else x2d

    out = pl.pallas_call(
        functools.partial(_ln_mlp_res_kernel, eps=eps),
        out_shape=jax.ShapeDtypeStruct((Mp, C), x2d.dtype),
        grid_spec=pltpu.PrefetchScalarGridSpec(
            num_scalar_prefetch=0,
            grid=(Mp // tm,),
            in_specs=[
                pl.BlockSpec((tm, C), lambda i: (i, 0)),
                pl.BlockSpec((C, Hd), lambda i: (0, 0)),
                pl.BlockSpec((1, Hd), lambda i: (0, 0)),
                pl.BlockSpec((Hd, C), lambda i: (0, 0)),
                pl.BlockSpec((1, C), lambda i: (0, 0)),
            ],
            out_specs=pl.BlockSpec((tm, C), lambda i: (i, 0)),
        ),
        input_output_aliases={0: 0},
        compiler_params=pltpu.CompilerParams(dimension_semantics=("parallel",)),
    )(xp, w1f, b1f, w2c, b2r)
    return out[:M]


def ln_mlp_connect_ln(x2d, ln1_p, mlp_p, lnc_p, *, eps=LN_EPS, tm=512):
    """out = connect_norm(x + fc2(gelu(fc1(LN1(x))))); the post-residual
    activation is never materialized in HBM, only its connect-LN."""
    M, C = x2d.shape
    w1f, b1f, w2c, b2r = _fold_ln_into_fc1(ln1_p, mlp_p)
    Hd = w1f.shape[1]
    gc, bc = lnc_p
    gcr = gc.reshape(1, C).astype(jnp.float32)
    bcr = bc.reshape(1, C).astype(jnp.float32)
    tm = min(tm, _round_up(M, 16))
    Mp = pl.cdiv(M, tm) * tm
    xp = jnp.pad(x2d, ((0, Mp - M), (0, 0))) if Mp != M else x2d

    out = pl.pallas_call(
        functools.partial(_ln_mlp_connect_kernel, eps=eps),
        out_shape=jax.ShapeDtypeStruct((Mp, C), x2d.dtype),
        grid_spec=pltpu.PrefetchScalarGridSpec(
            num_scalar_prefetch=0,
            grid=(Mp // tm,),
            in_specs=[
                pl.BlockSpec((tm, C), lambda i: (i, 0)),
                pl.BlockSpec((C, Hd), lambda i: (0, 0)),
                pl.BlockSpec((1, Hd), lambda i: (0, 0)),
                pl.BlockSpec((Hd, C), lambda i: (0, 0)),
                pl.BlockSpec((1, C), lambda i: (0, 0)),
                pl.BlockSpec((1, C), lambda i: (0, 0)),
                pl.BlockSpec((1, C), lambda i: (0, 0)),
            ],
            out_specs=pl.BlockSpec((tm, C), lambda i: (i, 0)),
        ),
        input_output_aliases={0: 0},
        compiler_params=pltpu.CompilerParams(dimension_semantics=("parallel",)),
    )(xp, w1f, b1f, w2c, b2r, gcr, bcr)
    return out[:M]


def dwconv3x3(z_nhwc, dw_w, *, row_tile=8):
    """Depthwise 3x3 conv (stride 1, pad 1, no bias). Input is pre-LayerNormed.
    Row-tiled with 1-row halos delivered through dedicated BlockSpecs."""
    N, H, W, C = z_nhwc.shape
    # torch depthwise weight (C, 1, 3, 3) -> (9, 1, C), tap-major.
    wk = jnp.transpose(dw_w.reshape(C, 9), (1, 0)).reshape(9, 1, C).astype(jnp.float32)
    th = _largest_divisor_leq(H, row_tile)
    nrt = H // th

    return pl.pallas_call(
        functools.partial(_dwconv_kernel, th=th, W=W),
        out_shape=jax.ShapeDtypeStruct((N, H, W, C), z_nhwc.dtype),
        grid_spec=pltpu.PrefetchScalarGridSpec(
            num_scalar_prefetch=0,
            grid=(N, nrt),
            in_specs=[
                # 1-row top halo (clamped at the border; zeroed in-kernel).
                pl.BlockSpec((None, 1, W, C),
                             lambda n, i: (n, jnp.maximum(i * th - 1, 0), 0, 0)),
                # main row tile.
                pl.BlockSpec((None, th, W, C), lambda n, i: (n, i, 0, 0)),
                # 1-row bottom halo.
                pl.BlockSpec((None, 1, W, C),
                             lambda n, i: (n, jnp.minimum(i * th + th, H - 1), 0, 0)),
                pl.BlockSpec((9, 1, C), lambda n, i: (0, 0, 0)),
            ],
            out_specs=pl.BlockSpec((None, th, W, C), lambda n, i: (n, i, 0, 0)),
        ),
        compiler_params=pltpu.CompilerParams(
            dimension_semantics=("parallel", "parallel")),
    )(z_nhwc, z_nhwc, z_nhwc, wk)


def conv_downsample(x_nhwc, w_oihw, bias):
    """ConvDownsample: Conv2d(Cin->Cout, 3x3, stride 2, pad 1) + bias, NHWC in/out."""
    N, H, W, Cin = x_nhwc.shape
    Cout = w_oihw.shape[0]
    assert H % 2 == 0 and W % 2 == 0, "even spatial dims assumed"  # TODO(synk): odd sizes
    Ho, Wo = H // 2, W // 2
    # Metadata-only reshape (no HBM copy): even/odd rows exposed on a small axis,
    # even/odd columns packed on the lane axis; taps are gathered in-kernel.
    xr = x_nhwc.reshape(N, Ho, 2, Wo, 2 * Cin)
    # (Cout, Cin, 3, 3) -> (kh, kw, Cin, Cout) -> (9*Cin, Cout), tap-major.
    w9 = jnp.transpose(w_oihw, (2, 3, 1, 0)).reshape(9 * Cin, Cout).astype(MXU_DTYPE)
    br = bias.reshape(1, Cout).astype(jnp.float32)

    # TODO(synk): for very large images (Ho*Wo*9*Cin f32 beyond a few MiB) split
    # the grid over output-row tiles with a 1-row halo, as done for the dwconv.
    return pl.pallas_call(
        functools.partial(_conv3x3_s2_kernel, Ho=Ho, Wo=Wo, Cin=Cin),
        out_shape=jax.ShapeDtypeStruct((N, Ho, Wo, Cout), jnp.float32),
        grid_spec=pltpu.PrefetchScalarGridSpec(
            num_scalar_prefetch=0,
            grid=(N,),
            in_specs=[
                pl.BlockSpec((None, Ho, 2, Wo, 2 * Cin), lambda n: (n, 0, 0, 0, 0)),
                pl.BlockSpec((9 * Cin, Cout), lambda n: (0, 0)),
                pl.BlockSpec((1, Cout), lambda n: (0, 0)),
            ],
            out_specs=pl.BlockSpec((None, Ho, Wo, Cout), lambda n: (n, 0, 0, 0)),
        ),
        compiler_params=pltpu.CompilerParams(dimension_semantics=("parallel",)),
    )(xr, w9, br)


def convmlp_stage(x, p, *, eps=LN_EPS):
    """One ConvMLPStage block (eval mode)."""
    # TODO(synk): DropPath (stochastic depth) is training-only; identity here.
    N, H, W, C = x.shape
    z = ln_mlp_connect_ln(x.reshape(N * H * W, C), p["norm1"], p["mlp1"],
                          p["connect_norm"], eps=eps).reshape(N, H, W, C)
    x = dwconv3x3(z, p["connect_w"])
    x = ln_mlp_residual(x.reshape(N * H * W, C), p["norm2"], p["mlp2"],
                        eps=eps).reshape(N, H, W, C)
    return x


def basic_stage(x, params):
    """BasicStage.forward: ConvMLPStage blocks then ConvDownsample. NHWC in/out."""
    x = x.astype(ACT_DTYPE)     # bf16 activation I/O between kernels; f32 compute inside
    for blk in params["blocks"]:
        x = convmlp_stage(x, blk)
    return conv_downsample(x, params["ds_w"], params["ds_b"])


# ---------------------------------------------------------------------------
# Deterministic parameter init (torch-style layouts where relevant)
# ---------------------------------------------------------------------------

def init_params(key, num_blocks, embedding_dims, mlp_ratio=1.0):
    C, C_out = embedding_dims
    Hd = int(C * mlp_ratio)

    def ln_p(k, c):
        k1, k2 = jax.random.split(k)
        return (1.0 + 0.3 * jax.random.normal(k1, (c,), jnp.float32),
                0.3 * jax.random.normal(k2, (c,), jnp.float32))

    def lin_p(k, cin, cout):
        k1, k2 = jax.random.split(k)
        return (0.03 * jax.random.normal(k1, (cin, cout), jnp.float32),
                0.1 * jax.random.normal(k2, (cout,), jnp.float32))

    keys = jax.random.split(key, num_blocks + 1)
    blocks = []
    for i in range(num_blocks):
        ks = jax.random.split(keys[i], 8)
        blocks.append(dict(
            norm1=ln_p(ks[0], C),
            mlp1=lin_p(ks[1], C, Hd) + lin_p(ks[2], Hd, C),       # (w1, b1, w2, b2)
            connect_norm=ln_p(ks[3], C),
            connect_w=0.2 * jax.random.normal(ks[4], (C, 1, 3, 3), jnp.float32),
            norm2=ln_p(ks[5], C),
            mlp2=lin_p(ks[6], C, Hd) + lin_p(ks[7], Hd, C),
        ))
    kd1, kd2 = jax.random.split(keys[-1])
    return dict(
        blocks=blocks,
        ds_w=0.03 * jax.random.normal(kd1, (C_out, C, 3, 3), jnp.float32),
        ds_b=0.1 * jax.random.normal(kd2, (C_out,), jnp.float32),
    )


# ---------------------------------------------------------------------------
# Pure-JAX f32 reference (true module semantics) for the correctness check
# ---------------------------------------------------------------------------

def reference(x, params, eps=LN_EPS):
    hi = lax.Precision.HIGHEST

    def ln(v, g, b):
        mu = jnp.mean(v, axis=-1, keepdims=True)
        var = jnp.mean((v - mu) ** 2, axis=-1, keepdims=True)
        return (v - mu) / jnp.sqrt(var + eps) * g + b

    def mlp(v, w1, b1, w2, b2):
        h = _gelu_tanh(jnp.dot(v, w1, precision=hi) + b1)
        return jnp.dot(h, w2, precision=hi) + b2

    C = x.shape[-1]
    for blk in params["blocks"]:
        x = x + mlp(ln(x, *blk["norm1"]), *blk["mlp1"])
        z = jnp.transpose(ln(x, *blk["connect_norm"]), (0, 3, 1, 2))
        z = lax.conv_general_dilated(
            z, blk["connect_w"], (1, 1), ((1, 1), (1, 1)),
            dimension_numbers=("NCHW", "OIHW", "NCHW"),
            feature_group_count=C, precision=hi)
        x = jnp.transpose(z, (0, 2, 3, 1))
        x = x + mlp(ln(x, *blk["norm2"]), *blk["mlp2"])
    z = jnp.transpose(x, (0, 3, 1, 2))
    z = lax.conv_general_dilated(
        z, params["ds_w"], (2, 2), ((1, 1), (1, 1)),
        dimension_numbers=("NCHW", "OIHW", "NCHW"), precision=hi)
    z = z + params["ds_b"].reshape(1, -1, 1, 1)
    return jnp.transpose(z, (0, 2, 3, 1))


if __name__ == "__main__":
    num_blocks = 2
    embedding_dims = (128, 128)          # lane-dense (multiple of 128) channel widths
    N, H, W = 2, 16, 16

    kx, kp = jax.random.split(jax.random.PRNGKey(0))
    x = jax.random.normal(kx, (N, H, W, embedding_dims[0]), dtype=jnp.float32)
    params = init_params(kp, num_blocks, embedding_dims, mlp_ratio=1.0)

    y = jax.block_until_ready(jax.jit(basic_stage)(x, params))
    assert y.shape == (N, H // 2, W // 2, embedding_dims[1]), y.shape

    y_ref = jax.block_until_ready(reference(x, params))
    err = float(jnp.max(jnp.abs(y - y_ref)))
    # Tolerance accounts for bf16 activation I/O between kernels and bf16 MXU
    # inputs (accumulation and LN/residual math stay f32); structural bugs would
    # produce errors >> 1 at these parameter scales.
    assert err < 1.5e-1, err

    print("KERNEL_OK")
</pallas_src>

<mosaic_0001>
module attributes {stable_mosaic.version = 11 : i64} {
  func.func @_ln_mlp_res_kernel(%arg0: i32, %arg1: memref<512x128xbf16, #tpu.memory_space<vmem>>, %arg2: memref<128x128xbf16, #tpu.memory_space<vmem>>, %arg3: memref<1x128xf32, #tpu.memory_space<vmem>>, %arg4: memref<128x128xbf16, #tpu.memory_space<vmem>>, %arg5: memref<1x128xf32, #tpu.memory_space<vmem>>, %arg6: memref<512x128xbf16, #tpu.memory_space<vmem>>) attributes {dimension_semantics = [#tpu.dimension_semantics<parallel>], iteration_bounds = array<i64: 1>, scalar_prefetch = 0 : i64, scratch_operands = 0 : i64, tpu.core_type = #tpu.core_type<tc>, window_params = [{transform_indices = @transform_0, window_bounds = array<i64: 512, 128>}, {pipeline_mode = #tpu.pipeline_mode<synchronous>, transform_indices = @transform_1, window_bounds = array<i64: 128, 128>}, {pipeline_mode = #tpu.pipeline_mode<synchronous>, transform_indices = @transform_2, window_bounds = array<i64: 1, 128>}, {pipeline_mode = #tpu.pipeline_mode<synchronous>, transform_indices = @transform_3, window_bounds = array<i64: 128, 128>}, {pipeline_mode = #tpu.pipeline_mode<synchronous>, transform_indices = @transform_4, window_bounds = array<i64: 1, 128>}, {transform_indices = @transform_5, window_bounds = array<i64: 512, 128>}]} {
    %c0 = arith.constant 0 : index
    %c0_0 = arith.constant 0 : index
    %0 = vector.load %arg1[%c0, %c0_0] : memref<512x128xbf16, #tpu.memory_space<vmem>>, vector<512x128xbf16>
    %1 = arith.extf %0 : vector<512x128xbf16> to vector<512x128xf32>
    %cst = arith.constant dense<0.000000e+00> : vector<512xf32>
    %2 = vector.multi_reduction <add>, %1, %cst [1] : vector<512x128xf32> to vector<512xf32>
    %3 = vector.shape_cast %2 : vector<512xf32> to vector<512x1xf32>
    %cst_1 = arith.constant 1.280000e+02 : f32
    %4 = vector.broadcast %cst_1 : f32 to vector<512x1xf32>
    %5 = arith.divf %3, %4 : vector<512x1xf32>
    %6 = vector.broadcast %5 : vector<512x1xf32> to vector<512x128xf32>
    %7 = arith.subf %1, %6 : vector<512x128xf32>
    %8 = arith.mulf %7, %7 : vector<512x128xf32>
    %cst_2 = arith.constant dense<0.000000e+00> : vector<512xf32>
    %9 = vector.multi_reduction <add>, %8, %cst_2 [1] : vector<512x128xf32> to vector<512xf32>
    %10 = vector.shape_cast %9 : vector<512xf32> to vector<512x1xf32>
    %cst_3 = arith.constant 1.280000e+02 : f32
    %11 = vector.broadcast %cst_3 : f32 to vector<512x1xf32>
    %12 = arith.divf %10, %11 : vector<512x1xf32>
    %cst_4 = arith.constant 9.99999974E-6 : f32
    %13 = vector.broadcast %cst_4 : f32 to vector<512x1xf32>
    %14 = arith.addf %12, %13 : vector<512x1xf32>
    %15 = math.rsqrt %14 : vector<512x1xf32>
    %16 = vector.broadcast %15 : vector<512x1xf32> to vector<512x128xf32>
    %17 = arith.mulf %7, %16 : vector<512x128xf32>
    %18 = arith.truncf %17 : vector<512x128xf32> to vector<512x128xbf16>
    %c0_5 = arith.constant 0 : index
    %c0_6 = arith.constant 0 : index
    %19 = vector.load %arg2[%c0_5, %c0_6] : memref<128x128xbf16, #tpu.memory_space<vmem>>, vector<128x128xbf16>
    %cst_7 = arith.constant dense<0.000000e+00> : vector<512x128xf32>
    %20 = tpu.matmul %18, %19, %cst_7 {dimension_numbers = #tpu.dot_dimension_numbers<[1], [0], [0], [1], [0, 0, 1, 1], [], []>} : vector<512x128xbf16>, vector<128x128xbf16>, vector<512x128xf32> -> vector<512x128xf32>
    %c0_8 = arith.constant 0 : index
    %c0_9 = arith.constant 0 : index
    %21 = vector.load %arg3[%c0_8, %c0_9] : memref<1x128xf32, #tpu.memory_space<vmem>>, vector<1x128xf32>
    %22 = vector.broadcast %21 : vector<1x128xf32> to vector<512x128xf32>
    %23 = arith.addf %20, %22 : vector<512x128xf32>
    %cst_10 = arith.constant 5.000000e-01 : f32
    %24 = vector.broadcast %cst_10 : f32 to vector<512x128xf32>
    %25 = arith.mulf %24, %23 : vector<512x128xf32>
    %cst_11 = arith.constant 4.471500e-02 : f32
    %26 = vector.broadcast %cst_11 : f32 to vector<512x128xf32>
    %27 = arith.mulf %26, %23 : vector<512x128xf32>
    %28 = arith.mulf %27, %23 : vector<512x128xf32>
    %29 = arith.mulf %28, %23 : vector<512x128xf32>
    %30 = arith.addf %23, %29 : vector<512x128xf32>
    %cst_12 = arith.constant 0.797884583 : f32
    %31 = vector.broadcast %cst_12 : f32 to vector<512x128xf32>
    %32 = arith.mulf %31, %30 : vector<512x128xf32>
    %33 = math.tanh %32 : vector<512x128xf32>
    %cst_13 = arith.constant 1.000000e+00 : f32
    %34 = vector.broadcast %cst_13 : f32 to vector<512x128xf32>
    %35 = arith.addf %34, %33 : vector<512x128xf32>
    %36 = arith.mulf %25, %35 : vector<512x128xf32>
    %37 = arith.truncf %36 : vector<512x128xf32> to vector<512x128xbf16>
    %c0_14 = arith.constant 0 : index
    %c0_15 = arith.constant 0 : index
    %38 = vector.load %arg4[%c0_14, %c0_15] : memref<128x128xbf16, #tpu.memory_space<vmem>>, vector<128x128xbf16>
    %cst_16 = arith.constant dense<0.000000e+00> : vector<512x128xf32>
    %39 = tpu.matmul %37, %38, %cst_16 {dimension_numbers = #tpu.dot_dimension_numbers<[1], [0], [0], [1], [0, 0, 1, 1], [], []>} : vector<512x128xbf16>, vector<128x128xbf16>, vector<512x128xf32> -> vector<512x128xf32>
    %c0_17 = arith.constant 0 : index
    %c0_18 = arith.constant 0 : index
    %40 = vector.load %arg5[%c0_17, %c0_18] : memref<1x128xf32, #tpu.memory_space<vmem>>, vector<1x128xf32>
    %41 = vector.broadcast %40 : vector<1x128xf32> to vector<512x128xf32>
    %42 = arith.addf %39, %41 : vector<512x128xf32>
    %43 = arith.addf %1, %42 : vector<512x128xf32>
    %44 = arith.truncf %43 : vector<512x128xf32> to vector<512x128xbf16>
    %c0_19 = arith.constant 0 : index
    %c0_20 = arith.constant 0 : index
    %45 = vector.load %arg6[%c0_19, %c0_20] : memref<512x128xbf16, #tpu.memory_space<vmem>>, vector<512x128xbf16>
    tpu.vector_store %arg6[%c0_19, %c0_20], %44 {strides = array<i32>} : memref<512x128xbf16, #tpu.memory_space<vmem>>, vector<512x128xbf16>,
    return
  }
  func.func @transform_0(%arg0: i32) -> (i32, i32) {
    %c0_i32 = arith.constant 0 : i32
    %c0_i32_0 = arith.constant 0 : i32
    return %arg0, %c0_i32 : i32, i32
  }
  func.func @transform_1(%arg0: i32) -> (i32, i32) {
    %c0_i32 = arith.constant 0 : i32
    %c0_i32_0 = arith.constant 0 : i32
    %c0_i32_1 = arith.constant 0 : i32
    return %c0_i32, %c0_i32_0 : i32, i32
  }
  func.func @transform_2(%arg0: i32) -> (i32, i32) {
    %c0_i32 = arith.constant 0 : i32
    %c0_i32_0 = arith.constant 0 : i32
    %c0_i32_1 = arith.constant 0 : i32
    return %c0_i32, %c0_i32_0 : i32, i32
  }
  func.func @transform_3(%arg0: i32) -> (i32, i32) {
    %c0_i32 = arith.constant 0 : i32
    %c0_i32_0 = arith.constant 0 : i32
    %c0_i32_1 = arith.constant 0 : i32
    return %c0_i32, %c0_i32_0 : i32, i32
  }
  func.func @transform_4(%arg0: i32) -> (i32, i32) {
    %c0_i32 = arith.constant 0 : i32
    %c0_i32_0 = arith.constant 0 : i32
    %c0_i32_1 = arith.constant 0 : i32
    return %c0_i32, %c0_i32_0 : i32, i32
  }
  func.func @transform_5(%arg0: i32) -> (i32, i32) {
    %c0_i32 = arith.constant 0 : i32
    %c0_i32_0 = arith.constant 0 : i32
    return %arg0, %c0_i32 : i32, i32
  }
}

module attributes {stable_mosaic.version = 11 : i64} {
  func.func @_dwconv_kernel(%arg0: i32, %arg1: i32, %arg2: memref<1x1x16x128xbf16, #tpu.memory_space<vmem>>, %arg3: memref<1x8x16x128xbf16, #tpu.memory_space<vmem>>, %arg4: memref<1x1x16x128xbf16, #tpu.memory_space<vmem>>, %arg5: memref<9x1x128xf32, #tpu.memory_space<vmem>>, %arg6: memref<1x8x16x128xbf16, #tpu.memory_space<vmem>>) attributes {dimension_semantics = [#tpu.dimension_semantics<parallel>, #tpu.dimension_semantics<parallel>], iteration_bounds = array<i64: 2, 2>, scalar_prefetch = 0 : i64, scratch_operands = 0 : i64, tpu.core_type = #tpu.core_type<tc>, window_params = [{transform_indices = @transform_0, window_bounds = array<i64: 1, 1, 16, 128>}, {transform_indices = @transform_1, window_bounds = array<i64: 1, 8, 16, 128>}, {transform_indices = @transform_2, window_bounds = array<i64: 1, 1, 16, 128>}, {pipeline_mode = #tpu.pipeline_mode<synchronous>, transform_indices = @transform_3, window_bounds = array<i64: 9, 1, 128>}, {transform_indices = @transform_4, window_bounds = array<i64: 1, 8, 16, 128>}]} {
    %c0 = arith.constant 0 : index
    %c0_0 = arith.constant 0 : index
    %c0_1 = arith.constant 0 : index
    %c0_2 = arith.constant 0 : index
    %0 = vector.load %arg2[%c0, %c0_0, %c0_1, %c0_2] : memref<1x1x16x128xbf16, #tpu.memory_space<vmem>>, vector<1x1x16x128xbf16>
    %1 = vector.shape_cast %0 : vector<1x1x16x128xbf16> to vector<1x16x128xbf16>
    %2 = arith.extf %1 : vector<1x16x128xbf16> to vector<1x16x128xf32>
    %c0_i32 = arith.constant 0 : i32
    %3 = arith.cmpi sgt, %arg1, %c0_i32 : i32
    %4 = arith.extui %3 : i1 to i32
    %5 = arith.sitofp %4 : i32 to f32
    %6 = vector.broadcast %5 : f32 to vector<1x16x128xf32>
    %7 = arith.mulf %2, %6 : vector<1x16x128xf32>
    %c0_3 = arith.constant 0 : index
    %c0_4 = arith.constant 0 : index
    %c0_5 = arith.constant 0 : index
    %c0_6 = arith.constant 0 : index
    %8 = vector.load %arg4[%c0_3, %c0_4, %c0_5, %c0_6] : memref<1x1x16x128xbf16, #tpu.memory_space<vmem>>, vector<1x1x16x128xbf16>
    %9 = vector.shape_cast %8 : vector<1x1x16x128xbf16> to vector<1x16x128xbf16>
    %10 = arith.extf %9 : vector<1x16x128xbf16> to vector<1x16x128xf32>
    %c1_i32 = arith.constant 1 : i32
    %11 = arith.cmpi slt, %arg1, %c1_i32 : i32
    %12 = arith.extui %11 : i1 to i32
    %13 = arith.sitofp %12 : i32 to f32
    %14 = vector.broadcast %13 : f32 to vector<1x16x128xf32>
    %15 = arith.mulf %10, %14 : vector<1x16x128xf32>
    %c0_7 = arith.constant 0 : index
    %c0_8 = arith.constant 0 : index
    %c0_9 = arith.constant 0 : index
    %c0_10 = arith.constant 0 : index
    %16 = vector.load %arg3[%c0_7, %c0_8, %c0_9, %c0_10] : memref<1x8x16x128xbf16, #tpu.memory_space<vmem>>, vector<1x8x16x128xbf16>
    %17 = vector.shape_cast %16 : vector<1x8x16x128xbf16> to vector<8x16x128xbf16>
    %18 = arith.extf %17 : vector<8x16x128xbf16> to vector<8x16x128xf32>
    %19 = tpu.concatenate %7, %18, %15 in 0 : vector<1x16x128xf32>, vector<8x16x128xf32>, vector<1x16x128xf32> -> vector<10x16x128xf32>
    %cst = arith.constant 0.000000e+00 : f32
    %20 = vector.broadcast %cst : f32 to vector<10x1x128xf32>
    %21 = tpu.concatenate %20, %19, %20 in 1 : vector<10x1x128xf32>, vector<10x16x128xf32>, vector<10x1x128xf32> -> vector<10x18x128xf32>
    %cst_11 = arith.constant 0.000000e+00 : f32
    %22 = vector.broadcast %cst_11 : f32 to vector<8x16x128xf32>
    %23 = vector.extract_strided_slice %21 {offsets = [0, 0, 0], sizes = [8, 16, 128], strides = [1, 1, 1]} : vector<10x18x128xf32> to vector<8x16x128xf32>
    %c0_12 = arith.constant 0 : index
    %c0_13 = arith.constant 0 : index
    %c0_14 = arith.constant 0 : index
    %24 = vector.load %arg5[%c0_12, %c0_13, %c0_14] : memref<9x1x128xf32, #tpu.memory_space<vmem>>, vector<1x1x128xf32>
    %25 = vector.shape_cast %24 : vector<1x1x128xf32> to vector<1x128xf32>
    %26 = vector.shape_cast %25 : vector<1x128xf32> to vector<1x1x128xf32>
    %27 = vector.broadcast %26 : vector<1x1x128xf32> to vector<8x16x128xf32>
    %28 = arith.mulf %23, %27 : vector<8x16x128xf32>
    %29 = arith.addf %22, %28 : vector<8x16x128xf32>
    %30 = vector.extract_strided_slice %21 {offsets = [0, 1, 0], sizes = [8, 16, 128], strides = [1, 1, 1]} : vector<10x18x128xf32> to vector<8x16x128xf32>
    %c1 = arith.constant 1 : index
    %c0_15 = arith.constant 0 : index
    %c0_16 = arith.constant 0 : index
    %31 = vector.load %arg5[%c1, %c0_15, %c0_16] : memref<9x1x128xf32, #tpu.memory_space<vmem>>, vector<1x1x128xf32>
    %32 = vector.shape_cast %31 : vector<1x1x128xf32> to vector<1x128xf32>
    %33 = vector.shape_cast %32 : vector<1x128xf32> to vector<1x1x128xf32>
    %34 = vector.broadcast %33 : vector<1x1x128xf32> to vector<8x16x128xf32>
    %35 = arith.mulf %30, %34 : vector<8x16x128xf32>
    %36 = arith.addf %29, %35 : vector<8x16x128xf32>
    %37 = vector.extract_strided_slice %21 {offsets = [0, 2, 0], sizes = [8, 16, 128], strides = [1, 1, 1]} : vector<10x18x128xf32> to vector<8x16x128xf32>
    %c2 = arith.constant 2 : index
    %c0_17 = arith.constant 0 : index
    %c0_18 = arith.constant 0 : index
    %38 = vector.load %arg5[%c2, %c0_17, %c0_18] : memref<9x1x128xf32, #tpu.memory_space<vmem>>, vector<1x1x128xf32>
    %39 = vector.shape_cast %38 : vector<1x1x128xf32> to vector<1x128xf32>
    %40 = vector.shape_cast %39 : vector<1x128xf32> to vector<1x1x128xf32>
    %41 = vector.broadcast %40 : vector<1x1x128xf32> to vector<8x16x128xf32>
    %42 = arith.mulf %37, %41 : vector<8x16x128xf32>
    %43 = arith.addf %36, %42 : vector<8x16x128xf32>
    %44 = vector.extract_strided_slice %21 {offsets = [1, 0, 0], sizes = [8, 16, 128], strides = [1, 1, 1]} : vector<10x18x128xf32> to vector<8x16x128xf32>
    %c3 = arith.constant 3 : index
    %c0_19 = arith.constant 0 : index
    %c0_20 = arith.constant 0 : index
    %45 = vector.load %arg5[%c3, %c0_19, %c0_20] : memref<9x1x128xf32, #tpu.memory_space<vmem>>, vector<1x1x128xf32>
    %46 = vector.shape_cast %45 : vector<1x1x128xf32> to vector<1x128xf32>
    %47 = vector.shape_cast %46 : vector<1x128xf32> to vector<1x1x128xf32>
    %48 = vector.broadcast %47 : vector<1x1x128xf32> to vector<8x16x128xf32>
    %49 = arith.mulf %44, %48 : vector<8x16x128xf32>
    %50 = arith.addf %43, %49 : vector<8x16x128xf32>
    %51 = vector.extract_strided_slice %21 {offsets = [1, 1, 0], sizes = [8, 16, 128], strides = [1, 1, 1]} : vector<10x18x128xf32> to vector<8x16x128xf32>
    %c4 = arith.constant 4 : index
    %c0_21 = arith.constant 0 : index
    %c0_22 = arith.constant 0 : index
    %52 = vector.load %arg5[%c4, %c0_21, %c0_22] : memref<9x1x128xf32, #tpu.memory_space<vmem>>, vector<1x1x128xf32>
    %53 = vector.shape_cast %52 : vector<1x1x128xf32> to vector<1x128xf32>
    %54 = vector.shape_cast %53 : vector<1x128xf32> to vector<1x1x128xf32>
    %55 = vector.broadcast %54 : vector<1x1x128xf32> to vector<8x16x128xf32>
    %56 = arith.mulf %51, %55 : vector<8x16x128xf32>
    %57 = arith.addf %50, %56 : vector<8x16x128xf32>
    %58 = vector.extract_strided_slice %21 {offsets = [1, 2, 0], sizes = [8, 16, 128], strides = [1, 1, 1]} : vector<10x18x128xf32> to vector<8x16x128xf32>
    %c5 = arith.constant 5 : index
    %c0_23 = arith.constant 0 : index
    %c0_24 = arith.constant 0 : index
    %59 = vector.load %arg5[%c5, %c0_23, %c0_24] : memref<9x1x128xf32, #tpu.memory_space<vmem>>, vector<1x1x128xf32>
    %60 = vector.shape_cast %59 : vector<1x1x128xf32> to vector<1x128xf32>
    %61 = vector.shape_cast %60 : vector<1x128xf32> to vector<1x1x128xf32>
    %62 = vector.broadcast %61 : vector<1x1x128xf32> to vector<8x16x128xf32>
    %63 = arith.mulf %58, %62 : vector<8x16x128xf32>
    %64 = arith.addf %57, %63 : vector<8x16x128xf32>
    %65 = vector.extract_strided_slice %21 {offsets = [2, 0, 0], sizes = [8, 16, 128], strides = [1, 1, 1]} : vector<10x18x128xf32> to vector<8x16x128xf32>
    %c6 = arith.constant 6 : index
    %c0_25 = arith.constant 0 : index
    %c0_26 = arith.constant 0 : index
    %66 = vector.load %arg5[%c6, %c0_25, %c0_26] : memref<9x1x128xf32, #tpu.memory_space<vmem>>, vector<1x1x128xf32>
    %67 = vector.shape_cast %66 : vector<1x1x128xf32> to vector<1x128xf32>
    %68 = vector.shape_cast %67 : vector<1x128xf32> to vector<1x1x128xf32>
    %69 = vector.broadcast %68 : vector<1x1x128xf32> to vector<8x16x128xf32>
    %70 = arith.mulf %65, %69 : vector<8x16x128xf32>
    %71 = arith.addf %64, %70 : vector<8x16x128xf32>
    %72 = vector.extract_strided_slice %21 {offsets = [2, 1, 0], sizes = [8, 16, 128], strides = [1, 1, 1]} : vector<10x18x128xf32> to vector<8x16x128xf32>
    %c7 = arith.constant 7 : index
    %c0_27 = arith.constant 0 : index
    %c0_28 = arith.constant 0 : index
    %73 = vector.load %arg5[%c7, %c0_27, %c0_28] : memref<9x1x128xf32, #tpu.memory_space<vmem>>, vector<1x1x128xf32>
    %74 = vector.shape_cast %73 : vector<1x1x128xf32> to vector<1x128xf32>
    %75 = vector.shape_cast %74 : vector<1x128xf32> to vector<1x1x128xf32>
    %76 = vector.broadcast %75 : vector<1x1x128xf32> to vector<8x16x128xf32>
    %77 = arith.mulf %72, %76 : vector<8x16x128xf32>
    %78 = arith.addf %71, %77 : vector<8x16x128xf32>
    %79 = vector.extract_strided_slice %21 {offsets = [2, 2, 0], sizes = [8, 16, 128], strides = [1, 1, 1]} : vector<10x18x128xf32> to vector<8x16x128xf32>
    %c8 = arith.constant 8 : index
    %c0_29 = arith.constant 0 : index
    %c0_30 = arith.constant 0 : index
    %80 = vector.load %arg5[%c8, %c0_29, %c0_30] : memref<9x1x128xf32, #tpu.memory_space<vmem>>, vector<1x1x128xf32>
    %81 = vector.shape_cast %80 : vector<1x1x128xf32> to vector<1x128xf32>
    %82 = vector.shape_cast %81 : vector<1x128xf32> to vector<1x1x128xf32>
    %83 = vector.broadcast %82 : vector<1x1x128xf32> to vector<8x16x128xf32>
    %84 = arith.mulf %79, %83 : vector<8x16x128xf32>
    %85 = arith.addf %78, %84 : vector<8x16x128xf32>
    %86 = arith.truncf %85 : vector<8x16x128xf32> to vector<8x16x128xbf16>
    %c0_31 = arith.constant 0 : index
    %c0_32 = arith.constant 0 : index
    %c0_33 = arith.constant 0 : index
    %c0_34 = arith.constant 0 : index
    %87 = vector.load %arg6[%c0_31, %c0_32, %c0_33, %c0_34] : memref<1x8x16x128xbf16, #tpu.memory_space<vmem>>, vector<1x8x16x128xbf16>
    %88 = vector.shape_cast %87 : vector<1x8x16x128xbf16> to vector<8x16x128xbf16>
    %89 = vector.shape_cast %86 : vector<8x16x128xbf16> to vector<1x8x16x128xbf16>
    tpu.vector_store %arg6[%c0_31, %c0_32, %c0_33, %c0_34], %89 {strides = array<i32>} : memref<1x8x16x128xbf16, #tpu.memory_space<vmem>>, vector<1x8x16x128xbf16>,
    return
  }
  func.func @transform_0(%arg0: i32, %arg1: i32) -> (i32, i32, i32, i32) {
    %c8_i32 = arith.constant 8 : i32
    %0 = arith.muli %arg1, %c8_i32 : i32
    %c1_i32 = arith.constant 1 : i32
    %1 = arith.subi %0, %c1_i32 : i32
    %c0_i32 = arith.constant 0 : i32
    %2 = arith.maxsi %1, %c0_i32 : i32
    %c0_i32_0 = arith.constant 0 : i32
    %c0_i32_1 = arith.constant 0 : i32
    %c0_i32_2 = arith.constant 0 : i32
    return %arg0, %2, %c0_i32_0, %c0_i32_1 : i32, i32, i32, i32
  }
  func.func @transform_1(%arg0: i32, %arg1: i32) -> (i32, i32, i32, i32) {
    %c0_i32 = arith.constant 0 : i32
    %c0_i32_0 = arith.constant 0 : i32
    %c0_i32_1 = arith.constant 0 : i32
    return %arg0, %arg1, %c0_i32, %c0_i32_0 : i32, i32, i32, i32
  }
  func.func @transform_2(%arg0: i32, %arg1: i32) -> (i32, i32, i32, i32) {
    %c8_i32 = arith.constant 8 : i32
    %0 = arith.muli %arg1, %c8_i32 : i32
    %c8_i32_0 = arith.constant 8 : i32
    %1 = arith.addi %0, %c8_i32_0 : i32
    %c15_i32 = arith.constant 15 : i32
    %2 = arith.minsi %1, %c15_i32 : i32
    %c0_i32 = arith.constant 0 : i32
    %c0_i32_1 = arith.constant 0 : i32
    %c0_i32_2 = arith.constant 0 : i32
    return %arg0, %2, %c0_i32, %c0_i32_1 : i32, i32, i32, i32
  }
  func.func @transform_3(%arg0: i32, %arg1: i32) -> (i32, i32, i32) {
    %c0_i32 = arith.constant 0 : i32
    %c0_i32_0 = arith.constant 0 : i32
    %c0_i32_1 = arith.constant 0 : i32
    %c0_i32_2 = arith.constant 0 : i32
    return %c0_i32, %c0_i32_0, %c0_i32_1 : i32, i32, i32
  }
  func.func @transform_4(%arg0: i32, %arg1: i32) -> (i32, i32, i32, i32) {
    %c0_i32 = arith.constant 0 : i32
    %c0_i32_0 = arith.constant 0 : i32
    %c0_i32_1 = arith.constant 0 : i32
    return %arg0, %arg1, %c0_i32, %c0_i32_0 : i32, i32, i32, i32
  }
}

module attributes {stable_mosaic.version = 11 : i64} {
  func.func @_ln_mlp_connect_kernel(%arg0: i32, %arg1: memref<512x128xbf16, #tpu.memory_space<vmem>>, %arg2: memref<128x128xbf16, #tpu.memory_space<vmem>>, %arg3: memref<1x128xf32, #tpu.memory_space<vmem>>, %arg4: memref<128x128xbf16, #tpu.memory_space<vmem>>, %arg5: memref<1x128xf32, #tpu.memory_space<vmem>>, %arg6: memref<1x128xf32, #tpu.memory_space<vmem>>, %arg7: memref<1x128xf32, #tpu.memory_space<vmem>>, %arg8: memref<512x128xbf16, #tpu.memory_space<vmem>>) attributes {dimension_semantics = [#tpu.dimension_semantics<parallel>], iteration_bounds = array<i64: 1>, scalar_prefetch = 0 : i64, scratch_operands = 0 : i64, tpu.core_type = #tpu.core_type<tc>, window_params = [{transform_indices = @transform_0, window_bounds = array<i64: 512, 128>}, {pipeline_mode = #tpu.pipeline_mode<synchronous>, transform_indices = @transform_1, window_bounds = array<i64: 128, 128>}, {pipeline_mode = #tpu.pipeline_mode<synchronous>, transform_indices = @transform_2, window_bounds = array<i64: 1, 128>}, {pipeline_mode = #tpu.pipeline_mode<synchronous>, transform_indices = @transform_3, window_bounds = array<i64: 128, 128>}, {pipeline_mode = #tpu.pipeline_mode<synchronous>, transform_indices = @transform_4, window_bounds = array<i64: 1, 128>}, {pipeline_mode = #tpu.pipeline_mode<synchronous>, transform_indices = @transform_5, window_bounds = array<i64: 1, 128>}, {pipeline_mode = #tpu.pipeline_mode<synchronous>, transform_indices = @transform_6, window_bounds = array<i64: 1, 128>}, {transform_indices = @transform_7, window_bounds = array<i64: 512, 128>}]} {
    %c0 = arith.constant 0 : index
    %c0_0 = arith.constant 0 : index
    %0 = vector.load %arg1[%c0, %c0_0] : memref<512x128xbf16, #tpu.memory_space<vmem>>, vector<512x128xbf16>
    %1 = arith.extf %0 : vector<512x128xbf16> to vector<512x128xf32>
    %cst = arith.constant dense<0.000000e+00> : vector<512xf32>
    %2 = vector.multi_reduction <add>, %1, %cst [1] : vector<512x128xf32> to vector<512xf32>
    %3 = vector.shape_cast %2 : vector<512xf32> to vector<512x1xf32>
    %cst_1 = arith.constant 1.280000e+02 : f32
    %4 = vector.broadcast %cst_1 : f32 to vector<512x1xf32>
    %5 = arith.divf %3, %4 : vector<512x1xf32>
    %6 = vector.broadcast %5 : vector<512x1xf32> to vector<512x128xf32>
    %7 = arith.subf %1, %6 : vector<512x128xf32>
    %8 = arith.mulf %7, %7 : vector<512x128xf32>
    %cst_2 = arith.constant dense<0.000000e+00> : vector<512xf32>
    %9 = vector.multi_reduction <add>, %8, %cst_2 [1] : vector<512x128xf32> to vector<512xf32>
    %10 = vector.shape_cast %9 : vector<512xf32> to vector<512x1xf32>
    %cst_3 = arith.constant 1.280000e+02 : f32
    %11 = vector.broadcast %cst_3 : f32 to vector<512x1xf32>
    %12 = arith.divf %10, %11 : vector<512x1xf32>
    %cst_4 = arith.constant 9.99999974E-6 : f32
    %13 = vector.broadcast %cst_4 : f32 to vector<512x1xf32>
    %14 = arith.addf %12, %13 : vector<512x1xf32>
    %15 = math.rsqrt %14 : vector<512x1xf32>
    %16 = vector.broadcast %15 : vector<512x1xf32> to vector<512x128xf32>
    %17 = arith.mulf %7, %16 : vector<512x128xf32>
    %18 = arith.truncf %17 : vector<512x128xf32> to vector<512x128xbf16>
    %c0_5 = arith.constant 0 : index
    %c0_6 = arith.constant 0 : index
    %19 = vector.load %arg2[%c0_5, %c0_6] : memref<128x128xbf16, #tpu.memory_space<vmem>>, vector<128x128xbf16>
    %cst_7 = arith.constant dense<0.000000e+00> : vector<512x128xf32>
    %20 = tpu.matmul %18, %19, %cst_7 {dimension_numbers = #tpu.dot_dimension_numbers<[1], [0], [0], [1], [0, 0, 1, 1], [], []>} : vector<512x128xbf16>, vector<128x128xbf16>, vector<512x128xf32> -> vector<512x128xf32>
    %c0_8 = arith.constant 0 : index
    %c0_9 = arith.constant 0 : index
    %21 = vector.load %arg3[%c0_8, %c0_9] : memref<1x128xf32, #tpu.memory_space<vmem>>, vector<1x128xf32>
    %22 = vector.broadcast %21 : vector<1x128xf32> to vector<512x128xf32>
    %23 = arith.addf %20, %22 : vector<512x128xf32>
    %cst_10 = arith.constant 5.000000e-01 : f32
    %24 = vector.broadcast %cst_10 : f32 to vector<512x128xf32>
    %25 = arith.mulf %24, %23 : vector<512x128xf32>
    %cst_11 = arith.constant 4.471500e-02 : f32
    %26 = vector.broadcast %cst_11 : f32 to vector<512x128xf32>
    %27 = arith.mulf %26, %23 : vector<512x128xf32>
    %28 = arith.mulf %27, %23 : vector<512x128xf32>
    %29 = arith.mulf %28, %23 : vector<512x128xf32>
    %30 = arith.addf %23, %29 : vector<512x128xf32>
    %cst_12 = arith.constant 0.797884583 : f32
    %31 = vector.broadcast %cst_12 : f32 to vector<512x128xf32>
    %32 = arith.mulf %31, %30 : vector<512x128xf32>
    %33 = math.tanh %32 : vector<512x128xf32>
    %cst_13 = arith.constant 1.000000e+00 : f32
    %34 = vector.broadcast %cst_13 : f32 to vector<512x128xf32>
    %35 = arith.addf %34, %33 : vector<512x128xf32>
    %36 = arith.mulf %25, %35 : vector<512x128xf32>
    %37 = arith.truncf %36 : vector<512x128xf32> to vector<512x128xbf16>
    %c0_14 = arith.constant 0 : index
    %c0_15 = arith.constant 0 : index
    %38 = vector.load %arg4[%c0_14, %c0_15] : memref<128x128xbf16, #tpu.memory_space<vmem>>, vector<128x128xbf16>
    %cst_16 = arith.constant dense<0.000000e+00> : vector<512x128xf32>
    %39 = tpu.matmul %37, %38, %cst_16 {dimension_numbers = #tpu.dot_dimension_numbers<[1], [0], [0], [1], [0, 0, 1, 1], [], []>} : vector<512x128xbf16>, vector<128x128xbf16>, vector<512x128xf32> -> vector<512x128xf32>
    %c0_17 = arith.constant 0 : index
    %c0_18 = arith.constant 0 : index
    %40 = vector.load %arg5[%c0_17, %c0_18] : memref<1x128xf32, #tpu.memory_space<vmem>>, vector<1x128xf32>
    %41 = vector.broadcast %40 : vector<1x128xf32> to vector<512x128xf32>
    %42 = arith.addf %39, %41 : vector<512x128xf32>
    %43 = arith.addf %1, %42 : vector<512x128xf32>
    %cst_19 = arith.constant dense<0.000000e+00> : vector<512xf32>
    %44 = vector.multi_reduction <add>, %43, %cst_19 [1] : vector<512x128xf32> to vector<512xf32>
    %45 = vector.shape_cast %44 : vector<512xf32> to vector<512x1xf32>
    %cst_20 = arith.constant 1.280000e+02 : f32
    %46 = vector.broadcast %cst_20 : f32 to vector<512x1xf32>
    %47 = arith.divf %45, %46 : vector<512x1xf32>
    %48 = vector.broadcast %47 : vector<512x1xf32> to vector<512x128xf32>
    %49 = arith.subf %43, %48 : vector<512x128xf32>
    %50 = arith.mulf %49, %49 : vector<512x128xf32>
    %cst_21 = arith.constant dense<0.000000e+00> : vector<512xf32>
    %51 = vector.multi_reduction <add>, %50, %cst_21 [1] : vector<512x128xf32> to vector<512xf32>
    %52 = vector.shape_cast %51 : vector<512xf32> to vector<512x1xf32>
    %cst_22 = arith.constant 1.280000e+02 : f32
    %53 = vector.broadcast %cst_22 : f32 to vector<512x1xf32>
    %54 = arith.divf %52, %53 : vector<512x1xf32>
    %cst_23 = arith.constant 9.99999974E-6 : f32
    %55 = vector.broadcast %cst_23 : f32 to vector<512x1xf32>
    %56 = arith.addf %54, %55 : vector<512x1xf32>
    %57 = math.rsqrt %56 : vector<512x1xf32>
    %58 = vector.broadcast %57 : vector<512x1xf32> to vector<512x128xf32>
    %59 = arith.mulf %49, %58 : vector<512x128xf32>
    %c0_24 = arith.constant 0 : index
    %c0_25 = arith.constant 0 : index
    %60 = vector.load %arg6[%c0_24, %c0_25] : memref<1x128xf32, #tpu.memory_space<vmem>>, vector<1x128xf32>
    %61 = vector.broadcast %60 : vector<1x128xf32> to vector<512x128xf32>
    %62 = arith.mulf %59, %61 : vector<512x128xf32>
    %c0_26 = arith.constant 0 : index
    %c0_27 = arith.constant 0 : index
    %63 = vector.load %arg7[%c0_26, %c0_27] : memref<1x128xf32, #tpu.memory_space<vmem>>, vector<1x128xf32>
    %64 = vector.broadcast %63 : vector<1x128xf32> to vector<512x128xf32>
    %65 = arith.addf %62, %64 : vector<512x128xf32>
    %66 = arith.truncf %65 : vector<512x128xf32> to vector<512x128xbf16>
    %c0_28 = arith.constant 0 : index
    %c0_29 = arith.constant 0 : index
    %67 = vector.load %arg8[%c0_28, %c0_29] : memref<512x128xbf16, #tpu.memory_space<vmem>>, vector<512x128xbf16>
    tpu.vector_store %arg8[%c0_28, %c0_29], %66 {strides = array<i32>} : memref<512x128xbf16, #tpu.memory_space<vmem>>, vector<512x128xbf16>,
    return
  }
  func.func @transform_0(%arg0: i32) -> (i32, i32) {
    %c0_i32 = arith.constant 0 : i32
    %c0_i32_0 = arith.constant 0 : i32
    return %arg0, %c0_i32 : i32, i32
  }
  func.func @transform_1(%arg0: i32) -> (i32, i32) {
    %c0_i32 = arith.constant 0 : i32
    %c0_i32_0 = arith.constant 0 : i32
    %c0_i32_1 = arith.constant 0 : i32
    return %c0_i32, %c0_i32_0 : i32, i32
  }
  func.func @transform_2(%arg0: i32) -> (i32, i32) {
    %c0_i32 = arith.constant 0 : i32
    %c0_i32_0 = arith.constant 0 : i32
    %c0_i32_1 = arith.constant 0 : i32
    return %c0_i32, %c0_i32_0 : i32, i32
  }
  func.func @transform_3(%arg0: i32) -> (i32, i32) {
    %c0_i32 = arith.constant 0 : i32
    %c0_i32_0 = arith.constant 0 : i32
    %c0_i32_1 = arith.constant 0 : i32
    return %c0_i32, %c0_i32_0 : i32, i32
  }
  func.func @transform_4(%arg0: i32) -> (i32, i32) {
    %c0_i32 = arith.constant 0 : i32
    %c0_i32_0 = arith.constant 0 : i32
    %c0_i32_1 = arith.constant 0 : i32
    return %c0_i32, %c0_i32_0 : i32, i32
  }
  func.func @transform_5(%arg0: i32) -> (i32, i32) {
    %c0_i32 = arith.constant 0 : i32
    %c0_i32_0 = arith.constant 0 : i32
    %c0_i32_1 = arith.constant 0 : i32
    return %c0_i32, %c0_i32_0 : i32, i32
  }
  func.func @transform_6(%arg0: i32) -> (i32, i32) {
    %c0_i32 = arith.constant 0 : i32
    %c0_i32_0 = arith.constant 0 : i32
    %c0_i32_1 = arith.constant 0 : i32
    return %c0_i32, %c0_i32_0 : i32, i32
  }
  func.func @transform_7(%arg0: i32) -> (i32, i32) {
    %c0_i32 = arith.constant 0 : i32
    %c0_i32_0 = arith.constant 0 : i32
    return %arg0, %c0_i32 : i32, i32
  }
}

module attributes {stable_mosaic.version = 11 : i64} {
  func.func @_conv3x3_s2_kernel(%arg0: i32, %arg1: memref<1x8x2x8x256xbf16, #tpu.memory_space<vmem>>, %arg2: memref<1152x128xbf16, #tpu.memory_space<vmem>>, %arg3: memref<1x128xf32, #tpu.memory_space<vmem>>, %arg4: memref<1x8x8x128xf32, #tpu.memory_space<vmem>>) attributes {dimension_semantics = [#tpu.dimension_semantics<parallel>], iteration_bounds = array<i64: 2>, scalar_prefetch = 0 : i64, scratch_operands = 0 : i64, tpu.core_type = #tpu.core_type<tc>, window_params = [{transform_indices = @transform_0, window_bounds = array<i64: 1, 8, 2, 8, 256>}, {pipeline_mode = #tpu.pipeline_mode<synchronous>, transform_indices = @transform_1, window_bounds = array<i64: 1152, 128>}, {pipeline_mode = #tpu.pipeline_mode<synchronous>, transform_indices = @transform_2, window_bounds = array<i64: 1, 128>}, {transform_indices = @transform_3, window_bounds = array<i64: 1, 8, 8, 128>}]} {
    %c0 = arith.constant 0 : index
    %c0_0 = arith.constant 0 : index
    %c0_1 = arith.constant 0 : index
    %c0_2 = arith.constant 0 : index
    %c0_3 = arith.constant 0 : index
    %0 = vector.load %arg1[%c0, %c0_0, %c0_1, %c0_2, %c0_3] : memref<1x8x2x8x256xbf16, #tpu.memory_space<vmem>>, vector<1x8x2x8x256xbf16>
    %1 = vector.shape_cast %0 : vector<1x8x2x8x256xbf16> to vector<8x2x8x256xbf16>
    %2 = arith.extf %1 : vector<8x2x8x256xbf16> to vector<8x2x8x256xf32>
    %3 = vector.extract_strided_slice %2 {offsets = [0, 0, 0, 0], sizes = [8, 1, 8, 256], strides = [1, 1, 1, 1]} : vector<8x2x8x256xf32> to vector<8x1x8x256xf32>
    %4 = vector.shape_cast %3 : vector<8x1x8x256xf32> to vector<8x8x256xf32>
    %5 = vector.extract_strided_slice %2 {offsets = [0, 1, 0, 0], sizes = [8, 1, 8, 256], strides = [1, 1, 1, 1]} : vector<8x2x8x256xf32> to vector<8x1x8x256xf32>
    %6 = vector.shape_cast %5 : vector<8x1x8x256xf32> to vector<8x8x256xf32>
    %cst = arith.constant 0.000000e+00 : f32
    %7 = vector.broadcast %cst : f32 to vector<1x8x256xf32>
    %8 = vector.extract_strided_slice %6 {offsets = [0, 0, 0], sizes = [7, 8, 256], strides = [1, 1, 1]} : vector<8x8x256xf32> to vector<7x8x256xf32>
    %9 = tpu.concatenate %7, %8 in 0 : vector<1x8x256xf32>, vector<7x8x256xf32> -> vector<8x8x256xf32>
    %10 = vector.extract_strided_slice %9 {offsets = [0, 0, 0], sizes = [8, 8, 128], strides = [1, 1, 1]} : vector<8x8x256xf32> to vector<8x8x128xf32>
    %11 = vector.extract_strided_slice %9 {offsets = [0, 0, 128], sizes = [8, 8, 128], strides = [1, 1, 1]} : vector<8x8x256xf32> to vector<8x8x128xf32>
    %cst_4 = arith.constant 0.000000e+00 : f32
    %12 = vector.broadcast %cst_4 : f32 to vector<8x1x128xf32>
    %13 = vector.extract_strided_slice %11 {offsets = [0, 0, 0], sizes = [8, 7, 128], strides = [1, 1, 1]} : vector<8x8x128xf32> to vector<8x7x128xf32>
    %14 = tpu.concatenate %12, %13 in 1 : vector<8x1x128xf32>, vector<8x7x128xf32> -> vector<8x8x128xf32>
    %15 = vector.extract_strided_slice %4 {offsets = [0, 0, 0], sizes = [8, 8, 128], strides = [1, 1, 1]} : vector<8x8x256xf32> to vector<8x8x128xf32>
    %16 = vector.extract_strided_slice %4 {offsets = [0, 0, 128], sizes = [8, 8, 128], strides = [1, 1, 1]} : vector<8x8x256xf32> to vector<8x8x128xf32>
    %cst_5 = arith.constant 0.000000e+00 : f32
    %17 = vector.broadcast %cst_5 : f32 to vector<8x1x128xf32>
    %18 = vector.extract_strided_slice %16 {offsets = [0, 0, 0], sizes = [8, 7, 128], strides = [1, 1, 1]} : vector<8x8x128xf32> to vector<8x7x128xf32>
    %19 = tpu.concatenate %17, %18 in 1 : vector<8x1x128xf32>, vector<8x7x128xf32> -> vector<8x8x128xf32>
    %20 = vector.extract_strided_slice %6 {offsets = [0, 0, 0], sizes = [8, 8, 128], strides = [1, 1, 1]} : vector<8x8x256xf32> to vector<8x8x128xf32>
    %21 = vector.extract_strided_slice %6 {offsets = [0, 0, 128], sizes = [8, 8, 128], strides = [1, 1, 1]} : vector<8x8x256xf32> to vector<8x8x128xf32>
    %cst_6 = arith.constant 0.000000e+00 : f32
    %22 = vector.broadcast %cst_6 : f32 to vector<8x1x128xf32>
    %23 = vector.extract_strided_slice %21 {offsets = [0, 0, 0], sizes = [8, 7, 128], strides = [1, 1, 1]} : vector<8x8x128xf32> to vector<8x7x128xf32>
    %24 = tpu.concatenate %22, %23 in 1 : vector<8x1x128xf32>, vector<8x7x128xf32> -> vector<8x8x128xf32>
    %25 = tpu.concatenate %14, %10, %11, %19, %15, %16, %24, %20, %21 in 2 : vector<8x8x128xf32>, vector<8x8x128xf32>, vector<8x8x128xf32>, vector<8x8x128xf32>, vector<8x8x128xf32>, vector<8x8x128xf32>, vector<8x8x128xf32>, vector<8x8x128xf32>, vector<8x8x128xf32> -> vector<8x8x1152xf32>
    %26 = vector.shape_cast %25 : vector<8x8x1152xf32> to vector<64x1152xf32>
    %27 = arith.truncf %26 : vector<64x1152xf32> to vector<64x1152xbf16>
    %c0_7 = arith.constant 0 : index
    %c0_8 = arith.constant 0 : index
    %28 = vector.load %arg2[%c0_7, %c0_8] : memref<1152x128xbf16, #tpu.memory_space<vmem>>, vector<1152x128xbf16>
    %cst_9 = arith.constant dense<0.000000e+00> : vector<64x128xf32>
    %29 = tpu.matmul %27, %28, %cst_9 {dimension_numbers = #tpu.dot_dimension_numbers<[1], [0], [0], [1], [0, 0, 1, 1], [], []>} : vector<64x1152xbf16>, vector<1152x128xbf16>, vector<64x128xf32> -> vector<64x128xf32>
    %c0_10 = arith.constant 0 : index
    %c0_11 = arith.constant 0 : index
    %30 = vector.load %arg3[%c0_10, %c0_11] : memref<1x128xf32, #tpu.memory_space<vmem>>, vector<1x128xf32>
    %31 = vector.broadcast %30 : vector<1x128xf32> to vector<64x128xf32>
    %32 = arith.addf %29, %31 : vector<64x128xf32>
    %33 = vector.shape_cast %32 : vector<64x128xf32> to vector<8x8x128xf32>
    %c0_12 = arith.constant 0 : index
    %c0_13 = arith.constant 0 : index
    %c0_14 = arith.constant 0 : index
    %c0_15 = arith.constant 0 : index
    %34 = vector.load %arg4[%c0_12, %c0_13, %c0_14, %c0_15] : memref<1x8x8x128xf32, #tpu.memory_space<vmem>>, vector<1x8x8x128xf32>
    %35 = vector.shape_cast %34 : vector<1x8x8x128xf32> to vector<8x8x128xf32>
    %36 = vector.shape_cast %33 : vector<8x8x128xf32> to vector<1x8x8x128xf32>
    tpu.vector_store %arg4[%c0_12, %c0_13, %c0_14, %c0_15], %36 {strides = array<i32>} : memref<1x8x8x128xf32, #tpu.memory_space<vmem>>, vector<1x8x8x128xf32>,
    return
  }
  func.func @transform_0(%arg0: i32) -> (i32, i32, i32, i32, i32) {
    %c0_i32 = arith.constant 0 : i32
    %c0_i32_0 = arith.constant 0 : i32
    %c0_i32_1 = arith.constant 0 : i32
    %c0_i32_2 = arith.constant 0 : i32
    %c0_i32_3 = arith.constant 0 : i32
    return %arg0, %c0_i32, %c0_i32_0, %c0_i32_1, %c0_i32_2 : i32, i32, i32, i32, i32
  }
  func.func @transform_1(%arg0: i32) -> (i32, i32) {
    %c0_i32 = arith.constant 0 : i32
    %c0_i32_0 = arith.constant 0 : i32
    %c0_i32_1 = arith.constant 0 : i32
    return %c0_i32, %c0_i32_0 : i32, i32
  }
  func.func @transform_2(%arg0: i32) -> (i32, i32) {
    %c0_i32 = arith.constant 0 : i32
    %c0_i32_0 = arith.constant 0 : i32
    %c0_i32_1 = arith.constant 0 : i32
    return %c0_i32, %c0_i32_0 : i32, i32
  }
  func.func @transform_3(%arg0: i32) -> (i32, i32, i32, i32) {
    %c0_i32 = arith.constant 0 : i32
    %c0_i32_0 = arith.constant 0 : i32
    %c0_i32_1 = arith.constant 0 : i32
    %c0_i32_2 = arith.constant 0 : i32
    return %arg0, %c0_i32, %c0_i32_0, %c0_i32_1 : i32, i32, i32, i32
  }
}

</mosaic_0001>

<llo_original>
// kernel: basic_stage.8
$region0: #{basic_stage.8}
  #allocation0 [shape = 'u32[]', space=smem, size = 0x4, offset = 0x4, fixed_abs, tag = 'smem constant byte address 0x4 - core index']
  #allocation1 [shape = 'u32[144,128]{1,0:T(1,128)}', space=vmem, size = 0x12000, scoped, tag = 'internal scratch']
  %s0 = inlined_call_operand.vmem [shape: bf16[2,16,16,128], index: 0, kind: input, shape index: {}, may-alias: {0,1,2}]
  %s1 = inlined_call_operand.vmem [shape: bf16[2,16,16,128], index: 1, kind: input, shape index: {}, may-alias: {0,1,2}]
  %s2 = inlined_call_operand.vmem [shape: bf16[2,16,16,128], index: 2, kind: input, shape index: {}, may-alias: {0,1,2}]
  %s3 = inlined_call_operand.vmem [shape: f32[9,1,128], index: 3, kind: input, shape index: {}]
  %s4 = inlined_call_operand.vmem [shape: bf16[2,16,16,128], index: 4, kind: output, shape index: {}]
  %s5 = sld [smem:[#allocation0]]
  $region49: #{basic_stage.8} parent=0
    _
  %s7 = ssub.s32 1, %s5
  %s8 = scalar_select 0, %s7, %s5
  loop: start=0, step=1, limit=6
  $region2: #{basic_stage.8} parent=0 // loop_pre_header
    _
  $region3: #{basic_stage.8} parent=0 // loop_header
    %s10 = sphi 0, %s14
    %p11 = scmp.ge.s32.totalorder %s10, 6
    %s17 = sphi 0, %s29
    %s18 = sphi 0, %s25
    %s19 = sphi 0, %s17
    %s20 = sphi 0, %s18
    %s21 = sphi 0, %s19
    %s22 = sphi 0, %s20
    %s42 = sphi 0, %s44
    %s45 = sphi 0, %s42
    %s46 = sphi 0, %s45
    %s62 = sphi 0, %s46
    %s70 = sphi 0, %s72
    %s73 = sphi 0, %s70
    %s74 = sphi 0, %s73
    %s90 = sphi 0, %s74
    %s106 = sphi 0, %s108
    %s109 = sphi 0, %s106
    %s110 = sphi 0, %s109
    %s126 = sphi 0, %s110
    %s130 = sphi 0, %s130
    %s132 = sphi 0, %s130
    %s133 = sphi 0, %s132
    %s147 = sphi 0, %s133
    %s155 = sphi 0, %s157
    %s158 = sphi 0, %s155
    %s159 = sphi 0, %s158
    %s175 = sphi 0, %s159
  $region4: #{basic_stage.8} parent=0 // loop_header_branch
    %13 = sbr.rel (%p11) target = $region8
  $region5: #{basic_stage.8} parent=0 // loop_body
    %s15 = ssub.s32 %s10, 1
    %s16 = ssub.s32 %s10, 2
    %s23 = sadd.s32 1, %s18
    %p24 = scmp.ge.s32.totalorder %s23, 2
    %s25 = scalar_select %p24, 0, %s23
    %s26 = sadd.s32 1, %s17
    %s27 = scalar_select %p24, %s26, %s17
    %p28 = scmp.ge.s32.totalorder %s27, 2
    %s29 = scalar_select %p28, 0, %s27
    %s30 = smul.u32 %s18, 8
    %s31 = ssub.s32 %s30, 1
    %p32 = scmp.gt.s32.totalorder %s31, 0
    %s33 = scalar_select %p32, %s31, 0
    %s34 = smul.u32 %s25, 8
    %s35 = ssub.s32 %s34, 1
    %p36 = scmp.gt.s32.totalorder %s35, 0
    %s37 = scalar_select %p36, %s35, 0
    %s38 = ssub.s32 %s17, %s29
    %s39 = ssub.s32 %s33, %s37
    %s40 = sor.u32 %s38, %s39
    %p41 = scmp.eq.s32.totalorder %s40, 0
    %s43 = sadd.s32 %s42, 1
    %s44 = scalar_select %p41, %s42, %s43
    %p47 = pneg %p41
    %p48 = scmp.eq.s32.totalorder %s10, 3
    %p49 = por %p47, %p48
    %p50 = scmp.ne.s32.totalorder %s42, %s45
    %p51 = scmp.eq.s32.totalorder %s10, 0
    %p52 = por %p50, %p51
    %p53 = scmp.ne.s32.totalorder %s42, %s45
    %p54 = scmp.eq.s32.totalorder %s15, 3
    %p55 = por %p53, %p54
    %p56 = scmp.ne.s32.totalorder %s45, %s46
    %p57 = scmp.eq.s32.totalorder %s15, 0
    %p58 = por %p56, %p57
    %p59 = scmp.ne.s32.totalorder %s45, %s46
    %p60 = scmp.eq.s32.totalorder %s16, 3
    %p61 = por %p59, %p60
    %p63 = scmp.ne.s32.totalorder %s46, %s62
    %p64 = scmp.eq.s32.totalorder %s16, 0
    %p65 = por %p63, %p64
    %s66 = ssub.s32 %s17, %s29
    %s67 = ssub.s32 %s18, %s25
    %s68 = sor.u32 %s66, %s67
    %p69 = scmp.eq.s32.totalorder %s68, 0
    %s71 = sadd.s32 %s70, 1
    %s72 = scalar_select %p69, %s70, %s71
    %p75 = pneg %p69
    %p76 = scmp.eq.s32.totalorder %s10, 3
    %p77 = por %p75, %p76
    %p78 = scmp.ne.s32.totalorder %s70, %s73
    %p79 = scmp.eq.s32.totalorder %s10, 0
    %p80 = por %p78, %p79
    %p81 = scmp.ne.s32.totalorder %s70, %s73
    %p82 = scmp.eq.s32.totalorder %s15, 3
    %p83 = por %p81, %p82
    %p84 = scmp.ne.s32.totalorder %s73, %s74
    %p85 = scmp.eq.s32.totalorder %s15, 0
    %p86 = por %p84, %p85
    %p87 = scmp.ne.s32.totalorder %s73, %s74
    %p88 = scmp.eq.s32.totalorder %s16, 3
    %p89 = por %p87, %p88
    %p91 = scmp.ne.s32.totalorder %s74, %s90
    %p92 = scmp.eq.s32.totalorder %s16, 0
    %p93 = por %p91, %p92
    %s94 = smul.u32 %s18, 8
    %s95 = sadd.s32 %s94, 8
    %p96 = scmp.lt.s32.totalorder %s95, 15
    %s97 = scalar_select %p96, %s95, 15
    %s98 = smul.u32 %s25, 8
    %s99 = sadd.s32 %s98, 8
    %p100 = scmp.lt.s32.totalorder %s99, 15
    %s101 = scalar_select %p100, %s99, 15
    %s102 = ssub.s32 %s17, %s29
    %s103 = ssub.s32 %s97, %s101
    %s104 = sor.u32 %s102, %s103
    %p105 = scmp.eq.s32.totalorder %s104, 0
    %s107 = sadd.s32 %s106, 1
    %s108 = scalar_select %p105, %s106, %s107
    %p111 = pneg %p105
    %p112 = scmp.eq.s32.totalorder %s10, 3
    %p113 = por %p111, %p112
    %p114 = scmp.ne.s32.totalorder %s106, %s109
    %p115 = scmp.eq.s32.totalorder %s10, 0
    %p116 = por %p114, %p115
    %p117 = scmp.ne.s32.totalorder %s106, %s109
    %p118 = scmp.eq.s32.totalorder %s15, 3
    %p119 = por %p117, %p118
    %p120 = scmp.ne.s32.totalorder %s109, %s110
    %p121 = scmp.eq.s32.totalorder %s15, 0
    %p122 = por %p120, %p121
    %p123 = scmp.ne.s32.totalorder %s109, %s110
    %p124 = scmp.eq.s32.totalorder %s16, 3
    %p125 = por %p123, %p124
    %p127 = scmp.ne.s32.totalorder %s110, %s126
    %p128 = scmp.eq.s32.totalorder %s16, 0
    %p129 = por %p127, %p128
    %s131 = sadd.s32 %s130, 1
    %p134 = scmp.eq.s32.totalorder %s10, 3
    %p135 = scmp.ne.s32.totalorder %s130, %s132
    %p136 = scmp.eq.s32.totalorder %s10, 0
    %p137 = por %p135, %p136
    %p138 = scmp.ne.s32.totalorder %s130, %s132
    %p139 = scmp.eq.s32.totalorder %s15, 3
    %p140 = por %p138, %p139
    %p141 = scmp.ne.s32.totalorder %s132, %s133
    %p142 = scmp.eq.s32.totalorder %s15, 0
    %p143 = por %p141, %p142
    %p144 = scmp.ne.s32.totalorder %s132, %s133
    %p145 = scmp.eq.s32.totalorder %s16, 3
    %p146 = por %p144, %p145
    %p148 = scmp.ne.s32.totalorder %s133, %s147
    %p149 = scmp.eq.s32.totalorder %s16, 0
    %p150 = por %p148, %p149
    %s151 = ssub.s32 %s17, %s29
    %s152 = ssub.s32 %s18, %s25
    %s153 = sor.u32 %s151, %s152
    %p154 = scmp.eq.s32.totalorder %s153, 0
    %s156 = sadd.s32 %s155, 1
    %s157 = scalar_select %p154, %s155, %s156
    %p160 = pneg %p154
    %p161 = scmp.eq.s32.totalorder %s10, 3
    %p162 = por %p160, %p161
    %p163 = scmp.ne.s32.totalorder %s155, %s158
    %p164 = scmp.eq.s32.totalorder %s10, 0
    %p165 = por %p163, %p164
    %p166 = scmp.ne.s32.totalorder %s155, %s158
    %p167 = scmp.eq.s32.totalorder %s15, 3
    %p168 = por %p166, %p167
    %p169 = scmp.ne.s32.totalorder %s158, %s159
    %p170 = scmp.eq.s32.totalorder %s15, 0
    %p171 = por %p169, %p170
    %p172 = scmp.ne.s32.totalorder %s158, %s159
    %p173 = scmp.eq.s32.totalorder %s16, 3
    %p174 = por %p172, %p173
    %p176 = scmp.ne.s32.totalorder %s159, %s175
    %p177 = scmp.eq.s32.totalorder %s16, 0
    %p178 = por %p176, %p177
    %p179 = scmp.le.s32.totalorder 1, %s10
    %p180 = scmp.lt.s32.totalorder %s10, 5
    %p181 = pnand %p179, %p180
    %p182 = pneg %p181
    // Predicated region
    $region9: #{basic_stage.8} parent=5 // pred_check
      _
    $region10: #{basic_stage.8} parent=5 // pred_check_branch
      %184 = sbr.rel (%p181) target = $region12
    $region11: #{basic_stage.8} parent=5 // pred_region
      %s185 = ssub.s32 %s10, 1
      // Predicated region
      $region13: #{basic_stage.8} parent=11 // pred_check
        %p186 = pneg %p143
      $region14: #{basic_stage.8} parent=11 // pred_check_branch
        %188 = sbr.rel (%p186) target = $region16
      $region15: #{basic_stage.8} parent=11 // pred_region
        _
      $region16: #{basic_stage.8} parent=11 // pred_fallthru
        _
    $region12: #{basic_stage.8} parent=5 // pred_fallthru
      _
    %p189 = scmp.lt.s32.totalorder %s10, 4
    // Predicated region
    $region17: #{basic_stage.8} parent=5 // pred_check
      %p190 = pneg %p189
    $region18: #{basic_stage.8} parent=5 // pred_check_branch
      %192 = sbr.rel (%p190) target = $region20
    $region19: #{basic_stage.8} parent=5 // pred_region
      // Predicated region
      $region21: #{basic_stage.8} parent=19 // pred_check
        %p193 = pneg %p52
      $region22: #{basic_stage.8} parent=19 // pred_check_branch
        %195 = sbr.rel (%p193) target = $region24
      $region23: #{basic_stage.8} parent=19 // pred_region
        %s196 = smul.u32 %s18, 8
        %s197 = ssub.s32 %s196, 1
        %p198 = scmp.gt.s32.totalorder %s197, 0
        %s199 = scalar_select %p198, %s197, 0
        %p200 = scmp.lt.s32.totalorder %s17, 1
        %s201 = scalar_select %p200, %s17, 1
        %p202 = scmp.lt.s32.totalorder %s199, 15
        %s203 = scalar_select %p202, %s199, 15
        %s204 = smul.addr %s203, 2
        %s205 = smul.addr %s201, 32
        %s206 = sadd.s32 %s204, %s205
        %s207 = smul.addr %s206, 4
        %s208 = scalar_lea.vmem %s0, %s207
        %s209 = smul.u32 %s18, 8
        %s210 = ssub.s32 %s209, 1
        %p211 = scmp.gt.s32.totalorder %s210, 0
        %s212 = scalar_select %p211, %s210, 0
      $region24: #{basic_stage.8} parent=19 // pred_fallthru
        _
      // Predicated region
      $region25: #{basic_stage.8} parent=19 // pred_check
        %p213 = pneg %p80
      $region26: #{basic_stage.8} parent=19 // pred_check_branch
        %215 = sbr.rel (%p213) target = $region28
      $region27: #{basic_stage.8} parent=19 // pred_region
        %s216 = smul.u32 8, %s18
        %p217 = scmp.lt.s32.totalorder %s17, 1
        %s218 = scalar_select %p217, %s17, 1
        %p219 = scmp.lt.s32.totalorder %s216, 15
        %s220 = scalar_select %p219, %s216, 15
        %s221 = smul.addr %s220, 2
        %s222 = smul.addr %s218, 32
        %s223 = sadd.s32 %s221, %s222
        %s224 = smul.addr %s223, 4
        %s225 = scalar_lea.vmem %s1, %s224
        %s226 = smul.u32 8, %s18
      $region28: #{basic_stage.8} parent=19 // pred_fallthru
        _
      // Predicated region
      $region29: #{basic_stage.8} parent=19 // pred_check
        %p227 = pneg %p116
      $region30: #{basic_stage.8} parent=19 // pred_check_branch
        %229 = sbr.rel (%p227) target = $region32
      $region31: #{basic_stage.8} parent=19 // pred_region
        %s230 = smul.u32 %s18, 8
        %s231 = sadd.s32 %s230, 8
        %p232 = scmp.lt.s32.totalorder %s231, 15
        %s233 = scalar_select %p232, %s231, 15
        %p234 = scmp.lt.s32.totalorder %s17, 1
        %s235 = scalar_select %p234, %s17, 1
        %p236 = scmp.lt.s32.totalorder %s233, 15
        %s237 = scalar_select %p236, %s233, 15
        %s238 = smul.addr %s237, 2
        %s239 = smul.addr %s235, 32
        %s240 = sadd.s32 %s238, %s239
        %s241 = smul.addr %s240, 4
        %s242 = scalar_lea.vmem %s2, %s241
        %s243 = smul.u32 %s18, 8
        %s244 = sadd.s32 %s243, 8
        %p245 = scmp.lt.s32.totalorder %s244, 15
        %s246 = scalar_select %p245, %s244, 15
      $region32: #{basic_stage.8} parent=19 // pred_fallthru
        _
    $region20: #{basic_stage.8} parent=5 // pred_fallthru
      _
    %p247 = scmp.le.s32.totalorder 1, %s10
    %p248 = scmp.lt.s32.totalorder %s10, 5
    %p249 = pnand %p247, %p248
    %p250 = pneg %p249
    // Predicated region
    $region33: #{basic_stage.8} parent=5 // pred_check
      _
    $region34: #{basic_stage.8} parent=5 // pred_check_branch
      %252 = sbr.rel (%p249) target = $region36
    $region35: #{basic_stage.8} parent=5 // pred_region
      %s253 = ssub.s32 %s10, 1
      %s254 = smul.u32 %s20, 8
      %s255 = ssub.s32 %s254, 1
      %p256 = scmp.gt.s32.totalorder %s255, 0
      %s257 = scalar_select %p256, %s255, 0
      %p258 = scmp.lt.s32.totalorder %s19, 1
      %s259 = scalar_select %p258, %s19, 1
      %p260 = scmp.lt.s32.totalorder %s257, 15
      %s261 = scalar_select %p260, %s257, 15
      %s262 = smul.addr %s261, 2
      %s263 = smul.addr %s259, 32
      %s264 = sadd.s32 %s262, %s263
      %s265 = smul.addr %s264, 4
      %s266 = scalar_lea.vmem %s0, %s265
      %p267 = pneg %p58
      %p268 = pneg %p55
      %s269 = smul.u32 8, %s20
      %p270 = scmp.lt.s32.totalorder %s19, 1
      %s271 = scalar_select %p270, %s19, 1
      %p272 = scmp.lt.s32.totalorder %s269, 15
      %s273 = scalar_select %p272, %s269, 15
      %s274 = smul.addr %s273, 2
      %s275 = smul.addr %s271, 32
      %s276 = sadd.s32 %s274, %s275
      %s277 = smul.addr %s276, 4
      %s278 = scalar_lea.vmem %s1, %s277
      %p279 = pneg %p86
      %p280 = pneg %p83
      %s281 = smul.u32 %s20, 8
      %s282 = sadd.s32 %s281, 8
      %p283 = scmp.lt.s32.totalorder %s282, 15
      %s284 = scalar_select %p283, %s282, 15
      %p285 = scmp.lt.s32.totalorder %s19, 1
      %s286 = scalar_select %p285, %s19, 1
      %p287 = scmp.lt.s32.totalorder %s284, 15
      %s288 = scalar_select %p287, %s284, 15
      %s289 = smul.addr %s288, 2
      %s290 = smul.addr %s286, 32
      %s291 = sadd.s32 %s289, %s290
      %s292 = smul.addr %s291, 4
      %s293 = scalar_lea.vmem %s2, %s292
      %p294 = pneg %p122
      %p295 = pneg %p119
      %p296 = pneg %p143
      %p297 = pneg %p140
      %p298 = pneg %p171
      %p299 = pneg %p168
      %s300 = smul.u32 8, %s20
      %p301 = scmp.lt.s32.totalorder %s19, 1
      %s302 = scalar_select %p301, %s19, 1
      %p303 = scmp.lt.s32.totalorder %s300, 15
      %s304 = scalar_select %p303, %s300, 15
      %s305 = smul.addr %s304, 2
      %s306 = smul.addr %s302, 32
      %s307 = sadd.s32 %s305, %s306
      %s308 = smul.addr %s307, 4
      %s309 = scalar_lea.vmem %s4, %s308
      %s310 = smul.u32 %s20, 8
      %s311 = ssub.s32 %s310, 1
      %p312 = scmp.gt.s32.totalorder %s311, 0
      %s313 = scalar_select %p312, %s311, 0
      %p314 = scmp.lt.s32.totalorder %s19, 1
      %s315 = scalar_select %p314, %s19, 1
      %p316 = scmp.lt.s32.totalorder %s313, 15
      %s317 = scalar_select %p316, %s313, 15
      %s318 = smul.addr %s317, 2
      %s319 = smul.addr %s315, 32
      %s320 = sadd.s32 %s318, %s319
      %s321 = smul.addr %s320, 4
      %s322 = scalar_lea.vmem %s0, %s321
      %s323 = smul.u32 %s20, 8
      %s324 = ssub.s32 %s323, 1
      %p325 = scmp.gt.s32.totalorder %s324, 0
      %s326 = scalar_select %p325, %s324, 0
      %s327 = smul.u32 8, %s20
      %p328 = scmp.lt.s32.totalorder %s19, 1
      %s329 = scalar_select %p328, %s19, 1
      %p330 = scmp.lt.s32.totalorder %s327, 15
      %s331 = scalar_select %p330, %s327, 15
      %s332 = smul.addr %s331, 2
      %s333 = smul.addr %s329, 32
      %s334 = sadd.s32 %s332, %s333
      %s335 = smul.addr %s334, 4
      %s336 = scalar_lea.vmem %s1, %s335
      %s337 = smul.u32 8, %s20
      %s338 = smul.u32 %s20, 8
      %s339 = sadd.s32 %s338, 8
      %p340 = scmp.lt.s32.totalorder %s339, 15
      %s341 = scalar_select %p340, %s339, 15
      %p342 = scmp.lt.s32.totalorder %s19, 1
      %s343 = scalar_select %p342, %s19, 1
      %p344 = scmp.lt.s32.totalorder %s341, 15
      %s345 = scalar_select %p344, %s341, 15
      %s346 = smul.addr %s345, 2
      %s347 = smul.addr %s343, 32
      %s348 = sadd.s32 %s346, %s347
      %s349 = smul.addr %s348, 4
      %s350 = scalar_lea.vmem %s2, %s349
      %s351 = smul.u32 %s20, 8
      %s352 = sadd.s32 %s351, 8
      %p353 = scmp.lt.s32.totalorder %s352, 15
      %s354 = scalar_select %p353, %s352, 15
      %s355 = smul.u32 8, %s20
      %p356 = scmp.lt.s32.totalorder %s19, 1
      %s357 = scalar_select %p356, %s19, 1
      %p358 = scmp.lt.s32.totalorder %s355, 15
      %s359 = scalar_select %p358, %s355, 15
      %s360 = smul.addr %s359, 2
      %s361 = smul.addr %s357, 32
      %s362 = sadd.s32 %s360, %s361
      %s363 = smul.addr %s362, 4
      %s364 = scalar_lea.vmem %s4, %s363
      %s365 = smul.u32 8, %s20
      %v366 = vld [vmem:[%s322] sm:$0xf]
      %v367 = vld [vmem:[%s322 + $0x4] sm:$0xf]
      %v368 = vunpack.c.l.bf16 %v366
      %v369 = vunpack.c.l.bf16 %v367
      %p370 = scmp.gt.s32.totalorder %s20, 0
      %s371 = scalar_select %p370, 1, 0
      %s372 = scvt.s32.f32 %s371
      %v373 = vstv %s372
      %v374 = vmul.f32 %v368, %v373
      %v375 = vmul.f32 %v369, %v373
      %v376 = vld [vmem:[%s350] sm:$0xf]
      %v377 = vld [vmem:[%s350 + $0x4] sm:$0xf]
      %v378 = vunpack.c.l.bf16 %v376
      %v379 = vunpack.c.l.bf16 %v377
      %p380 = scmp.lt.s32.totalorder %s20, 1
      %s381 = scalar_select %p380, 1, 0
      %s382 = scvt.s32.f32 %s381
      %v383 = vstv %s382
      %v384 = vmul.f32 %v378, %v383
      %v385 = vmul.f32 %v379, %v383
      %v386 = vld [vmem:[%s336] sm:$0xf]
      %v387 = vld [vmem:[%s336 + $0x4] sm:$0xf]
      %v388 = vld [vmem:[%s336 + $0x8] sm:$0xf]
      %v389 = vld [vmem:[%s336 + $0xc] sm:$0xf]
      %v390 = vld [vmem:[%s336 + $0x10] sm:$0xf]
      %v391 = vld [vmem:[%s336 + $0x14] sm:$0xf]
      %v392 = vld [vmem:[%s336 + $0x18] sm:$0xf]
      %v393 = vld [vmem:[%s336 + $0x1c] sm:$0xf]
      %v394 = vld [vmem:[%s336 + $0x20] sm:$0xf]
      %v395 = vld [vmem:[%s336 + $0x24] sm:$0xf]
      %v396 = vld [vmem:[%s336 + $0x28] sm:$0xf]
      %v397 = vld [vmem:[%s336 + $0x2c] sm:$0xf]
      %v398 = vld [vmem:[%s336 + $0x30] sm:$0xf]
      %v399 = vld [vmem:[%s336 + $0x34] sm:$0xf]
      %v400 = vld [vmem:[%s336 + $0x38] sm:$0xf]
      %v401 = vld [vmem:[%s336 + $0x3c] sm:$0xf]
      %v402 = vunpack.c.l.bf16 %v386
      %v403 = vunpack.c.l.bf16 %v387
      %v404 = vunpack.c.l.bf16 %v388
      %v405 = vunpack.c.l.bf16 %v389
      %v406 = vunpack.c.l.bf16 %v390
      %v407 = vunpack.c.l.bf16 %v391
      %v408 = vunpack.c.l.bf16 %v392
      %v409 = vunpack.c.l.bf16 %v393
      %v410 = vunpack.c.l.bf16 %v394
      %v411 = vunpack.c.l.bf16 %v395
      %v412 = vunpack.c.l.bf16 %v396
      %v413 = vunpack.c.l.bf16 %v397
      %v414 = vunpack.c.l.bf16 %v398
      %v415 = vunpack.c.l.bf16 %v399
      %v416 = vunpack.c.l.bf16 %v400
      %v417 = vunpack.c.l.bf16 %v401
      %vm438 = vcmask 1040384
      %v439 = vrot.slane %v374, 7
      %v440 = vrot.slane %v375, 7
      %v441 = vsel %vm438, %v439, %v440
      %v442 = vrot.slane %v402, 7
      %v443 = vrot.slane %v403, 7
      %v444 = vsel %vm438, %v442, %v443
      %v445 = vrot.slane %v404, 7
      %v446 = vrot.slane %v405, 7
      %v447 = vsel %vm438, %v445, %v446
      %v448 = vrot.slane %v406, 7
      %v449 = vrot.slane %v407, 7
      %v450 = vsel %vm438, %v448, %v449
      %v451 = vrot.slane %v408, 7
      %v452 = vrot.slane %v409, 7
      %v453 = vsel %vm438, %v451, %v452
      %v454 = vrot.slane %v410, 7
      %v455 = vrot.slane %v411, 7
      %v456 = vsel %vm438, %v454, %v455
      %v457 = vrot.slane %v412, 7
      %v458 = vrot.slane %v413, 7
      %v459 = vsel %vm438, %v457, %v458
      %v460 = vrot.slane %v414, 7
      %v461 = vrot.slane %v415, 7
      %v462 = vsel %vm438, %v460, %v461
      %v463 = vrot.slane %v416, 7
      %v464 = vrot.slane %v417, 7
      %v465 = vsel %vm438, %v463, %v464
      %v466 = vrot.slane %v384, 7
      %v467 = vrot.slane %v385, 7
      %v468 = vsel %vm438, %v466, %v467
      %v499 = vsel %vm438, 0.0, %v439
      %v500 = vsel %vm438, 0.0, %v442
      %v501 = vsel %vm438, 0.0, %v445
      %v502 = vsel %vm438, 0.0, %v448
      %v503 = vsel %vm438, 0.0, %v451
      %v504 = vsel %vm438, 0.0, %v454
      %v505 = vsel %vm438, 0.0, %v457
      %v506 = vsel %vm438, 0.0, %v460
      %v507 = vsel %vm438, 0.0, %v463
      %v508 = vsel %vm438, 0.0, %v466
      %v509 = vsel %vm438, %v440, 0.0
      %v510 = vsel %vm438, %v443, 0.0
      %v511 = vsel %vm438, %v446, 0.0
      %v512 = vsel %vm438, %v449, 0.0
      %v513 = vsel %vm438, %v452, 0.0
      %v514 = vsel %vm438, %v455, 0.0
      %v515 = vsel %vm438, %v458, 0.0
      %v516 = vsel %vm438, %v461, 0.0
      %v517 = vsel %vm438, %v464, 0.0
      %v518 = vsel %vm438, %v467, 0.0
      %v519 = vld [vmem:[%s3] sm:$0x1]
      %v521 = vlaneseq
      %v522 = vshrl.u32 %v521, 7
      %v523 = vsub.s32 0, %v522
      %v524 = vrot.slane %v519, %v523
      %v526 = vmul.f32 %v499, %v524
      %v527 = vmul.f32 %v441, %v524
      %v528 = vmul.f32 %v500, %v524
      %v529 = vmul.f32 %v444, %v524
      %v530 = vmul.f32 %v501, %v524
      %v531 = vmul.f32 %v447, %v524
      %v532 = vmul.f32 %v502, %v524
      %v533 = vmul.f32 %v450, %v524
      %v534 = vmul.f32 %v503, %v524
      %v535 = vmul.f32 %v453, %v524
      %v536 = vmul.f32 %v504, %v524
      %v537 = vmul.f32 %v456, %v524
      %v538 = vmul.f32 %v505, %v524
      %v539 = vmul.f32 %v459, %v524
      %v540 = vmul.f32 %v506, %v524
      %v541 = vmul.f32 %v462, %v524
      %v542 = vadd.f32 %v526, 0.0
      %v543 = vadd.f32 %v527, 0.0
      %v544 = vadd.f32 %v528, 0.0
      %v545 = vadd.f32 %v529, 0.0
      %v546 = vadd.f32 %v530, 0.0
      %v547 = vadd.f32 %v531, 0.0
      %v548 = vadd.f32 %v532, 0.0
      %v549 = vadd.f32 %v533, 0.0
      %v550 = vadd.f32 %v534, 0.0
      %v551 = vadd.f32 %v535, 0.0
      %v552 = vadd.f32 %v536, 0.0
      %v553 = vadd.f32 %v537, 0.0
      %v554 = vadd.f32 %v538, 0.0
      %v555 = vadd.f32 %v539, 0.0
      %v556 = vadd.f32 %v540, 0.0
      %v557 = vadd.f32 %v541, 0.0
      %s558 = scalar_lea.vmem %s3, 1
      %v559 = vld [vmem:[%s558] sm:$0x1]
      %v561 = vlaneseq
      %v562 = vshrl.u32 %v561, 7
      %v563 = vsub.s32 0, %v562
      %v564 = vrot.slane %v559, %v563
      %v566 = vmul.f32 %v499, %v564
      %v567 = vmul.f32 %v441, %v564
      %v568 = vmul.f32 %v509, %v564
      %v569 = vmul.f32 %v500, %v564
      %v570 = vmul.f32 %v444, %v564
      %v571 = vmul.f32 %v510, %v564
      %v572 = vmul.f32 %v501, %v564
      %v573 = vmul.f32 %v447, %v564
      %v574 = vmul.f32 %v511, %v564
      %v575 = vmul.f32 %v502, %v564
      %v576 = vmul.f32 %v450, %v564
      %v577 = vmul.f32 %v512, %v564
      %v578 = vmul.f32 %v503, %v564
      %v579 = vmul.f32 %v453, %v564
      %v580 = vmul.f32 %v513, %v564
      %v581 = vmul.f32 %v504, %v564
      %v582 = vmul.f32 %v456, %v564
      %v583 = vmul.f32 %v514, %v564
      %v584 = vmul.f32 %v505, %v564
      %v585 = vmul.f32 %v459, %v564
      %v586 = vmul.f32 %v515, %v564
      %v587 = vmul.f32 %v506, %v564
      %v588 = vmul.f32 %v462, %v564
      %v589 = vmul.f32 %v516, %v564
      %vm614 = vcmask 1046528
      %v615 = vrot.slane %v566, 1
      %v616 = vrot.slane %v567, 1
      %v617 = vsel %vm614, %v615, %v616
      %v618 = vrot.slane %v568, 1
      %v619 = vsel %vm614, %v616, %v618
      %v620 = vrot.slane %v569, 1
      %v621 = vrot.slane %v570, 1
      %v622 = vsel %vm614, %v620, %v621
      %v623 = vrot.slane %v571, 1
      %v624 = vsel %vm614, %v621, %v623
      %v625 = vrot.slane %v572, 1
      %v626 = vrot.slane %v573, 1
      %v627 = vsel %vm614, %v625, %v626
      %v628 = vrot.slane %v574, 1
      %v629 = vsel %vm614, %v626, %v628
      %v630 = vrot.slane %v575, 1
      %v631 = vrot.slane %v576, 1
      %v632 = vsel %vm614, %v630, %v631
      %v633 = vrot.slane %v577, 1
      %v634 = vsel %vm614, %v631, %v633
      %v635 = vrot.slane %v578, 1
      %v636 = vrot.slane %v579, 1
      %v637 = vsel %vm614, %v635, %v636
      %v638 = vrot.slane %v580, 1
      %v639 = vsel %vm614, %v636, %v638
      %v640 = vrot.slane %v581, 1
      %v641 = vrot.slane %v582, 1
      %v642 = vsel %vm614, %v640, %v641
      %v643 = vrot.slane %v583, 1
      %v644 = vsel %vm614, %v641, %v643
      %v645 = vrot.slane %v584, 1
      %v646 = vrot.slane %v585, 1
      %v647 = vsel %vm614, %v645, %v646
      %v648 = vrot.slane %v586, 1
      %v649 = vsel %vm614, %v646, %v648
      %v650 = vrot.slane %v587, 1
      %v651 = vrot.slane %v588, 1
      %v652 = vsel %vm614, %v650, %v651
      %v653 = vrot.slane %v589, 1
      %v654 = vsel %vm614, %v651, %v653
      %v671 = vadd.f32 %v542, %v617
      %v672 = vadd.f32 %v543, %v619
      %v673 = vadd.f32 %v544, %v622
      %v674 = vadd.f32 %v545, %v624
      %v675 = vadd.f32 %v546, %v627
      %v676 = vadd.f32 %v547, %v629
      %v677 = vadd.f32 %v548, %v632
      %v678 = vadd.f32 %v549, %v634
      %v679 = vadd.f32 %v550, %v637
      %v680 = vadd.f32 %v551, %v639
      %v681 = vadd.f32 %v552, %v642
      %v682 = vadd.f32 %v553, %v644
      %v683 = vadd.f32 %v554, %v647
      %v684 = vadd.f32 %v555, %v649
      %v685 = vadd.f32 %v556, %v652
      %v686 = vadd.f32 %v557, %v654
      %s687 = scalar_lea.vmem %s3, 2
      %v688 = vld [vmem:[%s687] sm:$0x1]
      %v690 = vlaneseq
      %v691 = vshrl.u32 %v690, 7
      %v692 = vsub.s32 0, %v691
      %v693 = vrot.slane %v688, %v692
      %v695 = vmul.f32 %v499, %v693
      %v696 = vmul.f32 %v441, %v693
      %v697 = vmul.f32 %v509, %v693
      %v698 = vmul.f32 %v500, %v693
      %v699 = vmul.f32 %v444, %v693
      %v700 = vmul.f32 %v510, %v693
      %v701 = vmul.f32 %v501, %v693
      %v702 = vmul.f32 %v447, %v693
      %v703 = vmul.f32 %v511, %v693
      %v704 = vmul.f32 %v502, %v693
      %v705 = vmul.f32 %v450, %v693
      %v706 = vmul.f32 %v512, %v693
      %v707 = vmul.f32 %v503, %v693
      %v708 = vmul.f32 %v453, %v693
      %v709 = vmul.f32 %v513, %v693
      %v710 = vmul.f32 %v504, %v693
      %v711 = vmul.f32 %v456, %v693
      %v712 = vmul.f32 %v514, %v693
      %v713 = vmul.f32 %v505, %v693
      %v714 = vmul.f32 %v459, %v693
      %v715 = vmul.f32 %v515, %v693
      %v716 = vmul.f32 %v506, %v693
      %v717 = vmul.f32 %v462, %v693
      %v718 = vmul.f32 %v516, %v693
      %vm743 = vcmask 1045504
      %v744 = vrot.slane %v695, 2
      %v745 = vrot.slane %v696, 2
      %v746 = vsel %vm743, %v744, %v745
      %v747 = vrot.slane %v697, 2
      %v748 = vsel %vm743, %v745, %v747
      %v749 = vrot.slane %v698, 2
      %v750 = vrot.slane %v699, 2
      %v751 = vsel %vm743, %v749, %v750
      %v752 = vrot.slane %v700, 2
      %v753 = vsel %vm743, %v750, %v752
      %v754 = vrot.slane %v701, 2
      %v755 = vrot.slane %v702, 2
      %v756 = vsel %vm743, %v754, %v755
      %v757 = vrot.slane %v703, 2
      %v758 = vsel %vm743, %v755, %v757
      %v759 = vrot.slane %v704, 2
      %v760 = vrot.slane %v705, 2
      %v761 = vsel %vm743, %v759, %v760
      %v762 = vrot.slane %v706, 2
      %v763 = vsel %vm743, %v760, %v762
      %v764 = vrot.slane %v707, 2
      %v765 = vrot.slane %v708, 2
      %v766 = vsel %vm743, %v764, %v765
      %v767 = vrot.slane %v709, 2
      %v768 = vsel %vm743, %v765, %v767
      %v769 = vrot.slane %v710, 2
      %v770 = vrot.slane %v711, 2
      %v771 = vsel %vm743, %v769, %v770
      %v772 = vrot.slane %v712, 2
      %v773 = vsel %vm743, %v770, %v772
      %v774 = vrot.slane %v713, 2
      %v775 = vrot.slane %v714, 2
      %v776 = vsel %vm743, %v774, %v775
      %v777 = vrot.slane %v715, 2
      %v778 = vsel %vm743, %v775, %v777
      %v779 = vrot.slane %v716, 2
      %v780 = vrot.slane %v717, 2
      %v781 = vsel %vm743, %v779, %v780
      %v782 = vrot.slane %v718, 2
      %v783 = vsel %vm743, %v780, %v782
      %v800 = vadd.f32 %v671, %v746
      %v801 = vadd.f32 %v672, %v748
      %v802 = vadd.f32 %v673, %v751
      %v803 = vadd.f32 %v674, %v753
      %v804 = vadd.f32 %v675, %v756
      %v805 = vadd.f32 %v676, %v758
      %v806 = vadd.f32 %v677, %v761
      %v807 = vadd.f32 %v678, %v763
      %v808 = vadd.f32 %v679, %v766
      %v809 = vadd.f32 %v680, %v768
      %v810 = vadd.f32 %v681, %v771
      %v811 = vadd.f32 %v682, %v773
      %v812 = vadd.f32 %v683, %v776
      %v813 = vadd.f32 %v684, %v778
      %v814 = vadd.f32 %v685, %v781
      %v815 = vadd.f32 %v686, %v783
      %s816 = scalar_lea.vmem %s3, 3
      %v817 = vld [vmem:[%s816] sm:$0x1]
      %v819 = vlaneseq
      %v820 = vshrl.u32 %v819, 7
      %v821 = vsub.s32 0, %v820
      %v822 = vrot.slane %v817, %v821
      %v824 = vmul.f32 %v500, %v822
      %v825 = vmul.f32 %v444, %v822
      %v826 = vmul.f32 %v501, %v822
      %v827 = vmul.f32 %v447, %v822
      %v828 = vmul.f32 %v502, %v822
      %v829 = vmul.f32 %v450, %v822
      %v830 = vmul.f32 %v503, %v822
      %v831 = vmul.f32 %v453, %v822
      %v832 = vmul.f32 %v504, %v822
      %v833 = vmul.f32 %v456, %v822
      %v834 = vmul.f32 %v505, %v822
      %v835 = vmul.f32 %v459, %v822
      %v836 = vmul.f32 %v506, %v822
      %v837 = vmul.f32 %v462, %v822
      %v838 = vmul.f32 %v507, %v822
      %v839 = vmul.f32 %v465, %v822
      %v840 = vadd.f32 %v800, %v824
      %v841 = vadd.f32 %v801, %v825
      %v842 = vadd.f32 %v802, %v826
      %v843 = vadd.f32 %v803, %v827
      %v844 = vadd.f32 %v804, %v828
      %v845 = vadd.f32 %v805, %v829
      %v846 = vadd.f32 %v806, %v830
      %v847 = vadd.f32 %v807, %v831
      %v848 = vadd.f32 %v808, %v832
      %v849 = vadd.f32 %v809, %v833
      %v850 = vadd.f32 %v810, %v834
      %v851 = vadd.f32 %v811, %v835
      %v852 = vadd.f32 %v812, %v836
      %v853 = vadd.f32 %v813, %v837
      %v854 = vadd.f32 %v814, %v838
      %v855 = vadd.f32 %v815, %v839
      %s856 = scalar_lea.vmem %s3, 4
      %v857 = vld [vmem:[%s856] sm:$0x1]
      %v859 = vlaneseq
      %v860 = vshrl.u32 %v859, 7
      %v861 = vsub.s32 0, %v860
      %v862 = vrot.slane %v857, %v861
      %v864 = vmul.f32 %v500, %v862
      %v865 = vmul.f32 %v444, %v862
      %v866 = vmul.f32 %v510, %v862
      %v867 = vmul.f32 %v501, %v862
      %v868 = vmul.f32 %v447, %v862
      %v869 = vmul.f32 %v511, %v862
      %v870 = vmul.f32 %v502, %v862
      %v871 = vmul.f32 %v450, %v862
      %v872 = vmul.f32 %v512, %v862
      %v873 = vmul.f32 %v503, %v862
      %v874 = vmul.f32 %v453, %v862
      %v875 = vmul.f32 %v513, %v862
      %v876 = vmul.f32 %v504, %v862
      %v877 = vmul.f32 %v456, %v862
      %v878 = vmul.f32 %v514, %v862
      %v879 = vmul.f32 %v505, %v862
      %v880 = vmul.f32 %v459, %v862
      %v881 = vmul.f32 %v515, %v862
      %v882 = vmul.f32 %v506, %v862
      %v883 = vmul.f32 %v462, %v862
      %v884 = vmul.f32 %v516, %v862
      %v885 = vmul.f32 %v507, %v862
      %v886 = vmul.f32 %v465, %v862
      %v887 = vmul.f32 %v517, %v862
      %v912 = vrot.slane %v864, 1
      %v913 = vrot.slane %v865, 1
      %v914 = vsel %vm614, %v912, %v913
      %v915 = vrot.slane %v866, 1
      %v916 = vsel %vm614, %v913, %v915
      %v917 = vrot.slane %v867, 1
      %v918 = vrot.slane %v868, 1
      %v919 = vsel %vm614, %v917, %v918
      %v920 = vrot.slane %v869, 1
      %v921 = vsel %vm614, %v918, %v920
      %v922 = vrot.slane %v870, 1
      %v923 = vrot.slane %v871, 1
      %v924 = vsel %vm614, %v922, %v923
      %v925 = vrot.slane %v872, 1
      %v926 = vsel %vm614, %v923, %v925
      %v927 = vrot.slane %v873, 1
      %v928 = vrot.slane %v874, 1
      %v929 = vsel %vm614, %v927, %v928
      %v930 = vrot.slane %v875, 1
      %v931 = vsel %vm614, %v928, %v930
      %v932 = vrot.slane %v876, 1
      %v933 = vrot.slane %v877, 1
      %v934 = vsel %vm614, %v932, %v933
      %v935 = vrot.slane %v878, 1
      %v936 = vsel %vm614, %v933, %v935
      %v937 = vrot.slane %v879, 1
      %v938 = vrot.slane %v880, 1
      %v939 = vsel %vm614, %v937, %v938
      %v940 = vrot.slane %v881, 1
      %v941 = vsel %vm614, %v938, %v940
      %v942 = vrot.slane %v882, 1
      %v943 = vrot.slane %v883, 1
      %v944 = vsel %vm614, %v942, %v943
      %v945 = vrot.slane %v884, 1
      %v946 = vsel %vm614, %v943, %v945
      %v947 = vrot.slane %v885, 1
      %v948 = vrot.slane %v886, 1
      %v949 = vsel %vm614, %v947, %v948
      %v950 = vrot.slane %v887, 1
      %v951 = vsel %vm614, %v948, %v950
      %v968 = vadd.f32 %v840, %v914
      %v969 = vadd.f32 %v841, %v916
      %v970 = vadd.f32 %v842, %v919
      %v971 = vadd.f32 %v843, %v921
      %v972 = vadd.f32 %v844, %v924
      %v973 = vadd.f32 %v845, %v926
      %v974 = vadd.f32 %v846, %v929
      %v975 = vadd.f32 %v847, %v931
      %v976 = vadd.f32 %v848, %v934
      %v977 = vadd.f32 %v849, %v936
      %v978 = vadd.f32 %v850, %v939
      %v979 = vadd.f32 %v851, %v941
      %v980 = vadd.f32 %v852, %v944
      %v981 = vadd.f32 %v853, %v946
      %v982 = vadd.f32 %v854, %v949
      %v983 = vadd.f32 %v855, %v951
      %s984 = scalar_lea.vmem %s3, 5
      %v985 = vld [vmem:[%s984] sm:$0x1]
      %v987 = vlaneseq
      %v988 = vshrl.u32 %v987, 7
      %v989 = vsub.s32 0, %v988
      %v990 = vrot.slane %v985, %v989
      %v992 = vmul.f32 %v500, %v990
      %v993 = vmul.f32 %v444, %v990
      %v994 = vmul.f32 %v510, %v990
      %v995 = vmul.f32 %v501, %v990
      %v996 = vmul.f32 %v447, %v990
      %v997 = vmul.f32 %v511, %v990
      %v998 = vmul.f32 %v502, %v990
      %v999 = vmul.f32 %v450, %v990
      %v1000 = vmul.f32 %v512, %v990
      %v1001 = vmul.f32 %v503, %v990
      %v1002 = vmul.f32 %v453, %v990
      %v1003 = vmul.f32 %v513, %v990
      %v1004 = vmul.f32 %v504, %v990
      %v1005 = vmul.f32 %v456, %v990
      %v1006 = vmul.f32 %v514, %v990
      %v1007 = vmul.f32 %v505, %v990
      %v1008 = vmul.f32 %v459, %v990
      %v1009 = vmul.f32 %v515, %v990
      %v1010 = vmul.f32 %v506, %v990
      %v1011 = vmul.f32 %v462, %v990
      %v1012 = vmul.f32 %v516, %v990
      %v1013 = vmul.f32 %v507, %v990
      %v1014 = vmul.f32 %v465, %v990
      %v1015 = vmul.f32 %v517, %v990
      %v1040 = vrot.slane %v992, 2
      %v1041 = vrot.slane %v993, 2
      %v1042 = vsel %vm743, %v1040, %v1041
      %v1043 = vrot.slane %v994, 2
      %v1044 = vsel %vm743, %v1041, %v1043
      %v1045 = vrot.slane %v995, 2
      %v1046 = vrot.slane %v996, 2
      %v1047 = vsel %vm743, %v1045, %v1046
      %v1048 = vrot.slane %v997, 2
      %v1049 = vsel %vm743, %v1046, %v1048
      %v1050 = vrot.slane %v998, 2
      %v1051 = vrot.slane %v999, 2
      %v1052 = vsel %vm743, %v1050, %v1051
      %v1053 = vrot.slane %v1000, 2
      %v1054 = vsel %vm743, %v1051, %v1053
      %v1055 = vrot.slane %v1001, 2
      %v1056 = vrot.slane %v1002, 2
      %v1057 = vsel %vm743, %v1055, %v1056
      %v1058 = vrot.slane %v1003, 2
      %v1059 = vsel %vm743, %v1056, %v1058
      %v1060 = vrot.slane %v1004, 2
      %v1061 = vrot.slane %v1005, 2
      %v1062 = vsel %vm743, %v1060, %v1061
      %v1063 = vrot.slane %v1006, 2
      %v1064 = vsel %vm743, %v1061, %v1063
      %v1065 = vrot.slane %v1007, 2
      %v1066 = vrot.slane %v1008, 2
      %v1067 = vsel %vm743, %v1065, %v1066
      %v1068 = vrot.slane %v1009, 2
      %v1069 = vsel %vm743, %v1066, %v1068
      %v1070 = vrot.slane %v1010, 2
      %v1071 = vrot.slane %v1011, 2
      %v1072 = vsel %vm743, %v1070, %v1071
      %v1073 = vrot.slane %v1012, 2
      %v1074 = vsel %vm743, %v1071, %v1073
      %v1075 = vrot.slane %v1013, 2
      %v1076 = vrot.slane %v1014, 2
      %v1077 = vsel %vm743, %v1075, %v1076
      %v1078 = vrot.slane %v1015, 2
      %v1079 = vsel %vm743, %v1076, %v1078
      %v1096 = vadd.f32 %v968, %v1042
      %v1097 = vadd.f32 %v969, %v1044
      %v1098 = vadd.f32 %v970, %v1047
      %v1099 = vadd.f32 %v971, %v1049
      %v1100 = vadd.f32 %v972, %v1052
      %v1101 = vadd.f32 %v973, %v1054
      %v1102 = vadd.f32 %v974, %v1057
      %v1103 = vadd.f32 %v975, %v1059
      %v1104 = vadd.f32 %v976, %v1062
      %v1105 = vadd.f32 %v977, %v1064
      %v1106 = vadd.f32 %v978, %v1067
      %v1107 = vadd.f32 %v979, %v1069
      %v1108 = vadd.f32 %v980, %v1072
      %v1109 = vadd.f32 %v981, %v1074
      %v1110 = vadd.f32 %v982, %v1077
      %v1111 = vadd.f32 %v983, %v1079
      %s1112 = scalar_lea.vmem %s3, 6
      %v1113 = vld [vmem:[%s1112] sm:$0x1]
      %v1115 = vlaneseq
      %v1116 = vshrl.u32 %v1115, 7
      %v1117 = vsub.s32 0, %v1116
      %v1118 = vrot.slane %v1113, %v1117
      %v1120 = vmul.f32 %v501, %v1118
      %v1121 = vmul.f32 %v447, %v1118
      %v1122 = vmul.f32 %v502, %v1118
      %v1123 = vmul.f32 %v450, %v1118
      %v1124 = vmul.f32 %v503, %v1118
      %v1125 = vmul.f32 %v453, %v1118
      %v1126 = vmul.f32 %v504, %v1118
      %v1127 = vmul.f32 %v456, %v1118
      %v1128 = vmul.f32 %v505, %v1118
      %v1129 = vmul.f32 %v459, %v1118
      %v1130 = vmul.f32 %v506, %v1118
      %v1131 = vmul.f32 %v462, %v1118
      %v1132 = vmul.f32 %v507, %v1118
      %v1133 = vmul.f32 %v465, %v1118
      %v1134 = vmul.f32 %v508, %v1118
      %v1135 = vmul.f32 %v468, %v1118
      %v1136 = vadd.f32 %v1096, %v1120
      %v1137 = vadd.f32 %v1097, %v1121
      %v1138 = vadd.f32 %v1098, %v1122
      %v1139 = vadd.f32 %v1099, %v1123
      %v1140 = vadd.f32 %v1100, %v1124
      %v1141 = vadd.f32 %v1101, %v1125
      %v1142 = vadd.f32 %v1102, %v1126
      %v1143 = vadd.f32 %v1103, %v1127
      %v1144 = vadd.f32 %v1104, %v1128
      %v1145 = vadd.f32 %v1105, %v1129
      %v1146 = vadd.f32 %v1106, %v1130
      %v1147 = vadd.f32 %v1107, %v1131
      %v1148 = vadd.f32 %v1108, %v1132
      %v1149 = vadd.f32 %v1109, %v1133
      %v1150 = vadd.f32 %v1110, %v1134
      %v1151 = vadd.f32 %v1111, %v1135
      %s1152 = scalar_lea.vmem %s3, 7
      %v1153 = vld [vmem:[%s1152] sm:$0x1]
      %v1155 = vlaneseq
      %v1156 = vshrl.u32 %v1155, 7
      %v1157 = vsub.s32 0, %v1156
      %v1158 = vrot.slane %v1153, %v1157
      %v1160 = vmul.f32 %v501, %v1158
      %v1161 = vmul.f32 %v447, %v1158
      %v1162 = vmul.f32 %v511, %v1158
      %v1163 = vmul.f32 %v502, %v1158
      %v1164 = vmul.f32 %v450, %v1158
      %v1165 = vmul.f32 %v512, %v1158
      %v1166 = vmul.f32 %v503, %v1158
      %v1167 = vmul.f32 %v453, %v1158
      %v1168 = vmul.f32 %v513, %v1158
      %v1169 = vmul.f32 %v504, %v1158
      %v1170 = vmul.f32 %v456, %v1158
      %v1171 = vmul.f32 %v514, %v1158
      %v1172 = vmul.f32 %v505, %v1158
      %v1173 = vmul.f32 %v459, %v1158
      %v1174 = vmul.f32 %v515, %v1158
      %v1175 = vmul.f32 %v506, %v1158
      %v1176 = vmul.f32 %v462, %v1158
      %v1177 = vmul.f32 %v516, %v1158
      %v1178 = vmul.f32 %v507, %v1158
      %v1179 = vmul.f32 %v465, %v1158
      %v1180 = vmul.f32 %v517, %v1158
      %v1181 = vmul.f32 %v508, %v1158
      %v1182 = vmul.f32 %v468, %v1158
      %v1183 = vmul.f32 %v518, %v1158
      %v1208 = vrot.slane %v1160, 1
      %v1209 = vrot.slane %v1161, 1
      %v1210 = vsel %vm614, %v1208, %v1209
      %v1211 = vrot.slane %v1162, 1
      %v1212 = vsel %vm614, %v1209, %v1211
      %v1213 = vrot.slane %v1163, 1
      %v1214 = vrot.slane %v1164, 1
      %v1215 = vsel %vm614, %v1213, %v1214
      %v1216 = vrot.slane %v1165, 1
      %v1217 = vsel %vm614, %v1214, %v1216
      %v1218 = vrot.slane %v1166, 1
      %v1219 = vrot.slane %v1167, 1
      %v1220 = vsel %vm614, %v1218, %v1219
      %v1221 = vrot.slane %v1168, 1
      %v1222 = vsel %vm614, %v1219, %v1221
      %v1223 = vrot.slane %v1169, 1
      %v1224 = vrot.slane %v1170, 1
      %v1225 = vsel %vm614, %v1223, %v1224
      %v1226 = vrot.slane %v1171, 1
      %v1227 = vsel %vm614, %v1224, %v1226
      %v1228 = vrot.slane %v1172, 1
      %v1229 = vrot.slane %v1173, 1
      %v1230 = vsel %vm614, %v1228, %v1229
      %v1231 = vrot.slane %v1174, 1
      %v1232 = vsel %vm614, %v1229, %v1231
      %v1233 = vrot.slane %v1175, 1
      %v1234 = vrot.slane %v1176, 1
      %v1235 = vsel %vm614, %v1233, %v1234
      %v1236 = vrot.slane %v1177, 1
      %v1237 = vsel %vm614, %v1234, %v1236
      %v1238 = vrot.slane %v1178, 1
      %v1239 = vrot.slane %v1179, 1
      %v1240 = vsel %vm614, %v1238, %v1239
      %v1241 = vrot.slane %v1180, 1
      %v1242 = vsel %vm614, %v1239, %v1241
      %v1243 = vrot.slane %v1181, 1
      %v1244 = vrot.slane %v1182, 1
      %v1245 = vsel %vm614, %v1243, %v1244
      %v1246 = vrot.slane %v1183, 1
      %v1247 = vsel %vm614, %v1244, %v1246
      %v1264 = vadd.f32 %v1136, %v1210
      %v1265 = vadd.f32 %v1137, %v1212
      %v1266 = vadd.f32 %v1138, %v1215
      %v1267 = vadd.f32 %v1139, %v1217
      %v1268 = vadd.f32 %v1140, %v1220
      %v1269 = vadd.f32 %v1141, %v1222
      %v1270 = vadd.f32 %v1142, %v1225
      %v1271 = vadd.f32 %v1143, %v1227
      %v1272 = vadd.f32 %v1144, %v1230
      %v1273 = vadd.f32 %v1145, %v1232
      %v1274 = vadd.f32 %v1146, %v1235
      %v1275 = vadd.f32 %v1147, %v1237
      %v1276 = vadd.f32 %v1148, %v1240
      %v1277 = vadd.f32 %v1149, %v1242
      %v1278 = vadd.f32 %v1150, %v1245
      %v1279 = vadd.f32 %v1151, %v1247
      %s1280 = scalar_lea.vmem %s3, 8
      %v1281 = vld [vmem:[%s1280] sm:$0x1]
      %v1283 = vlaneseq
      %v1284 = vshrl.u32 %v1283, 7
      %v1285 = vsub.s32 0, %v1284
      %v1286 = vrot.slane %v1281, %v1285
      %v1288 = vmul.f32 %v501, %v1286
      %v1289 = vmul.f32 %v447, %v1286
      %v1290 = vmul.f32 %v511, %v1286
      %v1291 = vmul.f32 %v502, %v1286
      %v1292 = vmul.f32 %v450, %v1286
      %v1293 = vmul.f32 %v512, %v1286
      %v1294 = vmul.f32 %v503, %v1286
      %v1295 = vmul.f32 %v453, %v1286
      %v1296 = vmul.f32 %v513, %v1286
      %v1297 = vmul.f32 %v504, %v1286
      %v1298 = vmul.f32 %v456, %v1286
      %v1299 = vmul.f32 %v514, %v1286
      %v1300 = vmul.f32 %v505, %v1286
      %v1301 = vmul.f32 %v459, %v1286
      %v1302 = vmul.f32 %v515, %v1286
      %v1303 = vmul.f32 %v506, %v1286
      %v1304 = vmul.f32 %v462, %v1286
      %v1305 = vmul.f32 %v516, %v1286
      %v1306 = vmul.f32 %v507, %v1286
      %v1307 = vmul.f32 %v465, %v1286
      %v1308 = vmul.f32 %v517, %v1286
      %v1309 = vmul.f32 %v508, %v1286
      %v1310 = vmul.f32 %v468, %v1286
      %v1311 = vmul.f32 %v518, %v1286
      %v1336 = vrot.slane %v1288, 2
      %v1337 = vrot.slane %v1289, 2
      %v1338 = vsel %vm743, %v1336, %v1337
      %v1339 = vrot.slane %v1290, 2
      %v1340 = vsel %vm743, %v1337, %v1339
      %v1341 = vrot.slane %v1291, 2
      %v1342 = vrot.slane %v1292, 2
      %v1343 = vsel %vm743, %v1341, %v1342
      %v1344 = vrot.slane %v1293, 2
      %v1345 = vsel %vm743, %v1342, %v1344
      %v1346 = vrot.slane %v1294, 2
      %v1347 = vrot.slane %v1295, 2
      %v1348 = vsel %vm743, %v1346, %v1347
      %v1349 = vrot.slane %v1296, 2
      %v1350 = vsel %vm743, %v1347, %v1349
      %v1351 = vrot.slane %v1297, 2
      %v1352 = vrot.slane %v1298, 2
      %v1353 = vsel %vm743, %v1351, %v1352
      %v1354 = vrot.slane %v1299, 2
      %v1355 = vsel %vm743, %v1352, %v1354
      %v1356 = vrot.slane %v1300, 2
      %v1357 = vrot.slane %v1301, 2
      %v1358 = vsel %vm743, %v1356, %v1357
      %v1359 = vrot.slane %v1302, 2
      %v1360 = vsel %vm743, %v1357, %v1359
      %v1361 = vrot.slane %v1303, 2
      %v1362 = vrot.slane %v1304, 2
      %v1363 = vsel %vm743, %v1361, %v1362
      %v1364 = vrot.slane %v1305, 2
      %v1365 = vsel %vm743, %v1362, %v1364
      %v1366 = vrot.slane %v1306, 2
      %v1367 = vrot.slane %v1307, 2
      %v1368 = vsel %vm743, %v1366, %v1367
      %v1369 = vrot.slane %v1308, 2
      %v1370 = vsel %vm743, %v1367, %v1369
      %v1371 = vrot.slane %v1309, 2
      %v1372 = vrot.slane %v1310, 2
      %v1373 = vsel %vm743, %v1371, %v1372
      %v1374 = vrot.slane %v1311, 2
      %v1375 = vsel %vm743, %v1372, %v1374
      %v1392 = vadd.f32 %v1264, %v1338
      %v1393 = vadd.f32 %v1265, %v1340
      %v1394 = vadd.f32 %v1266, %v1343
      %v1395 = vadd.f32 %v1267, %v1345
      %v1396 = vadd.f32 %v1268, %v1348
      %v1397 = vadd.f32 %v1269, %v1350
      %v1398 = vadd.f32 %v1270, %v1353
      %v1399 = vadd.f32 %v1271, %v1355
      %v1400 = vadd.f32 %v1272, %v1358
      %v1401 = vadd.f32 %v1273, %v1360
      %v1402 = vadd.f32 %v1274, %v1363
      %v1403 = vadd.f32 %v1275, %v1365
      %v1404 = vadd.f32 %v1276, %v1368
      %v1405 = vadd.f32 %v1277, %v1370
      %v1406 = vadd.f32 %v1278, %v1373
      %v1407 = vadd.f32 %v1279, %v1375
      %v1408 = vpack.c.bf16 %v1393, %v1392
      %v1409 = vpack.c.bf16 %v1395, %v1394
      %v1410 = vpack.c.bf16 %v1397, %v1396
      %v1411 = vpack.c.bf16 %v1399, %v1398
      %v1412 = vpack.c.bf16 %v1401, %v1400
      %v1413 = vpack.c.bf16 %v1403, %v1402
      %v1414 = vpack.c.bf16 %v1405, %v1404
      %v1415 = vpack.c.bf16 %v1407, %v1406
      %v1424 = vunpack.c.l.b16 %v1408
      %v1425 = vunpack.c.h.b16 %v1408
      %v1426 = vunpack.c.l.b16 %v1409
      %v1427 = vunpack.c.h.b16 %v1409
      %v1428 = vunpack.c.l.b16 %v1410
      %v1429 = vunpack.c.h.b16 %v1410
      %v1430 = vunpack.c.l.b16 %v1411
      %v1431 = vunpack.c.h.b16 %v1411
      %v1432 = vunpack.c.l.b16 %v1412
      %v1433 = vunpack.c.h.b16 %v1412
      %v1434 = vunpack.c.l.b16 %v1413
      %v1435 = vunpack.c.h.b16 %v1413
      %v1436 = vunpack.c.l.b16 %v1414
      %v1437 = vunpack.c.h.b16 %v1414
      %v1438 = vunpack.c.l.b16 %v1415
      %v1439 = vunpack.c.h.b16 %v1415
      %v1440 = vpack.c.b16 %v1424, %v1424
      %v1441 = vpack.c.b16 %v1425, %v1425
      %v1442 = vpack.c.b16 %v1426, %v1426
      %v1443 = vpack.c.b16 %v1427, %v1427
      %v1444 = vpack.c.b16 %v1428, %v1428
      %v1445 = vpack.c.b16 %v1429, %v1429
      %v1446 = vpack.c.b16 %v1430, %v1430
      %v1447 = vpack.c.b16 %v1431, %v1431
      %v1448 = vpack.c.b16 %v1432, %v1432
      %v1449 = vpack.c.b16 %v1433, %v1433
      %v1450 = vpack.c.b16 %v1434, %v1434
      %v1451 = vpack.c.b16 %v1435, %v1435
      %v1452 = vpack.c.b16 %v1436, %v1436
      %v1453 = vpack.c.b16 %v1437, %v1437
      %v1454 = vpack.c.b16 %v1438, %v1438
      %v1455 = vpack.c.b16 %v1439, %v1439
      %1472 = vst [vmem:[%s364] sm:$0xf] %v1440
      %1473 = vst [vmem:[%s364 + $0x4] sm:$0xf] %v1441
      %1474 = vst [vmem:[%s364 + $0x8] sm:$0xf] %v1442
      %1475 = vst [vmem:[%s364 + $0xc] sm:$0xf] %v1443
      %1476 = vst [vmem:[%s364 + $0x10] sm:$0xf] %v1444
      %1477 = vst [vmem:[%s364 + $0x14] sm:$0xf] %v1445
      %1478 = vst [vmem:[%s364 + $0x18] sm:$0xf] %v1446
      %1479 = vst [vmem:[%s364 + $0x1c] sm:$0xf] %v1447
      %1480 = vst [vmem:[%s364 + $0x20] sm:$0xf] %v1448
      %1481 = vst [vmem:[%s364 + $0x24] sm:$0xf] %v1449
      %1482 = vst [vmem:[%s364 + $0x28] sm:$0xf] %v1450
      %1483 = vst [vmem:[%s364 + $0x2c] sm:$0xf] %v1451
      %1484 = vst [vmem:[%s364 + $0x30] sm:$0xf] %v1452
      %1485 = vst [vmem:[%s364 + $0x34] sm:$0xf] %v1453
      %1486 = vst [vmem:[%s364 + $0x38] sm:$0xf] %v1454
      %1487 = vst [vmem:[%s364 + $0x3c] sm:$0xf] %v1455
      %s1488 = smul.u32 8, %s20
      %p1489 = scmp.lt.s32.totalorder %s19, 1
      %s1490 = scalar_select %p1489, %s19, 1
      %p1491 = scmp.lt.s32.totalorder %s1488, 15
      %s1492 = scalar_select %p1491, %s1488, 15
      %s1493 = smul.addr %s1492, 2
      %s1494 = smul.addr %s1490, 32
      %s1495 = sadd.s32 %s1493, %s1494
      %s1496 = smul.addr %s1495, 4
      %s1497 = scalar_lea.vmem %s4, %s1496
      // Predicated region
      $region37: #{basic_stage.8} parent=35 // pred_check
        %p1498 = pneg %p168
      $region38: #{basic_stage.8} parent=35 // pred_check_branch
        %1500 = sbr.rel (%p1498) target = $region40
      $region39: #{basic_stage.8} parent=35 // pred_region
        %s1501 = smul.u32 8, %s20
      $region40: #{basic_stage.8} parent=35 // pred_fallthru
        _
    $region36: #{basic_stage.8} parent=5 // pred_fallthru
      _
    %p1502 = scmp.le.s32.totalorder 2, %s10
    // Predicated region
    $region41: #{basic_stage.8} parent=5 // pred_check
      %p1503 = pneg %p1502
    $region42: #{basic_stage.8} parent=5 // pred_check_branch
      %1505 = sbr.rel (%p1503) target = $region44
    $region43: #{basic_stage.8} parent=5 // pred_region
      %s1506 = ssub.s32 %s10, 2
      // Predicated region
      $region45: #{basic_stage.8} parent=43 // pred_check
        %p1507 = pneg %p174
      $region46: #{basic_stage.8} parent=43 // pred_check_branch
        %1509 = sbr.rel (%p1507) target = $region48
      $region47: #{basic_stage.8} parent=43 // pred_region
        %s1510 = smul.u32 8, %s22
        %p1511 = scmp.lt.s32.totalorder %s21, 1
        %s1512 = scalar_select %p1511, %s21, 1
        %p1513 = scmp.lt.s32.totalorder %s1510, 15
        %s1514 = scalar_select %p1513, %s1510, 15
        %s1515 = smul.addr %s1514, 2
        %s1516 = smul.addr %s1512, 32
        %s1517 = sadd.s32 %s1515, %s1516
        %s1518 = smul.addr %s1517, 4
        %s1519 = scalar_lea.vmem %s4, %s1518
      $region48: #{basic_stage.8} parent=43 // pred_fallthru
        _
    $region44: #{basic_stage.8} parent=5 // pred_fallthru
      _
  $region6: #{basic_stage.8} parent=0 // loop_footer
    %s14 = sadd.s32 1, %s10
  $region7: #{basic_stage.8} parent=0 // loop_footer_branch
    %9 = sbr.rel target = $region3
  $region8: #{basic_stage.8} parent=0 // loop_exit
    _

// kernel: basic_stage.9
$region0: #{basic_stage.9}
  #allocation0 [shape = 'u32[]', space=smem, size = 0x4, offset = 0x4, fixed_abs, tag = 'smem constant byte address 0x4 - core index']
  #allocation1 [shape = 'u32[144,128]{1,0:T(1,128)}', space=vmem, size = 0x12000, scoped, tag = 'internal scratch']
  %s0 = inlined_call_operand.vmem [shape: bf16[512,128], index: 0, kind: input, shape index: {}, may-alias: {0,5}]
  %s1 = inlined_call_operand.vmem [shape: bf16[128,128], index: 1, kind: input, shape index: {}]
  %s2 = inlined_call_operand.vmem [shape: f32[1,128], index: 2, kind: input, shape index: {}]
  %s3 = inlined_call_operand.vmem [shape: bf16[128,128], index: 3, kind: input, shape index: {}]
  %s4 = inlined_call_operand.vmem [shape: f32[1,128], index: 4, kind: input, shape index: {}]
  %s5 = inlined_call_operand.vmem [shape: bf16[512,128], index: 5, kind: output, shape index: {}, may-alias: {0,5}]
  %s6 = sld [smem:[#allocation0]]
  $region30: #{basic_stage.9} parent=0
    _
  %s8 = ssub.s32 1, %s6
  %s9 = scalar_select 0, %s8, %s6
  // Predicated region
  $region2: #{basic_stage.9} parent=0 // pred_check
    _
  $region3: #{basic_stage.9} parent=0 // pred_check_branch
    %11 = sbr.rel (0) target = $region5
  $region4: #{basic_stage.9} parent=0 // pred_region
    _
  $region5: #{basic_stage.9} parent=0 // pred_fallthru
    _
  // Predicated region
  $region6: #{basic_stage.9} parent=0 // pred_check
    _
  $region7: #{basic_stage.9} parent=0 // pred_check_branch
    %13 = sbr.rel (0) target = $region9
  $region8: #{basic_stage.9} parent=0 // pred_region
    _
  $region9: #{basic_stage.9} parent=0 // pred_fallthru
    _
  // Predicated region
  $region10: #{basic_stage.9} parent=0 // pred_check
    _
  $region11: #{basic_stage.9} parent=0 // pred_check_branch
    %15 = sbr.rel (0) target = $region13
  $region12: #{basic_stage.9} parent=0 // pred_region
    _
  $region13: #{basic_stage.9} parent=0 // pred_fallthru
    _
  // Predicated region
  $region14: #{basic_stage.9} parent=0 // pred_check
    _
  $region15: #{basic_stage.9} parent=0 // pred_check_branch
    %17 = sbr.rel (0) target = $region17
  $region16: #{basic_stage.9} parent=0 // pred_region
    _
  $region17: #{basic_stage.9} parent=0 // pred_fallthru
    _
  // Predicated region
  $region18: #{basic_stage.9} parent=0 // pred_check
    _
  $region19: #{basic_stage.9} parent=0 // pred_check_branch
    %19 = sbr.rel (0) target = $region21
  $region20: #{basic_stage.9} parent=0 // pred_region
    _
  $region21: #{basic_stage.9} parent=0 // pred_fallthru
    _
  %v21 = vld [vmem:[%s0] sm:$0xf]
  %v22 = vld [vmem:[%s0 + $0x4] sm:$0xf]
  %v23 = vld [vmem:[%s0 + $0x8] sm:$0xf]
  %v24 = vld [vmem:[%s0 + $0xc] sm:$0xf]
  %v25 = vld [vmem:[%s0 + $0x10] sm:$0xf]
  %v26 = vld [vmem:[%s0 + $0x14] sm:$0xf]
  %v27 = vld [vmem:[%s0 + $0x18] sm:$0xf]
  %v28 = vld [vmem:[%s0 + $0x1c] sm:$0xf]
  %v29 = vld [vmem:[%s0 + $0x20] sm:$0xf]
  %v30 = vld [vmem:[%s0 + $0x24] sm:$0xf]
  %v31 = vld [vmem:[%s0 + $0x28] sm:$0xf]
  %v32 = vld [vmem:[%s0 + $0x2c] sm:$0xf]
  %v33 = vld [vmem:[%s0 + $0x30] sm:$0xf]
  %v34 = vld [vmem:[%s0 + $0x34] sm:$0xf]
  %v35 = vld [vmem:[%s0 + $0x38] sm:$0xf]
  %v36 = vld [vmem:[%s0 + $0x3c] sm:$0xf]
  %v37 = vld [vmem:[%s0 + $0x40] sm:$0xf]
  %v38 = vld [vmem:[%s0 + $0x44] sm:$0xf]
  %v39 = vld [vmem:[%s0 + $0x48] sm:$0xf]
  %v40 = vld [vmem:[%s0 + $0x4c] sm:$0xf]
  %v41 = vld [vmem:[%s0 + $0x50] sm:$0xf]
  %v42 = vld [vmem:[%s0 + $0x54] sm:$0xf]
  %v43 = vld [vmem:[%s0 + $0x58] sm:$0xf]
  %v44 = vld [vmem:[%s0 + $0x5c] sm:$0xf]
  %v45 = vld [vmem:[%s0 + $0x60] sm:$0xf]
  %v46 = vld [vmem:[%s0 + $0x64] sm:$0xf]
  %v47 = vld [vmem:[%s0 + $0x68] sm:$0xf]
  %v48 = vld [vmem:[%s0 + $0x6c] sm:$0xf]
  %v49 = vld [vmem:[%s0 + $0x70] sm:$0xf]
  %v50 = vld [vmem:[%s0 + $0x74] sm:$0xf]
  %v51 = vld [vmem:[%s0 + $0x78] sm:$0xf]
  %v52 = vld [vmem:[%s0 + $0x7c] sm:$0xf]
  %v53 = vld [vmem:[%s0 + $0x80] sm:$0xf]
  %v54 = vld [vmem:[%s0 + $0x84] sm:$0xf]
  %v55 = vld [vmem:[%s0 + $0x88] sm:$0xf]
  %v56 = vld [vmem:[%s0 + $0x8c] sm:$0xf]
  %v57 = vld [vmem:[%s0 + $0x90] sm:$0xf]
  %v58 = vld [vmem:[%s0 + $0x94] sm:$0xf]
  %v59 = vld [vmem:[%s0 + $0x98] sm:$0xf]
  %v60 = vld [vmem:[%s0 + $0x9c] sm:$0xf]
  %v61 = vld [vmem:[%s0 + $0xa0] sm:$0xf]
  %v62 = vld [vmem:[%s0 + $0xa4] sm:$0xf]
  %v63 = vld [vmem:[%s0 + $0xa8] sm:$0xf]
  %v64 = vld [vmem:[%s0 + $0xac] sm:$0xf]
  %v65 = vld [vmem:[%s0 + $0xb0] sm:$0xf]
  %v66 = vld [vmem:[%s0 + $0xb4] sm:$0xf]
  %v67 = vld [vmem:[%s0 + $0xb8] sm:$0xf]
  %v68 = vld [vmem:[%s0 + $0xbc] sm:$0xf]
  %v69 = vld [vmem:[%s0 + $0xc0] sm:$0xf]
  %v70 = vld [vmem:[%s0 + $0xc4] sm:$0xf]
  %v71 = vld [vmem:[%s0 + $0xc8] sm:$0xf]
  %v72 = vld [vmem:[%s0 + $0xcc] sm:$0xf]
  %v73 = vld [vmem:[%s0 + $0xd0] sm:$0xf]
  %v74 = vld [vmem:[%s0 + $0xd4] sm:$0xf]
  %v75 = vld [vmem:[%s0 + $0xd8] sm:$0xf]
  %v76 = vld [vmem:[%s0 + $0xdc] sm:$0xf]
  %v77 = vld [vmem:[%s0 + $0xe0] sm:$0xf]
  %v78 = vld [vmem:[%s0 + $0xe4] sm:$0xf]
  %v79 = vld [vmem:[%s0 + $0xe8] sm:$0xf]
  %v80 = vld [vmem:[%s0 + $0xec] sm:$0xf]
  %v81 = vld [vmem:[%s0 + $0xf0] sm:$0xf]
  %v82 = vld [vmem:[%s0 + $0xf4] sm:$0xf]
  %v83 = vld [vmem:[%s0 + $0xf8] sm:$0xf]
  %v84 = vld [vmem:[%s0 + $0xfc] sm:$0xf]
  %v85 = vunpack.c.l.bf16 %v21
  %v86 = vunpack.c.l.bf16 %v22
  %v87 = vunpack.c.l.bf16 %v23
  %v88 = vunpack.c.l.bf16 %v24
  %v89 = vunpack.c.l.bf16 %v25
  %v90 = vunpack.c.l.bf16 %v26
  %v91 = vunpack.c.l.bf16 %v27
  %v92 = vunpack.c.l.bf16 %v28
  %v93 = vunpack.c.l.bf16 %v29
  %v94 = vunpack.c.l.bf16 %v30
  %v95 = vunpack.c.l.bf16 %v31
  %v96 = vunpack.c.l.bf16 %v32
  %v97 = vunpack.c.l.bf16 %v33
  %v98 = vunpack.c.l.bf16 %v34
  %v99 = vunpack.c.l.bf16 %v35
  %v100 = vunpack.c.l.bf16 %v36
  %v101 = vunpack.c.l.bf16 %v37
  %v102 = vunpack.c.l.bf16 %v38
  %v103 = vunpack.c.l.bf16 %v39
  %v104 = vunpack.c.l.bf16 %v40
  %v105 = vunpack.c.l.bf16 %v41
  %v106 = vunpack.c.l.bf16 %v42
  %v107 = vunpack.c.l.bf16 %v43
  %v108 = vunpack.c.l.bf16 %v44
  %v109 = vunpack.c.l.bf16 %v45
  %v110 = vunpack.c.l.bf16 %v46
  %v111 = vunpack.c.l.bf16 %v47
  %v112 = vunpack.c.l.bf16 %v48
  %v113 = vunpack.c.l.bf16 %v49
  %v114 = vunpack.c.l.bf16 %v50
  %v115 = vunpack.c.l.bf16 %v51
  %v116 = vunpack.c.l.bf16 %v52
  %v117 = vunpack.c.l.bf16 %v53
  %v118 = vunpack.c.l.bf16 %v54
  %v119 = vunpack.c.l.bf16 %v55
  %v120 = vunpack.c.l.bf16 %v56
  %v121 = vunpack.c.l.bf16 %v57
  %v122 = vunpack.c.l.bf16 %v58
  %v123 = vunpack.c.l.bf16 %v59
  %v124 = vunpack.c.l.bf16 %v60
  %v125 = vunpack.c.l.bf16 %v61
  %v126 = vunpack.c.l.bf16 %v62
  %v127 = vunpack.c.l.bf16 %v63
  %v128 = vunpack.c.l.bf16 %v64
  %v129 = vunpack.c.l.bf16 %v65
  %v130 = vunpack.c.l.bf16 %v66
  %v131 = vunpack.c.l.bf16 %v67
  %v132 = vunpack.c.l.bf16 %v68
  %v133 = vunpack.c.l.bf16 %v69
  %v134 = vunpack.c.l.bf16 %v70
  %v135 = vunpack.c.l.bf16 %v71
  %v136 = vunpack.c.l.bf16 %v72
  %v137 = vunpack.c.l.bf16 %v73
  %v138 = vunpack.c.l.bf16 %v74
  %v139 = vunpack.c.l.bf16 %v75
  %v140 = vunpack.c.l.bf16 %v76
  %v141 = vunpack.c.l.bf16 %v77
  %v142 = vunpack.c.l.bf16 %v78
  %v143 = vunpack.c.l.bf16 %v79
  %v144 = vunpack.c.l.bf16 %v80
  %v145 = vunpack.c.l.bf16 %v81
  %v146 = vunpack.c.l.bf16 %v82
  %v147 = vunpack.c.l.bf16 %v83
  %v148 = vunpack.c.l.bf16 %v84
  %149 = vadd.xlane.f32.xlu0 %v85
  %v150 = vpop.xlane.xlu0 %149
  %151 = vadd.xlane.f32.xlu0 %v86
  %v152 = vpop.xlane.xlu0 %151
  %153 = vadd.xlane.f32.xlu0 %v87
  %v154 = vpop.xlane.xlu0 %153
  %155 = vadd.xlane.f32.xlu0 %v88
  %v156 = vpop.xlane.xlu0 %155
  %157 = vadd.xlane.f32.xlu0 %v89
  %v158 = vpop.xlane.xlu0 %157
  %159 = vadd.xlane.f32.xlu0 %v90
  %v160 = vpop.xlane.xlu0 %159
  %161 = vadd.xlane.f32.xlu0 %v91
  %v162 = vpop.xlane.xlu0 %161
  %163 = vadd.xlane.f32.xlu0 %v92
  %v164 = vpop.xlane.xlu0 %163
  %165 = vadd.xlane.f32.xlu0 %v93
  %v166 = vpop.xlane.xlu0 %165
  %167 = vadd.xlane.f32.xlu0 %v94
  %v168 = vpop.xlane.xlu0 %167
  %169 = vadd.xlane.f32.xlu0 %v95
  %v170 = vpop.xlane.xlu0 %169
  %171 = vadd.xlane.f32.xlu0 %v96
  %v172 = vpop.xlane.xlu0 %171
  %173 = vadd.xlane.f32.xlu0 %v97
  %v174 = vpop.xlane.xlu0 %173
  %175 = vadd.xlane.f32.xlu0 %v98
  %v176 = vpop.xlane.xlu0 %175
  %177 = vadd.xlane.f32.xlu0 %v99
  %v178 = vpop.xlane.xlu0 %177
  %179 = vadd.xlane.f32.xlu0 %v100
  %v180 = vpop.xlane.xlu0 %179
  %181 = vadd.xlane.f32.xlu0 %v101
  %v182 = vpop.xlane.xlu0 %181
  %183 = vadd.xlane.f32.xlu0 %v102
  %v184 = vpop.xlane.xlu0 %183
  %185 = vadd.xlane.f32.xlu0 %v103
  %v186 = vpop.xlane.xlu0 %185
  %187 = vadd.xlane.f32.xlu0 %v104
  %v188 = vpop.xlane.xlu0 %187
  %189 = vadd.xlane.f32.xlu0 %v105
  %v190 = vpop.xlane.xlu0 %189
  %191 = vadd.xlane.f32.xlu0 %v106
  %v192 = vpop.xlane.xlu0 %191
  %193 = vadd.xlane.f32.xlu0 %v107
  %v194 = vpop.xlane.xlu0 %193
  %195 = vadd.xlane.f32.xlu0 %v108
  %v196 = vpop.xlane.xlu0 %195
  %197 = vadd.xlane.f32.xlu0 %v109
  %v198 = vpop.xlane.xlu0 %197
  %199 = vadd.xlane.f32.xlu0 %v110
  %v200 = vpop.xlane.xlu0 %199
  %201 = vadd.xlane.f32.xlu0 %v111
  %v202 = vpop.xlane.xlu0 %201
  %203 = vadd.xlane.f32.xlu0 %v112
  %v204 = vpop.xlane.xlu0 %203
  %205 = vadd.xlane.f32.xlu0 %v113
  %v206 = vpop.xlane.xlu0 %205
  %207 = vadd.xlane.f32.xlu0 %v114
  %v208 = vpop.xlane.xlu0 %207
  %209 = vadd.xlane.f32.xlu0 %v115
  %v210 = vpop.xlane.xlu0 %209
  %211 = vadd.xlane.f32.xlu0 %v116
  %v212 = vpop.xlane.xlu0 %211
  %213 = vadd.xlane.f32.xlu0 %v117
  %v214 = vpop.xlane.xlu0 %213
  %215 = vadd.xlane.f32.xlu0 %v118
  %v216 = vpop.xlane.xlu0 %215
  %217 = vadd.xlane.f32.xlu0 %v119
  %v218 = vpop.xlane.xlu0 %217
  %219 = vadd.xlane.f32.xlu0 %v120
  %v220 = vpop.xlane.xlu0 %219
  %221 = vadd.xlane.f32.xlu0 %v121
  %v222 = vpop.xlane.xlu0 %221
  %223 = vadd.xlane.f32.xlu0 %v122
  %v224 = vpop.xlane.xlu0 %223
  %225 = vadd.xlane.f32.xlu0 %v123
  %v226 = vpop.xlane.xlu0 %225
  %227 = vadd.xlane.f32.xlu0 %v124
  %v228 = vpop.xlane.xlu0 %227
  %229 = vadd.xlane.f32.xlu0 %v125
  %v230 = vpop.xlane.xlu0 %229
  %231 = vadd.xlane.f32.xlu0 %v126
  %v232 = vpop.xlane.xlu0 %231
  %233 = vadd.xlane.f32.xlu0 %v127
  %v234 = vpop.xlane.xlu0 %233
  %235 = vadd.xlane.f32.xlu0 %v128
  %v236 = vpop.xlane.xlu0 %235
  %237 = vadd.xlane.f32.xlu0 %v129
  %v238 = vpop.xlane.xlu0 %237
  %239 = vadd.xlane.f32.xlu0 %v130
  %v240 = vpop.xlane.xlu0 %239
  %241 = vadd.xlane.f32.xlu0 %v131
  %v242 = vpop.xlane.xlu0 %241
  %243 = vadd.xlane.f32.xlu0 %v132
  %v244 = vpop.xlane.xlu0 %243
  %245 = vadd.xlane.f32.xlu0 %v133
  %v246 = vpop.xlane.xlu0 %245
  %247 = vadd.xlane.f32.xlu0 %v134
  %v248 = vpop.xlane.xlu0 %247
  %249 = vadd.xlane.f32.xlu0 %v135
  %v250 = vpop.xlane.xlu0 %249
  %251 = vadd.xlane.f32.xlu0 %v136
  %v252 = vpop.xlane.xlu0 %251
  %253 = vadd.xlane.f32.xlu0 %v137
  %v254 = vpop.xlane.xlu0 %253
  %255 = vadd.xlane.f32.xlu0 %v138
  %v256 = vpop.xlane.xlu0 %255
  %257 = vadd.xlane.f32.xlu0 %v139
  %v258 = vpop.xlane.xlu0 %257
  %259 = vadd.xlane.f32.xlu0 %v140
  %v260 = vpop.xlane.xlu0 %259
  %261 = vadd.xlane.f32.xlu0 %v141
  %v262 = vpop.xlane.xlu0 %261
  %263 = vadd.xlane.f32.xlu0 %v142
  %v264 = vpop.xlane.xlu0 %263
  %265 = vadd.xlane.f32.xlu0 %v143
  %v266 = vpop.xlane.xlu0 %265
  %267 = vadd.xlane.f32.xlu0 %v144
  %v268 = vpop.xlane.xlu0 %267
  %269 = vadd.xlane.f32.xlu0 %v145
  %v270 = vpop.xlane.xlu0 %269
  %271 = vadd.xlane.f32.xlu0 %v146
  %v272 = vpop.xlane.xlu0 %271
  %273 = vadd.xlane.f32.xlu0 %v147
  %v274 = vpop.xlane.xlu0 %273
  %275 = vadd.xlane.f32.xlu0 %v148
  %v276 = vpop.xlane.xlu0 %275
  %v277 = vrcp.pop 128.0
  %v278 = vmul.f32 %v150, %v277
  %v279 = vmul.f32 %v152, %v277
  %v280 = vmul.f32 %v154, %v277
  %v281 = vmul.f32 %v156, %v277
  %v282 = vmul.f32 %v158, %v277
  %v283 = vmul.f32 %v160, %v277
  %v284 = vmul.f32 %v162, %v277
  %v285 = vmul.f32 %v164, %v277
  %v286 = vmul.f32 %v166, %v277
  %v287 = vmul.f32 %v168, %v277
  %v288 = vmul.f32 %v170, %v277
  %v289 = vmul.f32 %v172, %v277
  %v290 = vmul.f32 %v174, %v277
  %v291 = vmul.f32 %v176, %v277
  %v292 = vmul.f32 %v178, %v277
  %v293 = vmul.f32 %v180, %v277
  %v294 = vmul.f32 %v182, %v277
  %v295 = vmul.f32 %v184, %v277
  %v296 = vmul.f32 %v186, %v277
  %v297 = vmul.f32 %v188, %v277
  %v298 = vmul.f32 %v190, %v277
  %v299 = vmul.f32 %v192, %v277
  %v300 = vmul.f32 %v194, %v277
  %v301 = vmul.f32 %v196, %v277
  %v302 = vmul.f32 %v198, %v277
  %v303 = vmul.f32 %v200, %v277
  %v304 = vmul.f32 %v202, %v277
  %v305 = vmul.f32 %v204, %v277
  %v306 = vmul.f32 %v206, %v277
  %v307 = vmul.f32 %v208, %v277
  %v308 = vmul.f32 %v210, %v277
  %v309 = vmul.f32 %v212, %v277
  %v310 = vmul.f32 %v214, %v277
  %v311 = vmul.f32 %v216, %v277
  %v312 = vmul.f32 %v218, %v277
  %v313 = vmul.f32 %v220, %v277
  %v314 = vmul.f32 %v222, %v277
  %v315 = vmul.f32 %v224, %v277
  %v316 = vmul.f32 %v226, %v277
  %v317 = vmul.f32 %v228, %v277
  %v318 = vmul.f32 %v230, %v277
  %v319 = vmul.f32 %v232, %v277
  %v320 = vmul.f32 %v234, %v277
  %v321 = vmul.f32 %v236, %v277
  %v322 = vmul.f32 %v238, %v277
  %v323 = vmul.f32 %v240, %v277
  %v324 = vmul.f32 %v242, %v277
  %v325 = vmul.f32 %v244, %v277
  %v326 = vmul.f32 %v246, %v277
  %v327 = vmul.f32 %v248, %v277
  %v328 = vmul.f32 %v250, %v277
  %v329 = vmul.f32 %v252, %v277
  %v330 = vmul.f32 %v254, %v277
  %v331 = vmul.f32 %v256, %v277
  %v332 = vmul.f32 %v258, %v277
  %v333 = vmul.f32 %v260, %v277
  %v334 = vmul.f32 %v262, %v277
  %v335 = vmul.f32 %v264, %v277
  %v336 = vmul.f32 %v266, %v277
  %v337 = vmul.f32 %v268, %v277
  %v338 = vmul.f32 %v270, %v277
  %v339 = vmul.f32 %v272, %v277
  %v340 = vmul.f32 %v274, %v277
  %v341 = vmul.f32 %v276, %v277
  %v342 = vsub.f32 %v85, %v278
  %v343 = vsub.f32 %v86, %v279
  %v344 = vsub.f32 %v87, %v280
  %v345 = vsub.f32 %v88, %v281
  %v346 = vsub.f32 %v89, %v282
  %v347 = vsub.f32 %v90, %v283
  %v348 = vsub.f32 %v91, %v284
  %v349 = vsub.f32 %v92, %v285
  %v350 = vsub.f32 %v93, %v286
  %v351 = vsub.f32 %v94, %v287
  %v352 = vsub.f32 %v95, %v288
  %v353 = vsub.f32 %v96, %v289
  %v354 = vsub.f32 %v97, %v290
  %v355 = vsub.f32 %v98, %v291
  %v356 = vsub.f32 %v99, %v292
  %v357 = vsub.f32 %v100, %v293
  %v358 = vsub.f32 %v101, %v294
  %v359 = vsub.f32 %v102, %v295
  %v360 = vsub.f32 %v103, %v296
  %v361 = vsub.f32 %v104, %v297
  %v362 = vsub.f32 %v105, %v298
  %v363 = vsub.f32 %v106, %v299
  %v364 = vsub.f32 %v107, %v300
  %v365 = vsub.f32 %v108, %v301
  %v366 = vsub.f32 %v109, %v302
  %v367 = vsub.f32 %v110, %v303
  %v368 = vsub.f32 %v111, %v304
  %v369 = vsub.f32 %v112, %v305
  %v370 = vsub.f32 %v113, %v306
  %v371 = vsub.f32 %v114, %v307
  %v372 = vsub.f32 %v115, %v308
  %v373 = vsub.f32 %v116, %v309
  %v374 = vsub.f32 %v117, %v310
  %v375 = vsub.f32 %v118, %v311
  %v376 = vsub.f32 %v119, %v312
  %v377 = vsub.f32 %v120, %v313
  %v378 = vsub.f32 %v121, %v314
  %v379 = vsub.f32 %v122, %v315
  %v380 = vsub.f32 %v123, %v316
  %v381 = vsub.f32 %v124, %v317
  %v382 = vsub.f32 %v125, %v318
  %v383 = vsub.f32 %v126, %v319
  %v384 = vsub.f32 %v127, %v320
  %v385 = vsub.f32 %v128, %v321
  %v386 = vsub.f32 %v129, %v322
  %v387 = vsub.f32 %v130, %v323
  %v388 = vsub.f32 %v131, %v324
  %v389 = vsub.f32 %v132, %v325
  %v390 = vsub.f32 %v133, %v326
  %v391 = vsub.f32 %v134, %v327
  %v392 = vsub.f32 %v135, %v328
  %v393 = vsub.f32 %v136, %v329
  %v394 = vsub.f32 %v137, %v330
  %v395 = vsub.f32 %v138, %v331
  %v396 = vsub.f32 %v139, %v332
  %v397 = vsub.f32 %v140, %v333
  %v398 = vsub.f32 %v141, %v334
  %v399 = vsub.f32 %v142, %v335
  %v400 = vsub.f32 %v143, %v336
  %v401 = vsub.f32 %v144, %v337
  %v402 = vsub.f32 %v145, %v338
  %v403 = vsub.f32 %v146, %v339
  %v404 = vsub.f32 %v147, %v340
  %v405 = vsub.f32 %v148, %v341
  %v406 = vmul.f32 %v342, %v342
  %v407 = vmul.f32 %v343, %v343
  %v408 = vmul.f32 %v344, %v344
  %v409 = vmul.f32 %v345, %v345
  %v410 = vmul.f32 %v346, %v346
  %v411 = vmul.f32 %v347, %v347
  %v412 = vmul.f32 %v348, %v348
  %v413 = vmul.f32 %v349, %v349
  %v414 = vmul.f32 %v350, %v350
  %v415 = vmul.f32 %v351, %v351
  %v416 = vmul.f32 %v352, %v352
  %v417 = vmul.f32 %v353, %v353
  %v418 = vmul.f32 %v354, %v354
  %v419 = vmul.f32 %v355, %v355
  %v420 = vmul.f32 %v356, %v356
  %v421 = vmul.f32 %v357, %v357
  %v422 = vmul.f32 %v358, %v358
  %v423 = vmul.f32 %v359, %v359
  %v424 = vmul.f32 %v360, %v360
  %v425 = vmul.f32 %v361, %v361
  %v426 = vmul.f32 %v362, %v362
  %v427 = vmul.f32 %v363, %v363
  %v428 = vmul.f32 %v364, %v364
  %v429 = vmul.f32 %v365, %v365
  %v430 = vmul.f32 %v366, %v366
  %v431 = vmul.f32 %v367, %v367
  %v432 = vmul.f32 %v368, %v368
  %v433 = vmul.f32 %v369, %v369
  %v434 = vmul.f32 %v370, %v370
  %v435 = vmul.f32 %v371, %v371
  %v436 = vmul.f32 %v372, %v372
  %v437 = vmul.f32 %v373, %v373
  %v438 = vmul.f32 %v374, %v374
  %v439 = vmul.f32 %v375, %v375
  %v440 = vmul.f32 %v376, %v376
  %v441 = vmul.f32 %v377, %v377
  %v442 = vmul.f32 %v378, %v378
  %v443 = vmul.f32 %v379, %v379
  %v444 = vmul.f32 %v380, %v380
  %v445 = vmul.f32 %v381, %v381
  %v446 = vmul.f32 %v382, %v382
  %v447 = vmul.f32 %v383, %v383
  %v448 = vmul.f32 %v384, %v384
  %v449 = vmul.f32 %v385, %v385
  %v450 = vmul.f32 %v386, %v386
  %v451 = vmul.f32 %v387, %v387
  %v452 = vmul.f32 %v388, %v388
  %v453 = vmul.f32 %v389, %v389
  %v454 = vmul.f32 %v390, %v390
  %v455 = vmul.f32 %v391, %v391
  %v456 = vmul.f32 %v392, %v392
  %v457 = vmul.f32 %v393, %v393
  %v458 = vmul.f32 %v394, %v394
  %v459 = vmul.f32 %v395, %v395
  %v460 = vmul.f32 %v396, %v396
  %v461 = vmul.f32 %v397, %v397
  %v462 = vmul.f32 %v398, %v398
  %v463 = vmul.f32 %v399, %v399
  %v464 = vmul.f32 %v400, %v400
  %v465 = vmul.f32 %v401, %v401
  %v466 = vmul.f32 %v402, %v402
  %v467 = vmul.f32 %v403, %v403
  %v468 = vmul.f32 %v404, %v404
  %v469 = vmul.f32 %v405, %v405
  %470 = vadd.xlane.f32.xlu0 %v406
  %v471 = vpop.xlane.xlu0 %470
  %472 = vadd.xlane.f32.xlu0 %v407
  %v473 = vpop.xlane.xlu0 %472
  %474 = vadd.xlane.f32.xlu0 %v408
  %v475 = vpop.xlane.xlu0 %474
  %476 = vadd.xlane.f32.xlu0 %v409
  %v477 = vpop.xlane.xlu0 %476
  %478 = vadd.xlane.f32.xlu0 %v410
  %v479 = vpop.xlane.xlu0 %478
  %480 = vadd.xlane.f32.xlu0 %v411
  %v481 = vpop.xlane.xlu0 %480
  %482 = vadd.xlane.f32.xlu0 %v412
  %v483 = vpop.xlane.xlu0 %482
  %484 = vadd.xlane.f32.xlu0 %v413
  %v485 = vpop.xlane.xlu0 %484
  %486 = vadd.xlane.f32.xlu0 %v414
  %v487 = vpop.xlane.xlu0 %486
  %488 = vadd.xlane.f32.xlu0 %v415
  %v489 = vpop.xlane.xlu0 %488
  %490 = vadd.xlane.f32.xlu0 %v416
  %v491 = vpop.xlane.xlu0 %490
  %492 = vadd.xlane.f32.xlu0 %v417
  %v493 = vpop.xlane.xlu0 %492
  %494 = vadd.xlane.f32.xlu0 %v418
  %v495 = vpop.xlane.xlu0 %494
  %496 = vadd.xlane.f32.xlu0 %v419
  %v497 = vpop.xlane.xlu0 %496
  %498 = vadd.xlane.f32.xlu0 %v420
  %v499 = vpop.xlane.xlu0 %498
  %500 = vadd.xlane.f32.xlu0 %v421
  %v501 = vpop.xlane.xlu0 %500
  %502 = vadd.xlane.f32.xlu0 %v422
  %v503 = vpop.xlane.xlu0 %502
  %504 = vadd.xlane.f32.xlu0 %v423
  %v505 = vpop.xlane.xlu0 %504
  %506 = vadd.xlane.f32.xlu0 %v424
  %v507 = vpop.xlane.xlu0 %506
  %508 = vadd.xlane.f32.xlu0 %v425
  %v509 = vpop.xlane.xlu0 %508
  %510 = vadd.xlane.f32.xlu0 %v426
  %v511 = vpop.xlane.xlu0 %510
  %512 = vadd.xlane.f32.xlu0 %v427
  %v513 = vpop.xlane.xlu0 %512
  %514 = vadd.xlane.f32.xlu0 %v428
  %v515 = vpop.xlane.xlu0 %514
  %516 = vadd.xlane.f32.xlu0 %v429
  %v517 = vpop.xlane.xlu0 %516
  %518 = vadd.xlane.f32.xlu0 %v430
  %v519 = vpop.xlane.xlu0 %518
  %520 = vadd.xlane.f32.xlu0 %v431
  %v521 = vpop.xlane.xlu0 %520
  %522 = vadd.xlane.f32.xlu0 %v432
  %v523 = vpop.xlane.xlu0 %522
  %524 = vadd.xlane.f32.xlu0 %v433
  %v525 = vpop.xlane.xlu0 %524
  %526 = vadd.xlane.f32.xlu0 %v434
  %v527 = vpop.xlane.xlu0 %526
  %528 = vadd.xlane.f32.xlu0 %v435
  %v529 = vpop.xlane.xlu0 %528
  %530 = vadd.xlane.f32.xlu0 %v436
  %v531 = vpop.xlane.xlu0 %530
  %532 = vadd.xlane.f32.xlu0 %v437
  %v533 = vpop.xlane.xlu0 %532
  %534 = vadd.xlane.f32.xlu0 %v438
  %v535 = vpop.xlane.xlu0 %534
  %536 = vadd.xlane.f32.xlu0 %v439
  %v537 = vpop.xlane.xlu0 %536
  %538 = vadd.xlane.f32.xlu0 %v440
  %v539 = vpop.xlane.xlu0 %538
  %540 = vadd.xlane.f32.xlu0 %v441
  %v541 = vpop.xlane.xlu0 %540
  %542 = vadd.xlane.f32.xlu0 %v442
  %v543 = vpop.xlane.xlu0 %542
  %544 = vadd.xlane.f32.xlu0 %v443
  %v545 = vpop.xlane.xlu0 %544
  %546 = vadd.xlane.f32.xlu0 %v444
  %v547 = vpop.xlane.xlu0 %546
  %548 = vadd.xlane.f32.xlu0 %v445
  %v549 = vpop.xlane.xlu0 %548
  %550 = vadd.xlane.f32.xlu0 %v446
  %v551 = vpop.xlane.xlu0 %550
  %552 = vadd.xlane.f32.xlu0 %v447
  %v553 = vpop.xlane.xlu0 %552
  %554 = vadd.xlane.f32.xlu0 %v448
  %v555 = vpop.xlane.xlu0 %554
  %556 = vadd.xlane.f32.xlu0 %v449
  %v557 = vpop.xlane.xlu0 %556
  %558 = vadd.xlane.f32.xlu0 %v450
  %v559 = vpop.xlane.xlu0 %558
  %560 = vadd.xlane.f32.xlu0 %v451
  %v561 = vpop.xlane.xlu0 %560
  %562 = vadd.xlane.f32.xlu0 %v452
  %v563 = vpop.xlane.xlu0 %562
  %564 = vadd.xlane.f32.xlu0 %v453
  %v565 = vpop.xlane.xlu0 %564
  %566 = vadd.xlane.f32.xlu0 %v454
  %v567 = vpop.xlane.xlu0 %566
  %568 = vadd.xlane.f32.xlu0 %v455
  %v569 = vpop.xlane.xlu0 %568
  %570 = vadd.xlane.f32.xlu0 %v456
  %v571 = vpop.xlane.xlu0 %570
  %572 = vadd.xlane.f32.xlu0 %v457
  %v573 = vpop.xlane.xlu0 %572
  %574 = vadd.xlane.f32.xlu0 %v458
  %v575 = vpop.xlane.xlu0 %574
  %576 = vadd.xlane.f32.xlu0 %v459
  %v577 = vpop.xlane.xlu0 %576
  %578 = vadd.xlane.f32.xlu0 %v460
  %v579 = vpop.xlane.xlu0 %578
  %580 = vadd.xlane.f32.xlu0 %v461
  %v581 = vpop.xlane.xlu0 %580
  %582 = vadd.xlane.f32.xlu0 %v462
  %v583 = vpop.xlane.xlu0 %582
  %584 = vadd.xlane.f32.xlu0 %v463
  %v585 = vpop.xlane.xlu0 %584
  %586 = vadd.xlane.f32.xlu0 %v464
  %v587 = vpop.xlane.xlu0 %586
  %588 = vadd.xlane.f32.xlu0 %v465
  %v589 = vpop.xlane.xlu0 %588
  %590 = vadd.xlane.f32.xlu0 %v466
  %v591 = vpop.xlane.xlu0 %590
  %592 = vadd.xlane.f32.xlu0 %v467
  %v593 = vpop.xlane.xlu0 %592
  %594 = vadd.xlane.f32.xlu0 %v468
  %v595 = vpop.xlane.xlu0 %594
  %596 = vadd.xlane.f32.xlu0 %v469
  %v597 = vpop.xlane.xlu0 %596
  %v598 = vmul.f32 %v471, %v277
  %v599 = vmul.f32 %v473, %v277
  %v600 = vmul.f32 %v475, %v277
  %v601 = vmul.f32 %v477, %v277
  %v602 = vmul.f32 %v479, %v277
  %v603 = vmul.f32 %v481, %v277
  %v604 = vmul.f32 %v483, %v277
  %v605 = vmul.f32 %v485, %v277
  %v606 = vmul.f32 %v487, %v277
  %v607 = vmul.f32 %v489, %v277
  %v608 = vmul.f32 %v491, %v277
  %v609 = vmul.f32 %v493, %v277
  %v610 = vmul.f32 %v495, %v277
  %v611 = vmul.f32 %v497, %v277
  %v612 = vmul.f32 %v499, %v277
  %v613 = vmul.f32 %v501, %v277
  %v614 = vmul.f32 %v503, %v277
  %v615 = vmul.f32 %v505, %v277
  %v616 = vmul.f32 %v507, %v277
  %v617 = vmul.f32 %v509, %v277
  %v618 = vmul.f32 %v511, %v277
  %v619 = vmul.f32 %v513, %v277
  %v620 = vmul.f32 %v515, %v277
  %v621 = vmul.f32 %v517, %v277
  %v622 = vmul.f32 %v519, %v277
  %v623 = vmul.f32 %v521, %v277
  %v624 = vmul.f32 %v523, %v277
  %v625 = vmul.f32 %v525, %v277
  %v626 = vmul.f32 %v527, %v277
  %v627 = vmul.f32 %v529, %v277
  %v628 = vmul.f32 %v531, %v277
  %v629 = vmul.f32 %v533, %v277
  %v630 = vmul.f32 %v535, %v277
  %v631 = vmul.f32 %v537, %v277
  %v632 = vmul.f32 %v539, %v277
  %v633 = vmul.f32 %v541, %v277
  %v634 = vmul.f32 %v543, %v277
  %v635 = vmul.f32 %v545, %v277
  %v636 = vmul.f32 %v547, %v277
  %v637 = vmul.f32 %v549, %v277
  %v638 = vmul.f32 %v551, %v277
  %v639 = vmul.f32 %v553, %v277
  %v640 = vmul.f32 %v555, %v277
  %v641 = vmul.f32 %v557, %v277
  %v642 = vmul.f32 %v559, %v277
  %v643 = vmul.f32 %v561, %v277
  %v644 = vmul.f32 %v563, %v277
  %v645 = vmul.f32 %v565, %v277
  %v646 = vmul.f32 %v567, %v277
  %v647 = vmul.f32 %v569, %v277
  %v648 = vmul.f32 %v571, %v277
  %v649 = vmul.f32 %v573, %v277
  %v650 = vmul.f32 %v575, %v277
  %v651 = vmul.f32 %v577, %v277
  %v652 = vmul.f32 %v579, %v277
  %v653 = vmul.f32 %v581, %v277
  %v654 = vmul.f32 %v583, %v277
  %v655 = vmul.f32 %v585, %v277
  %v656 = vmul.f32 %v587, %v277
  %v657 = vmul.f32 %v589, %v277
  %v658 = vmul.f32 %v591, %v277
  %v659 = vmul.f32 %v593, %v277
  %v660 = vmul.f32 %v595, %v277
  %v661 = vmul.f32 %v597, %v277
  %v662 = vadd.f32 %v598, 1e-05
  %v663 = vadd.f32 %v599, 1e-05
  %v664 = vadd.f32 %v600, 1e-05
  %v665 = vadd.f32 %v601, 1e-05
  %v666 = vadd.f32 %v602, 1e-05
  %v667 = vadd.f32 %v603, 1e-05
  %v668 = vadd.f32 %v604, 1e-05
  %v669 = vadd.f32 %v605, 1e-05
  %v670 = vadd.f32 %v606, 1e-05
  %v671 = vadd.f32 %v607, 1e-05
  %v672 = vadd.f32 %v608, 1e-05
  %v673 = vadd.f32 %v609, 1e-05
  %v674 = vadd.f32 %v610, 1e-05
  %v675 = vadd.f32 %v611, 1e-05
  %v676 = vadd.f32 %v612, 1e-05
  %v677 = vadd.f32 %v613, 1e-05
  %v678 = vadd.f32 %v614, 1e-05
  %v679 = vadd.f32 %v615, 1e-05
  %v680 = vadd.f32 %v616, 1e-05
  %v681 = vadd.f32 %v617, 1e-05
  %v682 = vadd.f32 %v618, 1e-05
  %v683 = vadd.f32 %v619, 1e-05
  %v684 = vadd.f32 %v620, 1e-05
  %v685 = vadd.f32 %v621, 1e-05
  %v686 = vadd.f32 %v622, 1e-05
  %v687 = vadd.f32 %v623, 1e-05
  %v688 = vadd.f32 %v624, 1e-05
  %v689 = vadd.f32 %v625, 1e-05
  %v690 = vadd.f32 %v626, 1e-05
  %v691 = vadd.f32 %v627, 1e-05
  %v692 = vadd.f32 %v628, 1e-05
  %v693 = vadd.f32 %v629, 1e-05
  %v694 = vadd.f32 %v630, 1e-05
  %v695 = vadd.f32 %v631, 1e-05
  %v696 = vadd.f32 %v632, 1e-05
  %v697 = vadd.f32 %v633, 1e-05
  %v698 = vadd.f32 %v634, 1e-05
  %v699 = vadd.f32 %v635, 1e-05
  %v700 = vadd.f32 %v636, 1e-05
  %v701 = vadd.f32 %v637, 1e-05
  %v702 = vadd.f32 %v638, 1e-05
  %v703 = vadd.f32 %v639, 1e-05
  %v704 = vadd.f32 %v640, 1e-05
  %v705 = vadd.f32 %v641, 1e-05
  %v706 = vadd.f32 %v642, 1e-05
  %v707 = vadd.f32 %v643, 1e-05
  %v708 = vadd.f32 %v644, 1e-05
  %v709 = vadd.f32 %v645, 1e-05
  %v710 = vadd.f32 %v646, 1e-05
  %v711 = vadd.f32 %v647, 1e-05
  %v712 = vadd.f32 %v648, 1e-05
  %v713 = vadd.f32 %v649, 1e-05
  %v714 = vadd.f32 %v650, 1e-05
  %v715 = vadd.f32 %v651, 1e-05
  %v716 = vadd.f32 %v652, 1e-05
  %v717 = vadd.f32 %v653, 1e-05
  %v718 = vadd.f32 %v654, 1e-05
  %v719 = vadd.f32 %v655, 1e-05
  %v720 = vadd.f32 %v656, 1e-05
  %v721 = vadd.f32 %v657, 1e-05
  %v722 = vadd.f32 %v658, 1e-05
  %v723 = vadd.f32 %v659, 1e-05
  %v724 = vadd.f32 %v660, 1e-05
  %v725 = vadd.f32 %v661, 1e-05
  %v726 = vrsqrt.pop %v662
  %v727 = vrsqrt.pop %v663
  %v728 = vrsqrt.pop %v664
  %v729 = vrsqrt.pop %v665
  %v730 = vrsqrt.pop %v666
  %v731 = vrsqrt.pop %v667
  %v732 = vrsqrt.pop %v668
  %v733 = vrsqrt.pop %v669
  %v734 = vrsqrt.pop %v670
  %v735 = vrsqrt.pop %v671
  %v736 = vrsqrt.pop %v672
  %v737 = vrsqrt.pop %v673
  %v738 = vrsqrt.pop %v674
  %v739 = vrsqrt.pop %v675
  %v740 = vrsqrt.pop %v676
  %v741 = vrsqrt.pop %v677
  %v742 = vrsqrt.pop %v678
  %v743 = vrsqrt.pop %v679
  %v744 = vrsqrt.pop %v680
  %v745 = vrsqrt.pop %v681
  %v746 = vrsqrt.pop %v682
  %v747 = vrsqrt.pop %v683
  %v748 = vrsqrt.pop %v684
  %v749 = vrsqrt.pop %v685
  %v750 = vrsqrt.pop %v686
  %v751 = vrsqrt.pop %v687
  %v752 = vrsqrt.pop %v688
  %v753 = vrsqrt.pop %v689
  %v754 = vrsqrt.pop %v690
  %v755 = vrsqrt.pop %v691
  %v756 = vrsqrt.pop %v692
  %v757 = vrsqrt.pop %v693
  %v758 = vrsqrt.pop %v694
  %v759 = vrsqrt.pop %v695
  %v760 = vrsqrt.pop %v696
  %v761 = vrsqrt.pop %v697
  %v762 = vrsqrt.pop %v698
  %v763 = vrsqrt.pop %v699
  %v764 = vrsqrt.pop %v700
  %v765 = vrsqrt.pop %v701
  %v766 = vrsqrt.pop %v702
  %v767 = vrsqrt.pop %v703
  %v768 = vrsqrt.pop %v704
  %v769 = vrsqrt.pop %v705
  %v770 = vrsqrt.pop %v706
  %v771 = vrsqrt.pop %v707
  %v772 = vrsqrt.pop %v708
  %v773 = vrsqrt.pop %v709
  %v774 = vrsqrt.pop %v710
  %v775 = vrsqrt.pop %v711
  %v776 = vrsqrt.pop %v712
  %v777 = vrsqrt.pop %v713
  %v778 = vrsqrt.pop %v714
  %v779 = vrsqrt.pop %v715
  %v780 = vrsqrt.pop %v716
  %v781 = vrsqrt.pop %v717
  %v782 = vrsqrt.pop %v718
  %v783 = vrsqrt.pop %v719
  %v784 = vrsqrt.pop %v720
  %v785 = vrsqrt.pop %v721
  %v786 = vrsqrt.pop %v722
  %v787 = vrsqrt.pop %v723
  %v788 = vrsqrt.pop %v724
  %v789 = vrsqrt.pop %v725
  %v790 = vmul.f32 %v342, %v726
  %v791 = vmul.f32 %v343, %v727
  %v792 = vmul.f32 %v344, %v728
  %v793 = vmul.f32 %v345, %v729
  %v794 = vmul.f32 %v346, %v730
  %v795 = vmul.f32 %v347, %v731
  %v796 = vmul.f32 %v348, %v732
  %v797 = vmul.f32 %v349, %v733
  %v798 = vmul.f32 %v350, %v734
  %v799 = vmul.f32 %v351, %v735
  %v800 = vmul.f32 %v352, %v736
  %v801 = vmul.f32 %v353, %v737
  %v802 = vmul.f32 %v354, %v738
  %v803 = vmul.f32 %v355, %v739
  %v804 = vmul.f32 %v356, %v740
  %v805 = vmul.f32 %v357, %v741
  %v806 = vmul.f32 %v358, %v742
  %v807 = vmul.f32 %v359, %v743
  %v808 = vmul.f32 %v360, %v744
  %v809 = vmul.f32 %v361, %v745
  %v810 = vmul.f32 %v362, %v746
  %v811 = vmul.f32 %v363, %v747
  %v812 = vmul.f32 %v364, %v748
  %v813 = vmul.f32 %v365, %v749
  %v814 = vmul.f32 %v366, %v750
  %v815 = vmul.f32 %v367, %v751
  %v816 = vmul.f32 %v368, %v752
  %v817 = vmul.f32 %v369, %v753
  %v818 = vmul.f32 %v370, %v754
  %v819 = vmul.f32 %v371, %v755
  %v820 = vmul.f32 %v372, %v756
  %v821 = vmul.f32 %v373, %v757
  %v822 = vmul.f32 %v374, %v758
  %v823 = vmul.f32 %v375, %v759
  %v824 = vmul.f32 %v376, %v760
  %v825 = vmul.f32 %v377, %v761
  %v826 = vmul.f32 %v378, %v762
  %v827 = vmul.f32 %v379, %v763
  %v828 = vmul.f32 %v380, %v764
  %v829 = vmul.f32 %v381, %v765
  %v830 = vmul.f32 %v382, %v766
  %v831 = vmul.f32 %v383, %v767
  %v832 = vmul.f32 %v384, %v768
  %v833 = vmul.f32 %v385, %v769
  %v834 = vmul.f32 %v386, %v770
  %v835 = vmul.f32 %v387, %v771
  %v836 = vmul.f32 %v388, %v772
  %v837 = vmul.f32 %v389, %v773
  %v838 = vmul.f32 %v390, %v774
  %v839 = vmul.f32 %v391, %v775
  %v840 = vmul.f32 %v392, %v776
  %v841 = vmul.f32 %v393, %v777
  %v842 = vmul.f32 %v394, %v778
  %v843 = vmul.f32 %v395, %v779
  %v844 = vmul.f32 %v396, %v780
  %v845 = vmul.f32 %v397, %v781
  %v846 = vmul.f32 %v398, %v782
  %v847 = vmul.f32 %v399, %v783
  %v848 = vmul.f32 %v400, %v784
  %v849 = vmul.f32 %v401, %v785
  %v850 = vmul.f32 %v402, %v786
  %v851 = vmul.f32 %v403, %v787
  %v852 = vmul.f32 %v404, %v788
  %v853 = vmul.f32 %v405, %v789
  %v854 = vpack.c.bf16 %v791, %v790
  %v855 = vpack.c.bf16 %v793, %v792
  %v856 = vpack.c.bf16 %v795, %v794
  %v857 = vpack.c.bf16 %v797, %v796
  %v858 = vpack.c.bf16 %v799, %v798
  %v859 = vpack.c.bf16 %v801, %v800
  %v860 = vpack.c.bf16 %v803, %v802
  %v861 = vpack.c.bf16 %v805, %v804
  %v862 = vpack.c.bf16 %v807, %v806
  %v863 = vpack.c.bf16 %v809, %v808
  %v864 = vpack.c.bf16 %v811, %v810
  %v865 = vpack.c.bf16 %v813, %v812
  %v866 = vpack.c.bf16 %v815, %v814
  %v867 = vpack.c.bf16 %v817, %v816
  %v868 = vpack.c.bf16 %v819, %v818
  %v869 = vpack.c.bf16 %v821, %v820
  %v870 = vpack.c.bf16 %v823, %v822
  %v871 = vpack.c.bf16 %v825, %v824
  %v872 = vpack.c.bf16 %v827, %v826
  %v873 = vpack.c.bf16 %v829, %v828
  %v874 = vpack.c.bf16 %v831, %v830
  %v875 = vpack.c.bf16 %v833, %v832
  %v876 = vpack.c.bf16 %v835, %v834
  %v877 = vpack.c.bf16 %v837, %v836
  %v878 = vpack.c.bf16 %v839, %v838
  %v879 = vpack.c.bf16 %v841, %v840
  %v880 = vpack.c.bf16 %v843, %v842
  %v881 = vpack.c.bf16 %v845, %v844
  %v882 = vpack.c.bf16 %v847, %v846
  %v883 = vpack.c.bf16 %v849, %v848
  %v884 = vpack.c.bf16 %v851, %v850
  %v885 = vpack.c.bf16 %v853, %v852
  %v886 = vld [vmem:[%s1] sm:$0xf]
  %v887 = vld [vmem:[%s1 + $0x4] sm:$0xf]
  %v888 = vld [vmem:[%s1 + $0x8] sm:$0xf]
  %v889 = vld [vmem:[%s1 + $0xc] sm:$0xf]
  %v890 = vld [vmem:[%s1 + $0x10] sm:$0xf]
  %v891 = vld [vmem:[%s1 + $0x14] sm:$0xf]
  %v892 = vld [vmem:[%s1 + $0x18] sm:$0xf]
  %v893 = vld [vmem:[%s1 + $0x1c] sm:$0xf]
  %v894 = vld [vmem:[%s1 + $0x20] sm:$0xf]
  %v895 = vld [vmem:[%s1 + $0x24] sm:$0xf]
  %v896 = vld [vmem:[%s1 + $0x28] sm:$0xf]
  %v897 = vld [vmem:[%s1 + $0x2c] sm:$0xf]
  %v898 = vld [vmem:[%s1 + $0x30] sm:$0xf]
  %v899 = vld [vmem:[%s1 + $0x34] sm:$0xf]
  %v900 = vld [vmem:[%s1 + $0x38] sm:$0xf]
  %v901 = vld [vmem:[%s1 + $0x3c] sm:$0xf]
  %v902 = vld [vmem:[%s2] sm:$0x1]
  %v904 = vlaneseq
  %v905 = vshrl.u32 %v904, 7
  %v906 = vsub.s32 0, %v905
  %v907 = vrot.slane %v902, %v906
  %v925 = vunpack.c.l.b16 %v886
  %v926 = vunpack.c.l.b16 %v887
  %v927 = vunpack.c.l.b16 %v888
  %v928 = vunpack.c.l.b16 %v889
  %v929 = vunpack.c.l.b16 %v890
  %v930 = vunpack.c.l.b16 %v891
  %v931 = vunpack.c.l.b16 %v892
  %v932 = vunpack.c.l.b16 %v893
  %v933 = vunpack.c.l.b16 %v894
  %v934 = vunpack.c.l.b16 %v895
  %v935 = vunpack.c.l.b16 %v896
  %v936 = vunpack.c.l.b16 %v897
  %v937 = vunpack.c.l.b16 %v898
  %v938 = vunpack.c.l.b16 %v899
  %v939 = vunpack.c.l.b16 %v900
  %v940 = vunpack.c.l.b16 %v901
  %v941 = vpack.c.b16 %v926, %v925
  %v942 = vpack.c.b16 %v928, %v927
  %v943 = vpack.c.b16 %v930, %v929
  %v944 = vpack.c.b16 %v932, %v931
  %v945 = vpack.c.b16 %v934, %v933
  %v946 = vpack.c.b16 %v936, %v935
  %v947 = vpack.c.b16 %v938, %v937
  %v948 = vpack.c.b16 %v940, %v939
  %957 = vmatprep.subr.bf16.mxu0 0
  %958 = vmatpush1.bf16.msra.mxu0 %v948
  %959 = vmatprep.subr.bf16.mxu0 0
  %960 = vmatpush1.bf16.msra.mxu0 %v947
  %961 = vmatprep.subr.bf16.mxu0 0
  %962 = vmatpush1.bf16.msra.mxu0 %v946
  %963 = vmatprep.subr.bf16.mxu0 0
  %964 = vmatpush1.bf16.msra.mxu0 %v945
  %965 = vmatprep.subr.bf16.mxu0 0
  %966 = vmatpush1.bf16.msra.mxu0 %v944
  %967 = vmatprep.subr.bf16.mxu0 0
  %968 = vmatpush1.bf16.msra.mxu0 %v943
  %969 = vmatprep.subr.bf16.mxu0 0
  %970 = vmatpush1.bf16.msra.mxu0 %v942
  %971 = vmatprep.subr.bf16.mxu0 0
  %972 = vmatpush1.bf16.msra.mxu0 %v941
  %973 = vmatprep.subr.bf16.mxu0 0
  %974 = vmatpush2.bf16.msra.mxu0 0
  %975 = vmatprep.subr.bf16.mxu0 0
  %976 = vmatpush2.bf16.msra.mxu0 0
  %977 = vmatprep.subr.bf16.mxu0 0
  %978 = vmatpush2.bf16.msra.mxu0 0
  %979 = vmatprep.subr.bf16.mxu0 0
  %980 = vmatpush2.bf16.msra.mxu0 0
  %981 = vmatprep.subr.bf16.mxu0 0
  %982 = vmatpush2.bf16.msra.mxu0 0
  %983 = vmatprep.subr.bf16.mxu0 0
  %984 = vmatpush2.bf16.msra.mxu0 0
  %985 = vmatprep.subr.bf16.mxu0 0
  %986 = vmatpush2.bf16.msra.mxu0 0
  %987 = vmatprep.subr.bf16.mxu0 0
  %988 = vmatpush2.bf16.msra.mxu0 0
  %989 = vmatprep.mubr.bf16.mxu0 0
  %990 = vmatmul.mubr.bf16.gmra.mxu0 %v854
  %v991 = vpop.f32.mrf.mxu0
  %v992 = vadd.f32 %v907, %v991
  %v993 = vpop.f32.mrf.mxu0
  %v994 = vpop.f32.mrf.mxu0
  %v995 = vadd.f32 %v907, %v994
  %v996 = vpop.f32.mrf.mxu0
  %997 = vmatprep.mubr.bf16.mxu0 0
  %998 = vmatmul.mubr.bf16.gmra.mxu0 %v855
  %v999 = vpop.f32.mrf.mxu0
  %v1000 = vadd.f32 %v907, %v999
  %v1001 = vpop.f32.mrf.mxu0
  %v1002 = vpop.f32.mrf.mxu0
  %v1003 = vadd.f32 %v907, %v1002
  %v1004 = vpop.f32.mrf.mxu0
  %1005 = vmatprep.mubr.bf16.mxu0 0
  %1006 = vmatmul.mubr.bf16.gmra.mxu0 %v856
  %v1007 = vpop.f32.mrf.mxu0
  %v1008 = vadd.f32 %v907, %v1007
  %v1009 = vpop.f32.mrf.mxu0
  %v1010 = vpop.f32.mrf.mxu0
  %v1011 = vadd.f32 %v907, %v1010
  %v1012 = vpop.f32.mrf.mxu0
  %1013 = vmatprep.mubr.bf16.mxu0 0
  %1014 = vmatmul.mubr.bf16.gmra.mxu0 %v857
  %v1015 = vpop.f32.mrf.mxu0
  %v1016 = vadd.f32 %v907, %v1015
  %v1017 = vpop.f32.mrf.mxu0
  %v1018 = vpop.f32.mrf.mxu0
  %v1019 = vadd.f32 %v907, %v1018
  %v1020 = vpop.f32.mrf.mxu0
  %1021 = vmatprep.mubr.bf16.mxu0 0
  %1022 = vmatmul.mubr.bf16.gmra.mxu0 %v858
  %v1023 = vpop.f32.mrf.mxu0
  %v1024 = vadd.f32 %v907, %v1023
  %v1025 = vpop.f32.mrf.mxu0
  %v1026 = vpop.f32.mrf.mxu0
  %v1027 = vadd.f32 %v907, %v1026
  %v1028 = vpop.f32.mrf.mxu0
  %1029 = vmatprep.mubr.bf16.mxu0 0
  %1030 = vmatmul.mubr.bf16.gmra.mxu0 %v859
  %v1031 = vpop.f32.mrf.mxu0
  %v1032 = vadd.f32 %v907, %v1031
  %v1033 = vpop.f32.mrf.mxu0
  %v1034 = vpop.f32.mrf.mxu0
  %v1035 = vadd.f32 %v907, %v1034
  %v1036 = vpop.f32.mrf.mxu0
  %1037 = vmatprep.mubr.bf16.mxu0 0
  %1038 = vmatmul.mubr.bf16.gmra.mxu0 %v860
  %v1039 = vpop.f32.mrf.mxu0
  %v1040 = vadd.f32 %v907, %v1039
  %v1041 = vpop.f32.mrf.mxu0
  %v1042 = vpop.f32.mrf.mxu0
  %v1043 = vadd.f32 %v907, %v1042
  %v1044 = vpop.f32.mrf.mxu0
  %1045 = vmatprep.mubr.bf16.mxu0 0
  %1046 = vmatmul.mubr.bf16.gmra.mxu0 %v861
  %v1047 = vpop.f32.mrf.mxu0
  %v1048 = vadd.f32 %v907, %v1047
  %v1049 = vpop.f32.mrf.mxu0
  %v1050 = vpop.f32.mrf.mxu0
  %v1051 = vadd.f32 %v907, %v1050
  %v1052 = vpop.f32.mrf.mxu0
  %1053 = vmatprep.mubr.bf16.mxu0 0
  %1054 = vmatmul.mubr.bf16.gmra.mxu0 %v862
  %v1055 = vpop.f32.mrf.mxu0
  %v1056 = vadd.f32 %v907, %v1055
  %v1057 = vpop.f32.mrf.mxu0
  %v1058 = vpop.f32.mrf.mxu0
  %v1059 = vadd.f32 %v907, %v1058
  %v1060 = vpop.f32.mrf.mxu0
  %1061 = vmatprep.mubr.bf16.mxu0 0
  %1062 = vmatmul.mubr.bf16.gmra.mxu0 %v863
  %v1063 = vpop.f32.mrf.mxu0
  %v1064 = vadd.f32 %v907, %v1063
  %v1065 = vpop.f32.mrf.mxu0
  %v1066 = vpop.f32.mrf.mxu0
  %v1067 = vadd.f32 %v907, %v1066
  %v1068 = vpop.f32.mrf.mxu0
  %1069 = vmatprep.mubr.bf16.mxu0 0
  %1070 = vmatmul.mubr.bf16.gmra.mxu0 %v864
  %v1071 = vpop.f32.mrf.mxu0
  %v1072 = vadd.f32 %v907, %v1071
  %v1073 = vpop.f32.mrf.mxu0
  %v1074 = vpop.f32.mrf.mxu0
  %v1075 = vadd.f32 %v907, %v1074
  %v1076 = vpop.f32.mrf.mxu0
  %1077 = vmatprep.mubr.bf16.mxu0 0
  %1078 = vmatmul.mubr.bf16.gmra.mxu0 %v865
  %v1079 = vpop.f32.mrf.mxu0
  %v1080 = vadd.f32 %v907, %v1079
  %v1081 = vpop.f32.mrf.mxu0
  %v1082 = vpop.f32.mrf.mxu0
  %v1083 = vadd.f32 %v907, %v1082
  %v1084 = vpop.f32.mrf.mxu0
  %1085 = vmatprep.mubr.bf16.mxu0 0
  %1086 = vmatmul.mubr.bf16.gmra.mxu0 %v866
  %v1087 = vpop.f32.mrf.mxu0
  %v1088 = vadd.f32 %v907, %v1087
  %v1089 = vpop.f32.mrf.mxu0
  %v1090 = vpop.f32.mrf.mxu0
  %v1091 = vadd.f32 %v907, %v1090
  %v1092 = vpop.f32.mrf.mxu0
  %1093 = vmatprep.mubr.bf16.mxu0 0
  %1094 = vmatmul.mubr.bf16.gmra.mxu0 %v867
  %v1095 = vpop.f32.mrf.mxu0
  %v1096 = vadd.f32 %v907, %v1095
  %v1097 = vpop.f32.mrf.mxu0
  %v1098 = vpop.f32.mrf.mxu0
  %v1099 = vadd.f32 %v907, %v1098
  %v1100 = vpop.f32.mrf.mxu0
  %1101 = vmatprep.mubr.bf16.mxu0 0
  %1102 = vmatmul.mubr.bf16.gmra.mxu0 %v868
  %v1103 = vpop.f32.mrf.mxu0
  %v1104 = vadd.f32 %v907, %v1103
  %v1105 = vpop.f32.mrf.mxu0
  %v1106 = vpop.f32.mrf.mxu0
  %v1107 = vadd.f32 %v907, %v1106
  %v1108 = vpop.f32.mrf.mxu0
  %1109 = vmatprep.mubr.bf16.mxu0 0
  %1110 = vmatmul.mubr.bf16.gmra.mxu0 %v869
  %v1111 = vpop.f32.mrf.mxu0
  %v1112 = vadd.f32 %v907, %v1111
  %v1113 = vpop.f32.mrf.mxu0
  %v1114 = vpop.f32.mrf.mxu0
  %v1115 = vadd.f32 %v907, %v1114
  %v1116 = vpop.f32.mrf.mxu0
  %1117 = vmatprep.mubr.bf16.mxu0 0
  %1118 = vmatmul.mubr.bf16.gmra.mxu0 %v870
  %v1119 = vpop.f32.mrf.mxu0
  %v1120 = vadd.f32 %v907, %v1119
  %v1121 = vpop.f32.mrf.mxu0
  %v1122 = vpop.f32.mrf.mxu0
  %v1123 = vadd.f32 %v907, %v1122
  %v1124 = vpop.f32.mrf.mxu0
  %1125 = vmatprep.mubr.bf16.mxu0 0
  %1126 = vmatmul.mubr.bf16.gmra.mxu0 %v871
  %v1127 = vpop.f32.mrf.mxu0
  %v1128 = vadd.f32 %v907, %v1127
  %v1129 = vpop.f32.mrf.mxu0
  %v1130 = vpop.f32.mrf.mxu0
  %v1131 = vadd.f32 %v907, %v1130
  %v1132 = vpop.f32.mrf.mxu0
  %1133 = vmatprep.mubr.bf16.mxu0 0
  %1134 = vmatmul.mubr.bf16.gmra.mxu0 %v872
  %v1135 = vpop.f32.mrf.mxu0
  %v1136 = vadd.f32 %v907, %v1135
  %v1137 = vpop.f32.mrf.mxu0
  %v1138 = vpop.f32.mrf.mxu0
  %v1139 = vadd.f32 %v907, %v1138
  %v1140 = vpop.f32.mrf.mxu0
  %1141 = vmatprep.mubr.bf16.mxu0 0
  %1142 = vmatmul.mubr.bf16.gmra.mxu0 %v873
  %v1143 = vpop.f32.mrf.mxu0
  %v1144 = vadd.f32 %v907, %v1143
  %v1145 = vpop.f32.mrf.mxu0
  %v1146 = vpop.f32.mrf.mxu0
  %v1147 = vadd.f32 %v907, %v1146
  %v1148 = vpop.f32.mrf.mxu0
  %1149 = vmatprep.mubr.bf16.mxu0 0
  %1150 = vmatmul.mubr.bf16.gmra.mxu0 %v874
  %v1151 = vpop.f32.mrf.mxu0
  %v1152 = vadd.f32 %v907, %v1151
  %v1153 = vpop.f32.mrf.mxu0
  %v1154 = vpop.f32.mrf.mxu0
  %v1155 = vadd.f32 %v907, %v1154
  %v1156 = vpop.f32.mrf.mxu0
  %1157 = vmatprep.mubr.bf16.mxu0 0
  %1158 = vmatmul.mubr.bf16.gmra.mxu0 %v875
  %v1159 = vpop.f32.mrf.mxu0
  %v1160 = vadd.f32 %v907, %v1159
  %v1161 = vpop.f32.mrf.mxu0
  %v1162 = vpop.f32.mrf.mxu0
  %v1163 = vadd.f32 %v907, %v1162
  %v1164 = vpop.f32.mrf.mxu0
  %1165 = vmatprep.mubr.bf16.mxu0 0
  %1166 = vmatmul.mubr.bf16.gmra.mxu0 %v876
  %v1167 = vpop.f32.mrf.mxu0
  %v1168 = vadd.f32 %v907, %v1167
  %v1169 = vpop.f32.mrf.mxu0
  %v1170 = vpop.f32.mrf.mxu0
  %v1171 = vadd.f32 %v907, %v1170
  %v1172 = vpop.f32.mrf.mxu0
  %1173 = vmatprep.mubr.bf16.mxu0 0
  %1174 = vmatmul.mubr.bf16.gmra.mxu0 %v877
  %v1175 = vpop.f32.mrf.mxu0
  %v1176 = vadd.f32 %v907, %v1175
  %v1177 = vpop.f32.mrf.mxu0
  %v1178 = vpop.f32.mrf.mxu0
  %v1179 = vadd.f32 %v907, %v1178
  %v1180 = vpop.f32.mrf.mxu0
  %1181 = vmatprep.mubr.bf16.mxu0 0
  %1182 = vmatmul.mubr.bf16.gmra.mxu0 %v878
  %v1183 = vpop.f32.mrf.mxu0
  %v1184 = vadd.f32 %v907, %v1183
  %v1185 = vpop.f32.mrf.mxu0
  %v1186 = vpop.f32.mrf.mxu0
  %v1187 = vadd.f32 %v907, %v1186
  %v1188 = vpop.f32.mrf.mxu0
  %1189 = vmatprep.mubr.bf16.mxu0 0
  %1190 = vmatmul.mubr.bf16.gmra.mxu0 %v879
  %v1191 = vpop.f32.mrf.mxu0
  %v1192 = vadd.f32 %v907, %v1191
  %v1193 = vpop.f32.mrf.mxu0
  %v1194 = vpop.f32.mrf.mxu0
  %v1195 = vadd.f32 %v907, %v1194
  %v1196 = vpop.f32.mrf.mxu0
  %1197 = vmatprep.mubr.bf16.mxu0 0
  %1198 = vmatmul.mubr.bf16.gmra.mxu0 %v880
  %v1199 = vpop.f32.mrf.mxu0
  %v1200 = vadd.f32 %v907, %v1199
  %v1201 = vpop.f32.mrf.mxu0
  %v1202 = vpop.f32.mrf.mxu0
  %v1203 = vadd.f32 %v907, %v1202
  %v1204 = vpop.f32.mrf.mxu0
  %1205 = vmatprep.mubr.bf16.mxu0 0
  %1206 = vmatmul.mubr.bf16.gmra.mxu0 %v881
  %v1207 = vpop.f32.mrf.mxu0
  %v1208 = vadd.f32 %v907, %v1207
  %v1209 = vpop.f32.mrf.mxu0
  %v1210 = vpop.f32.mrf.mxu0
  %v1211 = vadd.f32 %v907, %v1210
  %v1212 = vpop.f32.mrf.mxu0
  %1213 = vmatprep.mubr.bf16.mxu0 0
  %1214 = vmatmul.mubr.bf16.gmra.mxu0 %v882
  %v1215 = vpop.f32.mrf.mxu0
  %v1216 = vadd.f32 %v907, %v1215
  %v1217 = vpop.f32.mrf.mxu0
  %v1218 = vpop.f32.mrf.mxu0
  %v1219 = vadd.f32 %v907, %v1218
  %v1220 = vpop.f32.mrf.mxu0
  %1221 = vmatprep.mubr.bf16.mxu0 0
  %1222 = vmatmul.mubr.bf16.gmra.mxu0 %v883
  %v1223 = vpop.f32.mrf.mxu0
  %v1224 = vadd.f32 %v907, %v1223
  %v1225 = vpop.f32.mrf.mxu0
  %v1226 = vpop.f32.mrf.mxu0
  %v1227 = vadd.f32 %v907, %v1226
  %v1228 = vpop.f32.mrf.mxu0
  %1229 = vmatprep.mubr.bf16.mxu0 0
  %1230 = vmatmul.mubr.bf16.gmra.mxu0 %v884
  %v1231 = vpop.f32.mrf.mxu0
  %v1232 = vadd.f32 %v907, %v1231
  %v1233 = vpop.f32.mrf.mxu0
  %v1234 = vpop.f32.mrf.mxu0
  %v1235 = vadd.f32 %v907, %v1234
  %v1236 = vpop.f32.mrf.mxu0
  %1237 = vmatprep.mubr.bf16.mxu0 0
  %1238 = vmatmul.mubr.bf16.gmra.mxu0 %v885
  %v1239 = vpop.f32.mrf.mxu0
  %v1240 = vadd.f32 %v907, %v1239
  %v1241 = vpop.f32.mrf.mxu0
  %v1242 = vpop.f32.mrf.mxu0
  %v1243 = vadd.f32 %v907, %v1242
  %v1244 = vpop.f32.mrf.mxu0
  %1245 = vdwg.mxu0
  %v1246 = vmul.f32 %v992, 0.5
  %v1247 = vmul.f32 %v995, 0.5
  %v1248 = vmul.f32 %v1000, 0.5
  %v1249 = vmul.f32 %v1003, 0.5
  %v1250 = vmul.f32 %v1008, 0.5
  %v1251 = vmul.f32 %v1011, 0.5
  %v1252 = vmul.f32 %v1016, 0.5
  %v1253 = vmul.f32 %v1019, 0.5
  %v1254 = vmul.f32 %v1024, 0.5
  %v1255 = vmul.f32 %v1027, 0.5
  %v1256 = vmul.f32 %v1032, 0.5
  %v1257 = vmul.f32 %v1035, 0.5
  %v1258 = vmul.f32 %v1040, 0.5
  %v1259 = vmul.f32 %v1043, 0.5
  %v1260 = vmul.f32 %v1048, 0.5
  %v1261 = vmul.f32 %v1051, 0.5
  %v1262 = vmul.f32 %v1056, 0.5
  %v1263 = vmul.f32 %v1059, 0.5
  %v1264 = vmul.f32 %v1064, 0.5
  %v1265 = vmul.f32 %v1067, 0.5
  %v1266 = vmul.f32 %v1072, 0.5
  %v1267 = vmul.f32 %v1075, 0.5
  %v1268 = vmul.f32 %v1080, 0.5
  %v1269 = vmul.f32 %v1083, 0.5
  %v1270 = vmul.f32 %v1088, 0.5
  %v1271 = vmul.f32 %v1091, 0.5
  %v1272 = vmul.f32 %v1096, 0.5
  %v1273 = vmul.f32 %v1099, 0.5
  %v1274 = vmul.f32 %v1104, 0.5
  %v1275 = vmul.f32 %v1107, 0.5
  %v1276 = vmul.f32 %v1112, 0.5
  %v1277 = vmul.f32 %v1115, 0.5
  %v1278 = vmul.f32 %v1120, 0.5
  %v1279 = vmul.f32 %v1123, 0.5
  %v1280 = vmul.f32 %v1128, 0.5
  %v1281 = vmul.f32 %v1131, 0.5
  %v1282 = vmul.f32 %v1136, 0.5
  %v1283 = vmul.f32 %v1139, 0.5
  %v1284 = vmul.f32 %v1144, 0.5
  %v1285 = vmul.f32 %v1147, 0.5
  %v1286 = vmul.f32 %v1152, 0.5
  %v1287 = vmul.f32 %v1155, 0.5
  %v1288 = vmul.f32 %v1160, 0.5
  %v1289 = vmul.f32 %v1163, 0.5
  %v1290 = vmul.f32 %v1168, 0.5
  %v1291 = vmul.f32 %v1171, 0.5
  %v1292 = vmul.f32 %v1176, 0.5
  %v1293 = vmul.f32 %v1179, 0.5
  %v1294 = vmul.f32 %v1184, 0.5
  %v1295 = vmul.f32 %v1187, 0.5
  %v1296 = vmul.f32 %v1192, 0.5
  %v1297 = vmul.f32 %v1195, 0.5
  %v1298 = vmul.f32 %v1200, 0.5
  %v1299 = vmul.f32 %v1203, 0.5
  %v1300 = vmul.f32 %v1208, 0.5
  %v1301 = vmul.f32 %v1211, 0.5
  %v1302 = vmul.f32 %v1216, 0.5
  %v1303 = vmul.f32 %v1219, 0.5
  %v1304 = vmul.f32 %v1224, 0.5
  %v1305 = vmul.f32 %v1227, 0.5
  %v1306 = vmul.f32 %v1232, 0.5
  %v1307 = vmul.f32 %v1235, 0.5
  %v1308 = vmul.f32 %v1240, 0.5
  %v1309 = vmul.f32 %v1243, 0.5
  %v1310 = vmul.f32 %v992, 0.044715
  %v1311 = vmul.f32 %v995, 0.044715
  %v1312 = vmul.f32 %v1000, 0.044715
  %v1313 = vmul.f32 %v1003, 0.044715
  %v1314 = vmul.f32 %v1008, 0.044715
  %v1315 = vmul.f32 %v1011, 0.044715
  %v1316 = vmul.f32 %v1016, 0.044715
  %v1317 = vmul.f32 %v1019, 0.044715
  %v1318 = vmul.f32 %v1024, 0.044715
  %v1319 = vmul.f32 %v1027, 0.044715
  %v1320 = vmul.f32 %v1032, 0.044715
  %v1321 = vmul.f32 %v1035, 0.044715
  %v1322 = vmul.f32 %v1040, 0.044715
  %v1323 = vmul.f32 %v1043, 0.044715
  %v1324 = vmul.f32 %v1048, 0.044715
  %v1325 = vmul.f32 %v1051, 0.044715
  %v1326 = vmul.f32 %v1056, 0.044715
  %v1327 = vmul.f32 %v1059, 0.044715
  %v1328 = vmul.f32 %v1064, 0.044715
  %v1329 = vmul.f32 %v1067, 0.044715
  %v1330 = vmul.f32 %v1072, 0.044715
  %v1331 = vmul.f32 %v1075, 0.044715
  %v1332 = vmul.f32 %v1080, 0.044715
  %v1333 = vmul.f32 %v1083, 0.044715
  %v1334 = vmul.f32 %v1088, 0.044715
  %v1335 = vmul.f32 %v1091, 0.044715
  %v1336 = vmul.f32 %v1096, 0.044715
  %v1337 = vmul.f32 %v1099, 0.044715
  %v1338 = vmul.f32 %v1104, 0.044715
  %v1339 = vmul.f32 %v1107, 0.044715
  %v1340 = vmul.f32 %v1112, 0.044715
  %v1341 = vmul.f32 %v1115, 0.044715
  %v1342 = vmul.f32 %v1120, 0.044715
  %v1343 = vmul.f32 %v1123, 0.044715
  %v1344 = vmul.f32 %v1128, 0.044715
  %v1345 = vmul.f32 %v1131, 0.044715
  %v1346 = vmul.f32 %v1136, 0.044715
  %v1347 = vmul.f32 %v1139, 0.044715
  %v1348 = vmul.f32 %v1144, 0.044715
  %v1349 = vmul.f32 %v1147, 0.044715
  %v1350 = vmul.f32 %v1152, 0.044715
  %v1351 = vmul.f32 %v1155, 0.044715
  %v1352 = vmul.f32 %v1160, 0.044715
  %v1353 = vmul.f32 %v1163, 0.044715
  %v1354 = vmul.f32 %v1168, 0.044715
  %v1355 = vmul.f32 %v1171, 0.044715
  %v1356 = vmul.f32 %v1176, 0.044715
  %v1357 = vmul.f32 %v1179, 0.044715
  %v1358 = vmul.f32 %v1184, 0.044715
  %v1359 = vmul.f32 %v1187, 0.044715
  %v1360 = vmul.f32 %v1192, 0.044715
  %v1361 = vmul.f32 %v1195, 0.044715
  %v1362 = vmul.f32 %v1200, 0.044715
  %v1363 = vmul.f32 %v1203, 0.044715
  %v1364 = vmul.f32 %v1208, 0.044715
  %v1365 = vmul.f32 %v1211, 0.044715
  %v1366 = vmul.f32 %v1216, 0.044715
  %v1367 = vmul.f32 %v1219, 0.044715
  %v1368 = vmul.f32 %v1224, 0.044715
  %v1369 = vmul.f32 %v1227, 0.044715
  %v1370 = vmul.f32 %v1232, 0.044715
  %v1371 = vmul.f32 %v1235, 0.044715
  %v1372 = vmul.f32 %v1240, 0.044715
  %v1373 = vmul.f32 %v1243, 0.044715
  %v1374 = vmul.f32 %v1310, %v992
  %v1375 = vmul.f32 %v1311, %v995
  %v1376 = vmul.f32 %v1312, %v1000
  %v1377 = vmul.f32 %v1313, %v1003
  %v1378 = vmul.f32 %v1314, %v1008
  %v1379 = vmul.f32 %v1315, %v1011
  %v1380 = vmul.f32 %v1316, %v1016
  %v1381 = vmul.f32 %v1317, %v1019
  %v1382 = vmul.f32 %v1318, %v1024
  %v1383 = vmul.f32 %v1319, %v1027
  %v1384 = vmul.f32 %v1320, %v1032
  %v1385 = vmul.f32 %v1321, %v1035
  %v1386 = vmul.f32 %v1322, %v1040
  %v1387 = vmul.f32 %v1323, %v1043
  %v1388 = vmul.f32 %v1324, %v1048
  %v1389 = vmul.f32 %v1325, %v1051
  %v1390 = vmul.f32 %v1326, %v1056
  %v1391 = vmul.f32 %v1327, %v1059
  %v1392 = vmul.f32 %v1328, %v1064
  %v1393 = vmul.f32 %v1329, %v1067
  %v1394 = vmul.f32 %v1330, %v1072
  %v1395 = vmul.f32 %v1331, %v1075
  %v1396 = vmul.f32 %v1332, %v1080
  %v1397 = vmul.f32 %v1333, %v1083
  %v1398 = vmul.f32 %v1334, %v1088
  %v1399 = vmul.f32 %v1335, %v1091
  %v1400 = vmul.f32 %v1336, %v1096
  %v1401 = vmul.f32 %v1337, %v1099
  %v1402 = vmul.f32 %v1338, %v1104
  %v1403 = vmul.f32 %v1339, %v1107
  %v1404 = vmul.f32 %v1340, %v1112
  %v1405 = vmul.f32 %v1341, %v1115
  %v1406 = vmul.f32 %v1342, %v1120
  %v1407 = vmul.f32 %v1343, %v1123
  %v1408 = vmul.f32 %v1344, %v1128
  %v1409 = vmul.f32 %v1345, %v1131
  %v1410 = vmul.f32 %v1346, %v1136
  %v1411 = vmul.f32 %v1347, %v1139
  %v1412 = vmul.f32 %v1348, %v1144
  %v1413 = vmul.f32 %v1349, %v1147
  %v1414 = vmul.f32 %v1350, %v1152
  %v1415 = vmul.f32 %v1351, %v1155
  %v1416 = vmul.f32 %v1352, %v1160
  %v1417 = vmul.f32 %v1353, %v1163
  %v1418 = vmul.f32 %v1354, %v1168
  %v1419 = vmul.f32 %v1355, %v1171
  %v1420 = vmul.f32 %v1356, %v1176
  %v1421 = vmul.f32 %v1357, %v1179
  %v1422 = vmul.f32 %v1358, %v1184
  %v1423 = vmul.f32 %v1359, %v1187
  %v1424 = vmul.f32 %v1360, %v1192
  %v1425 = vmul.f32 %v1361, %v1195
  %v1426 = vmul.f32 %v1362, %v1200
  %v1427 = vmul.f32 %v1363, %v1203
  %v1428 = vmul.f32 %v1364, %v1208
  %v1429 = vmul.f32 %v1365, %v1211
  %v1430 = vmul.f32 %v1366, %v1216
  %v1431 = vmul.f32 %v1367, %v1219
  %v1432 = vmul.f32 %v1368, %v1224
  %v1433 = vmul.f32 %v1369, %v1227
  %v1434 = vmul.f32 %v1370, %v1232
  %v1435 = vmul.f32 %v1371, %v1235
  %v1436 = vmul.f32 %v1372, %v1240
  %v1437 = vmul.f32 %v1373, %v1243
  %v1438 = vmul.f32 %v1374, %v992
  %v1439 = vmul.f32 %v1375, %v995
  %v1440 = vmul.f32 %v1376, %v1000
  %v1441 = vmul.f32 %v1377, %v1003
  %v1442 = vmul.f32 %v1378, %v1008
  %v1443 = vmul.f32 %v1379, %v1011
  %v1444 = vmul.f32 %v1380, %v1016
  %v1445 = vmul.f32 %v1381, %v1019
  %v1446 = vmul.f32 %v1382, %v1024
  %v1447 = vmul.f32 %v1383, %v1027
  %v1448 = vmul.f32 %v1384, %v1032
  %v1449 = vmul.f32 %v1385, %v1035
  %v1450 = vmul.f32 %v1386, %v1040
  %v1451 = vmul.f32 %v1387, %v1043
  %v1452 = vmul.f32 %v1388, %v1048
  %v1453 = vmul.f32 %v1389, %v1051
  %v1454 = vmul.f32 %v1390, %v1056
  %v1455 = vmul.f32 %v1391, %v1059
  %v1456 = vmul.f32 %v1392, %v1064
  %v1457 = vmul.f32 %v1393, %v1067
  %v1458 = vmul.f32 %v1394, %v1072
  %v1459 = vmul.f32 %v1395, %v1075
  %v1460 = vmul.f32 %v1396, %v1080
  %v1461 = vmul.f32 %v1397, %v1083
  %v1462 = vmul.f32 %v1398, %v1088
  %v1463 = vmul.f32 %v1399, %v1091
  %v1464 = vmul.f32 %v1400, %v1096
  %v1465 = vmul.f32 %v1401, %v1099
  %v1466 = vmul.f32 %v1402, %v1104
  %v1467 = vmul.f32 %v1403, %v1107
  %v1468 = vmul.f32 %v1404, %v1112
  %v1469 = vmul.f32 %v1405, %v1115
  %v1470 = vmul.f32 %v1406, %v1120
  %v1471 = vmul.f32 %v1407, %v1123
  %v1472 = vmul.f32 %v1408, %v1128
  %v1473 = vmul.f32 %v1409, %v1131
  %v1474 = vmul.f32 %v1410, %v1136
  %v1475 = vmul.f32 %v1411, %v1139
  %v1476 = vmul.f32 %v1412, %v1144
  %v1477 = vmul.f32 %v1413, %v1147
  %v1478 = vmul.f32 %v1414, %v1152
  %v1479 = vmul.f32 %v1415, %v1155
  %v1480 = vmul.f32 %v1416, %v1160
  %v1481 = vmul.f32 %v1417, %v1163
  %v1482 = vmul.f32 %v1418, %v1168
  %v1483 = vmul.f32 %v1419, %v1171
  %v1484 = vmul.f32 %v1420, %v1176
  %v1485 = vmul.f32 %v1421, %v1179
  %v1486 = vmul.f32 %v1422, %v1184
  %v1487 = vmul.f32 %v1423, %v1187
  %v1488 = vmul.f32 %v1424, %v1192
  %v1489 = vmul.f32 %v1425, %v1195
  %v1490 = vmul.f32 %v1426, %v1200
  %v1491 = vmul.f32 %v1427, %v1203
  %v1492 = vmul.f32 %v1428, %v1208
  %v1493 = vmul.f32 %v1429, %v1211
  %v1494 = vmul.f32 %v1430, %v1216
  %v1495 = vmul.f32 %v1431, %v1219
  %v1496 = vmul.f32 %v1432, %v1224
  %v1497 = vmul.f32 %v1433, %v1227
  %v1498 = vmul.f32 %v1434, %v1232
  %v1499 = vmul.f32 %v1435, %v1235
  %v1500 = vmul.f32 %v1436, %v1240
  %v1501 = vmul.f32 %v1437, %v1243
  %v1502 = vadd.f32 %v992, %v1438
  %v1503 = vadd.f32 %v995, %v1439
  %v1504 = vadd.f32 %v1000, %v1440
  %v1505 = vadd.f32 %v1003, %v1441
  %v1506 = vadd.f32 %v1008, %v1442
  %v1507 = vadd.f32 %v1011, %v1443
  %v1508 = vadd.f32 %v1016, %v1444
  %v1509 = vadd.f32 %v1019, %v1445
  %v1510 = vadd.f32 %v1024, %v1446
  %v1511 = vadd.f32 %v1027, %v1447
  %v1512 = vadd.f32 %v1032, %v1448
  %v1513 = vadd.f32 %v1035, %v1449
  %v1514 = vadd.f32 %v1040, %v1450
  %v1515 = vadd.f32 %v1043, %v1451
  %v1516 = vadd.f32 %v1048, %v1452
  %v1517 = vadd.f32 %v1051, %v1453
  %v1518 = vadd.f32 %v1056, %v1454
  %v1519 = vadd.f32 %v1059, %v1455
  %v1520 = vadd.f32 %v1064, %v1456
  %v1521 = vadd.f32 %v1067, %v1457
  %v1522 = vadd.f32 %v1072, %v1458
  %v1523 = vadd.f32 %v1075, %v1459
  %v1524 = vadd.f32 %v1080, %v1460
  %v1525 = vadd.f32 %v1083, %v1461
  %v1526 = vadd.f32 %v1088, %v1462
  %v1527 = vadd.f32 %v1091, %v1463
  %v1528 = vadd.f32 %v1096, %v1464
  %v1529 = vadd.f32 %v1099, %v1465
  %v1530 = vadd.f32 %v1104, %v1466
  %v1531 = vadd.f32 %v1107, %v1467
  %v1532 = vadd.f32 %v1112, %v1468
  %v1533 = vadd.f32 %v1115, %v1469
  %v1534 = vadd.f32 %v1120, %v1470
  %v1535 = vadd.f32 %v1123, %v1471
  %v1536 = vadd.f32 %v1128, %v1472
  %v1537 = vadd.f32 %v1131, %v1473
  %v1538 = vadd.f32 %v1136, %v1474
  %v1539 = vadd.f32 %v1139, %v1475
  %v1540 = vadd.f32 %v1144, %v1476
  %v1541 = vadd.f32 %v1147, %v1477
  %v1542 = vadd.f32 %v1152, %v1478
  %v1543 = vadd.f32 %v1155, %v1479
  %v1544 = vadd.f32 %v1160, %v1480
  %v1545 = vadd.f32 %v1163, %v1481
  %v1546 = vadd.f32 %v1168, %v1482
  %v1547 = vadd.f32 %v1171, %v1483
  %v1548 = vadd.f32 %v1176, %v1484
  %v1549 = vadd.f32 %v1179, %v1485
  %v1550 = vadd.f32 %v1184, %v1486
  %v1551 = vadd.f32 %v1187, %v1487
  %v1552 = vadd.f32 %v1192, %v1488
  %v1553 = vadd.f32 %v1195, %v1489
  %v1554 = vadd.f32 %v1200, %v1490
  %v1555 = vadd.f32 %v1203, %v1491
  %v1556 = vadd.f32 %v1208, %v1492
  %v1557 = vadd.f32 %v1211, %v1493
  %v1558 = vadd.f32 %v1216, %v1494
  %v1559 = vadd.f32 %v1219, %v1495
  %v1560 = vadd.f32 %v1224, %v1496
  %v1561 = vadd.f32 %v1227, %v1497
  %v1562 = vadd.f32 %v1232, %v1498
  %v1563 = vadd.f32 %v1235, %v1499
  %v1564 = vadd.f32 %v1240, %v1500
  %v1565 = vadd.f32 %v1243, %v1501
  %v1566 = vmul.f32 %v1502, 0.7978846
  %v1567 = vmul.f32 %v1503, 0.7978846
  %v1568 = vmul.f32 %v1504, 0.7978846
  %v1569 = vmul.f32 %v1505, 0.7978846
  %v1570 = vmul.f32 %v1506, 0.7978846
  %v1571 = vmul.f32 %v1507, 0.7978846
  %v1572 = vmul.f32 %v1508, 0.7978846
  %v1573 = vmul.f32 %v1509, 0.7978846
  %v1574 = vmul.f32 %v1510, 0.7978846
  %v1575 = vmul.f32 %v1511, 0.7978846
  %v1576 = vmul.f32 %v1512, 0.7978846
  %v1577 = vmul.f32 %v1513, 0.7978846
  %v1578 = vmul.f32 %v1514, 0.7978846
  %v1579 = vmul.f32 %v1515, 0.7978846
  %v1580 = vmul.f32 %v1516, 0.7978846
  %v1581 = vmul.f32 %v1517, 0.7978846
  %v1582 = vmul.f32 %v1518, 0.7978846
  %v1583 = vmul.f32 %v1519, 0.7978846
  %v1584 = vmul.f32 %v1520, 0.7978846
  %v1585 = vmul.f32 %v1521, 0.7978846
  %v1586 = vmul.f32 %v1522, 0.7978846
  %v1587 = vmul.f32 %v1523, 0.7978846
  %v1588 = vmul.f32 %v1524, 0.7978846
  %v1589 = vmul.f32 %v1525, 0.7978846
  %v1590 = vmul.f32 %v1526, 0.7978846
  %v1591 = vmul.f32 %v1527, 0.7978846
  %v1592 = vmul.f32 %v1528, 0.7978846
  %v1593 = vmul.f32 %v1529, 0.7978846
  %v1594 = vmul.f32 %v1530, 0.7978846
  %v1595 = vmul.f32 %v1531, 0.7978846
  %v1596 = vmul.f32 %v1532, 0.7978846
  %v1597 = vmul.f32 %v1533, 0.7978846
  %v1598 = vmul.f32 %v1534, 0.7978846
  %v1599 = vmul.f32 %v1535, 0.7978846
  %v1600 = vmul.f32 %v1536, 0.7978846
  %v1601 = vmul.f32 %v1537, 0.7978846
  %v1602 = vmul.f32 %v1538, 0.7978846
  %v1603 = vmul.f32 %v1539, 0.7978846
  %v1604 = vmul.f32 %v1540, 0.7978846
  %v1605 = vmul.f32 %v1541, 0.7978846
  %v1606 = vmul.f32 %v1542, 0.7978846
  %v1607 = vmul.f32 %v1543, 0.7978846
  %v1608 = vmul.f32 %v1544, 0.7978846
  %v1609 = vmul.f32 %v1545, 0.7978846
  %v1610 = vmul.f32 %v1546, 0.7978846
  %v1611 = vmul.f32 %v1547, 0.7978846
  %v1612 = vmul.f32 %v1548, 0.7978846
  %v1613 = vmul.f32 %v1549, 0.7978846
  %v1614 = vmul.f32 %v1550, 0.7978846
  %v1615 = vmul.f32 %v1551, 0.7978846
  %v1616 = vmul.f32 %v1552, 0.7978846
  %v1617 = vmul.f32 %v1553, 0.7978846
  %v1618 = vmul.f32 %v1554, 0.7978846
  %v1619 = vmul.f32 %v1555, 0.7978846
  %v1620 = vmul.f32 %v1556, 0.7978846
  %v1621 = vmul.f32 %v1557, 0.7978846
  %v1622 = vmul.f32 %v1558, 0.7978846
  %v1623 = vmul.f32 %v1559, 0.7978846
  %v1624 = vmul.f32 %v1560, 0.7978846
  %v1625 = vmul.f32 %v1561, 0.7978846
  %v1626 = vmul.f32 %v1562, 0.7978846
  %v1627 = vmul.f32 %v1563, 0.7978846
  %v1628 = vmul.f32 %v1564, 0.7978846
  %v1629 = vmul.f32 %v1565, 0.7978846
  %v1630 = vtanh.pop %v1566
  %v1631 = vtanh.pop %v1567
  %v1632 = vtanh.pop %v1568
  %v1633 = vtanh.pop %v1569
  %v1634 = vtanh.pop %v1570
  %v1635 = vtanh.pop %v1571
  %v1636 = vtanh.pop %v1572
  %v1637 = vtanh.pop %v1573
  %v1638 = vtanh.pop %v1574
  %v1639 = vtanh.pop %v1575
  %v1640 = vtanh.pop %v1576
  %v1641 = vtanh.pop %v1577
  %v1642 = vtanh.pop %v1578
  %v1643 = vtanh.pop %v1579
  %v1644 = vtanh.pop %v1580
  %v1645 = vtanh.pop %v1581
  %v1646 = vtanh.pop %v1582
  %v1647 = vtanh.pop %v1583
  %v1648 = vtanh.pop %v1584
  %v1649 = vtanh.pop %v1585
  %v1650 = vtanh.pop %v1586
  %v1651 = vtanh.pop %v1587
  %v1652 = vtanh.pop %v1588
  %v1653 = vtanh.pop %v1589
  %v1654 = vtanh.pop %v1590
  %v1655 = vtanh.pop %v1591
  %v1656 = vtanh.pop %v1592
  %v1657 = vtanh.pop %v1593
  %v1658 = vtanh.pop %v1594
  %v1659 = vtanh.pop %v1595
  %v1660 = vtanh.pop %v1596
  %v1661 = vtanh.pop %v1597
  %v1662 = vtanh.pop %v1598
  %v1663 = vtanh.pop %v1599
  %v1664 = vtanh.pop %v1600
  %v1665 = vtanh.pop %v1601
  %v1666 = vtanh.pop %v1602
  %v1667 = vtanh.pop %v1603
  %v1668 = vtanh.pop %v1604
  %v1669 = vtanh.pop %v1605
  %v1670 = vtanh.pop %v1606
  %v1671 = vtanh.pop %v1607
  %v1672 = vtanh.pop %v1608
  %v1673 = vtanh.pop %v1609
  %v1674 = vtanh.pop %v1610
  %v1675 = vtanh.pop %v1611
  %v1676 = vtanh.pop %v1612
  %v1677 = vtanh.pop %v1613
  %v1678 = vtanh.pop %v1614
  %v1679 = vtanh.pop %v1615
  %v1680 = vtanh.pop %v1616
  %v1681 = vtanh.pop %v1617
  %v1682 = vtanh.pop %v1618
  %v1683 = vtanh.pop %v1619
  %v1684 = vtanh.pop %v1620
  %v1685 = vtanh.pop %v1621
  %v1686 = vtanh.pop %v1622
  %v1687 = vtanh.pop %v1623
  %v1688 = vtanh.pop %v1624
  %v1689 = vtanh.pop %v1625
  %v1690 = vtanh.pop %v1626
  %v1691 = vtanh.pop %v1627
  %v1692 = vtanh.pop %v1628
  %v1693 = vtanh.pop %v1629
  %v1694 = vadd.f32 %v1630, 1.0
  %v1695 = vadd.f32 %v1631, 1.0
  %v1696 = vadd.f32 %v1632, 1.0
  %v1697 = vadd.f32 %v1633, 1.0
  %v1698 = vadd.f32 %v1634, 1.0
  %v1699 = vadd.f32 %v1635, 1.0
  %v1700 = vadd.f32 %v1636, 1.0
  %v1701 = vadd.f32 %v1637, 1.0
  %v1702 = vadd.f32 %v1638, 1.0
  %v1703 = vadd.f32 %v1639, 1.0
  %v1704 = vadd.f32 %v1640, 1.0
  %v1705 = vadd.f32 %v1641, 1.0
  %v1706 = vadd.f32 %v1642, 1.0
  %v1707 = vadd.f32 %v1643, 1.0
  %v1708 = vadd.f32 %v1644, 1.0
  %v1709 = vadd.f32 %v1645, 1.0
  %v1710 = vadd.f32 %v1646, 1.0
  %v1711 = vadd.f32 %v1647, 1.0
  %v1712 = vadd.f32 %v1648, 1.0
  %v1713 = vadd.f32 %v1649, 1.0
  %v1714 = vadd.f32 %v1650, 1.0
  %v1715 = vadd.f32 %v1651, 1.0
  %v1716 = vadd.f32 %v1652, 1.0
  %v1717 = vadd.f32 %v1653, 1.0
  %v1718 = vadd.f32 %v1654, 1.0
  %v1719 = vadd.f32 %v1655, 1.0
  %v1720 = vadd.f32 %v1656, 1.0
  %v1721 = vadd.f32 %v1657, 1.0
  %v1722 = vadd.f32 %v1658, 1.0
  %v1723 = vadd.f32 %v1659, 1.0
  %v1724 = vadd.f32 %v1660, 1.0
  %v1725 = vadd.f32 %v1661, 1.0
  %v1726 = vadd.f32 %v1662, 1.0
  %v1727 = vadd.f32 %v1663, 1.0
  %v1728 = vadd.f32 %v1664, 1.0
  %v1729 = vadd.f32 %v1665, 1.0
  %v1730 = vadd.f32 %v1666, 1.0
  %v1731 = vadd.f32 %v1667, 1.0
  %v1732 = vadd.f32 %v1668, 1.0
  %v1733 = vadd.f32 %v1669, 1.0
  %v1734 = vadd.f32 %v1670, 1.0
  %v1735 = vadd.f32 %v1671, 1.0
  %v1736 = vadd.f32 %v1672, 1.0
  %v1737 = vadd.f32 %v1673, 1.0
  %v1738 = vadd.f32 %v1674, 1.0
  %v1739 = vadd.f32 %v1675, 1.0
  %v1740 = vadd.f32 %v1676, 1.0
  %v1741 = vadd.f32 %v1677, 1.0
  %v1742 = vadd.f32 %v1678, 1.0
  %v1743 = vadd.f32 %v1679, 1.0
  %v1744 = vadd.f32 %v1680, 1.0
  %v1745 = vadd.f32 %v1681, 1.0
  %v1746 = vadd.f32 %v1682, 1.0
  %v1747 = vadd.f32 %v1683, 1.0
  %v1748 = vadd.f32 %v1684, 1.0
  %v1749 = vadd.f32 %v1685, 1.0
  %v1750 = vadd.f32 %v1686, 1.0
  %v1751 = vadd.f32 %v1687, 1.0
  %v1752 = vadd.f32 %v1688, 1.0
  %v1753 = vadd.f32 %v1689, 1.0
  %v1754 = vadd.f32 %v1690, 1.0
  %v1755 = vadd.f32 %v1691, 1.0
  %v1756 = vadd.f32 %v1692, 1.0
  %v1757 = vadd.f32 %v1693, 1.0
  %v1758 = vmul.f32 %v1246, %v1694
  %v1759 = vmul.f32 %v1247, %v1695
  %v1760 = vmul.f32 %v1248, %v1696
  %v1761 = vmul.f32 %v1249, %v1697
  %v1762 = vmul.f32 %v1250, %v1698
  %v1763 = vmul.f32 %v1251, %v1699
  %v1764 = vmul.f32 %v1252, %v1700
  %v1765 = vmul.f32 %v1253, %v1701
  %v1766 = vmul.f32 %v1254, %v1702
  %v1767 = vmul.f32 %v1255, %v1703
  %v1768 = vmul.f32 %v1256, %v1704
  %v1769 = vmul.f32 %v1257, %v1705
  %v1770 = vmul.f32 %v1258, %v1706
  %v1771 = vmul.f32 %v1259, %v1707
  %v1772 = vmul.f32 %v1260, %v1708
  %v1773 = vmul.f32 %v1261, %v1709
  %v1774 = vmul.f32 %v1262, %v1710
  %v1775 = vmul.f32 %v1263, %v1711
  %v1776 = vmul.f32 %v1264, %v1712
  %v1777 = vmul.f32 %v1265, %v1713
  %v1778 = vmul.f32 %v1266, %v1714
  %v1779 = vmul.f32 %v1267, %v1715
  %v1780 = vmul.f32 %v1268, %v1716
  %v1781 = vmul.f32 %v1269, %v1717
  %v1782 = vmul.f32 %v1270, %v1718
  %v1783 = vmul.f32 %v1271, %v1719
  %v1784 = vmul.f32 %v1272, %v1720
  %v1785 = vmul.f32 %v1273, %v1721
  %v1786 = vmul.f32 %v1274, %v1722
  %v1787 = vmul.f32 %v1275, %v1723
  %v1788 = vmul.f32 %v1276, %v1724
  %v1789 = vmul.f32 %v1277, %v1725
  %v1790 = vmul.f32 %v1278, %v1726
  %v1791 = vmul.f32 %v1279, %v1727
  %v1792 = vmul.f32 %v1280, %v1728
  %v1793 = vmul.f32 %v1281, %v1729
  %v1794 = vmul.f32 %v1282, %v1730
  %v1795 = vmul.f32 %v1283, %v1731
  %v1796 = vmul.f32 %v1284, %v1732
  %v1797 = vmul.f32 %v1285, %v1733
  %v1798 = vmul.f32 %v1286, %v1734
  %v1799 = vmul.f32 %v1287, %v1735
  %v1800 = vmul.f32 %v1288, %v1736
  %v1801 = vmul.f32 %v1289, %v1737
  %v1802 = vmul.f32 %v1290, %v1738
  %v1803 = vmul.f32 %v1291, %v1739
  %v1804 = vmul.f32 %v1292, %v1740
  %v1805 = vmul.f32 %v1293, %v1741
  %v1806 = vmul.f32 %v1294, %v1742
  %v1807 = vmul.f32 %v1295, %v1743
  %v1808 = vmul.f32 %v1296, %v1744
  %v1809 = vmul.f32 %v1297, %v1745
  %v1810 = vmul.f32 %v1298, %v1746
  %v1811 = vmul.f32 %v1299, %v1747
  %v1812 = vmul.f32 %v1300, %v1748
  %v1813 = vmul.f32 %v1301, %v1749
  %v1814 = vmul.f32 %v1302, %v1750
  %v1815 = vmul.f32 %v1303, %v1751
  %v1816 = vmul.f32 %v1304, %v1752
  %v1817 = vmul.f32 %v1305, %v1753
  %v1818 = vmul.f32 %v1306, %v1754
  %v1819 = vmul.f32 %v1307, %v1755
  %v1820 = vmul.f32 %v1308, %v1756
  %v1821 = vmul.f32 %v1309, %v1757
  %v1822 = vpack.c.bf16 %v1759, %v1758
  %v1823 = vpack.c.bf16 %v1761, %v1760
  %v1824 = vpack.c.bf16 %v1763, %v1762
  %v1825 = vpack.c.bf16 %v1765, %v1764
  %v1826 = vpack.c.bf16 %v1767, %v1766
  %v1827 = vpack.c.bf16 %v1769, %v1768
  %v1828 = vpack.c.bf16 %v1771, %v1770
  %v1829 = vpack.c.bf16 %v1773, %v1772
  %v1830 = vpack.c.bf16 %v1775, %v1774
  %v1831 = vpack.c.bf16 %v1777, %v1776
  %v1832 = vpack.c.bf16 %v1779, %v1778
  %v1833 = vpack.c.bf16 %v1781, %v1780
  %v1834 = vpack.c.bf16 %v1783, %v1782
  %v1835 = vpack.c.bf16 %v1785, %v1784
  %v1836 = vpack.c.bf16 %v1787, %v1786
  %v1837 = vpack.c.bf16 %v1789, %v1788
  %v1838 = vpack.c.bf16 %v1791, %v1790
  %v1839 = vpack.c.bf16 %v1793, %v1792
  %v1840 = vpack.c.bf16 %v1795, %v1794
  %v1841 = vpack.c.bf16 %v1797, %v1796
  %v1842 = vpack.c.bf16 %v1799, %v1798
  %v1843 = vpack.c.bf16 %v1801, %v1800
  %v1844 = vpack.c.bf16 %v1803, %v1802
  %v1845 = vpack.c.bf16 %v1805, %v1804
  %v1846 = vpack.c.bf16 %v1807, %v1806
  %v1847 = vpack.c.bf16 %v1809, %v1808
  %v1848 = vpack.c.bf16 %v1811, %v1810
  %v1849 = vpack.c.bf16 %v1813, %v1812
  %v1850 = vpack.c.bf16 %v1815, %v1814
  %v1851 = vpack.c.bf16 %v1817, %v1816
  %v1852 = vpack.c.bf16 %v1819, %v1818
  %v1853 = vpack.c.bf16 %v1821, %v1820
  %v1854 = vld [vmem:[%s3] sm:$0xf]
  %v1855 = vld [vmem:[%s3 + $0x4] sm:$0xf]
  %v1856 = vld [vmem:[%s3 + $0x8] sm:$0xf]
  %v1857 = vld [vmem:[%s3 + $0xc] sm:$0xf]
  %v1858 = vld [vmem:[%s3 + $0x10] sm:$0xf]
  %v1859 = vld [vmem:[%s3 + $0x14] sm:$0xf]
  %v1860 = vld [vmem:[%s3 + $0x18] sm:$0xf]
  %v1861 = vld [vmem:[%s3 + $0x1c] sm:$0xf]
  %v1862 = vld [vmem:[%s3 + $0x20] sm:$0xf]
  %v1863 = vld [vmem:[%s3 + $0x24] sm:$0xf]
  %v1864 = vld [vmem:[%s3 + $0x28] sm:$0xf]
  %v1865 = vld [vmem:[%s3 + $0x2c] sm:$0xf]
  %v1866 = vld [vmem:[%s3 + $0x30] sm:$0xf]
  %v1867 = vld [vmem:[%s3 + $0x34] sm:$0xf]
  %v1868 = vld [vmem:[%s3 + $0x38] sm:$0xf]
  %v1869 = vld [vmem:[%s3 + $0x3c] sm:$0xf]
  %v1870 = vld [vmem:[%s4] sm:$0x1]
  %v1872 = vlaneseq
  %v1873 = vshrl.u32 %v1872, 7
  %v1874 = vsub.s32 0, %v1873
  %v1875 = vrot.slane %v1870, %v1874
  %v1893 = vunpack.c.l.b16 %v1854
  %v1894 = vunpack.c.l.b16 %v1855
  %v1895 = vunpack.c.l.b16 %v1856
  %v1896 = vunpack.c.l.b16 %v1857
  %v1897 = vunpack.c.l.b16 %v1858
  %v1898 = vunpack.c.l.b16 %v1859
  %v1899 = vunpack.c.l.b16 %v1860
  %v1900 = vunpack.c.l.b16 %v1861
  %v1901 = vunpack.c.l.b16 %v1862
  %v1902 = vunpack.c.l.b16 %v1863
  %v1903 = vunpack.c.l.b16 %v1864
  %v1904 = vunpack.c.l.b16 %v1865
  %v1905 = vunpack.c.l.b16 %v1866
  %v1906 = vunpack.c.l.b16 %v1867
  %v1907 = vunpack.c.l.b16 %v1868
  %v1908 = vunpack.c.l.b16 %v1869
  %v1909 = vpack.c.b16 %v1894, %v1893
  %v1910 = vpack.c.b16 %v1896, %v1895
  %v1911 = vpack.c.b16 %v1898, %v1897
  %v1912 = vpack.c.b16 %v1900, %v1899
  %v1913 = vpack.c.b16 %v1902, %v1901
  %v1914 = vpack.c.b16 %v1904, %v1903
  %v1915 = vpack.c.b16 %v1906, %v1905
  %v1916 = vpack.c.b16 %v1908, %v1907
  %1925 = vmatprep.subr.bf16.mxu0 0
  %1926 = vmatpush1.bf16.msra.mxu0 %v1916
  %1927 = vmatprep.subr.bf16.mxu0 0
  %1928 = vmatpush1.bf16.msra.mxu0 %v1915
  %1929 = vmatprep.subr.bf16.mxu0 0
  %1930 = vmatpush1.bf16.msra.mxu0 %v1914
  %1931 = vmatprep.subr.bf16.mxu0 0
  %1932 = vmatpush1.bf16.msra.mxu0 %v1913
  %1933 = vmatprep.subr.bf16.mxu0 0
  %1934 = vmatpush1.bf16.msra.mxu0 %v1912
  %1935 = vmatprep.subr.bf16.mxu0 0
  %1936 = vmatpush1.bf16.msra.mxu0 %v1911
  %1937 = vmatprep.subr.bf16.mxu0 0
  %1938 = vmatpush1.bf16.msra.mxu0 %v1910
  %1939 = vmatprep.subr.bf16.mxu0 0
  %1940 = vmatpush1.bf16.msra.mxu0 %v1909
  %1941 = vmatprep.subr.bf16.mxu0 0
  %1942 = vmatpush2.bf16.msra.mxu0 0
  %1943 = vmatprep.subr.bf16.mxu0 0
  %1944 = vmatpush2.bf16.msra.mxu0 0
  %1945 = vmatprep.subr.bf16.mxu0 0
  %1946 = vmatpush2.bf16.msra.mxu0 0
  %1947 = vmatprep.subr.bf16.mxu0 0
  %1948 = vmatpush2.bf16.msra.mxu0 0
  %1949 = vmatprep.subr.bf16.mxu0 0
  %1950 = vmatpush2.bf16.msra.mxu0 0
  %1951 = vmatprep.subr.bf16.mxu0 0
  %1952 = vmatpush2.bf16.msra.mxu0 0
  %1953 = vmatprep.subr.bf16.mxu0 0
  %1954 = vmatpush2.bf16.msra.mxu0 0
  %1955 = vmatprep.subr.bf16.mxu0 0
  %1956 = vmatpush2.bf16.msra.mxu0 0
  %1957 = vmatprep.mubr.bf16.mxu0 0
  %1958 = vmatmul.mubr.bf16.gmra.mxu0 %v1822
  %v1959 = vpop.f32.mrf.mxu0
  %v1960 = vadd.f32 %v1875, %v1959
  %v1961 = vpop.f32.mrf.mxu0
  %v1962 = vpop.f32.mrf.mxu0
  %v1963 = vadd.f32 %v1875, %v1962
  %v1964 = vpop.f32.mrf.mxu0
  %1965 = vmatprep.mubr.bf16.mxu0 0
  %1966 = vmatmul.mubr.bf16.gmra.mxu0 %v1823
  %v1967 = vpop.f32.mrf.mxu0
  %v1968 = vadd.f32 %v1875, %v1967
  %v1969 = vpop.f32.mrf.mxu0
  %v1970 = vpop.f32.mrf.mxu0
  %v1971 = vadd.f32 %v1875, %v1970
  %v1972 = vpop.f32.mrf.mxu0
  %1973 = vmatprep.mubr.bf16.mxu0 0
  %1974 = vmatmul.mubr.bf16.gmra.mxu0 %v1824
  %v1975 = vpop.f32.mrf.mxu0
  %v1976 = vadd.f32 %v1875, %v1975
  %v1977 = vpop.f32.mrf.mxu0
  %v1978 = vpop.f32.mrf.mxu0
  %v1979 = vadd.f32 %v1875, %v1978
  %v1980 = vpop.f32.mrf.mxu0
  %1981 = vmatprep.mubr.bf16.mxu0 0
  %1982 = vmatmul.mubr.bf16.gmra.mxu0 %v1825
  %v1983 = vpop.f32.mrf.mxu0
  %v1984 = vadd.f32 %v1875, %v1983
  %v1985 = vpop.f32.mrf.mxu0
  %v1986 = vpop.f32.mrf.mxu0
  %v1987 = vadd.f32 %v1875, %v1986
  %v1988 = vpop.f32.mrf.mxu0
  %1989 = vmatprep.mubr.bf16.mxu0 0
  %1990 = vmatmul.mubr.bf16.gmra.mxu0 %v1826
  %v1991 = vpop.f32.mrf.mxu0
  %v1992 = vadd.f32 %v1875, %v1991
  %v1993 = vpop.f32.mrf.mxu0
  %v1994 = vpop.f32.mrf.mxu0
  %v1995 = vadd.f32 %v1875, %v1994
  %v1996 = vpop.f32.mrf.mxu0
  %1997 = vmatprep.mubr.bf16.mxu0 0
  %1998 = vmatmul.mubr.bf16.gmra.mxu0 %v1827
  %v1999 = vpop.f32.mrf.mxu0
  %v2000 = vadd.f32 %v1875, %v1999
  %v2001 = vpop.f32.mrf.mxu0
  %v2002 = vpop.f32.mrf.mxu0
  %v2003 = vadd.f32 %v1875, %v2002
  %v2004 = vpop.f32.mrf.mxu0
  %2005 = vmatprep.mubr.bf16.mxu0 0
  %2006 = vmatmul.mubr.bf16.gmra.mxu0 %v1828
  %v2007 = vpop.f32.mrf.mxu0
  %v2008 = vadd.f32 %v1875, %v2007
  %v2009 = vpop.f32.mrf.mxu0
  %v2010 = vpop.f32.mrf.mxu0
  %v2011 = vadd.f32 %v1875, %v2010
  %v2012 = vpop.f32.mrf.mxu0
  %2013 = vmatprep.mubr.bf16.mxu0 0
  %2014 = vmatmul.mubr.bf16.gmra.mxu0 %v1829
  %v2015 = vpop.f32.mrf.mxu0
  %v2016 = vadd.f32 %v1875, %v2015
  %v2017 = vpop.f32.mrf.mxu0
  %v2018 = vpop.f32.mrf.mxu0
  %v2019 = vadd.f32 %v1875, %v2018
  %v2020 = vpop.f32.mrf.mxu0
  %2021 = vmatprep.mubr.bf16.mxu0 0
  %2022 = vmatmul.mubr.bf16.gmra.mxu0 %v1830
  %v2023 = vpop.f32.mrf.mxu0
  %v2024 = vadd.f32 %v1875, %v2023
  %v2025 = vpop.f32.mrf.mxu0
  %v2026 = vpop.f32.mrf.mxu0
  %v2027 = vadd.f32 %v1875, %v2026
  %v2028 = vpop.f32.mrf.mxu0
  %2029 = vmatprep.mubr.bf16.mxu0 0
  %2030 = vmatmul.mubr.bf16.gmra.mxu0 %v1831
  %v2031 = vpop.f32.mrf.mxu0
  %v2032 = vadd.f32 %v1875, %v2031
  %v2033 = vpop.f32.mrf.mxu0
  %v2034 = vpop.f32.mrf.mxu0
  %v2035 = vadd.f32 %v1875, %v2034
  %v2036 = vpop.f32.mrf.mxu0
  %2037 = vmatprep.mubr.bf16.mxu0 0
  %2038 = vmatmul.mubr.bf16.gmra.mxu0 %v1832
  %v2039 = vpop.f32.mrf.mxu0
  %v2040 = vadd.f32 %v1875, %v2039
  %v2041 = vpop.f32.mrf.mxu0
  %v2042 = vpop.f32.mrf.mxu0
  %v2043 = vadd.f32 %v1875, %v2042
  %v2044 = vpop.f32.mrf.mxu0
  %2045 = vmatprep.mubr.bf16.mxu0 0
  %2046 = vmatmul.mubr.bf16.gmra.mxu0 %v1833
  %v2047 = vpop.f32.mrf.mxu0
  %v2048 = vadd.f32 %v1875, %v2047
  %v2049 = vpop.f32.mrf.mxu0
  %v2050 = vpop.f32.mrf.mxu0
  %v2051 = vadd.f32 %v1875, %v2050
  %v2052 = vpop.f32.mrf.mxu0
  %2053 = vmatprep.mubr.bf16.mxu0 0
  %2054 = vmatmul.mubr.bf16.gmra.mxu0 %v1834
  %v2055 = vpop.f32.mrf.mxu0
  %v2056 = vadd.f32 %v1875, %v2055
  %v2057 = vpop.f32.mrf.mxu0
  %v2058 = vpop.f32.mrf.mxu0
  %v2059 = vadd.f32 %v1875, %v2058
  %v2060 = vpop.f32.mrf.mxu0
  %2061 = vmatprep.mubr.bf16.mxu0 0
  %2062 = vmatmul.mubr.bf16.gmra.mxu0 %v1835
  %v2063 = vpop.f32.mrf.mxu0
  %v2064 = vadd.f32 %v1875, %v2063
  %v2065 = vpop.f32.mrf.mxu0
  %v2066 = vpop.f32.mrf.mxu0
  %v2067 = vadd.f32 %v1875, %v2066
  %v2068 = vpop.f32.mrf.mxu0
  %2069 = vmatprep.mubr.bf16.mxu0 0
  %2070 = vmatmul.mubr.bf16.gmra.mxu0 %v1836
  %v2071 = vpop.f32.mrf.mxu0
  %v2072 = vadd.f32 %v1875, %v2071
  %v2073 = vpop.f32.mrf.mxu0
  %v2074 = vpop.f32.mrf.mxu0
  %v2075 = vadd.f32 %v1875, %v2074
  %v2076 = vpop.f32.mrf.mxu0
  %2077 = vmatprep.mubr.bf16.mxu0 0
  %2078 = vmatmul.mubr.bf16.gmra.mxu0 %v1837
  %v2079 = vpop.f32.mrf.mxu0
  %v2080 = vadd.f32 %v1875, %v2079
  %v2081 = vpop.f32.mrf.mxu0
  %v2082 = vpop.f32.mrf.mxu0
  %v2083 = vadd.f32 %v1875, %v2082
  %v2084 = vpop.f32.mrf.mxu0
  %2085 = vmatprep.mubr.bf16.mxu0 0
  %2086 = vmatmul.mubr.bf16.gmra.mxu0 %v1838
  %v2087 = vpop.f32.mrf.mxu0
  %v2088 = vadd.f32 %v1875, %v2087
  %v2089 = vpop.f32.mrf.mxu0
  %v2090 = vpop.f32.mrf.mxu0
  %v2091 = vadd.f32 %v1875, %v2090
  %v2092 = vpop.f32.mrf.mxu0
  %2093 = vmatprep.mubr.bf16.mxu0 0
  %2094 = vmatmul.mubr.bf16.gmra.mxu0 %v1839
  %v2095 = vpop.f32.mrf.mxu0
  %v2096 = vadd.f32 %v1875, %v2095
  %v2097 = vpop.f32.mrf.mxu0
  %v2098 = vpop.f32.mrf.mxu0
  %v2099 = vadd.f32 %v1875, %v2098
  %v2100 = vpop.f32.mrf.mxu0
  %2101 = vmatprep.mubr.bf16.mxu0 0
  %2102 = vmatmul.mubr.bf16.gmra.mxu0 %v1840
  %v2103 = vpop.f32.mrf.mxu0
  %v2104 = vadd.f32 %v1875, %v2103
  %v2105 = vpop.f32.mrf.mxu0
  %v2106 = vpop.f32.mrf.mxu0
  %v2107 = vadd.f32 %v1875, %v2106
  %v2108 = vpop.f32.mrf.mxu0
  %2109 = vmatprep.mubr.bf16.mxu0 0
  %2110 = vmatmul.mubr.bf16.gmra.mxu0 %v1841
  %v2111 = vpop.f32.mrf.mxu0
  %v2112 = vadd.f32 %v1875, %v2111
  %v2113 = vpop.f32.mrf.mxu0
  %v2114 = vpop.f32.mrf.mxu0
  %v2115 = vadd.f32 %v1875, %v2114
  %v2116 = vpop.f32.mrf.mxu0
  %2117 = vmatprep.mubr.bf16.mxu0 0
  %2118 = vmatmul.mubr.bf16.gmra.mxu0 %v1842
  %v2119 = vpop.f32.mrf.mxu0
  %v2120 = vadd.f32 %v1875, %v2119
  %v2121 = vpop.f32.mrf.mxu0
  %v2122 = vpop.f32.mrf.mxu0
  %v2123 = vadd.f32 %v1875, %v2122
  %v2124 = vpop.f32.mrf.mxu0
  %2125 = vmatprep.mubr.bf16.mxu0 0
  %2126 = vmatmul.mubr.bf16.gmra.mxu0 %v1843
  %v2127 = vpop.f32.mrf.mxu0
  %v2128 = vadd.f32 %v1875, %v2127
  %v2129 = vpop.f32.mrf.mxu0
  %v2130 = vpop.f32.mrf.mxu0
  %v2131 = vadd.f32 %v1875, %v2130
  %v2132 = vpop.f32.mrf.mxu0
  %2133 = vmatprep.mubr.bf16.mxu0 0
  %2134 = vmatmul.mubr.bf16.gmra.mxu0 %v1844
  %v2135 = vpop.f32.mrf.mxu0
  %v2136 = vadd.f32 %v1875, %v2135
  %v2137 = vpop.f32.mrf.mxu0
  %v2138 = vpop.f32.mrf.mxu0
  %v2139 = vadd.f32 %v1875, %v2138
  %v2140 = vpop.f32.mrf.mxu0
  %2141 = vmatprep.mubr.bf16.mxu0 0
  %2142 = vmatmul.mubr.bf16.gmra.mxu0 %v1845
  %v2143 = vpop.f32.mrf.mxu0
  %v2144 = vadd.f32 %v1875, %v2143
  %v2145 = vpop.f32.mrf.mxu0
  %v2146 = vpop.f32.mrf.mxu0
  %v2147 = vadd.f32 %v1875, %v2146
  %v2148 = vpop.f32.mrf.mxu0
  %2149 = vmatprep.mubr.bf16.mxu0 0
  %2150 = vmatmul.mubr.bf16.gmra.mxu0 %v1846
  %v2151 = vpop.f32.mrf.mxu0
  %v2152 = vadd.f32 %v1875, %v2151
  %v2153 = vpop.f32.mrf.mxu0
  %v2154 = vpop.f32.mrf.mxu0
  %v2155 = vadd.f32 %v1875, %v2154
  %v2156 = vpop.f32.mrf.mxu0
  %2157 = vmatprep.mubr.bf16.mxu0 0
  %2158 = vmatmul.mubr.bf16.gmra.mxu0 %v1847
  %v2159 = vpop.f32.mrf.mxu0
  %v2160 = vadd.f32 %v1875, %v2159
  %v2161 = vpop.f32.mrf.mxu0
  %v2162 = vpop.f32.mrf.mxu0
  %v2163 = vadd.f32 %v1875, %v2162
  %v2164 = vpop.f32.mrf.mxu0
  %2165 = vmatprep.mubr.bf16.mxu0 0
  %2166 = vmatmul.mubr.bf16.gmra.mxu0 %v1848
  %v2167 = vpop.f32.mrf.mxu0
  %v2168 = vadd.f32 %v1875, %v2167
  %v2169 = vpop.f32.mrf.mxu0
  %v2170 = vpop.f32.mrf.mxu0
  %v2171 = vadd.f32 %v1875, %v2170
  %v2172 = vpop.f32.mrf.mxu0
  %2173 = vmatprep.mubr.bf16.mxu0 0
  %2174 = vmatmul.mubr.bf16.gmra.mxu0 %v1849
  %v2175 = vpop.f32.mrf.mxu0
  %v2176 = vadd.f32 %v1875, %v2175
  %v2177 = vpop.f32.mrf.mxu0
  %v2178 = vpop.f32.mrf.mxu0
  %v2179 = vadd.f32 %v1875, %v2178
  %v2180 = vpop.f32.mrf.mxu0
  %2181 = vmatprep.mubr.bf16.mxu0 0
  %2182 = vmatmul.mubr.bf16.gmra.mxu0 %v1850
  %v2183 = vpop.f32.mrf.mxu0
  %v2184 = vadd.f32 %v1875, %v2183
  %v2185 = vpop.f32.mrf.mxu0
  %v2186 = vpop.f32.mrf.mxu0
  %v2187 = vadd.f32 %v1875, %v2186
  %v2188 = vpop.f32.mrf.mxu0
  %2189 = vmatprep.mubr.bf16.mxu0 0
  %2190 = vmatmul.mubr.bf16.gmra.mxu0 %v1851
  %v2191 = vpop.f32.mrf.mxu0
  %v2192 = vadd.f32 %v1875, %v2191
  %v2193 = vpop.f32.mrf.mxu0
  %v2194 = vpop.f32.mrf.mxu0
  %v2195 = vadd.f32 %v1875, %v2194
  %v2196 = vpop.f32.mrf.mxu0
  %2197 = vmatprep.mubr.bf16.mxu0 0
  %2198 = vmatmul.mubr.bf16.gmra.mxu0 %v1852
  %v2199 = vpop.f32.mrf.mxu0
  %v2200 = vadd.f32 %v1875, %v2199
  %v2201 = vpop.f32.mrf.mxu0
  %v2202 = vpop.f32.mrf.mxu0
  %v2203 = vadd.f32 %v1875, %v2202
  %v2204 = vpop.f32.mrf.mxu0
  %2205 = vmatprep.mubr.bf16.mxu0 0
  %2206 = vmatmul.mubr.bf16.gmra.mxu0 %v1853
  %v2207 = vpop.f32.mrf.mxu0
  %v2208 = vadd.f32 %v1875, %v2207
  %v2209 = vpop.f32.mrf.mxu0
  %v2210 = vpop.f32.mrf.mxu0
  %v2211 = vadd.f32 %v1875, %v2210
  %v2212 = vpop.f32.mrf.mxu0
  %2213 = vdwg.mxu0
  %v2214 = vadd.f32 %v85, %v1960
  %v2215 = vadd.f32 %v86, %v1963
  %v2216 = vadd.f32 %v87, %v1968
  %v2217 = vadd.f32 %v88, %v1971
  %v2218 = vadd.f32 %v89, %v1976
  %v2219 = vadd.f32 %v90, %v1979
  %v2220 = vadd.f32 %v91, %v1984
  %v2221 = vadd.f32 %v92, %v1987
  %v2222 = vadd.f32 %v93, %v1992
  %v2223 = vadd.f32 %v94, %v1995
  %v2224 = vadd.f32 %v95, %v2000
  %v2225 = vadd.f32 %v96, %v2003
  %v2226 = vadd.f32 %v97, %v2008
  %v2227 = vadd.f32 %v98, %v2011
  %v2228 = vadd.f32 %v99, %v2016
  %v2229 = vadd.f32 %v100, %v2019
  %v2230 = vadd.f32 %v101, %v2024
  %v2231 = vadd.f32 %v102, %v2027
  %v2232 = vadd.f32 %v103, %v2032
  %v2233 = vadd.f32 %v104, %v2035
  %v2234 = vadd.f32 %v105, %v2040
  %v2235 = vadd.f32 %v106, %v2043
  %v2236 = vadd.f32 %v107, %v2048
  %v2237 = vadd.f32 %v108, %v2051
  %v2238 = vadd.f32 %v109, %v2056
  %v2239 = vadd.f32 %v110, %v2059
  %v2240 = vadd.f32 %v111, %v2064
  %v2241 = vadd.f32 %v112, %v2067
  %v2242 = vadd.f32 %v113, %v2072
  %v2243 = vadd.f32 %v114, %v2075
  %v2244 = vadd.f32 %v115, %v2080
  %v2245 = vadd.f32 %v116, %v2083
  %v2246 = vadd.f32 %v117, %v2088
  %v2247 = vadd.f32 %v118, %v2091
  %v2248 = vadd.f32 %v119, %v2096
  %v2249 = vadd.f32 %v120, %v2099
  %v2250 = vadd.f32 %v121, %v2104
  %v2251 = vadd.f32 %v122, %v2107
  %v2252 = vadd.f32 %v123, %v2112
  %v2253 = vadd.f32 %v124, %v2115
  %v2254 = vadd.f32 %v125, %v2120
  %v2255 = vadd.f32 %v126, %v2123
  %v2256 = vadd.f32 %v127, %v2128
  %v2257 = vadd.f32 %v128, %v2131
  %v2258 = vadd.f32 %v129, %v2136
  %v2259 = vadd.f32 %v130, %v2139
  %v2260 = vadd.f32 %v131, %v2144
  %v2261 = vadd.f32 %v132, %v2147
  %v2262 = vadd.f32 %v133, %v2152
  %v2263 = vadd.f32 %v134, %v2155
  %v2264 = vadd.f32 %v135, %v2160
  %v2265 = vadd.f32 %v136, %v2163
  %v2266 = vadd.f32 %v137, %v2168
  %v2267 = vadd.f32 %v138, %v2171
  %v2268 = vadd.f32 %v139, %v2176
  %v2269 = vadd.f32 %v140, %v2179
  %v2270 = vadd.f32 %v141, %v2184
  %v2271 = vadd.f32 %v142, %v2187
  %v2272 = vadd.f32 %v143, %v2192
  %v2273 = vadd.f32 %v144, %v2195
  %v2274 = vadd.f32 %v145, %v2200
  %v2275 = vadd.f32 %v146, %v2203
  %v2276 = vadd.f32 %v147, %v2208
  %v2277 = vadd.f32 %v148, %v2211
  %v2278 = vpack.c.bf16 %v2215, %v2214
  %v2279 = vpack.c.bf16 %v2217, %v2216
  %v2280 = vpack.c.bf16 %v2219, %v2218
  %v2281 = vpack.c.bf16 %v2221, %v2220
  %v2282 = vpack.c.bf16 %v2223, %v2222
  %v2283 = vpack.c.bf16 %v2225, %v2224
  %v2284 = vpack.c.bf16 %v2227, %v2226
  %v2285 = vpack.c.bf16 %v2229, %v2228
  %v2286 = vpack.c.bf16 %v2231, %v2230
  %v2287 = vpack.c.bf16 %v2233, %v2232
  %v2288 = vpack.c.bf16 %v2235, %v2234
  %v2289 = vpack.c.bf16 %v2237, %v2236
  %v2290 = vpack.c.bf16 %v2239, %v2238
  %v2291 = vpack.c.bf16 %v2241, %v2240
  %v2292 = vpack.c.bf16 %v2243, %v2242
  %v2293 = vpack.c.bf16 %v2245, %v2244
  %v2294 = vpack.c.bf16 %v2247, %v2246
  %v2295 = vpack.c.bf16 %v2249, %v2248
  %v2296 = vpack.c.bf16 %v2251, %v2250
  %v2297 = vpack.c.bf16 %v2253, %v2252
  %v2298 = vpack.c.bf16 %v2255, %v2254
  %v2299 = vpack.c.bf16 %v2257, %v2256
  %v2300 = vpack.c.bf16 %v2259, %v2258
  %v2301 = vpack.c.bf16 %v2261, %v2260
  %v2302 = vpack.c.bf16 %v2263, %v2262
  %v2303 = vpack.c.bf16 %v2265, %v2264
  %v2304 = vpack.c.bf16 %v2267, %v2266
  %v2305 = vpack.c.bf16 %v2269, %v2268
  %v2306 = vpack.c.bf16 %v2271, %v2270
  %v2307 = vpack.c.bf16 %v2273, %v2272
  %v2308 = vpack.c.bf16 %v2275, %v2274
  %v2309 = vpack.c.bf16 %v2277, %v2276
  %v2342 = vunpack.c.l.b16 %v2278
  %v2343 = vunpack.c.h.b16 %v2278
  %v2344 = vunpack.c.l.b16 %v2279
  %v2345 = vunpack.c.h.b16 %v2279
  %v2346 = vunpack.c.l.b16 %v2280
  %v2347 = vunpack.c.h.b16 %v2280
  %v2348 = vunpack.c.l.b16 %v2281
  %v2349 = vunpack.c.h.b16 %v2281
  %v2350 = vunpack.c.l.b16 %v2282
  %v2351 = vunpack.c.h.b16 %v2282
  %v2352 = vunpack.c.l.b16 %v2283
  %v2353 = vunpack.c.h.b16 %v2283
  %v2354 = vunpack.c.l.b16 %v2284
  %v2355 = vunpack.c.h.b16 %v2284
  %v2356 = vunpack.c.l.b16 %v2285
  %v2357 = vunpack.c.h.b16 %v2285
  %v2358 = vunpack.c.l.b16 %v2286
  %v2359 = vunpack.c.h.b16 %v2286
  %v2360 = vunpack.c.l.b16 %v2287
  %v2361 = vunpack.c.h.b16 %v2287
  %v2362 = vunpack.c.l.b16 %v2288
  %v2363 = vunpack.c.h.b16 %v2288
  %v2364 = vunpack.c.l.b16 %v2289
  %v2365 = vunpack.c.h.b16 %v2289
  %v2366 = vunpack.c.l.b16 %v2290
  %v2367 = vunpack.c.h.b16 %v2290
  %v2368 = vunpack.c.l.b16 %v2291
  %v2369 = vunpack.c.h.b16 %v2291
  %v2370 = vunpack.c.l.b16 %v2292
  %v2371 = vunpack.c.h.b16 %v2292
  %v2372 = vunpack.c.l.b16 %v2293
  %v2373 = vunpack.c.h.b16 %v2293
  %v2374 = vunpack.c.l.b16 %v2294
  %v2375 = vunpack.c.h.b16 %v2294
  %v2376 = vunpack.c.l.b16 %v2295
  %v2377 = vunpack.c.h.b16 %v2295
  %v2378 = vunpack.c.l.b16 %v2296
  %v2379 = vunpack.c.h.b16 %v2296
  %v2380 = vunpack.c.l.b16 %v2297
  %v2381 = vunpack.c.h.b16 %v2297
  %v2382 = vunpack.c.l.b16 %v2298
  %v2383 = vunpack.c.h.b16 %v2298
  %v2384 = vunpack.c.l.b16 %v2299
  %v2385 = vunpack.c.h.b16 %v2299
  %v2386 = vunpack.c.l.b16 %v2300
  %v2387 = vunpack.c.h.b16 %v2300
  %v2388 = vunpack.c.l.b16 %v2301
  %v2389 = vunpack.c.h.b16 %v2301
  %v2390 = vunpack.c.l.b16 %v2302
  %v2391 = vunpack.c.h.b16 %v2302
  %v2392 = vunpack.c.l.b16 %v2303
  %v2393 = vunpack.c.h.b16 %v2303
  %v2394 = vunpack.c.l.b16 %v2304
  %v2395 = vunpack.c.h.b16 %v2304
  %v2396 = vunpack.c.l.b16 %v2305
  %v2397 = vunpack.c.h.b16 %v2305
  %v2398 = vunpack.c.l.b16 %v2306
  %v2399 = vunpack.c.h.b16 %v2306
  %v2400 = vunpack.c.l.b16 %v2307
  %v2401 = vunpack.c.h.b16 %v2307
  %v2402 = vunpack.c.l.b16 %v2308
  %v2403 = vunpack.c.h.b16 %v2308
  %v2404 = vunpack.c.l.b16 %v2309
  %v2405 = vunpack.c.h.b16 %v2309
  %v2406 = vpack.c.b16 %v2342, %v2342
  %v2407 = vpack.c.b16 %v2343, %v2343
  %v2408 = vpack.c.b16 %v2344, %v2344
  %v2409 = vpack.c.b16 %v2345, %v2345
  %v2410 = vpack.c.b16 %v2346, %v2346
  %v2411 = vpack.c.b16 %v2347, %v2347
  %v2412 = vpack.c.b16 %v2348, %v2348
  %v2413 = vpack.c.b16 %v2349, %v2349
  %v2414 = vpack.c.b16 %v2350, %v2350
  %v2415 = vpack.c.b16 %v2351, %v2351
  %v2416 = vpack.c.b16 %v2352, %v2352
  %v2417 = vpack.c.b16 %v2353, %v2353
  %v2418 = vpack.c.b16 %v2354, %v2354
  %v2419 = vpack.c.b16 %v2355, %v2355
  %v2420 = vpack.c.b16 %v2356, %v2356
  %v2421 = vpack.c.b16 %v2357, %v2357
  %v2422 = vpack.c.b16 %v2358, %v2358
  %v2423 = vpack.c.b16 %v2359, %v2359
  %v2424 = vpack.c.b16 %v2360, %v2360
  %v2425 = vpack.c.b16 %v2361, %v2361
  %v2426 = vpack.c.b16 %v2362, %v2362
  %v2427 = vpack.c.b16 %v2363, %v2363
  %v2428 = vpack.c.b16 %v2364, %v2364
  %v2429 = vpack.c.b16 %v2365, %v2365
  %v2430 = vpack.c.b16 %v2366, %v2366
  %v2431 = vpack.c.b16 %v2367, %v2367
  %v2432 = vpack.c.b16 %v2368, %v2368
  %v2433 = vpack.c.b16 %v2369, %v2369
  %v2434 = vpack.c.b16 %v2370, %v2370
  %v2435 = vpack.c.b16 %v2371, %v2371
  %v2436 = vpack.c.b16 %v2372, %v2372
  %v2437 = vpack.c.b16 %v2373, %v2373
  %v2438 = vpack.c.b16 %v2374, %v2374
  %v2439 = vpack.c.b16 %v2375, %v2375
  %v2440 = vpack.c.b16 %v2376, %v2376
  %v2441 = vpack.c.b16 %v2377, %v2377
  %v2442 = vpack.c.b16 %v2378, %v2378
  %v2443 = vpack.c.b16 %v2379, %v2379
  %v2444 = vpack.c.b16 %v2380, %v2380
  %v2445 = vpack.c.b16 %v2381, %v2381
  %v2446 = vpack.c.b16 %v2382, %v2382
  %v2447 = vpack.c.b16 %v2383, %v2383
  %v2448 = vpack.c.b16 %v2384, %v2384
  %v2449 = vpack.c.b16 %v2385, %v2385
  %v2450 = vpack.c.b16 %v2386, %v2386
  %v2451 = vpack.c.b16 %v2387, %v2387
  %v2452 = vpack.c.b16 %v2388, %v2388
  %v2453 = vpack.c.b16 %v2389, %v2389
  %v2454 = vpack.c.b16 %v2390, %v2390
  %v2455 = vpack.c.b16 %v2391, %v2391
  %v2456 = vpack.c.b16 %v2392, %v2392
  %v2457 = vpack.c.b16 %v2393, %v2393
  %v2458 = vpack.c.b16 %v2394, %v2394
  %v2459 = vpack.c.b16 %v2395, %v2395
  %v2460 = vpack.c.b16 %v2396, %v2396
  %v2461 = vpack.c.b16 %v2397, %v2397
  %v2462 = vpack.c.b16 %v2398, %v2398
  %v2463 = vpack.c.b16 %v2399, %v2399
  %v2464 = vpack.c.b16 %v2400, %v2400
  %v2465 = vpack.c.b16 %v2401, %v2401
  %v2466 = vpack.c.b16 %v2402, %v2402
  %v2467 = vpack.c.b16 %v2403, %v2403
  %v2468 = vpack.c.b16 %v2404, %v2404
  %v2469 = vpack.c.b16 %v2405, %v2405
  %2534 = vst [vmem:[%s5] sm:$0xf] %v2406
  %2535 = vst [vmem:[%s5 + $0x4] sm:$0xf] %v2407
  %2536 = vst [vmem:[%s5 + $0x8] sm:$0xf] %v2408
  %2537 = vst [vmem:[%s5 + $0xc] sm:$0xf] %v2409
  %2538 = vst [vmem:[%s5 + $0x10] sm:$0xf] %v2410
  %2539 = vst [vmem:[%s5 + $0x14] sm:$0xf] %v2411
  %2540 = vst [vmem:[%s5 + $0x18] sm:$0xf] %v2412
  %2541 = vst [vmem:[%s5 + $0x1c] sm:$0xf] %v2413
  %2542 = vst [vmem:[%s5 + $0x20] sm:$0xf] %v2414
  %2543 = vst [vmem:[%s5 + $0x24] sm:$0xf] %v2415
  %2544 = vst [vmem:[%s5 + $0x28] sm:$0xf] %v2416
  %2545 = vst [vmem:[%s5 + $0x2c] sm:$0xf] %v2417
  %2546 = vst [vmem:[%s5 + $0x30] sm:$0xf] %v2418
  %2547 = vst [vmem:[%s5 + $0x34] sm:$0xf] %v2419
  %2548 = vst [vmem:[%s5 + $0x38] sm:$0xf] %v2420
  %2549 = vst [vmem:[%s5 + $0x3c] sm:$0xf] %v2421
  %2550 = vst [vmem:[%s5 + $0x40] sm:$0xf] %v2422
  %2551 = vst [vmem:[%s5 + $0x44] sm:$0xf] %v2423
  %2552 = vst [vmem:[%s5 + $0x48] sm:$0xf] %v2424
  %2553 = vst [vmem:[%s5 + $0x4c] sm:$0xf] %v2425
  %2554 = vst [vmem:[%s5 + $0x50] sm:$0xf] %v2426
  %2555 = vst [vmem:[%s5 + $0x54] sm:$0xf] %v2427
  %2556 = vst [vmem:[%s5 + $0x58] sm:$0xf] %v2428
  %2557 = vst [vmem:[%s5 + $0x5c] sm:$0xf] %v2429
  %2558 = vst [vmem:[%s5 + $0x60] sm:$0xf] %v2430
  %2559 = vst [vmem:[%s5 + $0x64] sm:$0xf] %v2431
  %2560 = vst [vmem:[%s5 + $0x68] sm:$0xf] %v2432
  %2561 = vst [vmem:[%s5 + $0x6c] sm:$0xf] %v2433
  %2562 = vst [vmem:[%s5 + $0x70] sm:$0xf] %v2434
  %2563 = vst [vmem:[%s5 + $0x74] sm:$0xf] %v2435
  %2564 = vst [vmem:[%s5 + $0x78] sm:$0xf] %v2436
  %2565 = vst [vmem:[%s5 + $0x7c] sm:$0xf] %v2437
  %2566 = vst [vmem:[%s5 + $0x80] sm:$0xf] %v2438
  %2567 = vst [vmem:[%s5 + $0x84] sm:$0xf] %v2439
  %2568 = vst [vmem:[%s5 + $0x88] sm:$0xf] %v2440
  %2569 = vst [vmem:[%s5 + $0x8c] sm:$0xf] %v2441
  %2570 = vst [vmem:[%s5 + $0x90] sm:$0xf] %v2442
  %2571 = vst [vmem:[%s5 + $0x94] sm:$0xf] %v2443
  %2572 = vst [vmem:[%s5 + $0x98] sm:$0xf] %v2444
  %2573 = vst [vmem:[%s5 + $0x9c] sm:$0xf] %v2445
  %2574 = vst [vmem:[%s5 + $0xa0] sm:$0xf] %v2446
  %2575 = vst [vmem:[%s5 + $0xa4] sm:$0xf] %v2447
  %2576 = vst [vmem:[%s5 + $0xa8] sm:$0xf] %v2448
  %2577 = vst [vmem:[%s5 + $0xac] sm:$0xf] %v2449
  %2578 = vst [vmem:[%s5 + $0xb0] sm:$0xf] %v2450
  %2579 = vst [vmem:[%s5 + $0xb4] sm:$0xf] %v2451
  %2580 = vst [vmem:[%s5 + $0xb8] sm:$0xf] %v2452
  %2581 = vst [vmem:[%s5 + $0xbc] sm:$0xf] %v2453
  %2582 = vst [vmem:[%s5 + $0xc0] sm:$0xf] %v2454
  %2583 = vst [vmem:[%s5 + $0xc4] sm:$0xf] %v2455
  %2584 = vst [vmem:[%s5 + $0xc8] sm:$0xf] %v2456
  %2585 = vst [vmem:[%s5 + $0xcc] sm:$0xf] %v2457
  %2586 = vst [vmem:[%s5 + $0xd0] sm:$0xf] %v2458
  %2587 = vst [vmem:[%s5 + $0xd4] sm:$0xf] %v2459
  %2588 = vst [vmem:[%s5 + $0xd8] sm:$0xf] %v2460
  %2589 = vst [vmem:[%s5 + $0xdc] sm:$0xf] %v2461
  %2590 = vst [vmem:[%s5 + $0xe0] sm:$0xf] %v2462
  %2591 = vst [vmem:[%s5 + $0xe4] sm:$0xf] %v2463
  %2592 = vst [vmem:[%s5 + $0xe8] sm:$0xf] %v2464
  %2593 = vst [vmem:[%s5 + $0xec] sm:$0xf] %v2465
  %2594 = vst [vmem:[%s5 + $0xf0] sm:$0xf] %v2466
  %2595 = vst [vmem:[%s5 + $0xf4] sm:$0xf] %v2467
  %2596 = vst [vmem:[%s5 + $0xf8] sm:$0xf] %v2468
  %2597 = vst [vmem:[%s5 + $0xfc] sm:$0xf] %v2469
  // Predicated region
  $region22: #{basic_stage.9} parent=0 // pred_check
    _
  $region23: #{basic_stage.9} parent=0 // pred_check_branch
    %2599 = sbr.rel (0) target = $region25
  $region24: #{basic_stage.9} parent=0 // pred_region
    _
  $region25: #{basic_stage.9} parent=0 // pred_fallthru
    _
  // Predicated region
  $region26: #{basic_stage.9} parent=0 // pred_check
    _
  $region27: #{basic_stage.9} parent=0 // pred_check_branch
    %2601 = sbr.rel (0) target = $region29
  $region28: #{basic_stage.9} parent=0 // pred_region
    _
  $region29: #{basic_stage.9} parent=0 // pred_fallthru
    _

// kernel: basic_stage.7
$region0: #{basic_stage.7}
  #allocation0 [shape = 'u32[]', space=smem, size = 0x4, offset = 0x4, fixed_abs, tag = 'smem constant byte address 0x4 - core index']
  #allocation1 [shape = 'u32[144,128]{1,0:T(1,128)}', space=vmem, size = 0x12000, scoped, tag = 'internal scratch']
  %s0 = inlined_call_operand.vmem [shape: bf16[512,128], index: 0, kind: input, shape index: {}, may-alias: {0,7}]
  %s1 = inlined_call_operand.vmem [shape: bf16[128,128], index: 1, kind: input, shape index: {}]
  %s2 = inlined_call_operand.vmem [shape: f32[1,128], index: 2, kind: input, shape index: {}]
  %s3 = inlined_call_operand.vmem [shape: bf16[128,128], index: 3, kind: input, shape index: {}]
  %s4 = inlined_call_operand.vmem [shape: f32[1,128], index: 4, kind: input, shape index: {}]
  %s5 = inlined_call_operand.vmem [shape: f32[1,128], index: 5, kind: input, shape index: {}]
  %s6 = inlined_call_operand.vmem [shape: f32[1,128], index: 6, kind: input, shape index: {}]
  %s7 = inlined_call_operand.vmem [shape: bf16[512,128], index: 7, kind: output, shape index: {}, may-alias: {0,7}]
  %s8 = sld [smem:[#allocation0]]
  $region38: #{basic_stage.7} parent=0
    _
  %s10 = ssub.s32 1, %s8
  %s11 = scalar_select 0, %s10, %s8
  // Predicated region
  $region2: #{basic_stage.7} parent=0 // pred_check
    _
  $region3: #{basic_stage.7} parent=0 // pred_check_branch
    %13 = sbr.rel (0) target = $region5
  $region4: #{basic_stage.7} parent=0 // pred_region
    _
  $region5: #{basic_stage.7} parent=0 // pred_fallthru
    _
  // Predicated region
  $region6: #{basic_stage.7} parent=0 // pred_check
    _
  $region7: #{basic_stage.7} parent=0 // pred_check_branch
    %15 = sbr.rel (0) target = $region9
  $region8: #{basic_stage.7} parent=0 // pred_region
    _
  $region9: #{basic_stage.7} parent=0 // pred_fallthru
    _
  // Predicated region
  $region10: #{basic_stage.7} parent=0 // pred_check
    _
  $region11: #{basic_stage.7} parent=0 // pred_check_branch
    %17 = sbr.rel (0) target = $region13
  $region12: #{basic_stage.7} parent=0 // pred_region
    _
  $region13: #{basic_stage.7} parent=0 // pred_fallthru
    _
  // Predicated region
  $region14: #{basic_stage.7} parent=0 // pred_check
    _
  $region15: #{basic_stage.7} parent=0 // pred_check_branch
    %19 = sbr.rel (0) target = $region17
  $region16: #{basic_stage.7} parent=0 // pred_region
    _
  $region17: #{basic_stage.7} parent=0 // pred_fallthru
    _
  // Predicated region
  $region18: #{basic_stage.7} parent=0 // pred_check
    _
  $region19: #{basic_stage.7} parent=0 // pred_check_branch
    %21 = sbr.rel (0) target = $region21
  $region20: #{basic_stage.7} parent=0 // pred_region
    _
  $region21: #{basic_stage.7} parent=0 // pred_fallthru
    _
  // Predicated region
  $region22: #{basic_stage.7} parent=0 // pred_check
    _
  $region23: #{basic_stage.7} parent=0 // pred_check_branch
    %23 = sbr.rel (0) target = $region25
  $region24: #{basic_stage.7} parent=0 // pred_region
    _
  $region25: #{basic_stage.7} parent=0 // pred_fallthru
    _
  // Predicated region
  $region26: #{basic_stage.7} parent=0 // pred_check
    _
  $region27: #{basic_stage.7} parent=0 // pred_check_branch
    %25 = sbr.rel (0) target = $region29
  $region28: #{basic_stage.7} parent=0 // pred_region
    _
  $region29: #{basic_stage.7} parent=0 // pred_fallthru
    _
  %v27 = vld [vmem:[%s0] sm:$0xf]
  %v28 = vld [vmem:[%s0 + $0x4] sm:$0xf]
  %v29 = vld [vmem:[%s0 + $0x8] sm:$0xf]
  %v30 = vld [vmem:[%s0 + $0xc] sm:$0xf]
  %v31 = vld [vmem:[%s0 + $0x10] sm:$0xf]
  %v32 = vld [vmem:[%s0 + $0x14] sm:$0xf]
  %v33 = vld [vmem:[%s0 + $0x18] sm:$0xf]
  %v34 = vld [vmem:[%s0 + $0x1c] sm:$0xf]
  %v35 = vld [vmem:[%s0 + $0x20] sm:$0xf]
  %v36 = vld [vmem:[%s0 + $0x24] sm:$0xf]
  %v37 = vld [vmem:[%s0 + $0x28] sm:$0xf]
  %v38 = vld [vmem:[%s0 + $0x2c] sm:$0xf]
  %v39 = vld [vmem:[%s0 + $0x30] sm:$0xf]
  %v40 = vld [vmem:[%s0 + $0x34] sm:$0xf]
  %v41 = vld [vmem:[%s0 + $0x38] sm:$0xf]
  %v42 = vld [vmem:[%s0 + $0x3c] sm:$0xf]
  %v43 = vld [vmem:[%s0 + $0x40] sm:$0xf]
  %v44 = vld [vmem:[%s0 + $0x44] sm:$0xf]
  %v45 = vld [vmem:[%s0 + $0x48] sm:$0xf]
  %v46 = vld [vmem:[%s0 + $0x4c] sm:$0xf]
  %v47 = vld [vmem:[%s0 + $0x50] sm:$0xf]
  %v48 = vld [vmem:[%s0 + $0x54] sm:$0xf]
  %v49 = vld [vmem:[%s0 + $0x58] sm:$0xf]
  %v50 = vld [vmem:[%s0 + $0x5c] sm:$0xf]
  %v51 = vld [vmem:[%s0 + $0x60] sm:$0xf]
  %v52 = vld [vmem:[%s0 + $0x64] sm:$0xf]
  %v53 = vld [vmem:[%s0 + $0x68] sm:$0xf]
  %v54 = vld [vmem:[%s0 + $0x6c] sm:$0xf]
  %v55 = vld [vmem:[%s0 + $0x70] sm:$0xf]
  %v56 = vld [vmem:[%s0 + $0x74] sm:$0xf]
  %v57 = vld [vmem:[%s0 + $0x78] sm:$0xf]
  %v58 = vld [vmem:[%s0 + $0x7c] sm:$0xf]
  %v59 = vld [vmem:[%s0 + $0x80] sm:$0xf]
  %v60 = vld [vmem:[%s0 + $0x84] sm:$0xf]
  %v61 = vld [vmem:[%s0 + $0x88] sm:$0xf]
  %v62 = vld [vmem:[%s0 + $0x8c] sm:$0xf]
  %v63 = vld [vmem:[%s0 + $0x90] sm:$0xf]
  %v64 = vld [vmem:[%s0 + $0x94] sm:$0xf]
  %v65 = vld [vmem:[%s0 + $0x98] sm:$0xf]
  %v66 = vld [vmem:[%s0 + $0x9c] sm:$0xf]
  %v67 = vld [vmem:[%s0 + $0xa0] sm:$0xf]
  %v68 = vld [vmem:[%s0 + $0xa4] sm:$0xf]
  %v69 = vld [vmem:[%s0 + $0xa8] sm:$0xf]
  %v70 = vld [vmem:[%s0 + $0xac] sm:$0xf]
  %v71 = vld [vmem:[%s0 + $0xb0] sm:$0xf]
  %v72 = vld [vmem:[%s0 + $0xb4] sm:$0xf]
  %v73 = vld [vmem:[%s0 + $0xb8] sm:$0xf]
  %v74 = vld [vmem:[%s0 + $0xbc] sm:$0xf]
  %v75 = vld [vmem:[%s0 + $0xc0] sm:$0xf]
  %v76 = vld [vmem:[%s0 + $0xc4] sm:$0xf]
  %v77 = vld [vmem:[%s0 + $0xc8] sm:$0xf]
  %v78 = vld [vmem:[%s0 + $0xcc] sm:$0xf]
  %v79 = vld [vmem:[%s0 + $0xd0] sm:$0xf]
  %v80 = vld [vmem:[%s0 + $0xd4] sm:$0xf]
  %v81 = vld [vmem:[%s0 + $0xd8] sm:$0xf]
  %v82 = vld [vmem:[%s0 + $0xdc] sm:$0xf]
  %v83 = vld [vmem:[%s0 + $0xe0] sm:$0xf]
  %v84 = vld [vmem:[%s0 + $0xe4] sm:$0xf]
  %v85 = vld [vmem:[%s0 + $0xe8] sm:$0xf]
  %v86 = vld [vmem:[%s0 + $0xec] sm:$0xf]
  %v87 = vld [vmem:[%s0 + $0xf0] sm:$0xf]
  %v88 = vld [vmem:[%s0 + $0xf4] sm:$0xf]
  %v89 = vld [vmem:[%s0 + $0xf8] sm:$0xf]
  %v90 = vld [vmem:[%s0 + $0xfc] sm:$0xf]
  %v91 = vunpack.c.l.bf16 %v27
  %v92 = vunpack.c.l.bf16 %v28
  %v93 = vunpack.c.l.bf16 %v29
  %v94 = vunpack.c.l.bf16 %v30
  %v95 = vunpack.c.l.bf16 %v31
  %v96 = vunpack.c.l.bf16 %v32
  %v97 = vunpack.c.l.bf16 %v33
  %v98 = vunpack.c.l.bf16 %v34
  %v99 = vunpack.c.l.bf16 %v35
  %v100 = vunpack.c.l.bf16 %v36
  %v101 = vunpack.c.l.bf16 %v37
  %v102 = vunpack.c.l.bf16 %v38
  %v103 = vunpack.c.l.bf16 %v39
  %v104 = vunpack.c.l.bf16 %v40
  %v105 = vunpack.c.l.bf16 %v41
  %v106 = vunpack.c.l.bf16 %v42
  %v107 = vunpack.c.l.bf16 %v43
  %v108 = vunpack.c.l.bf16 %v44
  %v109 = vunpack.c.l.bf16 %v45
  %v110 = vunpack.c.l.bf16 %v46
  %v111 = vunpack.c.l.bf16 %v47
  %v112 = vunpack.c.l.bf16 %v48
  %v113 = vunpack.c.l.bf16 %v49
  %v114 = vunpack.c.l.bf16 %v50
  %v115 = vunpack.c.l.bf16 %v51
  %v116 = vunpack.c.l.bf16 %v52
  %v117 = vunpack.c.l.bf16 %v53
  %v118 = vunpack.c.l.bf16 %v54
  %v119 = vunpack.c.l.bf16 %v55
  %v120 = vunpack.c.l.bf16 %v56
  %v121 = vunpack.c.l.bf16 %v57
  %v122 = vunpack.c.l.bf16 %v58
  %v123 = vunpack.c.l.bf16 %v59
  %v124 = vunpack.c.l.bf16 %v60
  %v125 = vunpack.c.l.bf16 %v61
  %v126 = vunpack.c.l.bf16 %v62
  %v127 = vunpack.c.l.bf16 %v63
  %v128 = vunpack.c.l.bf16 %v64
  %v129 = vunpack.c.l.bf16 %v65
  %v130 = vunpack.c.l.bf16 %v66
  %v131 = vunpack.c.l.bf16 %v67
  %v132 = vunpack.c.l.bf16 %v68
  %v133 = vunpack.c.l.bf16 %v69
  %v134 = vunpack.c.l.bf16 %v70
  %v135 = vunpack.c.l.bf16 %v71
  %v136 = vunpack.c.l.bf16 %v72
  %v137 = vunpack.c.l.bf16 %v73
  %v138 = vunpack.c.l.bf16 %v74
  %v139 = vunpack.c.l.bf16 %v75
  %v140 = vunpack.c.l.bf16 %v76
  %v141 = vunpack.c.l.bf16 %v77
  %v142 = vunpack.c.l.bf16 %v78
  %v143 = vunpack.c.l.bf16 %v79
  %v144 = vunpack.c.l.bf16 %v80
  %v145 = vunpack.c.l.bf16 %v81
  %v146 = vunpack.c.l.bf16 %v82
  %v147 = vunpack.c.l.bf16 %v83
  %v148 = vunpack.c.l.bf16 %v84
  %v149 = vunpack.c.l.bf16 %v85
  %v150 = vunpack.c.l.bf16 %v86
  %v151 = vunpack.c.l.bf16 %v87
  %v152 = vunpack.c.l.bf16 %v88
  %v153 = vunpack.c.l.bf16 %v89
  %v154 = vunpack.c.l.bf16 %v90
  %155 = vadd.xlane.f32.xlu0 %v91
  %v156 = vpop.xlane.xlu0 %155
  %157 = vadd.xlane.f32.xlu0 %v92
  %v158 = vpop.xlane.xlu0 %157
  %159 = vadd.xlane.f32.xlu0 %v93
  %v160 = vpop.xlane.xlu0 %159
  %161 = vadd.xlane.f32.xlu0 %v94
  %v162 = vpop.xlane.xlu0 %161
  %163 = vadd.xlane.f32.xlu0 %v95
  %v164 = vpop.xlane.xlu0 %163
  %165 = vadd.xlane.f32.xlu0 %v96
  %v166 = vpop.xlane.xlu0 %165
  %167 = vadd.xlane.f32.xlu0 %v97
  %v168 = vpop.xlane.xlu0 %167
  %169 = vadd.xlane.f32.xlu0 %v98
  %v170 = vpop.xlane.xlu0 %169
  %171 = vadd.xlane.f32.xlu0 %v99
  %v172 = vpop.xlane.xlu0 %171
  %173 = vadd.xlane.f32.xlu0 %v100
  %v174 = vpop.xlane.xlu0 %173
  %175 = vadd.xlane.f32.xlu0 %v101
  %v176 = vpop.xlane.xlu0 %175
  %177 = vadd.xlane.f32.xlu0 %v102
  %v178 = vpop.xlane.xlu0 %177
  %179 = vadd.xlane.f32.xlu0 %v103
  %v180 = vpop.xlane.xlu0 %179
  %181 = vadd.xlane.f32.xlu0 %v104
  %v182 = vpop.xlane.xlu0 %181
  %183 = vadd.xlane.f32.xlu0 %v105
  %v184 = vpop.xlane.xlu0 %183
  %185 = vadd.xlane.f32.xlu0 %v106
  %v186 = vpop.xlane.xlu0 %185
  %187 = vadd.xlane.f32.xlu0 %v107
  %v188 = vpop.xlane.xlu0 %187
  %189 = vadd.xlane.f32.xlu0 %v108
  %v190 = vpop.xlane.xlu0 %189
  %191 = vadd.xlane.f32.xlu0 %v109
  %v192 = vpop.xlane.xlu0 %191
  %193 = vadd.xlane.f32.xlu0 %v110
  %v194 = vpop.xlane.xlu0 %193
  %195 = vadd.xlane.f32.xlu0 %v111
  %v196 = vpop.xlane.xlu0 %195
  %197 = vadd.xlane.f32.xlu0 %v112
  %v198 = vpop.xlane.xlu0 %197
  %199 = vadd.xlane.f32.xlu0 %v113
  %v200 = vpop.xlane.xlu0 %199
  %201 = vadd.xlane.f32.xlu0 %v114
  %v202 = vpop.xlane.xlu0 %201
  %203 = vadd.xlane.f32.xlu0 %v115
  %v204 = vpop.xlane.xlu0 %203
  %205 = vadd.xlane.f32.xlu0 %v116
  %v206 = vpop.xlane.xlu0 %205
  %207 = vadd.xlane.f32.xlu0 %v117
  %v208 = vpop.xlane.xlu0 %207
  %209 = vadd.xlane.f32.xlu0 %v118
  %v210 = vpop.xlane.xlu0 %209
  %211 = vadd.xlane.f32.xlu0 %v119
  %v212 = vpop.xlane.xlu0 %211
  %213 = vadd.xlane.f32.xlu0 %v120
  %v214 = vpop.xlane.xlu0 %213
  %215 = vadd.xlane.f32.xlu0 %v121
  %v216 = vpop.xlane.xlu0 %215
  %217 = vadd.xlane.f32.xlu0 %v122
  %v218 = vpop.xlane.xlu0 %217
  %219 = vadd.xlane.f32.xlu0 %v123
  %v220 = vpop.xlane.xlu0 %219
  %221 = vadd.xlane.f32.xlu0 %v124
  %v222 = vpop.xlane.xlu0 %221
  %223 = vadd.xlane.f32.xlu0 %v125
  %v224 = vpop.xlane.xlu0 %223
  %225 = vadd.xlane.f32.xlu0 %v126
  %v226 = vpop.xlane.xlu0 %225
  %227 = vadd.xlane.f32.xlu0 %v127
  %v228 = vpop.xlane.xlu0 %227
  %229 = vadd.xlane.f32.xlu0 %v128
  %v230 = vpop.xlane.xlu0 %229
  %231 = vadd.xlane.f32.xlu0 %v129
  %v232 = vpop.xlane.xlu0 %231
  %233 = vadd.xlane.f32.xlu0 %v130
  %v234 = vpop.xlane.xlu0 %233
  %235 = vadd.xlane.f32.xlu0 %v131
  %v236 = vpop.xlane.xlu0 %235
  %237 = vadd.xlane.f32.xlu0 %v132
  %v238 = vpop.xlane.xlu0 %237
  %239 = vadd.xlane.f32.xlu0 %v133
  %v240 = vpop.xlane.xlu0 %239
  %241 = vadd.xlane.f32.xlu0 %v134
  %v242 = vpop.xlane.xlu0 %241
  %243 = vadd.xlane.f32.xlu0 %v135
  %v244 = vpop.xlane.xlu0 %243
  %245 = vadd.xlane.f32.xlu0 %v136
  %v246 = vpop.xlane.xlu0 %245
  %247 = vadd.xlane.f32.xlu0 %v137
  %v248 = vpop.xlane.xlu0 %247
  %249 = vadd.xlane.f32.xlu0 %v138
  %v250 = vpop.xlane.xlu0 %249
  %251 = vadd.xlane.f32.xlu0 %v139
  %v252 = vpop.xlane.xlu0 %251
  %253 = vadd.xlane.f32.xlu0 %v140
  %v254 = vpop.xlane.xlu0 %253
  %255 = vadd.xlane.f32.xlu0 %v141
  %v256 = vpop.xlane.xlu0 %255
  %257 = vadd.xlane.f32.xlu0 %v142
  %v258 = vpop.xlane.xlu0 %257
  %259 = vadd.xlane.f32.xlu0 %v143
  %v260 = vpop.xlane.xlu0 %259
  %261 = vadd.xlane.f32.xlu0 %v144
  %v262 = vpop.xlane.xlu0 %261
  %263 = vadd.xlane.f32.xlu0 %v145
  %v264 = vpop.xlane.xlu0 %263
  %265 = vadd.xlane.f32.xlu0 %v146
  %v266 = vpop.xlane.xlu0 %265
  %267 = vadd.xlane.f32.xlu0 %v147
  %v268 = vpop.xlane.xlu0 %267
  %269 = vadd.xlane.f32.xlu0 %v148
  %v270 = vpop.xlane.xlu0 %269
  %271 = vadd.xlane.f32.xlu0 %v149
  %v272 = vpop.xlane.xlu0 %271
  %273 = vadd.xlane.f32.xlu0 %v150
  %v274 = vpop.xlane.xlu0 %273
  %275 = vadd.xlane.f32.xlu0 %v151
  %v276 = vpop.xlane.xlu0 %275
  %277 = vadd.xlane.f32.xlu0 %v152
  %v278 = vpop.xlane.xlu0 %277
  %279 = vadd.xlane.f32.xlu0 %v153
  %v280 = vpop.xlane.xlu0 %279
  %281 = vadd.xlane.f32.xlu0 %v154
  %v282 = vpop.xlane.xlu0 %281
  %v283 = vrcp.pop 128.0
  %v284 = vmul.f32 %v156, %v283
  %v285 = vmul.f32 %v158, %v283
  %v286 = vmul.f32 %v160, %v283
  %v287 = vmul.f32 %v162, %v283
  %v288 = vmul.f32 %v164, %v283
  %v289 = vmul.f32 %v166, %v283
  %v290 = vmul.f32 %v168, %v283
  %v291 = vmul.f32 %v170, %v283
  %v292 = vmul.f32 %v172, %v283
  %v293 = vmul.f32 %v174, %v283
  %v294 = vmul.f32 %v176, %v283
  %v295 = vmul.f32 %v178, %v283
  %v296 = vmul.f32 %v180, %v283
  %v297 = vmul.f32 %v182, %v283
  %v298 = vmul.f32 %v184, %v283
  %v299 = vmul.f32 %v186, %v283
  %v300 = vmul.f32 %v188, %v283
  %v301 = vmul.f32 %v190, %v283
  %v302 = vmul.f32 %v192, %v283
  %v303 = vmul.f32 %v194, %v283
  %v304 = vmul.f32 %v196, %v283
  %v305 = vmul.f32 %v198, %v283
  %v306 = vmul.f32 %v200, %v283
  %v307 = vmul.f32 %v202, %v283
  %v308 = vmul.f32 %v204, %v283
  %v309 = vmul.f32 %v206, %v283
  %v310 = vmul.f32 %v208, %v283
  %v311 = vmul.f32 %v210, %v283
  %v312 = vmul.f32 %v212, %v283
  %v313 = vmul.f32 %v214, %v283
  %v314 = vmul.f32 %v216, %v283
  %v315 = vmul.f32 %v218, %v283
  %v316 = vmul.f32 %v220, %v283
  %v317 = vmul.f32 %v222, %v283
  %v318 = vmul.f32 %v224, %v283
  %v319 = vmul.f32 %v226, %v283
  %v320 = vmul.f32 %v228, %v283
  %v321 = vmul.f32 %v230, %v283
  %v322 = vmul.f32 %v232, %v283
  %v323 = vmul.f32 %v234, %v283
  %v324 = vmul.f32 %v236, %v283
  %v325 = vmul.f32 %v238, %v283
  %v326 = vmul.f32 %v240, %v283
  %v327 = vmul.f32 %v242, %v283
  %v328 = vmul.f32 %v244, %v283
  %v329 = vmul.f32 %v246, %v283
  %v330 = vmul.f32 %v248, %v283
  %v331 = vmul.f32 %v250, %v283
  %v332 = vmul.f32 %v252, %v283
  %v333 = vmul.f32 %v254, %v283
  %v334 = vmul.f32 %v256, %v283
  %v335 = vmul.f32 %v258, %v283
  %v336 = vmul.f32 %v260, %v283
  %v337 = vmul.f32 %v262, %v283
  %v338 = vmul.f32 %v264, %v283
  %v339 = vmul.f32 %v266, %v283
  %v340 = vmul.f32 %v268, %v283
  %v341 = vmul.f32 %v270, %v283
  %v342 = vmul.f32 %v272, %v283
  %v343 = vmul.f32 %v274, %v283
  %v344 = vmul.f32 %v276, %v283
  %v345 = vmul.f32 %v278, %v283
  %v346 = vmul.f32 %v280, %v283
  %v347 = vmul.f32 %v282, %v283
  %v348 = vsub.f32 %v91, %v284
  %v349 = vsub.f32 %v92, %v285
  %v350 = vsub.f32 %v93, %v286
  %v351 = vsub.f32 %v94, %v287
  %v352 = vsub.f32 %v95, %v288
  %v353 = vsub.f32 %v96, %v289
  %v354 = vsub.f32 %v97, %v290
  %v355 = vsub.f32 %v98, %v291
  %v356 = vsub.f32 %v99, %v292
  %v357 = vsub.f32 %v100, %v293
  %v358 = vsub.f32 %v101, %v294
  %v359 = vsub.f32 %v102, %v295
  %v360 = vsub.f32 %v103, %v296
  %v361 = vsub.f32 %v104, %v297
  %v362 = vsub.f32 %v105, %v298
  %v363 = vsub.f32 %v106, %v299
  %v364 = vsub.f32 %v107, %v300
  %v365 = vsub.f32 %v108, %v301
  %v366 = vsub.f32 %v109, %v302
  %v367 = vsub.f32 %v110, %v303
  %v368 = vsub.f32 %v111, %v304
  %v369 = vsub.f32 %v112, %v305
  %v370 = vsub.f32 %v113, %v306
  %v371 = vsub.f32 %v114, %v307
  %v372 = vsub.f32 %v115, %v308
  %v373 = vsub.f32 %v116, %v309
  %v374 = vsub.f32 %v117, %v310
  %v375 = vsub.f32 %v118, %v311
  %v376 = vsub.f32 %v119, %v312
  %v377 = vsub.f32 %v120, %v313
  %v378 = vsub.f32 %v121, %v314
  %v379 = vsub.f32 %v122, %v315
  %v380 = vsub.f32 %v123, %v316
  %v381 = vsub.f32 %v124, %v317
  %v382 = vsub.f32 %v125, %v318
  %v383 = vsub.f32 %v126, %v319
  %v384 = vsub.f32 %v127, %v320
  %v385 = vsub.f32 %v128, %v321
  %v386 = vsub.f32 %v129, %v322
  %v387 = vsub.f32 %v130, %v323
  %v388 = vsub.f32 %v131, %v324
  %v389 = vsub.f32 %v132, %v325
  %v390 = vsub.f32 %v133, %v326
  %v391 = vsub.f32 %v134, %v327
  %v392 = vsub.f32 %v135, %v328
  %v393 = vsub.f32 %v136, %v329
  %v394 = vsub.f32 %v137, %v330
  %v395 = vsub.f32 %v138, %v331
  %v396 = vsub.f32 %v139, %v332
  %v397 = vsub.f32 %v140, %v333
  %v398 = vsub.f32 %v141, %v334
  %v399 = vsub.f32 %v142, %v335
  %v400 = vsub.f32 %v143, %v336
  %v401 = vsub.f32 %v144, %v337
  %v402 = vsub.f32 %v145, %v338
  %v403 = vsub.f32 %v146, %v339
  %v404 = vsub.f32 %v147, %v340
  %v405 = vsub.f32 %v148, %v341
  %v406 = vsub.f32 %v149, %v342
  %v407 = vsub.f32 %v150, %v343
  %v408 = vsub.f32 %v151, %v344
  %v409 = vsub.f32 %v152, %v345
  %v410 = vsub.f32 %v153, %v346
  %v411 = vsub.f32 %v154, %v347
  %v412 = vmul.f32 %v348, %v348
  %v413 = vmul.f32 %v349, %v349
  %v414 = vmul.f32 %v350, %v350
  %v415 = vmul.f32 %v351, %v351
  %v416 = vmul.f32 %v352, %v352
  %v417 = vmul.f32 %v353, %v353
  %v418 = vmul.f32 %v354, %v354
  %v419 = vmul.f32 %v355, %v355
  %v420 = vmul.f32 %v356, %v356
  %v421 = vmul.f32 %v357, %v357
  %v422 = vmul.f32 %v358, %v358
  %v423 = vmul.f32 %v359, %v359
  %v424 = vmul.f32 %v360, %v360
  %v425 = vmul.f32 %v361, %v361
  %v426 = vmul.f32 %v362, %v362
  %v427 = vmul.f32 %v363, %v363
  %v428 = vmul.f32 %v364, %v364
  %v429 = vmul.f32 %v365, %v365
  %v430 = vmul.f32 %v366, %v366
  %v431 = vmul.f32 %v367, %v367
  %v432 = vmul.f32 %v368, %v368
  %v433 = vmul.f32 %v369, %v369
  %v434 = vmul.f32 %v370, %v370
  %v435 = vmul.f32 %v371, %v371
  %v436 = vmul.f32 %v372, %v372
  %v437 = vmul.f32 %v373, %v373
  %v438 = vmul.f32 %v374, %v374
  %v439 = vmul.f32 %v375, %v375
  %v440 = vmul.f32 %v376, %v376
  %v441 = vmul.f32 %v377, %v377
  %v442 = vmul.f32 %v378, %v378
  %v443 = vmul.f32 %v379, %v379
  %v444 = vmul.f32 %v380, %v380
  %v445 = vmul.f32 %v381, %v381
  %v446 = vmul.f32 %v382, %v382
  %v447 = vmul.f32 %v383, %v383
  %v448 = vmul.f32 %v384, %v384
  %v449 = vmul.f32 %v385, %v385
  %v450 = vmul.f32 %v386, %v386
  %v451 = vmul.f32 %v387, %v387
  %v452 = vmul.f32 %v388, %v388
  %v453 = vmul.f32 %v389, %v389
  %v454 = vmul.f32 %v390, %v390
  %v455 = vmul.f32 %v391, %v391
  %v456 = vmul.f32 %v392, %v392
  %v457 = vmul.f32 %v393, %v393
  %v458 = vmul.f32 %v394, %v394
  %v459 = vmul.f32 %v395, %v395
  %v460 = vmul.f32 %v396, %v396
  %v461 = vmul.f32 %v397, %v397
  %v462 = vmul.f32 %v398, %v398
  %v463 = vmul.f32 %v399, %v399
  %v464 = vmul.f32 %v400, %v400
  %v465 = vmul.f32 %v401, %v401
  %v466 = vmul.f32 %v402, %v402
  %v467 = vmul.f32 %v403, %v403
  %v468 = vmul.f32 %v404, %v404
  %v469 = vmul.f32 %v405, %v405
  %v470 = vmul.f32 %v406, %v406
  %v471 = vmul.f32 %v407, %v407
  %v472 = vmul.f32 %v408, %v408
  %v473 = vmul.f32 %v409, %v409
  %v474 = vmul.f32 %v410, %v410
  %v475 = vmul.f32 %v411, %v411
  %476 = vadd.xlane.f32.xlu0 %v412
  %v477 = vpop.xlane.xlu0 %476
  %478 = vadd.xlane.f32.xlu0 %v413
  %v479 = vpop.xlane.xlu0 %478
  %480 = vadd.xlane.f32.xlu0 %v414
  %v481 = vpop.xlane.xlu0 %480
  %482 = vadd.xlane.f32.xlu0 %v415
  %v483 = vpop.xlane.xlu0 %482
  %484 = vadd.xlane.f32.xlu0 %v416
  %v485 = vpop.xlane.xlu0 %484
  %486 = vadd.xlane.f32.xlu0 %v417
  %v487 = vpop.xlane.xlu0 %486
  %488 = vadd.xlane.f32.xlu0 %v418
  %v489 = vpop.xlane.xlu0 %488
  %490 = vadd.xlane.f32.xlu0 %v419
  %v491 = vpop.xlane.xlu0 %490
  %492 = vadd.xlane.f32.xlu0 %v420
  %v493 = vpop.xlane.xlu0 %492
  %494 = vadd.xlane.f32.xlu0 %v421
  %v495 = vpop.xlane.xlu0 %494
  %496 = vadd.xlane.f32.xlu0 %v422
  %v497 = vpop.xlane.xlu0 %496
  %498 = vadd.xlane.f32.xlu0 %v423
  %v499 = vpop.xlane.xlu0 %498
  %500 = vadd.xlane.f32.xlu0 %v424
  %v501 = vpop.xlane.xlu0 %500
  %502 = vadd.xlane.f32.xlu0 %v425
  %v503 = vpop.xlane.xlu0 %502
  %504 = vadd.xlane.f32.xlu0 %v426
  %v505 = vpop.xlane.xlu0 %504
  %506 = vadd.xlane.f32.xlu0 %v427
  %v507 = vpop.xlane.xlu0 %506
  %508 = vadd.xlane.f32.xlu0 %v428
  %v509 = vpop.xlane.xlu0 %508
  %510 = vadd.xlane.f32.xlu0 %v429
  %v511 = vpop.xlane.xlu0 %510
  %512 = vadd.xlane.f32.xlu0 %v430
  %v513 = vpop.xlane.xlu0 %512
  %514 = vadd.xlane.f32.xlu0 %v431
  %v515 = vpop.xlane.xlu0 %514
  %516 = vadd.xlane.f32.xlu0 %v432
  %v517 = vpop.xlane.xlu0 %516
  %518 = vadd.xlane.f32.xlu0 %v433
  %v519 = vpop.xlane.xlu0 %518
  %520 = vadd.xlane.f32.xlu0 %v434
  %v521 = vpop.xlane.xlu0 %520
  %522 = vadd.xlane.f32.xlu0 %v435
  %v523 = vpop.xlane.xlu0 %522
  %524 = vadd.xlane.f32.xlu0 %v436
  %v525 = vpop.xlane.xlu0 %524
  %526 = vadd.xlane.f32.xlu0 %v437
  %v527 = vpop.xlane.xlu0 %526
  %528 = vadd.xlane.f32.xlu0 %v438
  %v529 = vpop.xlane.xlu0 %528
  %530 = vadd.xlane.f32.xlu0 %v439
  %v531 = vpop.xlane.xlu0 %530
  %532 = vadd.xlane.f32.xlu0 %v440
  %v533 = vpop.xlane.xlu0 %532
  %534 = vadd.xlane.f32.xlu0 %v441
  %v535 = vpop.xlane.xlu0 %534
  %536 = vadd.xlane.f32.xlu0 %v442
  %v537 = vpop.xlane.xlu0 %536
  %538 = vadd.xlane.f32.xlu0 %v443
  %v539 = vpop.xlane.xlu0 %538
  %540 = vadd.xlane.f32.xlu0 %v444
  %v541 = vpop.xlane.xlu0 %540
  %542 = vadd.xlane.f32.xlu0 %v445
  %v543 = vpop.xlane.xlu0 %542
  %544 = vadd.xlane.f32.xlu0 %v446
  %v545 = vpop.xlane.xlu0 %544
  %546 = vadd.xlane.f32.xlu0 %v447
  %v547 = vpop.xlane.xlu0 %546
  %548 = vadd.xlane.f32.xlu0 %v448
  %v549 = vpop.xlane.xlu0 %548
  %550 = vadd.xlane.f32.xlu0 %v449
  %v551 = vpop.xlane.xlu0 %550
  %552 = vadd.xlane.f32.xlu0 %v450
  %v553 = vpop.xlane.xlu0 %552
  %554 = vadd.xlane.f32.xlu0 %v451
  %v555 = vpop.xlane.xlu0 %554
  %556 = vadd.xlane.f32.xlu0 %v452
  %v557 = vpop.xlane.xlu0 %556
  %558 = vadd.xlane.f32.xlu0 %v453
  %v559 = vpop.xlane.xlu0 %558
  %560 = vadd.xlane.f32.xlu0 %v454
  %v561 = vpop.xlane.xlu0 %560
  %562 = vadd.xlane.f32.xlu0 %v455
  %v563 = vpop.xlane.xlu0 %562
  %564 = vadd.xlane.f32.xlu0 %v456
  %v565 = vpop.xlane.xlu0 %564
  %566 = vadd.xlane.f32.xlu0 %v457
  %v567 = vpop.xlane.xlu0 %566
  %568 = vadd.xlane.f32.xlu0 %v458
  %v569 = vpop.xlane.xlu0 %568
  %570 = vadd.xlane.f32.xlu0 %v459
  %v571 = vpop.xlane.xlu0 %570
  %572 = vadd.xlane.f32.xlu0 %v460
  %v573 = vpop.xlane.xlu0 %572
  %574 = vadd.xlane.f32.xlu0 %v461
  %v575 = vpop.xlane.xlu0 %574
  %576 = vadd.xlane.f32.xlu0 %v462
  %v577 = vpop.xlane.xlu0 %576
  %578 = vadd.xlane.f32.xlu0 %v463
  %v579 = vpop.xlane.xlu0 %578
  %580 = vadd.xlane.f32.xlu0 %v464
  %v581 = vpop.xlane.xlu0 %580
  %582 = vadd.xlane.f32.xlu0 %v465
  %v583 = vpop.xlane.xlu0 %582
  %584 = vadd.xlane.f32.xlu0 %v466
  %v585 = vpop.xlane.xlu0 %584
  %586 = vadd.xlane.f32.xlu0 %v467
  %v587 = vpop.xlane.xlu0 %586
  %588 = vadd.xlane.f32.xlu0 %v468
  %v589 = vpop.xlane.xlu0 %588
  %590 = vadd.xlane.f32.xlu0 %v469
  %v591 = vpop.xlane.xlu0 %590
  %592 = vadd.xlane.f32.xlu0 %v470
  %v593 = vpop.xlane.xlu0 %592
  %594 = vadd.xlane.f32.xlu0 %v471
  %v595 = vpop.xlane.xlu0 %594
  %596 = vadd.xlane.f32.xlu0 %v472
  %v597 = vpop.xlane.xlu0 %596
  %598 = vadd.xlane.f32.xlu0 %v473
  %v599 = vpop.xlane.xlu0 %598
  %600 = vadd.xlane.f32.xlu0 %v474
  %v601 = vpop.xlane.xlu0 %600
  %602 = vadd.xlane.f32.xlu0 %v475
  %v603 = vpop.xlane.xlu0 %602
  %v604 = vmul.f32 %v477, %v283
  %v605 = vmul.f32 %v479, %v283
  %v606 = vmul.f32 %v481, %v283
  %v607 = vmul.f32 %v483, %v283
  %v608 = vmul.f32 %v485, %v283
  %v609 = vmul.f32 %v487, %v283
  %v610 = vmul.f32 %v489, %v283
  %v611 = vmul.f32 %v491, %v283
  %v612 = vmul.f32 %v493, %v283
  %v613 = vmul.f32 %v495, %v283
  %v614 = vmul.f32 %v497, %v283
  %v615 = vmul.f32 %v499, %v283
  %v616 = vmul.f32 %v501, %v283
  %v617 = vmul.f32 %v503, %v283
  %v618 = vmul.f32 %v505, %v283
  %v619 = vmul.f32 %v507, %v283
  %v620 = vmul.f32 %v509, %v283
  %v621 = vmul.f32 %v511, %v283
  %v622 = vmul.f32 %v513, %v283
  %v623 = vmul.f32 %v515, %v283
  %v624 = vmul.f32 %v517, %v283
  %v625 = vmul.f32 %v519, %v283
  %v626 = vmul.f32 %v521, %v283
  %v627 = vmul.f32 %v523, %v283
  %v628 = vmul.f32 %v525, %v283
  %v629 = vmul.f32 %v527, %v283
  %v630 = vmul.f32 %v529, %v283
  %v631 = vmul.f32 %v531, %v283
  %v632 = vmul.f32 %v533, %v283
  %v633 = vmul.f32 %v535, %v283
  %v634 = vmul.f32 %v537, %v283
  %v635 = vmul.f32 %v539, %v283
  %v636 = vmul.f32 %v541, %v283
  %v637 = vmul.f32 %v543, %v283
  %v638 = vmul.f32 %v545, %v283
  %v639 = vmul.f32 %v547, %v283
  %v640 = vmul.f32 %v549, %v283
  %v641 = vmul.f32 %v551, %v283
  %v642 = vmul.f32 %v553, %v283
  %v643 = vmul.f32 %v555, %v283
  %v644 = vmul.f32 %v557, %v283
  %v645 = vmul.f32 %v559, %v283
  %v646 = vmul.f32 %v561, %v283
  %v647 = vmul.f32 %v563, %v283
  %v648 = vmul.f32 %v565, %v283
  %v649 = vmul.f32 %v567, %v283
  %v650 = vmul.f32 %v569, %v283
  %v651 = vmul.f32 %v571, %v283
  %v652 = vmul.f32 %v573, %v283
  %v653 = vmul.f32 %v575, %v283
  %v654 = vmul.f32 %v577, %v283
  %v655 = vmul.f32 %v579, %v283
  %v656 = vmul.f32 %v581, %v283
  %v657 = vmul.f32 %v583, %v283
  %v658 = vmul.f32 %v585, %v283
  %v659 = vmul.f32 %v587, %v283
  %v660 = vmul.f32 %v589, %v283
  %v661 = vmul.f32 %v591, %v283
  %v662 = vmul.f32 %v593, %v283
  %v663 = vmul.f32 %v595, %v283
  %v664 = vmul.f32 %v597, %v283
  %v665 = vmul.f32 %v599, %v283
  %v666 = vmul.f32 %v601, %v283
  %v667 = vmul.f32 %v603, %v283
  %v668 = vadd.f32 %v604, 1e-05
  %v669 = vadd.f32 %v605, 1e-05
  %v670 = vadd.f32 %v606, 1e-05
  %v671 = vadd.f32 %v607, 1e-05
  %v672 = vadd.f32 %v608, 1e-05
  %v673 = vadd.f32 %v609, 1e-05
  %v674 = vadd.f32 %v610, 1e-05
  %v675 = vadd.f32 %v611, 1e-05
  %v676 = vadd.f32 %v612, 1e-05
  %v677 = vadd.f32 %v613, 1e-05
  %v678 = vadd.f32 %v614, 1e-05
  %v679 = vadd.f32 %v615, 1e-05
  %v680 = vadd.f32 %v616, 1e-05
  %v681 = vadd.f32 %v617, 1e-05
  %v682 = vadd.f32 %v618, 1e-05
  %v683 = vadd.f32 %v619, 1e-05
  %v684 = vadd.f32 %v620, 1e-05
  %v685 = vadd.f32 %v621, 1e-05
  %v686 = vadd.f32 %v622, 1e-05
  %v687 = vadd.f32 %v623, 1e-05
  %v688 = vadd.f32 %v624, 1e-05
  %v689 = vadd.f32 %v625, 1e-05
  %v690 = vadd.f32 %v626, 1e-05
  %v691 = vadd.f32 %v627, 1e-05
  %v692 = vadd.f32 %v628, 1e-05
  %v693 = vadd.f32 %v629, 1e-05
  %v694 = vadd.f32 %v630, 1e-05
  %v695 = vadd.f32 %v631, 1e-05
  %v696 = vadd.f32 %v632, 1e-05
  %v697 = vadd.f32 %v633, 1e-05
  %v698 = vadd.f32 %v634, 1e-05
  %v699 = vadd.f32 %v635, 1e-05
  %v700 = vadd.f32 %v636, 1e-05
  %v701 = vadd.f32 %v637, 1e-05
  %v702 = vadd.f32 %v638, 1e-05
  %v703 = vadd.f32 %v639, 1e-05
  %v704 = vadd.f32 %v640, 1e-05
  %v705 = vadd.f32 %v641, 1e-05
  %v706 = vadd.f32 %v642, 1e-05
  %v707 = vadd.f32 %v643, 1e-05
  %v708 = vadd.f32 %v644, 1e-05
  %v709 = vadd.f32 %v645, 1e-05
  %v710 = vadd.f32 %v646, 1e-05
  %v711 = vadd.f32 %v647, 1e-05
  %v712 = vadd.f32 %v648, 1e-05
  %v713 = vadd.f32 %v649, 1e-05
  %v714 = vadd.f32 %v650, 1e-05
  %v715 = vadd.f32 %v651, 1e-05
  %v716 = vadd.f32 %v652, 1e-05
  %v717 = vadd.f32 %v653, 1e-05
  %v718 = vadd.f32 %v654, 1e-05
  %v719 = vadd.f32 %v655, 1e-05
  %v720 = vadd.f32 %v656, 1e-05
  %v721 = vadd.f32 %v657, 1e-05
  %v722 = vadd.f32 %v658, 1e-05
  %v723 = vadd.f32 %v659, 1e-05
  %v724 = vadd.f32 %v660, 1e-05
  %v725 = vadd.f32 %v661, 1e-05
  %v726 = vadd.f32 %v662, 1e-05
  %v727 = vadd.f32 %v663, 1e-05
  %v728 = vadd.f32 %v664, 1e-05
  %v729 = vadd.f32 %v665, 1e-05
  %v730 = vadd.f32 %v666, 1e-05
  %v731 = vadd.f32 %v667, 1e-05
  %v732 = vrsqrt.pop %v668
  %v733 = vrsqrt.pop %v669
  %v734 = vrsqrt.pop %v670
  %v735 = vrsqrt.pop %v671
  %v736 = vrsqrt.pop %v672
  %v737 = vrsqrt.pop %v673
  %v738 = vrsqrt.pop %v674
  %v739 = vrsqrt.pop %v675
  %v740 = vrsqrt.pop %v676
  %v741 = vrsqrt.pop %v677
  %v742 = vrsqrt.pop %v678
  %v743 = vrsqrt.pop %v679
  %v744 = vrsqrt.pop %v680
  %v745 = vrsqrt.pop %v681
  %v746 = vrsqrt.pop %v682
  %v747 = vrsqrt.pop %v683
  %v748 = vrsqrt.pop %v684
  %v749 = vrsqrt.pop %v685
  %v750 = vrsqrt.pop %v686
  %v751 = vrsqrt.pop %v687
  %v752 = vrsqrt.pop %v688
  %v753 = vrsqrt.pop %v689
  %v754 = vrsqrt.pop %v690
  %v755 = vrsqrt.pop %v691
  %v756 = vrsqrt.pop %v692
  %v757 = vrsqrt.pop %v693
  %v758 = vrsqrt.pop %v694
  %v759 = vrsqrt.pop %v695
  %v760 = vrsqrt.pop %v696
  %v761 = vrsqrt.pop %v697
  %v762 = vrsqrt.pop %v698
  %v763 = vrsqrt.pop %v699
  %v764 = vrsqrt.pop %v700
  %v765 = vrsqrt.pop %v701
  %v766 = vrsqrt.pop %v702
  %v767 = vrsqrt.pop %v703
  %v768 = vrsqrt.pop %v704
  %v769 = vrsqrt.pop %v705
  %v770 = vrsqrt.pop %v706
  %v771 = vrsqrt.pop %v707
  %v772 = vrsqrt.pop %v708
  %v773 = vrsqrt.pop %v709
  %v774 = vrsqrt.pop %v710
  %v775 = vrsqrt.pop %v711
  %v776 = vrsqrt.pop %v712
  %v777 = vrsqrt.pop %v713
  %v778 = vrsqrt.pop %v714
  %v779 = vrsqrt.pop %v715
  %v780 = vrsqrt.pop %v716
  %v781 = vrsqrt.pop %v717
  %v782 = vrsqrt.pop %v718
  %v783 = vrsqrt.pop %v719
  %v784 = vrsqrt.pop %v720
  %v785 = vrsqrt.pop %v721
  %v786 = vrsqrt.pop %v722
  %v787 = vrsqrt.pop %v723
  %v788 = vrsqrt.pop %v724
  %v789 = vrsqrt.pop %v725
  %v790 = vrsqrt.pop %v726
  %v791 = vrsqrt.pop %v727
  %v792 = vrsqrt.pop %v728
  %v793 = vrsqrt.pop %v729
  %v794 = vrsqrt.pop %v730
  %v795 = vrsqrt.pop %v731
  %v796 = vmul.f32 %v348, %v732
  %v797 = vmul.f32 %v349, %v733
  %v798 = vmul.f32 %v350, %v734
  %v799 = vmul.f32 %v351, %v735
  %v800 = vmul.f32 %v352, %v736
  %v801 = vmul.f32 %v353, %v737
  %v802 = vmul.f32 %v354, %v738
  %v803 = vmul.f32 %v355, %v739
  %v804 = vmul.f32 %v356, %v740
  %v805 = vmul.f32 %v357, %v741
  %v806 = vmul.f32 %v358, %v742
  %v807 = vmul.f32 %v359, %v743
  %v808 = vmul.f32 %v360, %v744
  %v809 = vmul.f32 %v361, %v745
  %v810 = vmul.f32 %v362, %v746
  %v811 = vmul.f32 %v363, %v747
  %v812 = vmul.f32 %v364, %v748
  %v813 = vmul.f32 %v365, %v749
  %v814 = vmul.f32 %v366, %v750
  %v815 = vmul.f32 %v367, %v751
  %v816 = vmul.f32 %v368, %v752
  %v817 = vmul.f32 %v369, %v753
  %v818 = vmul.f32 %v370, %v754
  %v819 = vmul.f32 %v371, %v755
  %v820 = vmul.f32 %v372, %v756
  %v821 = vmul.f32 %v373, %v757
  %v822 = vmul.f32 %v374, %v758
  %v823 = vmul.f32 %v375, %v759
  %v824 = vmul.f32 %v376, %v760
  %v825 = vmul.f32 %v377, %v761
  %v826 = vmul.f32 %v378, %v762
  %v827 = vmul.f32 %v379, %v763
  %v828 = vmul.f32 %v380, %v764
  %v829 = vmul.f32 %v381, %v765
  %v830 = vmul.f32 %v382, %v766
  %v831 = vmul.f32 %v383, %v767
  %v832 = vmul.f32 %v384, %v768
  %v833 = vmul.f32 %v385, %v769
  %v834 = vmul.f32 %v386, %v770
  %v835 = vmul.f32 %v387, %v771
  %v836 = vmul.f32 %v388, %v772
  %v837 = vmul.f32 %v389, %v773
  %v838 = vmul.f32 %v390, %v774
  %v839 = vmul.f32 %v391, %v775
  %v840 = vmul.f32 %v392, %v776
  %v841 = vmul.f32 %v393, %v777
  %v842 = vmul.f32 %v394, %v778
  %v843 = vmul.f32 %v395, %v779
  %v844 = vmul.f32 %v396, %v780
  %v845 = vmul.f32 %v397, %v781
  %v846 = vmul.f32 %v398, %v782
  %v847 = vmul.f32 %v399, %v783
  %v848 = vmul.f32 %v400, %v784
  %v849 = vmul.f32 %v401, %v785
  %v850 = vmul.f32 %v402, %v786
  %v851 = vmul.f32 %v403, %v787
  %v852 = vmul.f32 %v404, %v788
  %v853 = vmul.f32 %v405, %v789
  %v854 = vmul.f32 %v406, %v790
  %v855 = vmul.f32 %v407, %v791
  %v856 = vmul.f32 %v408, %v792
  %v857 = vmul.f32 %v409, %v793
  %v858 = vmul.f32 %v410, %v794
  %v859 = vmul.f32 %v411, %v795
  %v860 = vpack.c.bf16 %v797, %v796
  %v861 = vpack.c.bf16 %v799, %v798
  %v862 = vpack.c.bf16 %v801, %v800
  %v863 = vpack.c.bf16 %v803, %v802
  %v864 = vpack.c.bf16 %v805, %v804
  %v865 = vpack.c.bf16 %v807, %v806
  %v866 = vpack.c.bf16 %v809, %v808
  %v867 = vpack.c.bf16 %v811, %v810
  %v868 = vpack.c.bf16 %v813, %v812
  %v869 = vpack.c.bf16 %v815, %v814
  %v870 = vpack.c.bf16 %v817, %v816
  %v871 = vpack.c.bf16 %v819, %v818
  %v872 = vpack.c.bf16 %v821, %v820
  %v873 = vpack.c.bf16 %v823, %v822
  %v874 = vpack.c.bf16 %v825, %v824
  %v875 = vpack.c.bf16 %v827, %v826
  %v876 = vpack.c.bf16 %v829, %v828
  %v877 = vpack.c.bf16 %v831, %v830
  %v878 = vpack.c.bf16 %v833, %v832
  %v879 = vpack.c.bf16 %v835, %v834
  %v880 = vpack.c.bf16 %v837, %v836
  %v881 = vpack.c.bf16 %v839, %v838
  %v882 = vpack.c.bf16 %v841, %v840
  %v883 = vpack.c.bf16 %v843, %v842
  %v884 = vpack.c.bf16 %v845, %v844
  %v885 = vpack.c.bf16 %v847, %v846
  %v886 = vpack.c.bf16 %v849, %v848
  %v887 = vpack.c.bf16 %v851, %v850
  %v888 = vpack.c.bf16 %v853, %v852
  %v889 = vpack.c.bf16 %v855, %v854
  %v890 = vpack.c.bf16 %v857, %v856
  %v891 = vpack.c.bf16 %v859, %v858
  %v892 = vld [vmem:[%s1] sm:$0xf]
  %v893 = vld [vmem:[%s1 + $0x4] sm:$0xf]
  %v894 = vld [vmem:[%s1 + $0x8] sm:$0xf]
  %v895 = vld [vmem:[%s1 + $0xc] sm:$0xf]
  %v896 = vld [vmem:[%s1 + $0x10] sm:$0xf]
  %v897 = vld [vmem:[%s1 + $0x14] sm:$0xf]
  %v898 = vld [vmem:[%s1 + $0x18] sm:$0xf]
  %v899 = vld [vmem:[%s1 + $0x1c] sm:$0xf]
  %v900 = vld [vmem:[%s1 + $0x20] sm:$0xf]
  %v901 = vld [vmem:[%s1 + $0x24] sm:$0xf]
  %v902 = vld [vmem:[%s1 + $0x28] sm:$0xf]
  %v903 = vld [vmem:[%s1 + $0x2c] sm:$0xf]
  %v904 = vld [vmem:[%s1 + $0x30] sm:$0xf]
  %v905 = vld [vmem:[%s1 + $0x34] sm:$0xf]
  %v906 = vld [vmem:[%s1 + $0x38] sm:$0xf]
  %v907 = vld [vmem:[%s1 + $0x3c] sm:$0xf]
  %v908 = vld [vmem:[%s2] sm:$0x1]
  %v910 = vlaneseq
  %v911 = vshrl.u32 %v910, 7
  %v912 = vsub.s32 0, %v911
  %v913 = vrot.slane %v908, %v912
  %v931 = vunpack.c.l.b16 %v892
  %v932 = vunpack.c.l.b16 %v893
  %v933 = vunpack.c.l.b16 %v894
  %v934 = vunpack.c.l.b16 %v895
  %v935 = vunpack.c.l.b16 %v896
  %v936 = vunpack.c.l.b16 %v897
  %v937 = vunpack.c.l.b16 %v898
  %v938 = vunpack.c.l.b16 %v899
  %v939 = vunpack.c.l.b16 %v900
  %v940 = vunpack.c.l.b16 %v901
  %v941 = vunpack.c.l.b16 %v902
  %v942 = vunpack.c.l.b16 %v903
  %v943 = vunpack.c.l.b16 %v904
  %v944 = vunpack.c.l.b16 %v905
  %v945 = vunpack.c.l.b16 %v906
  %v946 = vunpack.c.l.b16 %v907
  %v947 = vpack.c.b16 %v932, %v931
  %v948 = vpack.c.b16 %v934, %v933
  %v949 = vpack.c.b16 %v936, %v935
  %v950 = vpack.c.b16 %v938, %v937
  %v951 = vpack.c.b16 %v940, %v939
  %v952 = vpack.c.b16 %v942, %v941
  %v953 = vpack.c.b16 %v944, %v943
  %v954 = vpack.c.b16 %v946, %v945
  %963 = vmatprep.subr.bf16.mxu0 0
  %964 = vmatpush1.bf16.msra.mxu0 %v954
  %965 = vmatprep.subr.bf16.mxu0 0
  %966 = vmatpush1.bf16.msra.mxu0 %v953
  %967 = vmatprep.subr.bf16.mxu0 0
  %968 = vmatpush1.bf16.msra.mxu0 %v952
  %969 = vmatprep.subr.bf16.mxu0 0
  %970 = vmatpush1.bf16.msra.mxu0 %v951
  %971 = vmatprep.subr.bf16.mxu0 0
  %972 = vmatpush1.bf16.msra.mxu0 %v950
  %973 = vmatprep.subr.bf16.mxu0 0
  %974 = vmatpush1.bf16.msra.mxu0 %v949
  %975 = vmatprep.subr.bf16.mxu0 0
  %976 = vmatpush1.bf16.msra.mxu0 %v948
  %977 = vmatprep.subr.bf16.mxu0 0
  %978 = vmatpush1.bf16.msra.mxu0 %v947
  %979 = vmatprep.subr.bf16.mxu0 0
  %980 = vmatpush2.bf16.msra.mxu0 0
  %981 = vmatprep.subr.bf16.mxu0 0
  %982 = vmatpush2.bf16.msra.mxu0 0
  %983 = vmatprep.subr.bf16.mxu0 0
  %984 = vmatpush2.bf16.msra.mxu0 0
  %985 = vmatprep.subr.bf16.mxu0 0
  %986 = vmatpush2.bf16.msra.mxu0 0
  %987 = vmatprep.subr.bf16.mxu0 0
  %988 = vmatpush2.bf16.msra.mxu0 0
  %989 = vmatprep.subr.bf16.mxu0 0
  %990 = vmatpush2.bf16.msra.mxu0 0
  %991 = vmatprep.subr.bf16.mxu0 0
  %992 = vmatpush2.bf16.msra.mxu0 0
  %993 = vmatprep.subr.bf16.mxu0 0
  %994 = vmatpush2.bf16.msra.mxu0 0
  %995 = vmatprep.mubr.bf16.mxu0 0
  %996 = vmatmul.mubr.bf16.gmra.mxu0 %v860
  %v997 = vpop.f32.mrf.mxu0
  %v998 = vadd.f32 %v913, %v997
  %v999 = vpop.f32.mrf.mxu0
  %v1000 = vpop.f32.mrf.mxu0
  %v1001 = vadd.f32 %v913, %v1000
  %v1002 = vpop.f32.mrf.mxu0
  %1003 = vmatprep.mubr.bf16.mxu0 0
  %1004 = vmatmul.mubr.bf16.gmra.mxu0 %v861
  %v1005 = vpop.f32.mrf.mxu0
  %v1006 = vadd.f32 %v913, %v1005
  %v1007 = vpop.f32.mrf.mxu0
  %v1008 = vpop.f32.mrf.mxu0
  %v1009 = vadd.f32 %v913, %v1008
  %v1010 = vpop.f32.mrf.mxu0
  %1011 = vmatprep.mubr.bf16.mxu0 0
  %1012 = vmatmul.mubr.bf16.gmra.mxu0 %v862
  %v1013 = vpop.f32.mrf.mxu0
  %v1014 = vadd.f32 %v913, %v1013
  %v1015 = vpop.f32.mrf.mxu0
  %v1016 = vpop.f32.mrf.mxu0
  %v1017 = vadd.f32 %v913, %v1016
  %v1018 = vpop.f32.mrf.mxu0
  %1019 = vmatprep.mubr.bf16.mxu0 0
  %1020 = vmatmul.mubr.bf16.gmra.mxu0 %v863
  %v1021 = vpop.f32.mrf.mxu0
  %v1022 = vadd.f32 %v913, %v1021
  %v1023 = vpop.f32.mrf.mxu0
  %v1024 = vpop.f32.mrf.mxu0
  %v1025 = vadd.f32 %v913, %v1024
  %v1026 = vpop.f32.mrf.mxu0
  %1027 = vmatprep.mubr.bf16.mxu0 0
  %1028 = vmatmul.mubr.bf16.gmra.mxu0 %v864
  %v1029 = vpop.f32.mrf.mxu0
  %v1030 = vadd.f32 %v913, %v1029
  %v1031 = vpop.f32.mrf.mxu0
  %v1032 = vpop.f32.mrf.mxu0
  %v1033 = vadd.f32 %v913, %v1032
  %v1034 = vpop.f32.mrf.mxu0
  %1035 = vmatprep.mubr.bf16.mxu0 0
  %1036 = vmatmul.mubr.bf16.gmra.mxu0 %v865
  %v1037 = vpop.f32.mrf.mxu0
  %v1038 = vadd.f32 %v913, %v1037
  %v1039 = vpop.f32.mrf.mxu0
  %v1040 = vpop.f32.mrf.mxu0
  %v1041 = vadd.f32 %v913, %v1040
  %v1042 = vpop.f32.mrf.mxu0
  %1043 = vmatprep.mubr.bf16.mxu0 0
  %1044 = vmatmul.mubr.bf16.gmra.mxu0 %v866
  %v1045 = vpop.f32.mrf.mxu0
  %v1046 = vadd.f32 %v913, %v1045
  %v1047 = vpop.f32.mrf.mxu0
  %v1048 = vpop.f32.mrf.mxu0
  %v1049 = vadd.f32 %v913, %v1048
  %v1050 = vpop.f32.mrf.mxu0
  %1051 = vmatprep.mubr.bf16.mxu0 0
  %1052 = vmatmul.mubr.bf16.gmra.mxu0 %v867
  %v1053 = vpop.f32.mrf.mxu0
  %v1054 = vadd.f32 %v913, %v1053
  %v1055 = vpop.f32.mrf.mxu0
  %v1056 = vpop.f32.mrf.mxu0
  %v1057 = vadd.f32 %v913, %v1056
  %v1058 = vpop.f32.mrf.mxu0
  %1059 = vmatprep.mubr.bf16.mxu0 0
  %1060 = vmatmul.mubr.bf16.gmra.mxu0 %v868
  %v1061 = vpop.f32.mrf.mxu0
  %v1062 = vadd.f32 %v913, %v1061
  %v1063 = vpop.f32.mrf.mxu0
  %v1064 = vpop.f32.mrf.mxu0
  %v1065 = vadd.f32 %v913, %v1064
  %v1066 = vpop.f32.mrf.mxu0
  %1067 = vmatprep.mubr.bf16.mxu0 0
  %1068 = vmatmul.mubr.bf16.gmra.mxu0 %v869
  %v1069 = vpop.f32.mrf.mxu0
  %v1070 = vadd.f32 %v913, %v1069
  %v1071 = vpop.f32.mrf.mxu0
  %v1072 = vpop.f32.mrf.mxu0
  %v1073 = vadd.f32 %v913, %v1072
  %v1074 = vpop.f32.mrf.mxu0
  %1075 = vmatprep.mubr.bf16.mxu0 0
  %1076 = vmatmul.mubr.bf16.gmra.mxu0 %v870
  %v1077 = vpop.f32.mrf.mxu0
  %v1078 = vadd.f32 %v913, %v1077
  %v1079 = vpop.f32.mrf.mxu0
  %v1080 = vpop.f32.mrf.mxu0
  %v1081 = vadd.f32 %v913, %v1080
  %v1082 = vpop.f32.mrf.mxu0
  %1083 = vmatprep.mubr.bf16.mxu0 0
  %1084 = vmatmul.mubr.bf16.gmra.mxu0 %v871
  %v1085 = vpop.f32.mrf.mxu0
  %v1086 = vadd.f32 %v913, %v1085
  %v1087 = vpop.f32.mrf.mxu0
  %v1088 = vpop.f32.mrf.mxu0
  %v1089 = vadd.f32 %v913, %v1088
  %v1090 = vpop.f32.mrf.mxu0
  %1091 = vmatprep.mubr.bf16.mxu0 0
  %1092 = vmatmul.mubr.bf16.gmra.mxu0 %v872
  %v1093 = vpop.f32.mrf.mxu0
  %v1094 = vadd.f32 %v913, %v1093
  %v1095 = vpop.f32.mrf.mxu0
  %v1096 = vpop.f32.mrf.mxu0
  %v1097 = vadd.f32 %v913, %v1096
  %v1098 = vpop.f32.mrf.mxu0
  %1099 = vmatprep.mubr.bf16.mxu0 0
  %1100 = vmatmul.mubr.bf16.gmra.mxu0 %v873
  %v1101 = vpop.f32.mrf.mxu0
  %v1102 = vadd.f32 %v913, %v1101
  %v1103 = vpop.f32.mrf.mxu0
  %v1104 = vpop.f32.mrf.mxu0
  %v1105 = vadd.f32 %v913, %v1104
  %v1106 = vpop.f32.mrf.mxu0
  %1107 = vmatprep.mubr.bf16.mxu0 0
  %1108 = vmatmul.mubr.bf16.gmra.mxu0 %v874
  %v1109 = vpop.f32.mrf.mxu0
  %v1110 = vadd.f32 %v913, %v1109
  %v1111 = vpop.f32.mrf.mxu0
  %v1112 = vpop.f32.mrf.mxu0
  %v1113 = vadd.f32 %v913, %v1112
  %v1114 = vpop.f32.mrf.mxu0
  %1115 = vmatprep.mubr.bf16.mxu0 0
  %1116 = vmatmul.mubr.bf16.gmra.mxu0 %v875
  %v1117 = vpop.f32.mrf.mxu0
  %v1118 = vadd.f32 %v913, %v1117
  %v1119 = vpop.f32.mrf.mxu0
  %v1120 = vpop.f32.mrf.mxu0
  %v1121 = vadd.f32 %v913, %v1120
  %v1122 = vpop.f32.mrf.mxu0
  %1123 = vmatprep.mubr.bf16.mxu0 0
  %1124 = vmatmul.mubr.bf16.gmra.mxu0 %v876
  %v1125 = vpop.f32.mrf.mxu0
  %v1126 = vadd.f32 %v913, %v1125
  %v1127 = vpop.f32.mrf.mxu0
  %v1128 = vpop.f32.mrf.mxu0
  %v1129 = vadd.f32 %v913, %v1128
  %v1130 = vpop.f32.mrf.mxu0
  %1131 = vmatprep.mubr.bf16.mxu0 0
  %1132 = vmatmul.mubr.bf16.gmra.mxu0 %v877
  %v1133 = vpop.f32.mrf.mxu0
  %v1134 = vadd.f32 %v913, %v1133
  %v1135 = vpop.f32.mrf.mxu0
  %v1136 = vpop.f32.mrf.mxu0
  %v1137 = vadd.f32 %v913, %v1136
  %v1138 = vpop.f32.mrf.mxu0
  %1139 = vmatprep.mubr.bf16.mxu0 0
  %1140 = vmatmul.mubr.bf16.gmra.mxu0 %v878
  %v1141 = vpop.f32.mrf.mxu0
  %v1142 = vadd.f32 %v913, %v1141
  %v1143 = vpop.f32.mrf.mxu0
  %v1144 = vpop.f32.mrf.mxu0
  %v1145 = vadd.f32 %v913, %v1144
  %v1146 = vpop.f32.mrf.mxu0
  %1147 = vmatprep.mubr.bf16.mxu0 0
  %1148 = vmatmul.mubr.bf16.gmra.mxu0 %v879
  %v1149 = vpop.f32.mrf.mxu0
  %v1150 = vadd.f32 %v913, %v1149
  %v1151 = vpop.f32.mrf.mxu0
  %v1152 = vpop.f32.mrf.mxu0
  %v1153 = vadd.f32 %v913, %v1152
  %v1154 = vpop.f32.mrf.mxu0
  %1155 = vmatprep.mubr.bf16.mxu0 0
  %1156 = vmatmul.mubr.bf16.gmra.mxu0 %v880
  %v1157 = vpop.f32.mrf.mxu0
  %v1158 = vadd.f32 %v913, %v1157
  %v1159 = vpop.f32.mrf.mxu0
  %v1160 = vpop.f32.mrf.mxu0
  %v1161 = vadd.f32 %v913, %v1160
  %v1162 = vpop.f32.mrf.mxu0
  %1163 = vmatprep.mubr.bf16.mxu0 0
  %1164 = vmatmul.mubr.bf16.gmra.mxu0 %v881
  %v1165 = vpop.f32.mrf.mxu0
  %v1166 = vadd.f32 %v913, %v1165
  %v1167 = vpop.f32.mrf.mxu0
  %v1168 = vpop.f32.mrf.mxu0
  %v1169 = vadd.f32 %v913, %v1168
  %v1170 = vpop.f32.mrf.mxu0
  %1171 = vmatprep.mubr.bf16.mxu0 0
  %1172 = vmatmul.mubr.bf16.gmra.mxu0 %v882
  %v1173 = vpop.f32.mrf.mxu0
  %v1174 = vadd.f32 %v913, %v1173
  %v1175 = vpop.f32.mrf.mxu0
  %v1176 = vpop.f32.mrf.mxu0
  %v1177 = vadd.f32 %v913, %v1176
  %v1178 = vpop.f32.mrf.mxu0
  %1179 = vmatprep.mubr.bf16.mxu0 0
  %1180 = vmatmul.mubr.bf16.gmra.mxu0 %v883
  %v1181 = vpop.f32.mrf.mxu0
  %v1182 = vadd.f32 %v913, %v1181
  %v1183 = vpop.f32.mrf.mxu0
  %v1184 = vpop.f32.mrf.mxu0
  %v1185 = vadd.f32 %v913, %v1184
  %v1186 = vpop.f32.mrf.mxu0
  %1187 = vmatprep.mubr.bf16.mxu0 0
  %1188 = vmatmul.mubr.bf16.gmra.mxu0 %v884
  %v1189 = vpop.f32.mrf.mxu0
  %v1190 = vadd.f32 %v913, %v1189
  %v1191 = vpop.f32.mrf.mxu0
  %v1192 = vpop.f32.mrf.mxu0
  %v1193 = vadd.f32 %v913, %v1192
  %v1194 = vpop.f32.mrf.mxu0
  %1195 = vmatprep.mubr.bf16.mxu0 0
  %1196 = vmatmul.mubr.bf16.gmra.mxu0 %v885
  %v1197 = vpop.f32.mrf.mxu0
  %v1198 = vadd.f32 %v913, %v1197
  %v1199 = vpop.f32.mrf.mxu0
  %v1200 = vpop.f32.mrf.mxu0
  %v1201 = vadd.f32 %v913, %v1200
  %v1202 = vpop.f32.mrf.mxu0
  %1203 = vmatprep.mubr.bf16.mxu0 0
  %1204 = vmatmul.mubr.bf16.gmra.mxu0 %v886
  %v1205 = vpop.f32.mrf.mxu0
  %v1206 = vadd.f32 %v913, %v1205
  %v1207 = vpop.f32.mrf.mxu0
  %v1208 = vpop.f32.mrf.mxu0
  %v1209 = vadd.f32 %v913, %v1208
  %v1210 = vpop.f32.mrf.mxu0
  %1211 = vmatprep.mubr.bf16.mxu0 0
  %1212 = vmatmul.mubr.bf16.gmra.mxu0 %v887
  %v1213 = vpop.f32.mrf.mxu0
  %v1214 = vadd.f32 %v913, %v1213
  %v1215 = vpop.f32.mrf.mxu0
  %v1216 = vpop.f32.mrf.mxu0
  %v1217 = vadd.f32 %v913, %v1216
  %v1218 = vpop.f32.mrf.mxu0
  %1219 = vmatprep.mubr.bf16.mxu0 0
  %1220 = vmatmul.mubr.bf16.gmra.mxu0 %v888
  %v1221 = vpop.f32.mrf.mxu0
  %v1222 = vadd.f32 %v913, %v1221
  %v1223 = vpop.f32.mrf.mxu0
  %v1224 = vpop.f32.mrf.mxu0
  %v1225 = vadd.f32 %v913, %v1224
  %v1226 = vpop.f32.mrf.mxu0
  %1227 = vmatprep.mubr.bf16.mxu0 0
  %1228 = vmatmul.mubr.bf16.gmra.mxu0 %v889
  %v1229 = vpop.f32.mrf.mxu0
  %v1230 = vadd.f32 %v913, %v1229
  %v1231 = vpop.f32.mrf.mxu0
  %v1232 = vpop.f32.mrf.mxu0
  %v1233 = vadd.f32 %v913, %v1232
  %v1234 = vpop.f32.mrf.mxu0
  %1235 = vmatprep.mubr.bf16.mxu0 0
  %1236 = vmatmul.mubr.bf16.gmra.mxu0 %v890
  %v1237 = vpop.f32.mrf.mxu0
  %v1238 = vadd.f32 %v913, %v1237
  %v1239 = vpop.f32.mrf.mxu0
  %v1240 = vpop.f32.mrf.mxu0
  %v1241 = vadd.f32 %v913, %v1240
  %v1242 = vpop.f32.mrf.mxu0
  %1243 = vmatprep.mubr.bf16.mxu0 0
  %1244 = vmatmul.mubr.bf16.gmra.mxu0 %v891
  %v1245 = vpop.f32.mrf.mxu0
  %v1246 = vadd.f32 %v913, %v1245
  %v1247 = vpop.f32.mrf.mxu0
  %v1248 = vpop.f32.mrf.mxu0
  %v1249 = vadd.f32 %v913, %v1248
  %v1250 = vpop.f32.mrf.mxu0
  %1251 = vdwg.mxu0
  %v1252 = vmul.f32 %v998, 0.5
  %v1253 = vmul.f32 %v1001, 0.5
  %v1254 = vmul.f32 %v1006, 0.5
  %v1255 = vmul.f32 %v1009, 0.5
  %v1256 = vmul.f32 %v1014, 0.5
  %v1257 = vmul.f32 %v1017, 0.5
  %v1258 = vmul.f32 %v1022, 0.5
  %v1259 = vmul.f32 %v1025, 0.5
  %v1260 = vmul.f32 %v1030, 0.5
  %v1261 = vmul.f32 %v1033, 0.5
  %v1262 = vmul.f32 %v1038, 0.5
  %v1263 = vmul.f32 %v1041, 0.5
  %v1264 = vmul.f32 %v1046, 0.5
  %v1265 = vmul.f32 %v1049, 0.5
  %v1266 = vmul.f32 %v1054, 0.5
  %v1267 = vmul.f32 %v1057, 0.5
  %v1268 = vmul.f32 %v1062, 0.5
  %v1269 = vmul.f32 %v1065, 0.5
  %v1270 = vmul.f32 %v1070, 0.5
  %v1271 = vmul.f32 %v1073, 0.5
  %v1272 = vmul.f32 %v1078, 0.5
  %v1273 = vmul.f32 %v1081, 0.5
  %v1274 = vmul.f32 %v1086, 0.5
  %v1275 = vmul.f32 %v1089, 0.5
  %v1276 = vmul.f32 %v1094, 0.5
  %v1277 = vmul.f32 %v1097, 0.5
  %v1278 = vmul.f32 %v1102, 0.5
  %v1279 = vmul.f32 %v1105, 0.5
  %v1280 = vmul.f32 %v1110, 0.5
  %v1281 = vmul.f32 %v1113, 0.5
  %v1282 = vmul.f32 %v1118, 0.5
  %v1283 = vmul.f32 %v1121, 0.5
  %v1284 = vmul.f32 %v1126, 0.5
  %v1285 = vmul.f32 %v1129, 0.5
  %v1286 = vmul.f32 %v1134, 0.5
  %v1287 = vmul.f32 %v1137, 0.5
  %v1288 = vmul.f32 %v1142, 0.5
  %v1289 = vmul.f32 %v1145, 0.5
  %v1290 = vmul.f32 %v1150, 0.5
  %v1291 = vmul.f32 %v1153, 0.5
  %v1292 = vmul.f32 %v1158, 0.5
  %v1293 = vmul.f32 %v1161, 0.5
  %v1294 = vmul.f32 %v1166, 0.5
  %v1295 = vmul.f32 %v1169, 0.5
  %v1296 = vmul.f32 %v1174, 0.5
  %v1297 = vmul.f32 %v1177, 0.5
  %v1298 = vmul.f32 %v1182, 0.5
  %v1299 = vmul.f32 %v1185, 0.5
  %v1300 = vmul.f32 %v1190, 0.5
  %v1301 = vmul.f32 %v1193, 0.5
  %v1302 = vmul.f32 %v1198, 0.5
  %v1303 = vmul.f32 %v1201, 0.5
  %v1304 = vmul.f32 %v1206, 0.5
  %v1305 = vmul.f32 %v1209, 0.5
  %v1306 = vmul.f32 %v1214, 0.5
  %v1307 = vmul.f32 %v1217, 0.5
  %v1308 = vmul.f32 %v1222, 0.5
  %v1309 = vmul.f32 %v1225, 0.5
  %v1310 = vmul.f32 %v1230, 0.5
  %v1311 = vmul.f32 %v1233, 0.5
  %v1312 = vmul.f32 %v1238, 0.5
  %v1313 = vmul.f32 %v1241, 0.5
  %v1314 = vmul.f32 %v1246, 0.5
  %v1315 = vmul.f32 %v1249, 0.5
  %v1316 = vmul.f32 %v998, 0.044715
  %v1317 = vmul.f32 %v1001, 0.044715
  %v1318 = vmul.f32 %v1006, 0.044715
  %v1319 = vmul.f32 %v1009, 0.044715
  %v1320 = vmul.f32 %v1014, 0.044715
  %v1321 = vmul.f32 %v1017, 0.044715
  %v1322 = vmul.f32 %v1022, 0.044715
  %v1323 = vmul.f32 %v1025, 0.044715
  %v1324 = vmul.f32 %v1030, 0.044715
  %v1325 = vmul.f32 %v1033, 0.044715
  %v1326 = vmul.f32 %v1038, 0.044715
  %v1327 = vmul.f32 %v1041, 0.044715
  %v1328 = vmul.f32 %v1046, 0.044715
  %v1329 = vmul.f32 %v1049, 0.044715
  %v1330 = vmul.f32 %v1054, 0.044715
  %v1331 = vmul.f32 %v1057, 0.044715
  %v1332 = vmul.f32 %v1062, 0.044715
  %v1333 = vmul.f32 %v1065, 0.044715
  %v1334 = vmul.f32 %v1070, 0.044715
  %v1335 = vmul.f32 %v1073, 0.044715
  %v1336 = vmul.f32 %v1078, 0.044715
  %v1337 = vmul.f32 %v1081, 0.044715
  %v1338 = vmul.f32 %v1086, 0.044715
  %v1339 = vmul.f32 %v1089, 0.044715
  %v1340 = vmul.f32 %v1094, 0.044715
  %v1341 = vmul.f32 %v1097, 0.044715
  %v1342 = vmul.f32 %v1102, 0.044715
  %v1343 = vmul.f32 %v1105, 0.044715
  %v1344 = vmul.f32 %v1110, 0.044715
  %v1345 = vmul.f32 %v1113, 0.044715
  %v1346 = vmul.f32 %v1118, 0.044715
  %v1347 = vmul.f32 %v1121, 0.044715
  %v1348 = vmul.f32 %v1126, 0.044715
  %v1349 = vmul.f32 %v1129, 0.044715
  %v1350 = vmul.f32 %v1134, 0.044715
  %v1351 = vmul.f32 %v1137, 0.044715
  %v1352 = vmul.f32 %v1142, 0.044715
  %v1353 = vmul.f32 %v1145, 0.044715
  %v1354 = vmul.f32 %v1150, 0.044715
  %v1355 = vmul.f32 %v1153, 0.044715
  %v1356 = vmul.f32 %v1158, 0.044715
  %v1357 = vmul.f32 %v1161, 0.044715
  %v1358 = vmul.f32 %v1166, 0.044715
  %v1359 = vmul.f32 %v1169, 0.044715
  %v1360 = vmul.f32 %v1174, 0.044715
  %v1361 = vmul.f32 %v1177, 0.044715
  %v1362 = vmul.f32 %v1182, 0.044715
  %v1363 = vmul.f32 %v1185, 0.044715
  %v1364 = vmul.f32 %v1190, 0.044715
  %v1365 = vmul.f32 %v1193, 0.044715
  %v1366 = vmul.f32 %v1198, 0.044715
  %v1367 = vmul.f32 %v1201, 0.044715
  %v1368 = vmul.f32 %v1206, 0.044715
  %v1369 = vmul.f32 %v1209, 0.044715
  %v1370 = vmul.f32 %v1214, 0.044715
  %v1371 = vmul.f32 %v1217, 0.044715
  %v1372 = vmul.f32 %v1222, 0.044715
  %v1373 = vmul.f32 %v1225, 0.044715
  %v1374 = vmul.f32 %v1230, 0.044715
  %v1375 = vmul.f32 %v1233, 0.044715
  %v1376 = vmul.f32 %v1238, 0.044715
  %v1377 = vmul.f32 %v1241, 0.044715
  %v1378 = vmul.f32 %v1246, 0.044715
  %v1379 = vmul.f32 %v1249, 0.044715
  %v1380 = vmul.f32 %v1316, %v998
  %v1381 = vmul.f32 %v1317, %v1001
  %v1382 = vmul.f32 %v1318, %v1006
  %v1383 = vmul.f32 %v1319, %v1009
  %v1384 = vmul.f32 %v1320, %v1014
  %v1385 = vmul.f32 %v1321, %v1017
  %v1386 = vmul.f32 %v1322, %v1022
  %v1387 = vmul.f32 %v1323, %v1025
  %v1388 = vmul.f32 %v1324, %v1030
  %v1389 = vmul.f32 %v1325, %v1033
  %v1390 = vmul.f32 %v1326, %v1038
  %v1391 = vmul.f32 %v1327, %v1041
  %v1392 = vmul.f32 %v1328, %v1046
  %v1393 = vmul.f32 %v1329, %v1049
  %v1394 = vmul.f32 %v1330, %v1054
  %v1395 = vmul.f32 %v1331, %v1057
  %v1396 = vmul.f32 %v1332, %v1062
  %v1397 = vmul.f32 %v1333, %v1065
  %v1398 = vmul.f32 %v1334, %v1070
  %v1399 = vmul.f32 %v1335, %v1073
  %v1400 = vmul.f32 %v1336, %v1078
  %v1401 = vmul.f32 %v1337, %v1081
  %v1402 = vmul.f32 %v1338, %v1086
  %v1403 = vmul.f32 %v1339, %v1089
  %v1404 = vmul.f32 %v1340, %v1094
  %v1405 = vmul.f32 %v1341, %v1097
  %v1406 = vmul.f32 %v1342, %v1102
  %v1407 = vmul.f32 %v1343, %v1105
  %v1408 = vmul.f32 %v1344, %v1110
  %v1409 = vmul.f32 %v1345, %v1113
  %v1410 = vmul.f32 %v1346, %v1118
  %v1411 = vmul.f32 %v1347, %v1121
  %v1412 = vmul.f32 %v1348, %v1126
  %v1413 = vmul.f32 %v1349, %v1129
  %v1414 = vmul.f32 %v1350, %v1134
  %v1415 = vmul.f32 %v1351, %v1137
  %v1416 = vmul.f32 %v1352, %v1142
  %v1417 = vmul.f32 %v1353, %v1145
  %v1418 = vmul.f32 %v1354, %v1150
  %v1419 = vmul.f32 %v1355, %v1153
  %v1420 = vmul.f32 %v1356, %v1158
  %v1421 = vmul.f32 %v1357, %v1161
  %v1422 = vmul.f32 %v1358, %v1166
  %v1423 = vmul.f32 %v1359, %v1169
  %v1424 = vmul.f32 %v1360, %v1174
  %v1425 = vmul.f32 %v1361, %v1177
  %v1426 = vmul.f32 %v1362, %v1182
  %v1427 = vmul.f32 %v1363, %v1185
  %v1428 = vmul.f32 %v1364, %v1190
  %v1429 = vmul.f32 %v1365, %v1193
  %v1430 = vmul.f32 %v1366, %v1198
  %v1431 = vmul.f32 %v1367, %v1201
  %v1432 = vmul.f32 %v1368, %v1206
  %v1433 = vmul.f32 %v1369, %v1209
  %v1434 = vmul.f32 %v1370, %v1214
  %v1435 = vmul.f32 %v1371, %v1217
  %v1436 = vmul.f32 %v1372, %v1222
  %v1437 = vmul.f32 %v1373, %v1225
  %v1438 = vmul.f32 %v1374, %v1230
  %v1439 = vmul.f32 %v1375, %v1233
  %v1440 = vmul.f32 %v1376, %v1238
  %v1441 = vmul.f32 %v1377, %v1241
  %v1442 = vmul.f32 %v1378, %v1246
  %v1443 = vmul.f32 %v1379, %v1249
  %v1444 = vmul.f32 %v1380, %v998
  %v1445 = vmul.f32 %v1381, %v1001
  %v1446 = vmul.f32 %v1382, %v1006
  %v1447 = vmul.f32 %v1383, %v1009
  %v1448 = vmul.f32 %v1384, %v1014
  %v1449 = vmul.f32 %v1385, %v1017
  %v1450 = vmul.f32 %v1386, %v1022
  %v1451 = vmul.f32 %v1387, %v1025
  %v1452 = vmul.f32 %v1388, %v1030
  %v1453 = vmul.f32 %v1389, %v1033
  %v1454 = vmul.f32 %v1390, %v1038
  %v1455 = vmul.f32 %v1391, %v1041
  %v1456 = vmul.f32 %v1392, %v1046
  %v1457 = vmul.f32 %v1393, %v1049
  %v1458 = vmul.f32 %v1394, %v1054
  %v1459 = vmul.f32 %v1395, %v1057
  %v1460 = vmul.f32 %v1396, %v1062
  %v1461 = vmul.f32 %v1397, %v1065
  %v1462 = vmul.f32 %v1398, %v1070
  %v1463 = vmul.f32 %v1399, %v1073
  %v1464 = vmul.f32 %v1400, %v1078
  %v1465 = vmul.f32 %v1401, %v1081
  %v1466 = vmul.f32 %v1402, %v1086
  %v1467 = vmul.f32 %v1403, %v1089
  %v1468 = vmul.f32 %v1404, %v1094
  %v1469 = vmul.f32 %v1405, %v1097
  %v1470 = vmul.f32 %v1406, %v1102
  %v1471 = vmul.f32 %v1407, %v1105
  %v1472 = vmul.f32 %v1408, %v1110
  %v1473 = vmul.f32 %v1409, %v1113
  %v1474 = vmul.f32 %v1410, %v1118
  %v1475 = vmul.f32 %v1411, %v1121
  %v1476 = vmul.f32 %v1412, %v1126
  %v1477 = vmul.f32 %v1413, %v1129
  %v1478 = vmul.f32 %v1414, %v1134
  %v1479 = vmul.f32 %v1415, %v1137
  %v1480 = vmul.f32 %v1416, %v1142
  %v1481 = vmul.f32 %v1417, %v1145
  %v1482 = vmul.f32 %v1418, %v1150
  %v1483 = vmul.f32 %v1419, %v1153
  %v1484 = vmul.f32 %v1420, %v1158
  %v1485 = vmul.f32 %v1421, %v1161
  %v1486 = vmul.f32 %v1422, %v1166
  %v1487 = vmul.f32 %v1423, %v1169
  %v1488 = vmul.f32 %v1424, %v1174
  %v1489 = vmul.f32 %v1425, %v1177
  %v1490 = vmul.f32 %v1426, %v1182
  %v1491 = vmul.f32 %v1427, %v1185
  %v1492 = vmul.f32 %v1428, %v1190
  %v1493 = vmul.f32 %v1429, %v1193
  %v1494 = vmul.f32 %v1430, %v1198
  %v1495 = vmul.f32 %v1431, %v1201
  %v1496 = vmul.f32 %v1432, %v1206
  %v1497 = vmul.f32 %v1433, %v1209
  %v1498 = vmul.f32 %v1434, %v1214
  %v1499 = vmul.f32 %v1435, %v1217
  %v1500 = vmul.f32 %v1436, %v1222
  %v1501 = vmul.f32 %v1437, %v1225
  %v1502 = vmul.f32 %v1438, %v1230
  %v1503 = vmul.f32 %v1439, %v1233
  %v1504 = vmul.f32 %v1440, %v1238
  %v1505 = vmul.f32 %v1441, %v1241
  %v1506 = vmul.f32 %v1442, %v1246
  %v1507 = vmul.f32 %v1443, %v1249
  %v1508 = vadd.f32 %v998, %v1444
  %v1509 = vadd.f32 %v1001, %v1445
  %v1510 = vadd.f32 %v1006, %v1446
  %v1511 = vadd.f32 %v1009, %v1447
  %v1512 = vadd.f32 %v1014, %v1448
  %v1513 = vadd.f32 %v1017, %v1449
  %v1514 = vadd.f32 %v1022, %v1450
  %v1515 = vadd.f32 %v1025, %v1451
  %v1516 = vadd.f32 %v1030, %v1452
  %v1517 = vadd.f32 %v1033, %v1453
  %v1518 = vadd.f32 %v1038, %v1454
  %v1519 = vadd.f32 %v1041, %v1455
  %v1520 = vadd.f32 %v1046, %v1456
  %v1521 = vadd.f32 %v1049, %v1457
  %v1522 = vadd.f32 %v1054, %v1458
  %v1523 = vadd.f32 %v1057, %v1459
  %v1524 = vadd.f32 %v1062, %v1460
  %v1525 = vadd.f32 %v1065, %v1461
  %v1526 = vadd.f32 %v1070, %v1462
  %v1527 = vadd.f32 %v1073, %v1463
  %v1528 = vadd.f32 %v1078, %v1464
  %v1529 = vadd.f32 %v1081, %v1465
  %v1530 = vadd.f32 %v1086, %v1466
  %v1531 = vadd.f32 %v1089, %v1467
  %v1532 = vadd.f32 %v1094, %v1468
  %v1533 = vadd.f32 %v1097, %v1469
  %v1534 = vadd.f32 %v1102, %v1470
  %v1535 = vadd.f32 %v1105, %v1471
  %v1536 = vadd.f32 %v1110, %v1472
  %v1537 = vadd.f32 %v1113, %v1473
  %v1538 = vadd.f32 %v1118, %v1474
  %v1539 = vadd.f32 %v1121, %v1475
  %v1540 = vadd.f32 %v1126, %v1476
  %v1541 = vadd.f32 %v1129, %v1477
  %v1542 = vadd.f32 %v1134, %v1478
  %v1543 = vadd.f32 %v1137, %v1479
  %v1544 = vadd.f32 %v1142, %v1480
  %v1545 = vadd.f32 %v1145, %v1481
  %v1546 = vadd.f32 %v1150, %v1482
  %v1547 = vadd.f32 %v1153, %v1483
  %v1548 = vadd.f32 %v1158, %v1484
  %v1549 = vadd.f32 %v1161, %v1485
  %v1550 = vadd.f32 %v1166, %v1486
  %v1551 = vadd.f32 %v1169, %v1487
  %v1552 = vadd.f32 %v1174, %v1488
  %v1553 = vadd.f32 %v1177, %v1489
  %v1554 = vadd.f32 %v1182, %v1490
  %v1555 = vadd.f32 %v1185, %v1491
  %v1556 = vadd.f32 %v1190, %v1492
  %v1557 = vadd.f32 %v1193, %v1493
  %v1558 = vadd.f32 %v1198, %v1494
  %v1559 = vadd.f32 %v1201, %v1495
  %v1560 = vadd.f32 %v1206, %v1496
  %v1561 = vadd.f32 %v1209, %v1497
  %v1562 = vadd.f32 %v1214, %v1498
  %v1563 = vadd.f32 %v1217, %v1499
  %v1564 = vadd.f32 %v1222, %v1500
  %v1565 = vadd.f32 %v1225, %v1501
  %v1566 = vadd.f32 %v1230, %v1502
  %v1567 = vadd.f32 %v1233, %v1503
  %v1568 = vadd.f32 %v1238, %v1504
  %v1569 = vadd.f32 %v1241, %v1505
  %v1570 = vadd.f32 %v1246, %v1506
  %v1571 = vadd.f32 %v1249, %v1507
  %v1572 = vmul.f32 %v1508, 0.7978846
  %v1573 = vmul.f32 %v1509, 0.7978846
  %v1574 = vmul.f32 %v1510, 0.7978846
  %v1575 = vmul.f32 %v1511, 0.7978846
  %v1576 = vmul.f32 %v1512, 0.7978846
  %v1577 = vmul.f32 %v1513, 0.7978846
  %v1578 = vmul.f32 %v1514, 0.7978846
  %v1579 = vmul.f32 %v1515, 0.7978846
  %v1580 = vmul.f32 %v1516, 0.7978846
  %v1581 = vmul.f32 %v1517, 0.7978846
  %v1582 = vmul.f32 %v1518, 0.7978846
  %v1583 = vmul.f32 %v1519, 0.7978846
  %v1584 = vmul.f32 %v1520, 0.7978846
  %v1585 = vmul.f32 %v1521, 0.7978846
  %v1586 = vmul.f32 %v1522, 0.7978846
  %v1587 = vmul.f32 %v1523, 0.7978846
  %v1588 = vmul.f32 %v1524, 0.7978846
  %v1589 = vmul.f32 %v1525, 0.7978846
  %v1590 = vmul.f32 %v1526, 0.7978846
  %v1591 = vmul.f32 %v1527, 0.7978846
  %v1592 = vmul.f32 %v1528, 0.7978846
  %v1593 = vmul.f32 %v1529, 0.7978846
  %v1594 = vmul.f32 %v1530, 0.7978846
  %v1595 = vmul.f32 %v1531, 0.7978846
  %v1596 = vmul.f32 %v1532, 0.7978846
  %v1597 = vmul.f32 %v1533, 0.7978846
  %v1598 = vmul.f32 %v1534, 0.7978846
  %v1599 = vmul.f32 %v1535, 0.7978846
  %v1600 = vmul.f32 %v1536, 0.7978846
  %v1601 = vmul.f32 %v1537, 0.7978846
  %v1602 = vmul.f32 %v1538, 0.7978846
  %v1603 = vmul.f32 %v1539, 0.7978846
  %v1604 = vmul.f32 %v1540, 0.7978846
  %v1605 = vmul.f32 %v1541, 0.7978846
  %v1606 = vmul.f32 %v1542, 0.7978846
  %v1607 = vmul.f32 %v1543, 0.7978846
  %v1608 = vmul.f32 %v1544, 0.7978846
  %v1609 = vmul.f32 %v1545, 0.7978846
  %v1610 = vmul.f32 %v1546, 0.7978846
  %v1611 = vmul.f32 %v1547, 0.7978846
  %v1612 = vmul.f32 %v1548, 0.7978846
  %v1613 = vmul.f32 %v1549, 0.7978846
  %v1614 = vmul.f32 %v1550, 0.7978846
  %v1615 = vmul.f32 %v1551, 0.7978846
  %v1616 = vmul.f32 %v1552, 0.7978846
  %v1617 = vmul.f32 %v1553, 0.7978846
  %v1618 = vmul.f32 %v1554, 0.7978846
  %v1619 = vmul.f32 %v1555, 0.7978846
  %v1620 = vmul.f32 %v1556, 0.7978846
  %v1621 = vmul.f32 %v1557, 0.7978846
  %v1622 = vmul.f32 %v1558, 0.7978846
  %v1623 = vmul.f32 %v1559, 0.7978846
  %v1624 = vmul.f32 %v1560, 0.7978846
  %v1625 = vmul.f32 %v1561, 0.7978846
  %v1626 = vmul.f32 %v1562, 0.7978846
  %v1627 = vmul.f32 %v1563, 0.7978846
  %v1628 = vmul.f32 %v1564, 0.7978846
  %v1629 = vmul.f32 %v1565, 0.7978846
  %v1630 = vmul.f32 %v1566, 0.7978846
  %v1631 = vmul.f32 %v1567, 0.7978846
  %v1632 = vmul.f32 %v1568, 0.7978846
  %v1633 = vmul.f32 %v1569, 0.7978846
  %v1634 = vmul.f32 %v1570, 0.7978846
  %v1635 = vmul.f32 %v1571, 0.7978846
  %v1636 = vtanh.pop %v1572
  %v1637 = vtanh.pop %v1573
  %v1638 = vtanh.pop %v1574
  %v1639 = vtanh.pop %v1575
  %v1640 = vtanh.pop %v1576
  %v1641 = vtanh.pop %v1577
  %v1642 = vtanh.pop %v1578
  %v1643 = vtanh.pop %v1579
  %v1644 = vtanh.pop %v1580
  %v1645 = vtanh.pop %v1581
  %v1646 = vtanh.pop %v1582
  %v1647 = vtanh.pop %v1583
  %v1648 = vtanh.pop %v1584
  %v1649 = vtanh.pop %v1585
  %v1650 = vtanh.pop %v1586
  %v1651 = vtanh.pop %v1587
  %v1652 = vtanh.pop %v1588
  %v1653 = vtanh.pop %v1589
  %v1654 = vtanh.pop %v1590
  %v1655 = vtanh.pop %v1591
  %v1656 = vtanh.pop %v1592
  %v1657 = vtanh.pop %v1593
  %v1658 = vtanh.pop %v1594
  %v1659 = vtanh.pop %v1595
  %v1660 = vtanh.pop %v1596
  %v1661 = vtanh.pop %v1597
  %v1662 = vtanh.pop %v1598
  %v1663 = vtanh.pop %v1599
  %v1664 = vtanh.pop %v1600
  %v1665 = vtanh.pop %v1601
  %v1666 = vtanh.pop %v1602
  %v1667 = vtanh.pop %v1603
  %v1668 = vtanh.pop %v1604
  %v1669 = vtanh.pop %v1605
  %v1670 = vtanh.pop %v1606
  %v1671 = vtanh.pop %v1607
  %v1672 = vtanh.pop %v1608
  %v1673 = vtanh.pop %v1609
  %v1674 = vtanh.pop %v1610
  %v1675 = vtanh.pop %v1611
  %v1676 = vtanh.pop %v1612
  %v1677 = vtanh.pop %v1613
  %v1678 = vtanh.pop %v1614
  %v1679 = vtanh.pop %v1615
  %v1680 = vtanh.pop %v1616
  %v1681 = vtanh.pop %v1617
  %v1682 = vtanh.pop %v1618
  %v1683 = vtanh.pop %v1619
  %v1684 = vtanh.pop %v1620
  %v1685 = vtanh.pop %v1621
  %v1686 = vtanh.pop %v1622
  %v1687 = vtanh.pop %v1623
  %v1688 = vtanh.pop %v1624
  %v1689 = vtanh.pop %v1625
  %v1690 = vtanh.pop %v1626
  %v1691 = vtanh.pop %v1627
  %v1692 = vtanh.pop %v1628
  %v1693 = vtanh.pop %v1629
  %v1694 = vtanh.pop %v1630
  %v1695 = vtanh.pop %v1631
  %v1696 = vtanh.pop %v1632
  %v1697 = vtanh.pop %v1633
  %v1698 = vtanh.pop %v1634
  %v1699 = vtanh.pop %v1635
  %v1700 = vadd.f32 %v1636, 1.0
  %v1701 = vadd.f32 %v1637, 1.0
  %v1702 = vadd.f32 %v1638, 1.0
  %v1703 = vadd.f32 %v1639, 1.0
  %v1704 = vadd.f32 %v1640, 1.0
  %v1705 = vadd.f32 %v1641, 1.0
  %v1706 = vadd.f32 %v1642, 1.0
  %v1707 = vadd.f32 %v1643, 1.0
  %v1708 = vadd.f32 %v1644, 1.0
  %v1709 = vadd.f32 %v1645, 1.0
  %v1710 = vadd.f32 %v1646, 1.0
  %v1711 = vadd.f32 %v1647, 1.0
  %v1712 = vadd.f32 %v1648, 1.0
  %v1713 = vadd.f32 %v1649, 1.0
  %v1714 = vadd.f32 %v1650, 1.0
  %v1715 = vadd.f32 %v1651, 1.0
  %v1716 = vadd.f32 %v1652, 1.0
  %v1717 = vadd.f32 %v1653, 1.0
  %v1718 = vadd.f32 %v1654, 1.0
  %v1719 = vadd.f32 %v1655, 1.0
  %v1720 = vadd.f32 %v1656, 1.0
  %v1721 = vadd.f32 %v1657, 1.0
  %v1722 = vadd.f32 %v1658, 1.0
  %v1723 = vadd.f32 %v1659, 1.0
  %v1724 = vadd.f32 %v1660, 1.0
  %v1725 = vadd.f32 %v1661, 1.0
  %v1726 = vadd.f32 %v1662, 1.0
  %v1727 = vadd.f32 %v1663, 1.0
  %v1728 = vadd.f32 %v1664, 1.0
  %v1729 = vadd.f32 %v1665, 1.0
  %v1730 = vadd.f32 %v1666, 1.0
  %v1731 = vadd.f32 %v1667, 1.0
  %v1732 = vadd.f32 %v1668, 1.0
  %v1733 = vadd.f32 %v1669, 1.0
  %v1734 = vadd.f32 %v1670, 1.0
  %v1735 = vadd.f32 %v1671, 1.0
  %v1736 = vadd.f32 %v1672, 1.0
  %v1737 = vadd.f32 %v1673, 1.0
  %v1738 = vadd.f32 %v1674, 1.0
  %v1739 = vadd.f32 %v1675, 1.0
  %v1740 = vadd.f32 %v1676, 1.0
  %v1741 = vadd.f32 %v1677, 1.0
  %v1742 = vadd.f32 %v1678, 1.0
  %v1743 = vadd.f32 %v1679, 1.0
  %v1744 = vadd.f32 %v1680, 1.0
  %v1745 = vadd.f32 %v1681, 1.0
  %v1746 = vadd.f32 %v1682, 1.0
  %v1747 = vadd.f32 %v1683, 1.0
  %v1748 = vadd.f32 %v1684, 1.0
  %v1749 = vadd.f32 %v1685, 1.0
  %v1750 = vadd.f32 %v1686, 1.0
  %v1751 = vadd.f32 %v1687, 1.0
  %v1752 = vadd.f32 %v1688, 1.0
  %v1753 = vadd.f32 %v1689, 1.0
  %v1754 = vadd.f32 %v1690, 1.0
  %v1755 = vadd.f32 %v1691, 1.0
  %v1756 = vadd.f32 %v1692, 1.0
  %v1757 = vadd.f32 %v1693, 1.0
  %v1758 = vadd.f32 %v1694, 1.0
  %v1759 = vadd.f32 %v1695, 1.0
  %v1760 = vadd.f32 %v1696, 1.0
  %v1761 = vadd.f32 %v1697, 1.0
  %v1762 = vadd.f32 %v1698, 1.0
  %v1763 = vadd.f32 %v1699, 1.0
  %v1764 = vmul.f32 %v1252, %v1700
  %v1765 = vmul.f32 %v1253, %v1701
  %v1766 = vmul.f32 %v1254, %v1702
  %v1767 = vmul.f32 %v1255, %v1703
  %v1768 = vmul.f32 %v1256, %v1704
  %v1769 = vmul.f32 %v1257, %v1705
  %v1770 = vmul.f32 %v1258, %v1706
  %v1771 = vmul.f32 %v1259, %v1707
  %v1772 = vmul.f32 %v1260, %v1708
  %v1773 = vmul.f32 %v1261, %v1709
  %v1774 = vmul.f32 %v1262, %v1710
  %v1775 = vmul.f32 %v1263, %v1711
  %v1776 = vmul.f32 %v1264, %v1712
  %v1777 = vmul.f32 %v1265, %v1713
  %v1778 = vmul.f32 %v1266, %v1714
  %v1779 = vmul.f32 %v1267, %v1715
  %v1780 = vmul.f32 %v1268, %v1716
  %v1781 = vmul.f32 %v1269, %v1717
  %v1782 = vmul.f32 %v1270, %v1718
  %v1783 = vmul.f32 %v1271, %v1719
  %v1784 = vmul.f32 %v1272, %v1720
  %v1785 = vmul.f32 %v1273, %v1721
  %v1786 = vmul.f32 %v1274, %v1722
  %v1787 = vmul.f32 %v1275, %v1723
  %v1788 = vmul.f32 %v1276, %v1724
  %v1789 = vmul.f32 %v1277, %v1725
  %v1790 = vmul.f32 %v1278, %v1726
  %v1791 = vmul.f32 %v1279, %v1727
  %v1792 = vmul.f32 %v1280, %v1728
  %v1793 = vmul.f32 %v1281, %v1729
  %v1794 = vmul.f32 %v1282, %v1730
  %v1795 = vmul.f32 %v1283, %v1731
  %v1796 = vmul.f32 %v1284, %v1732
  %v1797 = vmul.f32 %v1285, %v1733
  %v1798 = vmul.f32 %v1286, %v1734
  %v1799 = vmul.f32 %v1287, %v1735
  %v1800 = vmul.f32 %v1288, %v1736
  %v1801 = vmul.f32 %v1289, %v1737
  %v1802 = vmul.f32 %v1290, %v1738
  %v1803 = vmul.f32 %v1291, %v1739
  %v1804 = vmul.f32 %v1292, %v1740
  %v1805 = vmul.f32 %v1293, %v1741
  %v1806 = vmul.f32 %v1294, %v1742
  %v1807 = vmul.f32 %v1295, %v1743
  %v1808 = vmul.f32 %v1296, %v1744
  %v1809 = vmul.f32 %v1297, %v1745
  %v1810 = vmul.f32 %v1298, %v1746
  %v1811 = vmul.f32 %v1299, %v1747
  %v1812 = vmul.f32 %v1300, %v1748
  %v1813 = vmul.f32 %v1301, %v1749
  %v1814 = vmul.f32 %v1302, %v1750
  %v1815 = vmul.f32 %v1303, %v1751
  %v1816 = vmul.f32 %v1304, %v1752
  %v1817 = vmul.f32 %v1305, %v1753
  %v1818 = vmul.f32 %v1306, %v1754
  %v1819 = vmul.f32 %v1307, %v1755
  %v1820 = vmul.f32 %v1308, %v1756
  %v1821 = vmul.f32 %v1309, %v1757
  %v1822 = vmul.f32 %v1310, %v1758
  %v1823 = vmul.f32 %v1311, %v1759
  %v1824 = vmul.f32 %v1312, %v1760
  %v1825 = vmul.f32 %v1313, %v1761
  %v1826 = vmul.f32 %v1314, %v1762
  %v1827 = vmul.f32 %v1315, %v1763
  %v1828 = vpack.c.bf16 %v1765, %v1764
  %v1829 = vpack.c.bf16 %v1767, %v1766
  %v1830 = vpack.c.bf16 %v1769, %v1768
  %v1831 = vpack.c.bf16 %v1771, %v1770
  %v1832 = vpack.c.bf16 %v1773, %v1772
  %v1833 = vpack.c.bf16 %v1775, %v1774
  %v1834 = vpack.c.bf16 %v1777, %v1776
  %v1835 = vpack.c.bf16 %v1779, %v1778
  %v1836 = vpack.c.bf16 %v1781, %v1780
  %v1837 = vpack.c.bf16 %v1783, %v1782
  %v1838 = vpack.c.bf16 %v1785, %v1784
  %v1839 = vpack.c.bf16 %v1787, %v1786
  %v1840 = vpack.c.bf16 %v1789, %v1788
  %v1841 = vpack.c.bf16 %v1791, %v1790
  %v1842 = vpack.c.bf16 %v1793, %v1792
  %v1843 = vpack.c.bf16 %v1795, %v1794
  %v1844 = vpack.c.bf16 %v1797, %v1796
  %v1845 = vpack.c.bf16 %v1799, %v1798
  %v1846 = vpack.c.bf16 %v1801, %v1800
  %v1847 = vpack.c.bf16 %v1803, %v1802
  %v1848 = vpack.c.bf16 %v1805, %v1804
  %v1849 = vpack.c.bf16 %v1807, %v1806
  %v1850 = vpack.c.bf16 %v1809, %v1808
  %v1851 = vpack.c.bf16 %v1811, %v1810
  %v1852 = vpack.c.bf16 %v1813, %v1812
  %v1853 = vpack.c.bf16 %v1815, %v1814
  %v1854 = vpack.c.bf16 %v1817, %v1816
  %v1855 = vpack.c.bf16 %v1819, %v1818
  %v1856 = vpack.c.bf16 %v1821, %v1820
  %v1857 = vpack.c.bf16 %v1823, %v1822
  %v1858 = vpack.c.bf16 %v1825, %v1824
  %v1859 = vpack.c.bf16 %v1827, %v1826
  %v1860 = vld [vmem:[%s3] sm:$0xf]
  %v1861 = vld [vmem:[%s3 + $0x4] sm:$0xf]
  %v1862 = vld [vmem:[%s3 + $0x8] sm:$0xf]
  %v1863 = vld [vmem:[%s3 + $0xc] sm:$0xf]
  %v1864 = vld [vmem:[%s3 + $0x10] sm:$0xf]
  %v1865 = vld [vmem:[%s3 + $0x14] sm:$0xf]
  %v1866 = vld [vmem:[%s3 + $0x18] sm:$0xf]
  %v1867 = vld [vmem:[%s3 + $0x1c] sm:$0xf]
  %v1868 = vld [vmem:[%s3 + $0x20] sm:$0xf]
  %v1869 = vld [vmem:[%s3 + $0x24] sm:$0xf]
  %v1870 = vld [vmem:[%s3 + $0x28] sm:$0xf]
  %v1871 = vld [vmem:[%s3 + $0x2c] sm:$0xf]
  %v1872 = vld [vmem:[%s3 + $0x30] sm:$0xf]
  %v1873 = vld [vmem:[%s3 + $0x34] sm:$0xf]
  %v1874 = vld [vmem:[%s3 + $0x38] sm:$0xf]
  %v1875 = vld [vmem:[%s3 + $0x3c] sm:$0xf]
  %v1876 = vld [vmem:[%s4] sm:$0x1]
  %v1878 = vlaneseq
  %v1879 = vshrl.u32 %v1878, 7
  %v1880 = vsub.s32 0, %v1879
  %v1881 = vrot.slane %v1876, %v1880
  %v1899 = vunpack.c.l.b16 %v1860
  %v1900 = vunpack.c.l.b16 %v1861
  %v1901 = vunpack.c.l.b16 %v1862
  %v1902 = vunpack.c.l.b16 %v1863
  %v1903 = vunpack.c.l.b16 %v1864
  %v1904 = vunpack.c.l.b16 %v1865
  %v1905 = vunpack.c.l.b16 %v1866
  %v1906 = vunpack.c.l.b16 %v1867
  %v1907 = vunpack.c.l.b16 %v1868
  %v1908 = vunpack.c.l.b16 %v1869
  %v1909 = vunpack.c.l.b16 %v1870
  %v1910 = vunpack.c.l.b16 %v1871
  %v1911 = vunpack.c.l.b16 %v1872
  %v1912 = vunpack.c.l.b16 %v1873
  %v1913 = vunpack.c.l.b16 %v1874
  %v1914 = vunpack.c.l.b16 %v1875
  %v1915 = vpack.c.b16 %v1900, %v1899
  %v1916 = vpack.c.b16 %v1902, %v1901
  %v1917 = vpack.c.b16 %v1904, %v1903
  %v1918 = vpack.c.b16 %v1906, %v1905
  %v1919 = vpack.c.b16 %v1908, %v1907
  %v1920 = vpack.c.b16 %v1910, %v1909
  %v1921 = vpack.c.b16 %v1912, %v1911
  %v1922 = vpack.c.b16 %v1914, %v1913
  %1931 = vmatprep.subr.bf16.mxu0 0
  %1932 = vmatpush1.bf16.msra.mxu0 %v1922
  %1933 = vmatprep.subr.bf16.mxu0 0
  %1934 = vmatpush1.bf16.msra.mxu0 %v1921
  %1935 = vmatprep.subr.bf16.mxu0 0
  %1936 = vmatpush1.bf16.msra.mxu0 %v1920
  %1937 = vmatprep.subr.bf16.mxu0 0
  %1938 = vmatpush1.bf16.msra.mxu0 %v1919
  %1939 = vmatprep.subr.bf16.mxu0 0
  %1940 = vmatpush1.bf16.msra.mxu0 %v1918
  %1941 = vmatprep.subr.bf16.mxu0 0
  %1942 = vmatpush1.bf16.msra.mxu0 %v1917
  %1943 = vmatprep.subr.bf16.mxu0 0
  %1944 = vmatpush1.bf16.msra.mxu0 %v1916
  %1945 = vmatprep.subr.bf16.mxu0 0
  %1946 = vmatpush1.bf16.msra.mxu0 %v1915
  %1947 = vmatprep.subr.bf16.mxu0 0
  %1948 = vmatpush2.bf16.msra.mxu0 0
  %1949 = vmatprep.subr.bf16.mxu0 0
  %1950 = vmatpush2.bf16.msra.mxu0 0
  %1951 = vmatprep.subr.bf16.mxu0 0
  %1952 = vmatpush2.bf16.msra.mxu0 0
  %1953 = vmatprep.subr.bf16.mxu0 0
  %1954 = vmatpush2.bf16.msra.mxu0 0
  %1955 = vmatprep.subr.bf16.mxu0 0
  %1956 = vmatpush2.bf16.msra.mxu0 0
  %1957 = vmatprep.subr.bf16.mxu0 0
  %1958 = vmatpush2.bf16.msra.mxu0 0
  %1959 = vmatprep.subr.bf16.mxu0 0
  %1960 = vmatpush2.bf16.msra.mxu0 0
  %1961 = vmatprep.subr.bf16.mxu0 0
  %1962 = vmatpush2.bf16.msra.mxu0 0
  %1963 = vmatprep.mubr.bf16.mxu0 0
  %1964 = vmatmul.mubr.bf16.gmra.mxu0 %v1828
  %v1965 = vpop.f32.mrf.mxu0
  %v1966 = vadd.f32 %v1881, %v1965
  %v1967 = vpop.f32.mrf.mxu0
  %v1968 = vpop.f32.mrf.mxu0
  %v1969 = vadd.f32 %v1881, %v1968
  %v1970 = vpop.f32.mrf.mxu0
  %1971 = vmatprep.mubr.bf16.mxu0 0
  %1972 = vmatmul.mubr.bf16.gmra.mxu0 %v1829
  %v1973 = vpop.f32.mrf.mxu0
  %v1974 = vadd.f32 %v1881, %v1973
  %v1975 = vpop.f32.mrf.mxu0
  %v1976 = vpop.f32.mrf.mxu0
  %v1977 = vadd.f32 %v1881, %v1976
  %v1978 = vpop.f32.mrf.mxu0
  %1979 = vmatprep.mubr.bf16.mxu0 0
  %1980 = vmatmul.mubr.bf16.gmra.mxu0 %v1830
  %v1981 = vpop.f32.mrf.mxu0
  %v1982 = vadd.f32 %v1881, %v1981
  %v1983 = vpop.f32.mrf.mxu0
  %v1984 = vpop.f32.mrf.mxu0
  %v1985 = vadd.f32 %v1881, %v1984
  %v1986 = vpop.f32.mrf.mxu0
  %1987 = vmatprep.mubr.bf16.mxu0 0
  %1988 = vmatmul.mubr.bf16.gmra.mxu0 %v1831
  %v1989 = vpop.f32.mrf.mxu0
  %v1990 = vadd.f32 %v1881, %v1989
  %v1991 = vpop.f32.mrf.mxu0
  %v1992 = vpop.f32.mrf.mxu0
  %v1993 = vadd.f32 %v1881, %v1992
  %v1994 = vpop.f32.mrf.mxu0
  %1995 = vmatprep.mubr.bf16.mxu0 0
  %1996 = vmatmul.mubr.bf16.gmra.mxu0 %v1832
  %v1997 = vpop.f32.mrf.mxu0
  %v1998 = vadd.f32 %v1881, %v1997
  %v1999 = vpop.f32.mrf.mxu0
  %v2000 = vpop.f32.mrf.mxu0
  %v2001 = vadd.f32 %v1881, %v2000
  %v2002 = vpop.f32.mrf.mxu0
  %2003 = vmatprep.mubr.bf16.mxu0 0
  %2004 = vmatmul.mubr.bf16.gmra.mxu0 %v1833
  %v2005 = vpop.f32.mrf.mxu0
  %v2006 = vadd.f32 %v1881, %v2005
  %v2007 = vpop.f32.mrf.mxu0
  %v2008 = vpop.f32.mrf.mxu0
  %v2009 = vadd.f32 %v1881, %v2008
  %v2010 = vpop.f32.mrf.mxu0
  %2011 = vmatprep.mubr.bf16.mxu0 0
  %2012 = vmatmul.mubr.bf16.gmra.mxu0 %v1834
  %v2013 = vpop.f32.mrf.mxu0
  %v2014 = vadd.f32 %v1881, %v2013
  %v2015 = vpop.f32.mrf.mxu0
  %v2016 = vpop.f32.mrf.mxu0
  %v2017 = vadd.f32 %v1881, %v2016
  %v2018 = vpop.f32.mrf.mxu0
  %2019 = vmatprep.mubr.bf16.mxu0 0
  %2020 = vmatmul.mubr.bf16.gmra.mxu0 %v1835
  %v2021 = vpop.f32.mrf.mxu0
  %v2022 = vadd.f32 %v1881, %v2021
  %v2023 = vpop.f32.mrf.mxu0
  %v2024 = vpop.f32.mrf.mxu0
  %v2025 = vadd.f32 %v1881, %v2024
  %v2026 = vpop.f32.mrf.mxu0
  %2027 = vmatprep.mubr.bf16.mxu0 0
  %2028 = vmatmul.mubr.bf16.gmra.mxu0 %v1836
  %v2029 = vpop.f32.mrf.mxu0
  %v2030 = vadd.f32 %v1881, %v2029
  %v2031 = vpop.f32.mrf.mxu0
  %v2032 = vpop.f32.mrf.mxu0
  %v2033 = vadd.f32 %v1881, %v2032
  %v2034 = vpop.f32.mrf.mxu0
  %2035 = vmatprep.mubr.bf16.mxu0 0
  %2036 = vmatmul.mubr.bf16.gmra.mxu0 %v1837
  %v2037 = vpop.f32.mrf.mxu0
  %v2038 = vadd.f32 %v1881, %v2037
  %v2039 = vpop.f32.mrf.mxu0
  %v2040 = vpop.f32.mrf.mxu0
  %v2041 = vadd.f32 %v1881, %v2040
  %v2042 = vpop.f32.mrf.mxu0
  %2043 = vmatprep.mubr.bf16.mxu0 0
  %2044 = vmatmul.mubr.bf16.gmra.mxu0 %v1838
  %v2045 = vpop.f32.mrf.mxu0
  %v2046 = vadd.f32 %v1881, %v2045
  %v2047 = vpop.f32.mrf.mxu0
  %v2048 = vpop.f32.mrf.mxu0
  %v2049 = vadd.f32 %v1881, %v2048
  %v2050 = vpop.f32.mrf.mxu0
  %2051 = vmatprep.mubr.bf16.mxu0 0
  %2052 = vmatmul.mubr.bf16.gmra.mxu0 %v1839
  %v2053 = vpop.f32.mrf.mxu0
  %v2054 = vadd.f32 %v1881, %v2053
  %v2055 = vpop.f32.mrf.mxu0
  %v2056 = vpop.f32.mrf.mxu0
  %v2057 = vadd.f32 %v1881, %v2056
  %v2058 = vpop.f32.mrf.mxu0
  %2059 = vmatprep.mubr.bf16.mxu0 0
  %2060 = vmatmul.mubr.bf16.gmra.mxu0 %v1840
  %v2061 = vpop.f32.mrf.mxu0
  %v2062 = vadd.f32 %v1881, %v2061
  %v2063 = vpop.f32.mrf.mxu0
  %v2064 = vpop.f32.mrf.mxu0
  %v2065 = vadd.f32 %v1881, %v2064
  %v2066 = vpop.f32.mrf.mxu0
  %2067 = vmatprep.mubr.bf16.mxu0 0
  %2068 = vmatmul.mubr.bf16.gmra.mxu0 %v1841
  %v2069 = vpop.f32.mrf.mxu0
  %v2070 = vadd.f32 %v1881, %v2069
  %v2071 = vpop.f32.mrf.mxu0
  %v2072 = vpop.f32.mrf.mxu0
  %v2073 = vadd.f32 %v1881, %v2072
  %v2074 = vpop.f32.mrf.mxu0
  %2075 = vmatprep.mubr.bf16.mxu0 0
  %2076 = vmatmul.mubr.bf16.gmra.mxu0 %v1842
  %v2077 = vpop.f32.mrf.mxu0
  %v2078 = vadd.f32 %v1881, %v2077
  %v2079 = vpop.f32.mrf.mxu0
  %v2080 = vpop.f32.mrf.mxu0
  %v2081 = vadd.f32 %v1881, %v2080
  %v2082 = vpop.f32.mrf.mxu0
  %2083 = vmatprep.mubr.bf16.mxu0 0
  %2084 = vmatmul.mubr.bf16.gmra.mxu0 %v1843
  %v2085 = vpop.f32.mrf.mxu0
  %v2086 = vadd.f32 %v1881, %v2085
  %v2087 = vpop.f32.mrf.mxu0
  %v2088 = vpop.f32.mrf.mxu0
  %v2089 = vadd.f32 %v1881, %v2088
  %v2090 = vpop.f32.mrf.mxu0
  %2091 = vmatprep.mubr.bf16.mxu0 0
  %2092 = vmatmul.mubr.bf16.gmra.mxu0 %v1844
  %v2093 = vpop.f32.mrf.mxu0
  %v2094 = vadd.f32 %v1881, %v2093
  %v2095 = vpop.f32.mrf.mxu0
  %v2096 = vpop.f32.mrf.mxu0
  %v2097 = vadd.f32 %v1881, %v2096
  %v2098 = vpop.f32.mrf.mxu0
  %2099 = vmatprep.mubr.bf16.mxu0 0
  %2100 = vmatmul.mubr.bf16.gmra.mxu0 %v1845
  %v2101 = vpop.f32.mrf.mxu0
  %v2102 = vadd.f32 %v1881, %v2101
  %v2103 = vpop.f32.mrf.mxu0
  %v2104 = vpop.f32.mrf.mxu0
  %v2105 = vadd.f32 %v1881, %v2104
  %v2106 = vpop.f32.mrf.mxu0
  %2107 = vmatprep.mubr.bf16.mxu0 0
  %2108 = vmatmul.mubr.bf16.gmra.mxu0 %v1846
  %v2109 = vpop.f32.mrf.mxu0
  %v2110 = vadd.f32 %v1881, %v2109
  %v2111 = vpop.f32.mrf.mxu0
  %v2112 = vpop.f32.mrf.mxu0
  %v2113 = vadd.f32 %v1881, %v2112
  %v2114 = vpop.f32.mrf.mxu0
  %2115 = vmatprep.mubr.bf16.mxu0 0
  %2116 = vmatmul.mubr.bf16.gmra.mxu0 %v1847
  %v2117 = vpop.f32.mrf.mxu0
  %v2118 = vadd.f32 %v1881, %v2117
  %v2119 = vpop.f32.mrf.mxu0
  %v2120 = vpop.f32.mrf.mxu0
  %v2121 = vadd.f32 %v1881, %v2120
  %v2122 = vpop.f32.mrf.mxu0
  %2123 = vmatprep.mubr.bf16.mxu0 0
  %2124 = vmatmul.mubr.bf16.gmra.mxu0 %v1848
  %v2125 = vpop.f32.mrf.mxu0
  %v2126 = vadd.f32 %v1881, %v2125
  %v2127 = vpop.f32.mrf.mxu0
  %v2128 = vpop.f32.mrf.mxu0
  %v2129 = vadd.f32 %v1881, %v2128
  %v2130 = vpop.f32.mrf.mxu0
  %2131 = vmatprep.mubr.bf16.mxu0 0
  %2132 = vmatmul.mubr.bf16.gmra.mxu0 %v1849
  %v2133 = vpop.f32.mrf.mxu0
  %v2134 = vadd.f32 %v1881, %v2133
  %v2135 = vpop.f32.mrf.mxu0
  %v2136 = vpop.f32.mrf.mxu0
  %v2137 = vadd.f32 %v1881, %v2136
  %v2138 = vpop.f32.mrf.mxu0
  %2139 = vmatprep.mubr.bf16.mxu0 0
  %2140 = vmatmul.mubr.bf16.gmra.mxu0 %v1850
  %v2141 = vpop.f32.mrf.mxu0
  %v2142 = vadd.f32 %v1881, %v2141
  %v2143 = vpop.f32.mrf.mxu0
  %v2144 = vpop.f32.mrf.mxu0
  %v2145 = vadd.f32 %v1881, %v2144
  %v2146 = vpop.f32.mrf.mxu0
  %2147 = vmatprep.mubr.bf16.mxu0 0
  %2148 = vmatmul.mubr.bf16.gmra.mxu0 %v1851
  %v2149 = vpop.f32.mrf.mxu0
  %v2150 = vadd.f32 %v1881, %v2149
  %v2151 = vpop.f32.mrf.mxu0
  %v2152 = vpop.f32.mrf.mxu0
  %v2153 = vadd.f32 %v1881, %v2152
  %v2154 = vpop.f32.mrf.mxu0
  %2155 = vmatprep.mubr.bf16.mxu0 0
  %2156 = vmatmul.mubr.bf16.gmra.mxu0 %v1852
  %v2157 = vpop.f32.mrf.mxu0
  %v2158 = vadd.f32 %v1881, %v2157
  %v2159 = vpop.f32.mrf.mxu0
  %v2160 = vpop.f32.mrf.mxu0
  %v2161 = vadd.f32 %v1881, %v2160
  %v2162 = vpop.f32.mrf.mxu0
  %2163 = vmatprep.mubr.bf16.mxu0 0
  %2164 = vmatmul.mubr.bf16.gmra.mxu0 %v1853
  %v2165 = vpop.f32.mrf.mxu0
  %v2166 = vadd.f32 %v1881, %v2165
  %v2167 = vpop.f32.mrf.mxu0
  %v2168 = vpop.f32.mrf.mxu0
  %v2169 = vadd.f32 %v1881, %v2168
  %v2170 = vpop.f32.mrf.mxu0
  %2171 = vmatprep.mubr.bf16.mxu0 0
  %2172 = vmatmul.mubr.bf16.gmra.mxu0 %v1854
  %v2173 = vpop.f32.mrf.mxu0
  %v2174 = vadd.f32 %v1881, %v2173
  %v2175 = vpop.f32.mrf.mxu0
  %v2176 = vpop.f32.mrf.mxu0
  %v2177 = vadd.f32 %v1881, %v2176
  %v2178 = vpop.f32.mrf.mxu0
  %2179 = vmatprep.mubr.bf16.mxu0 0
  %2180 = vmatmul.mubr.bf16.gmra.mxu0 %v1855
  %v2181 = vpop.f32.mrf.mxu0
  %v2182 = vadd.f32 %v1881, %v2181
  %v2183 = vpop.f32.mrf.mxu0
  %v2184 = vpop.f32.mrf.mxu0
  %v2185 = vadd.f32 %v1881, %v2184
  %v2186 = vpop.f32.mrf.mxu0
  %2187 = vmatprep.mubr.bf16.mxu0 0
  %2188 = vmatmul.mubr.bf16.gmra.mxu0 %v1856
  %v2189 = vpop.f32.mrf.mxu0
  %v2190 = vadd.f32 %v1881, %v2189
  %v2191 = vpop.f32.mrf.mxu0
  %v2192 = vpop.f32.mrf.mxu0
  %v2193 = vadd.f32 %v1881, %v2192
  %v2194 = vpop.f32.mrf.mxu0
  %2195 = vmatprep.mubr.bf16.mxu0 0
  %2196 = vmatmul.mubr.bf16.gmra.mxu0 %v1857
  %v2197 = vpop.f32.mrf.mxu0
  %v2198 = vadd.f32 %v1881, %v2197
  %v2199 = vpop.f32.mrf.mxu0
  %v2200 = vpop.f32.mrf.mxu0
  %v2201 = vadd.f32 %v1881, %v2200
  %v2202 = vpop.f32.mrf.mxu0
  %2203 = vmatprep.mubr.bf16.mxu0 0
  %2204 = vmatmul.mubr.bf16.gmra.mxu0 %v1858
  %v2205 = vpop.f32.mrf.mxu0
  %v2206 = vadd.f32 %v1881, %v2205
  %v2207 = vpop.f32.mrf.mxu0
  %v2208 = vpop.f32.mrf.mxu0
  %v2209 = vadd.f32 %v1881, %v2208
  %v2210 = vpop.f32.mrf.mxu0
  %2211 = vmatprep.mubr.bf16.mxu0 0
  %2212 = vmatmul.mubr.bf16.gmra.mxu0 %v1859
  %v2213 = vpop.f32.mrf.mxu0
  %v2214 = vadd.f32 %v1881, %v2213
  %v2215 = vpop.f32.mrf.mxu0
  %v2216 = vpop.f32.mrf.mxu0
  %v2217 = vadd.f32 %v1881, %v2216
  %v2218 = vpop.f32.mrf.mxu0
  %2219 = vdwg.mxu0
  %v2220 = vadd.f32 %v91, %v1966
  %v2221 = vadd.f32 %v92, %v1969
  %v2222 = vadd.f32 %v93, %v1974
  %v2223 = vadd.f32 %v94, %v1977
  %v2224 = vadd.f32 %v95, %v1982
  %v2225 = vadd.f32 %v96, %v1985
  %v2226 = vadd.f32 %v97, %v1990
  %v2227 = vadd.f32 %v98, %v1993
  %v2228 = vadd.f32 %v99, %v1998
  %v2229 = vadd.f32 %v100, %v2001
  %v2230 = vadd.f32 %v101, %v2006
  %v2231 = vadd.f32 %v102, %v2009
  %v2232 = vadd.f32 %v103, %v2014
  %v2233 = vadd.f32 %v104, %v2017
  %v2234 = vadd.f32 %v105, %v2022
  %v2235 = vadd.f32 %v106, %v2025
  %v2236 = vadd.f32 %v107, %v2030
  %v2237 = vadd.f32 %v108, %v2033
  %v2238 = vadd.f32 %v109, %v2038
  %v2239 = vadd.f32 %v110, %v2041
  %v2240 = vadd.f32 %v111, %v2046
  %v2241 = vadd.f32 %v112, %v2049
  %v2242 = vadd.f32 %v113, %v2054
  %v2243 = vadd.f32 %v114, %v2057
  %v2244 = vadd.f32 %v115, %v2062
  %v2245 = vadd.f32 %v116, %v2065
  %v2246 = vadd.f32 %v117, %v2070
  %v2247 = vadd.f32 %v118, %v2073
  %v2248 = vadd.f32 %v119, %v2078
  %v2249 = vadd.f32 %v120, %v2081
  %v2250 = vadd.f32 %v121, %v2086
  %v2251 = vadd.f32 %v122, %v2089
  %v2252 = vadd.f32 %v123, %v2094
  %v2253 = vadd.f32 %v124, %v2097
  %v2254 = vadd.f32 %v125, %v2102
  %v2255 = vadd.f32 %v126, %v2105
  %v2256 = vadd.f32 %v127, %v2110
  %v2257 = vadd.f32 %v128, %v2113
  %v2258 = vadd.f32 %v129, %v2118
  %v2259 = vadd.f32 %v130, %v2121
  %v2260 = vadd.f32 %v131, %v2126
  %v2261 = vadd.f32 %v132, %v2129
  %v2262 = vadd.f32 %v133, %v2134
  %v2263 = vadd.f32 %v134, %v2137
  %v2264 = vadd.f32 %v135, %v2142
  %v2265 = vadd.f32 %v136, %v2145
  %v2266 = vadd.f32 %v137, %v2150
  %v2267 = vadd.f32 %v138, %v2153
  %v2268 = vadd.f32 %v139, %v2158
  %v2269 = vadd.f32 %v140, %v2161
  %v2270 = vadd.f32 %v141, %v2166
  %v2271 = vadd.f32 %v142, %v2169
  %v2272 = vadd.f32 %v143, %v2174
  %v2273 = vadd.f32 %v144, %v2177
  %v2274 = vadd.f32 %v145, %v2182
  %v2275 = vadd.f32 %v146, %v2185
  %v2276 = vadd.f32 %v147, %v2190
  %v2277 = vadd.f32 %v148, %v2193
  %v2278 = vadd.f32 %v149, %v2198
  %v2279 = vadd.f32 %v150, %v2201
  %v2280 = vadd.f32 %v151, %v2206
  %v2281 = vadd.f32 %v152, %v2209
  %v2282 = vadd.f32 %v153, %v2214
  %v2283 = vadd.f32 %v154, %v2217
  %2284 = vadd.xlane.f32.xlu0 %v2220
  %v2285 = vpop.xlane.xlu0 %2284
  %2286 = vadd.xlane.f32.xlu0 %v2221
  %v2287 = vpop.xlane.xlu0 %2286
  %2288 = vadd.xlane.f32.xlu0 %v2222
  %v2289 = vpop.xlane.xlu0 %2288
  %2290 = vadd.xlane.f32.xlu0 %v2223
  %v2291 = vpop.xlane.xlu0 %2290
  %2292 = vadd.xlane.f32.xlu0 %v2224
  %v2293 = vpop.xlane.xlu0 %2292
  %2294 = vadd.xlane.f32.xlu0 %v2225
  %v2295 = vpop.xlane.xlu0 %2294
  %2296 = vadd.xlane.f32.xlu0 %v2226
  %v2297 = vpop.xlane.xlu0 %2296
  %2298 = vadd.xlane.f32.xlu0 %v2227
  %v2299 = vpop.xlane.xlu0 %2298
  %2300 = vadd.xlane.f32.xlu0 %v2228
  %v2301 = vpop.xlane.xlu0 %2300
  %2302 = vadd.xlane.f32.xlu0 %v2229
  %v2303 = vpop.xlane.xlu0 %2302
  %2304 = vadd.xlane.f32.xlu0 %v2230
  %v2305 = vpop.xlane.xlu0 %2304
  %2306 = vadd.xlane.f32.xlu0 %v2231
  %v2307 = vpop.xlane.xlu0 %2306
  %2308 = vadd.xlane.f32.xlu0 %v2232
  %v2309 = vpop.xlane.xlu0 %2308
  %2310 = vadd.xlane.f32.xlu0 %v2233
  %v2311 = vpop.xlane.xlu0 %2310
  %2312 = vadd.xlane.f32.xlu0 %v2234
  %v2313 = vpop.xlane.xlu0 %2312
  %2314 = vadd.xlane.f32.xlu0 %v2235
  %v2315 = vpop.xlane.xlu0 %2314
  %2316 = vadd.xlane.f32.xlu0 %v2236
  %v2317 = vpop.xlane.xlu0 %2316
  %2318 = vadd.xlane.f32.xlu0 %v2237
  %v2319 = vpop.xlane.xlu0 %2318
  %2320 = vadd.xlane.f32.xlu0 %v2238
  %v2321 = vpop.xlane.xlu0 %2320
  %2322 = vadd.xlane.f32.xlu0 %v2239
  %v2323 = vpop.xlane.xlu0 %2322
  %2324 = vadd.xlane.f32.xlu0 %v2240
  %v2325 = vpop.xlane.xlu0 %2324
  %2326 = vadd.xlane.f32.xlu0 %v2241
  %v2327 = vpop.xlane.xlu0 %2326
  %2328 = vadd.xlane.f32.xlu0 %v2242
  %v2329 = vpop.xlane.xlu0 %2328
  %2330 = vadd.xlane.f32.xlu0 %v2243
  %v2331 = vpop.xlane.xlu0 %2330
  %2332 = vadd.xlane.f32.xlu0 %v2244
  %v2333 = vpop.xlane.xlu0 %2332
  %2334 = vadd.xlane.f32.xlu0 %v2245
  %v2335 = vpop.xlane.xlu0 %2334
  %2336 = vadd.xlane.f32.xlu0 %v2246
  %v2337 = vpop.xlane.xlu0 %2336
  %2338 = vadd.xlane.f32.xlu0 %v2247
  %v2339 = vpop.xlane.xlu0 %2338
  %2340 = vadd.xlane.f32.xlu0 %v2248
  %v2341 = vpop.xlane.xlu0 %2340
  %2342 = vadd.xlane.f32.xlu0 %v2249
  %v2343 = vpop.xlane.xlu0 %2342
  %2344 = vadd.xlane.f32.xlu0 %v2250
  %v2345 = vpop.xlane.xlu0 %2344
  %2346 = vadd.xlane.f32.xlu0 %v2251
  %v2347 = vpop.xlane.xlu0 %2346
  %2348 = vadd.xlane.f32.xlu0 %v2252
  %v2349 = vpop.xlane.xlu0 %2348
  %2350 = vadd.xlane.f32.xlu0 %v2253
  %v2351 = vpop.xlane.xlu0 %2350
  %2352 = vadd.xlane.f32.xlu0 %v2254
  %v2353 = vpop.xlane.xlu0 %2352
  %2354 = vadd.xlane.f32.xlu0 %v2255
  %v2355 = vpop.xlane.xlu0 %2354
  %2356 = vadd.xlane.f32.xlu0 %v2256
  %v2357 = vpop.xlane.xlu0 %2356
  %2358 = vadd.xlane.f32.xlu0 %v2257
  %v2359 = vpop.xlane.xlu0 %2358
  %2360 = vadd.xlane.f32.xlu0 %v2258
  %v2361 = vpop.xlane.xlu0 %2360
  %2362 = vadd.xlane.f32.xlu0 %v2259
  %v2363 = vpop.xlane.xlu0 %2362
  %2364 = vadd.xlane.f32.xlu0 %v2260
  %v2365 = vpop.xlane.xlu0 %2364
  %2366 = vadd.xlane.f32.xlu0 %v2261
  %v2367 = vpop.xlane.xlu0 %2366
  %2368 = vadd.xlane.f32.xlu0 %v2262
  %v2369 = vpop.xlane.xlu0 %2368
  %2370 = vadd.xlane.f32.xlu0 %v2263
  %v2371 = vpop.xlane.xlu0 %2370
  %2372 = vadd.xlane.f32.xlu0 %v2264
  %v2373 = vpop.xlane.xlu0 %2372
  %2374 = vadd.xlane.f32.xlu0 %v2265
  %v2375 = vpop.xlane.xlu0 %2374
  %2376 = vadd.xlane.f32.xlu0 %v2266
  %v2377 = vpop.xlane.xlu0 %2376
  %2378 = vadd.xlane.f32.xlu0 %v2267
  %v2379 = vpop.xlane.xlu0 %2378
  %2380 = vadd.xlane.f32.xlu0 %v2268
  %v2381 = vpop.xlane.xlu0 %2380
  %2382 = vadd.xlane.f32.xlu0 %v2269
  %v2383 = vpop.xlane.xlu0 %2382
  %2384 = vadd.xlane.f32.xlu0 %v2270
  %v2385 = vpop.xlane.xlu0 %2384
  %2386 = vadd.xlane.f32.xlu0 %v2271
  %v2387 = vpop.xlane.xlu0 %2386
  %2388 = vadd.xlane.f32.xlu0 %v2272
  %v2389 = vpop.xlane.xlu0 %2388
  %2390 = vadd.xlane.f32.xlu0 %v2273
  %v2391 = vpop.xlane.xlu0 %2390
  %2392 = vadd.xlane.f32.xlu0 %v2274
  %v2393 = vpop.xlane.xlu0 %2392
  %2394 = vadd.xlane.f32.xlu0 %v2275
  %v2395 = vpop.xlane.xlu0 %2394
  %2396 = vadd.xlane.f32.xlu0 %v2276
  %v2397 = vpop.xlane.xlu0 %2396
  %2398 = vadd.xlane.f32.xlu0 %v2277
  %v2399 = vpop.xlane.xlu0 %2398
  %2400 = vadd.xlane.f32.xlu0 %v2278
  %v2401 = vpop.xlane.xlu0 %2400
  %2402 = vadd.xlane.f32.xlu0 %v2279
  %v2403 = vpop.xlane.xlu0 %2402
  %2404 = vadd.xlane.f32.xlu0 %v2280
  %v2405 = vpop.xlane.xlu0 %2404
  %2406 = vadd.xlane.f32.xlu0 %v2281
  %v2407 = vpop.xlane.xlu0 %2406
  %2408 = vadd.xlane.f32.xlu0 %v2282
  %v2409 = vpop.xlane.xlu0 %2408
  %2410 = vadd.xlane.f32.xlu0 %v2283
  %v2411 = vpop.xlane.xlu0 %2410
  %v2412 = vmul.f32 %v2285, %v283
  %v2413 = vmul.f32 %v2287, %v283
  %v2414 = vmul.f32 %v2289, %v283
  %v2415 = vmul.f32 %v2291, %v283
  %v2416 = vmul.f32 %v2293, %v283
  %v2417 = vmul.f32 %v2295, %v283
  %v2418 = vmul.f32 %v2297, %v283
  %v2419 = vmul.f32 %v2299, %v283
  %v2420 = vmul.f32 %v2301, %v283
  %v2421 = vmul.f32 %v2303, %v283
  %v2422 = vmul.f32 %v2305, %v283
  %v2423 = vmul.f32 %v2307, %v283
  %v2424 = vmul.f32 %v2309, %v283
  %v2425 = vmul.f32 %v2311, %v283
  %v2426 = vmul.f32 %v2313, %v283
  %v2427 = vmul.f32 %v2315, %v283
  %v2428 = vmul.f32 %v2317, %v283
  %v2429 = vmul.f32 %v2319, %v283
  %v2430 = vmul.f32 %v2321, %v283
  %v2431 = vmul.f32 %v2323, %v283
  %v2432 = vmul.f32 %v2325, %v283
  %v2433 = vmul.f32 %v2327, %v283
  %v2434 = vmul.f32 %v2329, %v283
  %v2435 = vmul.f32 %v2331, %v283
  %v2436 = vmul.f32 %v2333, %v283
  %v2437 = vmul.f32 %v2335, %v283
  %v2438 = vmul.f32 %v2337, %v283
  %v2439 = vmul.f32 %v2339, %v283
  %v2440 = vmul.f32 %v2341, %v283
  %v2441 = vmul.f32 %v2343, %v283
  %v2442 = vmul.f32 %v2345, %v283
  %v2443 = vmul.f32 %v2347, %v283
  %v2444 = vmul.f32 %v2349, %v283
  %v2445 = vmul.f32 %v2351, %v283
  %v2446 = vmul.f32 %v2353, %v283
  %v2447 = vmul.f32 %v2355, %v283
  %v2448 = vmul.f32 %v2357, %v283
  %v2449 = vmul.f32 %v2359, %v283
  %v2450 = vmul.f32 %v2361, %v283
  %v2451 = vmul.f32 %v2363, %v283
  %v2452 = vmul.f32 %v2365, %v283
  %v2453 = vmul.f32 %v2367, %v283
  %v2454 = vmul.f32 %v2369, %v283
  %v2455 = vmul.f32 %v2371, %v283
  %v2456 = vmul.f32 %v2373, %v283
  %v2457 = vmul.f32 %v2375, %v283
  %v2458 = vmul.f32 %v2377, %v283
  %v2459 = vmul.f32 %v2379, %v283
  %v2460 = vmul.f32 %v2381, %v283
  %v2461 = vmul.f32 %v2383, %v283
  %v2462 = vmul.f32 %v2385, %v283
  %v2463 = vmul.f32 %v2387, %v283
  %v2464 = vmul.f32 %v2389, %v283
  %v2465 = vmul.f32 %v2391, %v283
  %v2466 = vmul.f32 %v2393, %v283
  %v2467 = vmul.f32 %v2395, %v283
  %v2468 = vmul.f32 %v2397, %v283
  %v2469 = vmul.f32 %v2399, %v283
  %v2470 = vmul.f32 %v2401, %v283
  %v2471 = vmul.f32 %v2403, %v283
  %v2472 = vmul.f32 %v2405, %v283
  %v2473 = vmul.f32 %v2407, %v283
  %v2474 = vmul.f32 %v2409, %v283
  %v2475 = vmul.f32 %v2411, %v283
  %v2476 = vsub.f32 %v2220, %v2412
  %v2477 = vsub.f32 %v2221, %v2413
  %v2478 = vsub.f32 %v2222, %v2414
  %v2479 = vsub.f32 %v2223, %v2415
  %v2480 = vsub.f32 %v2224, %v2416
  %v2481 = vsub.f32 %v2225, %v2417
  %v2482 = vsub.f32 %v2226, %v2418
  %v2483 = vsub.f32 %v2227, %v2419
  %v2484 = vsub.f32 %v2228, %v2420
  %v2485 = vsub.f32 %v2229, %v2421
  %v2486 = vsub.f32 %v2230, %v2422
  %v2487 = vsub.f32 %v2231, %v2423
  %v2488 = vsub.f32 %v2232, %v2424
  %v2489 = vsub.f32 %v2233, %v2425
  %v2490 = vsub.f32 %v2234, %v2426
  %v2491 = vsub.f32 %v2235, %v2427
  %v2492 = vsub.f32 %v2236, %v2428
  %v2493 = vsub.f32 %v2237, %v2429
  %v2494 = vsub.f32 %v2238, %v2430
  %v2495 = vsub.f32 %v2239, %v2431
  %v2496 = vsub.f32 %v2240, %v2432
  %v2497 = vsub.f32 %v2241, %v2433
  %v2498 = vsub.f32 %v2242, %v2434
  %v2499 = vsub.f32 %v2243, %v2435
  %v2500 = vsub.f32 %v2244, %v2436
  %v2501 = vsub.f32 %v2245, %v2437
  %v2502 = vsub.f32 %v2246, %v2438
  %v2503 = vsub.f32 %v2247, %v2439
  %v2504 = vsub.f32 %v2248, %v2440
  %v2505 = vsub.f32 %v2249, %v2441
  %v2506 = vsub.f32 %v2250, %v2442
  %v2507 = vsub.f32 %v2251, %v2443
  %v2508 = vsub.f32 %v2252, %v2444
  %v2509 = vsub.f32 %v2253, %v2445
  %v2510 = vsub.f32 %v2254, %v2446
  %v2511 = vsub.f32 %v2255, %v2447
  %v2512 = vsub.f32 %v2256, %v2448
  %v2513 = vsub.f32 %v2257, %v2449
  %v2514 = vsub.f32 %v2258, %v2450
  %v2515 = vsub.f32 %v2259, %v2451
  %v2516 = vsub.f32 %v2260, %v2452
  %v2517 = vsub.f32 %v2261, %v2453
  %v2518 = vsub.f32 %v2262, %v2454
  %v2519 = vsub.f32 %v2263, %v2455
  %v2520 = vsub.f32 %v2264, %v2456
  %v2521 = vsub.f32 %v2265, %v2457
  %v2522 = vsub.f32 %v2266, %v2458
  %v2523 = vsub.f32 %v2267, %v2459
  %v2524 = vsub.f32 %v2268, %v2460
  %v2525 = vsub.f32 %v2269, %v2461
  %v2526 = vsub.f32 %v2270, %v2462
  %v2527 = vsub.f32 %v2271, %v2463
  %v2528 = vsub.f32 %v2272, %v2464
  %v2529 = vsub.f32 %v2273, %v2465
  %v2530 = vsub.f32 %v2274, %v2466
  %v2531 = vsub.f32 %v2275, %v2467
  %v2532 = vsub.f32 %v2276, %v2468
  %v2533 = vsub.f32 %v2277, %v2469
  %v2534 = vsub.f32 %v2278, %v2470
  %v2535 = vsub.f32 %v2279, %v2471
  %v2536 = vsub.f32 %v2280, %v2472
  %v2537 = vsub.f32 %v2281, %v2473
  %v2538 = vsub.f32 %v2282, %v2474
  %v2539 = vsub.f32 %v2283, %v2475
  %v2540 = vmul.f32 %v2476, %v2476
  %v2541 = vmul.f32 %v2477, %v2477
  %v2542 = vmul.f32 %v2478, %v2478
  %v2543 = vmul.f32 %v2479, %v2479
  %v2544 = vmul.f32 %v2480, %v2480
  %v2545 = vmul.f32 %v2481, %v2481
  %v2546 = vmul.f32 %v2482, %v2482
  %v2547 = vmul.f32 %v2483, %v2483
  %v2548 = vmul.f32 %v2484, %v2484
  %v2549 = vmul.f32 %v2485, %v2485
  %v2550 = vmul.f32 %v2486, %v2486
  %v2551 = vmul.f32 %v2487, %v2487
  %v2552 = vmul.f32 %v2488, %v2488
  %v2553 = vmul.f32 %v2489, %v2489
  %v2554 = vmul.f32 %v2490, %v2490
  %v2555 = vmul.f32 %v2491, %v2491
  %v2556 = vmul.f32 %v2492, %v2492
  %v2557 = vmul.f32 %v2493, %v2493
  %v2558 = vmul.f32 %v2494, %v2494
  %v2559 = vmul.f32 %v2495, %v2495
  %v2560 = vmul.f32 %v2496, %v2496
  %v2561 = vmul.f32 %v2497, %v2497
  %v2562 = vmul.f32 %v2498, %v2498
  %v2563 = vmul.f32 %v2499, %v2499
  %v2564 = vmul.f32 %v2500, %v2500
  %v2565 = vmul.f32 %v2501, %v2501
  %v2566 = vmul.f32 %v2502, %v2502
  %v2567 = vmul.f32 %v2503, %v2503
  %v2568 = vmul.f32 %v2504, %v2504
  %v2569 = vmul.f32 %v2505, %v2505
  %v2570 = vmul.f32 %v2506, %v2506
  %v2571 = vmul.f32 %v2507, %v2507
  %v2572 = vmul.f32 %v2508, %v2508
  %v2573 = vmul.f32 %v2509, %v2509
  %v2574 = vmul.f32 %v2510, %v2510
  %v2575 = vmul.f32 %v2511, %v2511
  %v2576 = vmul.f32 %v2512, %v2512
  %v2577 = vmul.f32 %v2513, %v2513
  %v2578 = vmul.f32 %v2514, %v2514
  %v2579 = vmul.f32 %v2515, %v2515
  %v2580 = vmul.f32 %v2516, %v2516
  %v2581 = vmul.f32 %v2517, %v2517
  %v2582 = vmul.f32 %v2518, %v2518
  %v2583 = vmul.f32 %v2519, %v2519
  %v2584 = vmul.f32 %v2520, %v2520
  %v2585 = vmul.f32 %v2521, %v2521
  %v2586 = vmul.f32 %v2522, %v2522
  %v2587 = vmul.f32 %v2523, %v2523
  %v2588 = vmul.f32 %v2524, %v2524
  %v2589 = vmul.f32 %v2525, %v2525
  %v2590 = vmul.f32 %v2526, %v2526
  %v2591 = vmul.f32 %v2527, %v2527
  %v2592 = vmul.f32 %v2528, %v2528
  %v2593 = vmul.f32 %v2529, %v2529
  %v2594 = vmul.f32 %v2530, %v2530
  %v2595 = vmul.f32 %v2531, %v2531
  %v2596 = vmul.f32 %v2532, %v2532
  %v2597 = vmul.f32 %v2533, %v2533
  %v2598 = vmul.f32 %v2534, %v2534
  %v2599 = vmul.f32 %v2535, %v2535
  %v2600 = vmul.f32 %v2536, %v2536
  %v2601 = vmul.f32 %v2537, %v2537
  %v2602 = vmul.f32 %v2538, %v2538
  %v2603 = vmul.f32 %v2539, %v2539
  %2604 = vadd.xlane.f32.xlu0 %v2540
  %v2605 = vpop.xlane.xlu0 %2604
  %2606 = vadd.xlane.f32.xlu0 %v2541
  %v2607 = vpop.xlane.xlu0 %2606
  %2608 = vadd.xlane.f32.xlu0 %v2542
  %v2609 = vpop.xlane.xlu0 %2608
  %2610 = vadd.xlane.f32.xlu0 %v2543
  %v2611 = vpop.xlane.xlu0 %2610
  %2612 = vadd.xlane.f32.xlu0 %v2544
  %v2613 = vpop.xlane.xlu0 %2612
  %2614 = vadd.xlane.f32.xlu0 %v2545
  %v2615 = vpop.xlane.xlu0 %2614
  %2616 = vadd.xlane.f32.xlu0 %v2546
  %v2617 = vpop.xlane.xlu0 %2616
  %2618 = vadd.xlane.f32.xlu0 %v2547
  %v2619 = vpop.xlane.xlu0 %2618
  %2620 = vadd.xlane.f32.xlu0 %v2548
  %v2621 = vpop.xlane.xlu0 %2620
  %2622 = vadd.xlane.f32.xlu0 %v2549
  %v2623 = vpop.xlane.xlu0 %2622
  %2624 = vadd.xlane.f32.xlu0 %v2550
  %v2625 = vpop.xlane.xlu0 %2624
  %2626 = vadd.xlane.f32.xlu0 %v2551
  %v2627 = vpop.xlane.xlu0 %2626
  %2628 = vadd.xlane.f32.xlu0 %v2552
  %v2629 = vpop.xlane.xlu0 %2628
  %2630 = vadd.xlane.f32.xlu0 %v2553
  %v2631 = vpop.xlane.xlu0 %2630
  %2632 = vadd.xlane.f32.xlu0 %v2554
  %v2633 = vpop.xlane.xlu0 %2632
  %2634 = vadd.xlane.f32.xlu0 %v2555
  %v2635 = vpop.xlane.xlu0 %2634
  %2636 = vadd.xlane.f32.xlu0 %v2556
  %v2637 = vpop.xlane.xlu0 %2636
  %2638 = vadd.xlane.f32.xlu0 %v2557
  %v2639 = vpop.xlane.xlu0 %2638
  %2640 = vadd.xlane.f32.xlu0 %v2558
  %v2641 = vpop.xlane.xlu0 %2640
  %2642 = vadd.xlane.f32.xlu0 %v2559
  %v2643 = vpop.xlane.xlu0 %2642
  %2644 = vadd.xlane.f32.xlu0 %v2560
  %v2645 = vpop.xlane.xlu0 %2644
  %2646 = vadd.xlane.f32.xlu0 %v2561
  %v2647 = vpop.xlane.xlu0 %2646
  %2648 = vadd.xlane.f32.xlu0 %v2562
  %v2649 = vpop.xlane.xlu0 %2648
  %2650 = vadd.xlane.f32.xlu0 %v2563
  %v2651 = vpop.xlane.xlu0 %2650
  %2652 = vadd.xlane.f32.xlu0 %v2564
  %v2653 = vpop.xlane.xlu0 %2652
  %2654 = vadd.xlane.f32.xlu0 %v2565
  %v2655 = vpop.xlane.xlu0 %2654
  %2656 = vadd.xlane.f32.xlu0 %v2566
  %v2657 = vpop.xlane.xlu0 %2656
  %2658 = vadd.xlane.f32.xlu0 %v2567
  %v2659 = vpop.xlane.xlu0 %2658
  %2660 = vadd.xlane.f32.xlu0 %v2568
  %v2661 = vpop.xlane.xlu0 %2660
  %2662 = vadd.xlane.f32.xlu0 %v2569
  %v2663 = vpop.xlane.xlu0 %2662
  %2664 = vadd.xlane.f32.xlu0 %v2570
  %v2665 = vpop.xlane.xlu0 %2664
  %2666 = vadd.xlane.f32.xlu0 %v2571
  %v2667 = vpop.xlane.xlu0 %2666
  %2668 = vadd.xlane.f32.xlu0 %v2572
  %v2669 = vpop.xlane.xlu0 %2668
  %2670 = vadd.xlane.f32.xlu0 %v2573
  %v2671 = vpop.xlane.xlu0 %2670
  %2672 = vadd.xlane.f32.xlu0 %v2574
  %v2673 = vpop.xlane.xlu0 %2672
  %2674 = vadd.xlane.f32.xlu0 %v2575
  %v2675 = vpop.xlane.xlu0 %2674
  %2676 = vadd.xlane.f32.xlu0 %v2576
  %v2677 = vpop.xlane.xlu0 %2676
  %2678 = vadd.xlane.f32.xlu0 %v2577
  %v2679 = vpop.xlane.xlu0 %2678
  %2680 = vadd.xlane.f32.xlu0 %v2578
  %v2681 = vpop.xlane.xlu0 %2680
  %2682 = vadd.xlane.f32.xlu0 %v2579
  %v2683 = vpop.xlane.xlu0 %2682
  %2684 = vadd.xlane.f32.xlu0 %v2580
  %v2685 = vpop.xlane.xlu0 %2684
  %2686 = vadd.xlane.f32.xlu0 %v2581
  %v2687 = vpop.xlane.xlu0 %2686
  %2688 = vadd.xlane.f32.xlu0 %v2582
  %v2689 = vpop.xlane.xlu0 %2688
  %2690 = vadd.xlane.f32.xlu0 %v2583
  %v2691 = vpop.xlane.xlu0 %2690
  %2692 = vadd.xlane.f32.xlu0 %v2584
  %v2693 = vpop.xlane.xlu0 %2692
  %2694 = vadd.xlane.f32.xlu0 %v2585
  %v2695 = vpop.xlane.xlu0 %2694
  %2696 = vadd.xlane.f32.xlu0 %v2586
  %v2697 = vpop.xlane.xlu0 %2696
  %2698 = vadd.xlane.f32.xlu0 %v2587
  %v2699 = vpop.xlane.xlu0 %2698
  %2700 = vadd.xlane.f32.xlu0 %v2588
  %v2701 = vpop.xlane.xlu0 %2700
  %2702 = vadd.xlane.f32.xlu0 %v2589
  %v2703 = vpop.xlane.xlu0 %2702
  %2704 = vadd.xlane.f32.xlu0 %v2590
  %v2705 = vpop.xlane.xlu0 %2704
  %2706 = vadd.xlane.f32.xlu0 %v2591
  %v2707 = vpop.xlane.xlu0 %2706
  %2708 = vadd.xlane.f32.xlu0 %v2592
  %v2709 = vpop.xlane.xlu0 %2708
  %2710 = vadd.xlane.f32.xlu0 %v2593
  %v2711 = vpop.xlane.xlu0 %2710
  %2712 = vadd.xlane.f32.xlu0 %v2594
  %v2713 = vpop.xlane.xlu0 %2712
  %2714 = vadd.xlane.f32.xlu0 %v2595
  %v2715 = vpop.xlane.xlu0 %2714
  %2716 = vadd.xlane.f32.xlu0 %v2596
  %v2717 = vpop.xlane.xlu0 %2716
  %2718 = vadd.xlane.f32.xlu0 %v2597
  %v2719 = vpop.xlane.xlu0 %2718
  %2720 = vadd.xlane.f32.xlu0 %v2598
  %v2721 = vpop.xlane.xlu0 %2720
  %2722 = vadd.xlane.f32.xlu0 %v2599
  %v2723 = vpop.xlane.xlu0 %2722
  %2724 = vadd.xlane.f32.xlu0 %v2600
  %v2725 = vpop.xlane.xlu0 %2724
  %2726 = vadd.xlane.f32.xlu0 %v2601
  %v2727 = vpop.xlane.xlu0 %2726
  %2728 = vadd.xlane.f32.xlu0 %v2602
  %v2729 = vpop.xlane.xlu0 %2728
  %2730 = vadd.xlane.f32.xlu0 %v2603
  %v2731 = vpop.xlane.xlu0 %2730
  %v2732 = vmul.f32 %v2605, %v283
  %v2733 = vmul.f32 %v2607, %v283
  %v2734 = vmul.f32 %v2609, %v283
  %v2735 = vmul.f32 %v2611, %v283
  %v2736 = vmul.f32 %v2613, %v283
  %v2737 = vmul.f32 %v2615, %v283
  %v2738 = vmul.f32 %v2617, %v283
  %v2739 = vmul.f32 %v2619, %v283
  %v2740 = vmul.f32 %v2621, %v283
  %v2741 = vmul.f32 %v2623, %v283
  %v2742 = vmul.f32 %v2625, %v283
  %v2743 = vmul.f32 %v2627, %v283
  %v2744 = vmul.f32 %v2629, %v283
  %v2745 = vmul.f32 %v2631, %v283
  %v2746 = vmul.f32 %v2633, %v283
  %v2747 = vmul.f32 %v2635, %v283
  %v2748 = vmul.f32 %v2637, %v283
  %v2749 = vmul.f32 %v2639, %v283
  %v2750 = vmul.f32 %v2641, %v283
  %v2751 = vmul.f32 %v2643, %v283
  %v2752 = vmul.f32 %v2645, %v283
  %v2753 = vmul.f32 %v2647, %v283
  %v2754 = vmul.f32 %v2649, %v283
  %v2755 = vmul.f32 %v2651, %v283
  %v2756 = vmul.f32 %v2653, %v283
  %v2757 = vmul.f32 %v2655, %v283
  %v2758 = vmul.f32 %v2657, %v283
  %v2759 = vmul.f32 %v2659, %v283
  %v2760 = vmul.f32 %v2661, %v283
  %v2761 = vmul.f32 %v2663, %v283
  %v2762 = vmul.f32 %v2665, %v283
  %v2763 = vmul.f32 %v2667, %v283
  %v2764 = vmul.f32 %v2669, %v283
  %v2765 = vmul.f32 %v2671, %v283
  %v2766 = vmul.f32 %v2673, %v283
  %v2767 = vmul.f32 %v2675, %v283
  %v2768 = vmul.f32 %v2677, %v283
  %v2769 = vmul.f32 %v2679, %v283
  %v2770 = vmul.f32 %v2681, %v283
  %v2771 = vmul.f32 %v2683, %v283
  %v2772 = vmul.f32 %v2685, %v283
  %v2773 = vmul.f32 %v2687, %v283
  %v2774 = vmul.f32 %v2689, %v283
  %v2775 = vmul.f32 %v2691, %v283
  %v2776 = vmul.f32 %v2693, %v283
  %v2777 = vmul.f32 %v2695, %v283
  %v2778 = vmul.f32 %v2697, %v283
  %v2779 = vmul.f32 %v2699, %v283
  %v2780 = vmul.f32 %v2701, %v283
  %v2781 = vmul.f32 %v2703, %v283
  %v2782 = vmul.f32 %v2705, %v283
  %v2783 = vmul.f32 %v2707, %v283
  %v2784 = vmul.f32 %v2709, %v283
  %v2785 = vmul.f32 %v2711, %v283
  %v2786 = vmul.f32 %v2713, %v283
  %v2787 = vmul.f32 %v2715, %v283
  %v2788 = vmul.f32 %v2717, %v283
  %v2789 = vmul.f32 %v2719, %v283
  %v2790 = vmul.f32 %v2721, %v283
  %v2791 = vmul.f32 %v2723, %v283
  %v2792 = vmul.f32 %v2725, %v283
  %v2793 = vmul.f32 %v2727, %v283
  %v2794 = vmul.f32 %v2729, %v283
  %v2795 = vmul.f32 %v2731, %v283
  %v2796 = vadd.f32 %v2732, 1e-05
  %v2797 = vadd.f32 %v2733, 1e-05
  %v2798 = vadd.f32 %v2734, 1e-05
  %v2799 = vadd.f32 %v2735, 1e-05
  %v2800 = vadd.f32 %v2736, 1e-05
  %v2801 = vadd.f32 %v2737, 1e-05
  %v2802 = vadd.f32 %v2738, 1e-05
  %v2803 = vadd.f32 %v2739, 1e-05
  %v2804 = vadd.f32 %v2740, 1e-05
  %v2805 = vadd.f32 %v2741, 1e-05
  %v2806 = vadd.f32 %v2742, 1e-05
  %v2807 = vadd.f32 %v2743, 1e-05
  %v2808 = vadd.f32 %v2744, 1e-05
  %v2809 = vadd.f32 %v2745, 1e-05
  %v2810 = vadd.f32 %v2746, 1e-05
  %v2811 = vadd.f32 %v2747, 1e-05
  %v2812 = vadd.f32 %v2748, 1e-05
  %v2813 = vadd.f32 %v2749, 1e-05
  %v2814 = vadd.f32 %v2750, 1e-05
  %v2815 = vadd.f32 %v2751, 1e-05
  %v2816 = vadd.f32 %v2752, 1e-05
  %v2817 = vadd.f32 %v2753, 1e-05
  %v2818 = vadd.f32 %v2754, 1e-05
  %v2819 = vadd.f32 %v2755, 1e-05
  %v2820 = vadd.f32 %v2756, 1e-05
  %v2821 = vadd.f32 %v2757, 1e-05
  %v2822 = vadd.f32 %v2758, 1e-05
  %v2823 = vadd.f32 %v2759, 1e-05
  %v2824 = vadd.f32 %v2760, 1e-05
  %v2825 = vadd.f32 %v2761, 1e-05
  %v2826 = vadd.f32 %v2762, 1e-05
  %v2827 = vadd.f32 %v2763, 1e-05
  %v2828 = vadd.f32 %v2764, 1e-05
  %v2829 = vadd.f32 %v2765, 1e-05
  %v2830 = vadd.f32 %v2766, 1e-05
  %v2831 = vadd.f32 %v2767, 1e-05
  %v2832 = vadd.f32 %v2768, 1e-05
  %v2833 = vadd.f32 %v2769, 1e-05
  %v2834 = vadd.f32 %v2770, 1e-05
  %v2835 = vadd.f32 %v2771, 1e-05
  %v2836 = vadd.f32 %v2772, 1e-05
  %v2837 = vadd.f32 %v2773, 1e-05
  %v2838 = vadd.f32 %v2774, 1e-05
  %v2839 = vadd.f32 %v2775, 1e-05
  %v2840 = vadd.f32 %v2776, 1e-05
  %v2841 = vadd.f32 %v2777, 1e-05
  %v2842 = vadd.f32 %v2778, 1e-05
  %v2843 = vadd.f32 %v2779, 1e-05
  %v2844 = vadd.f32 %v2780, 1e-05
  %v2845 = vadd.f32 %v2781, 1e-05
  %v2846 = vadd.f32 %v2782, 1e-05
  %v2847 = vadd.f32 %v2783, 1e-05
  %v2848 = vadd.f32 %v2784, 1e-05
  %v2849 = vadd.f32 %v2785, 1e-05
  %v2850 = vadd.f32 %v2786, 1e-05
  %v2851 = vadd.f32 %v2787, 1e-05
  %v2852 = vadd.f32 %v2788, 1e-05
  %v2853 = vadd.f32 %v2789, 1e-05
  %v2854 = vadd.f32 %v2790, 1e-05
  %v2855 = vadd.f32 %v2791, 1e-05
  %v2856 = vadd.f32 %v2792, 1e-05
  %v2857 = vadd.f32 %v2793, 1e-05
  %v2858 = vadd.f32 %v2794, 1e-05
  %v2859 = vadd.f32 %v2795, 1e-05
  %v2860 = vrsqrt.pop %v2796
  %v2861 = vrsqrt.pop %v2797
  %v2862 = vrsqrt.pop %v2798
  %v2863 = vrsqrt.pop %v2799
  %v2864 = vrsqrt.pop %v2800
  %v2865 = vrsqrt.pop %v2801
  %v2866 = vrsqrt.pop %v2802
  %v2867 = vrsqrt.pop %v2803
  %v2868 = vrsqrt.pop %v2804
  %v2869 = vrsqrt.pop %v2805
  %v2870 = vrsqrt.pop %v2806
  %v2871 = vrsqrt.pop %v2807
  %v2872 = vrsqrt.pop %v2808
  %v2873 = vrsqrt.pop %v2809
  %v2874 = vrsqrt.pop %v2810
  %v2875 = vrsqrt.pop %v2811
  %v2876 = vrsqrt.pop %v2812
  %v2877 = vrsqrt.pop %v2813
  %v2878 = vrsqrt.pop %v2814
  %v2879 = vrsqrt.pop %v2815
  %v2880 = vrsqrt.pop %v2816
  %v2881 = vrsqrt.pop %v2817
  %v2882 = vrsqrt.pop %v2818
  %v2883 = vrsqrt.pop %v2819
  %v2884 = vrsqrt.pop %v2820
  %v2885 = vrsqrt.pop %v2821
  %v2886 = vrsqrt.pop %v2822
  %v2887 = vrsqrt.pop %v2823
  %v2888 = vrsqrt.pop %v2824
  %v2889 = vrsqrt.pop %v2825
  %v2890 = vrsqrt.pop %v2826
  %v2891 = vrsqrt.pop %v2827
  %v2892 = vrsqrt.pop %v2828
  %v2893 = vrsqrt.pop %v2829
  %v2894 = vrsqrt.pop %v2830
  %v2895 = vrsqrt.pop %v2831
  %v2896 = vrsqrt.pop %v2832
  %v2897 = vrsqrt.pop %v2833
  %v2898 = vrsqrt.pop %v2834
  %v2899 = vrsqrt.pop %v2835
  %v2900 = vrsqrt.pop %v2836
  %v2901 = vrsqrt.pop %v2837
  %v2902 = vrsqrt.pop %v2838
  %v2903 = vrsqrt.pop %v2839
  %v2904 = vrsqrt.pop %v2840
  %v2905 = vrsqrt.pop %v2841
  %v2906 = vrsqrt.pop %v2842
  %v2907 = vrsqrt.pop %v2843
  %v2908 = vrsqrt.pop %v2844
  %v2909 = vrsqrt.pop %v2845
  %v2910 = vrsqrt.pop %v2846
  %v2911 = vrsqrt.pop %v2847
  %v2912 = vrsqrt.pop %v2848
  %v2913 = vrsqrt.pop %v2849
  %v2914 = vrsqrt.pop %v2850
  %v2915 = vrsqrt.pop %v2851
  %v2916 = vrsqrt.pop %v2852
  %v2917 = vrsqrt.pop %v2853
  %v2918 = vrsqrt.pop %v2854
  %v2919 = vrsqrt.pop %v2855
  %v2920 = vrsqrt.pop %v2856
  %v2921 = vrsqrt.pop %v2857
  %v2922 = vrsqrt.pop %v2858
  %v2923 = vrsqrt.pop %v2859
  %v2924 = vmul.f32 %v2476, %v2860
  %v2925 = vmul.f32 %v2477, %v2861
  %v2926 = vmul.f32 %v2478, %v2862
  %v2927 = vmul.f32 %v2479, %v2863
  %v2928 = vmul.f32 %v2480, %v2864
  %v2929 = vmul.f32 %v2481, %v2865
  %v2930 = vmul.f32 %v2482, %v2866
  %v2931 = vmul.f32 %v2483, %v2867
  %v2932 = vmul.f32 %v2484, %v2868
  %v2933 = vmul.f32 %v2485, %v2869
  %v2934 = vmul.f32 %v2486, %v2870
  %v2935 = vmul.f32 %v2487, %v2871
  %v2936 = vmul.f32 %v2488, %v2872
  %v2937 = vmul.f32 %v2489, %v2873
  %v2938 = vmul.f32 %v2490, %v2874
  %v2939 = vmul.f32 %v2491, %v2875
  %v2940 = vmul.f32 %v2492, %v2876
  %v2941 = vmul.f32 %v2493, %v2877
  %v2942 = vmul.f32 %v2494, %v2878
  %v2943 = vmul.f32 %v2495, %v2879
  %v2944 = vmul.f32 %v2496, %v2880
  %v2945 = vmul.f32 %v2497, %v2881
  %v2946 = vmul.f32 %v2498, %v2882
  %v2947 = vmul.f32 %v2499, %v2883
  %v2948 = vmul.f32 %v2500, %v2884
  %v2949 = vmul.f32 %v2501, %v2885
  %v2950 = vmul.f32 %v2502, %v2886
  %v2951 = vmul.f32 %v2503, %v2887
  %v2952 = vmul.f32 %v2504, %v2888
  %v2953 = vmul.f32 %v2505, %v2889
  %v2954 = vmul.f32 %v2506, %v2890
  %v2955 = vmul.f32 %v2507, %v2891
  %v2956 = vmul.f32 %v2508, %v2892
  %v2957 = vmul.f32 %v2509, %v2893
  %v2958 = vmul.f32 %v2510, %v2894
  %v2959 = vmul.f32 %v2511, %v2895
  %v2960 = vmul.f32 %v2512, %v2896
  %v2961 = vmul.f32 %v2513, %v2897
  %v2962 = vmul.f32 %v2514, %v2898
  %v2963 = vmul.f32 %v2515, %v2899
  %v2964 = vmul.f32 %v2516, %v2900
  %v2965 = vmul.f32 %v2517, %v2901
  %v2966 = vmul.f32 %v2518, %v2902
  %v2967 = vmul.f32 %v2519, %v2903
  %v2968 = vmul.f32 %v2520, %v2904
  %v2969 = vmul.f32 %v2521, %v2905
  %v2970 = vmul.f32 %v2522, %v2906
  %v2971 = vmul.f32 %v2523, %v2907
  %v2972 = vmul.f32 %v2524, %v2908
  %v2973 = vmul.f32 %v2525, %v2909
  %v2974 = vmul.f32 %v2526, %v2910
  %v2975 = vmul.f32 %v2527, %v2911
  %v2976 = vmul.f32 %v2528, %v2912
  %v2977 = vmul.f32 %v2529, %v2913
  %v2978 = vmul.f32 %v2530, %v2914
  %v2979 = vmul.f32 %v2531, %v2915
  %v2980 = vmul.f32 %v2532, %v2916
  %v2981 = vmul.f32 %v2533, %v2917
  %v2982 = vmul.f32 %v2534, %v2918
  %v2983 = vmul.f32 %v2535, %v2919
  %v2984 = vmul.f32 %v2536, %v2920
  %v2985 = vmul.f32 %v2537, %v2921
  %v2986 = vmul.f32 %v2538, %v2922
  %v2987 = vmul.f32 %v2539, %v2923
  %v2988 = vld [vmem:[%s5] sm:$0x1]
  %v2990 = vlaneseq
  %v2991 = vshrl.u32 %v2990, 7
  %v2992 = vsub.s32 0, %v2991
  %v2993 = vrot.slane %v2988, %v2992
  %v2995 = vmul.f32 %v2924, %v2993
  %v2996 = vmul.f32 %v2925, %v2993
  %v2997 = vmul.f32 %v2926, %v2993
  %v2998 = vmul.f32 %v2927, %v2993
  %v2999 = vmul.f32 %v2928, %v2993
  %v3000 = vmul.f32 %v2929, %v2993
  %v3001 = vmul.f32 %v2930, %v2993
  %v3002 = vmul.f32 %v2931, %v2993
  %v3003 = vmul.f32 %v2932, %v2993
  %v3004 = vmul.f32 %v2933, %v2993
  %v3005 = vmul.f32 %v2934, %v2993
  %v3006 = vmul.f32 %v2935, %v2993
  %v3007 = vmul.f32 %v2936, %v2993
  %v3008 = vmul.f32 %v2937, %v2993
  %v3009 = vmul.f32 %v2938, %v2993
  %v3010 = vmul.f32 %v2939, %v2993
  %v3011 = vmul.f32 %v2940, %v2993
  %v3012 = vmul.f32 %v2941, %v2993
  %v3013 = vmul.f32 %v2942, %v2993
  %v3014 = vmul.f32 %v2943, %v2993
  %v3015 = vmul.f32 %v2944, %v2993
  %v3016 = vmul.f32 %v2945, %v2993
  %v3017 = vmul.f32 %v2946, %v2993
  %v3018 = vmul.f32 %v2947, %v2993
  %v3019 = vmul.f32 %v2948, %v2993
  %v3020 = vmul.f32 %v2949, %v2993
  %v3021 = vmul.f32 %v2950, %v2993
  %v3022 = vmul.f32 %v2951, %v2993
  %v3023 = vmul.f32 %v2952, %v2993
  %v3024 = vmul.f32 %v2953, %v2993
  %v3025 = vmul.f32 %v2954, %v2993
  %v3026 = vmul.f32 %v2955, %v2993
  %v3027 = vmul.f32 %v2956, %v2993
  %v3028 = vmul.f32 %v2957, %v2993
  %v3029 = vmul.f32 %v2958, %v2993
  %v3030 = vmul.f32 %v2959, %v2993
  %v3031 = vmul.f32 %v2960, %v2993
  %v3032 = vmul.f32 %v2961, %v2993
  %v3033 = vmul.f32 %v2962, %v2993
  %v3034 = vmul.f32 %v2963, %v2993
  %v3035 = vmul.f32 %v2964, %v2993
  %v3036 = vmul.f32 %v2965, %v2993
  %v3037 = vmul.f32 %v2966, %v2993
  %v3038 = vmul.f32 %v2967, %v2993
  %v3039 = vmul.f32 %v2968, %v2993
  %v3040 = vmul.f32 %v2969, %v2993
  %v3041 = vmul.f32 %v2970, %v2993
  %v3042 = vmul.f32 %v2971, %v2993
  %v3043 = vmul.f32 %v2972, %v2993
  %v3044 = vmul.f32 %v2973, %v2993
  %v3045 = vmul.f32 %v2974, %v2993
  %v3046 = vmul.f32 %v2975, %v2993
  %v3047 = vmul.f32 %v2976, %v2993
  %v3048 = vmul.f32 %v2977, %v2993
  %v3049 = vmul.f32 %v2978, %v2993
  %v3050 = vmul.f32 %v2979, %v2993
  %v3051 = vmul.f32 %v2980, %v2993
  %v3052 = vmul.f32 %v2981, %v2993
  %v3053 = vmul.f32 %v2982, %v2993
  %v3054 = vmul.f32 %v2983, %v2993
  %v3055 = vmul.f32 %v2984, %v2993
  %v3056 = vmul.f32 %v2985, %v2993
  %v3057 = vmul.f32 %v2986, %v2993
  %v3058 = vmul.f32 %v2987, %v2993
  %v3059 = vld [vmem:[%s6] sm:$0x1]
  %v3061 = vlaneseq
  %v3062 = vshrl.u32 %v3061, 7
  %v3063 = vsub.s32 0, %v3062
  %v3064 = vrot.slane %v3059, %v3063
  %v3066 = vadd.f32 %v2995, %v3064
  %v3067 = vadd.f32 %v2996, %v3064
  %v3068 = vadd.f32 %v2997, %v3064
  %v3069 = vadd.f32 %v2998, %v3064
  %v3070 = vadd.f32 %v2999, %v3064
  %v3071 = vadd.f32 %v3000, %v3064
  %v3072 = vadd.f32 %v3001, %v3064
  %v3073 = vadd.f32 %v3002, %v3064
  %v3074 = vadd.f32 %v3003, %v3064
  %v3075 = vadd.f32 %v3004, %v3064
  %v3076 = vadd.f32 %v3005, %v3064
  %v3077 = vadd.f32 %v3006, %v3064
  %v3078 = vadd.f32 %v3007, %v3064
  %v3079 = vadd.f32 %v3008, %v3064
  %v3080 = vadd.f32 %v3009, %v3064
  %v3081 = vadd.f32 %v3010, %v3064
  %v3082 = vadd.f32 %v3011, %v3064
  %v3083 = vadd.f32 %v3012, %v3064
  %v3084 = vadd.f32 %v3013, %v3064
  %v3085 = vadd.f32 %v3014, %v3064
  %v3086 = vadd.f32 %v3015, %v3064
  %v3087 = vadd.f32 %v3016, %v3064
  %v3088 = vadd.f32 %v3017, %v3064
  %v3089 = vadd.f32 %v3018, %v3064
  %v3090 = vadd.f32 %v3019, %v3064
  %v3091 = vadd.f32 %v3020, %v3064
  %v3092 = vadd.f32 %v3021, %v3064
  %v3093 = vadd.f32 %v3022, %v3064
  %v3094 = vadd.f32 %v3023, %v3064
  %v3095 = vadd.f32 %v3024, %v3064
  %v3096 = vadd.f32 %v3025, %v3064
  %v3097 = vadd.f32 %v3026, %v3064
  %v3098 = vadd.f32 %v3027, %v3064
  %v3099 = vadd.f32 %v3028, %v3064
  %v3100 = vadd.f32 %v3029, %v3064
  %v3101 = vadd.f32 %v3030, %v3064
  %v3102 = vadd.f32 %v3031, %v3064
  %v3103 = vadd.f32 %v3032, %v3064
  %v3104 = vadd.f32 %v3033, %v3064
  %v3105 = vadd.f32 %v3034, %v3064
  %v3106 = vadd.f32 %v3035, %v3064
  %v3107 = vadd.f32 %v3036, %v3064
  %v3108 = vadd.f32 %v3037, %v3064
  %v3109 = vadd.f32 %v3038, %v3064
  %v3110 = vadd.f32 %v3039, %v3064
  %v3111 = vadd.f32 %v3040, %v3064
  %v3112 = vadd.f32 %v3041, %v3064
  %v3113 = vadd.f32 %v3042, %v3064
  %v3114 = vadd.f32 %v3043, %v3064
  %v3115 = vadd.f32 %v3044, %v3064
  %v3116 = vadd.f32 %v3045, %v3064
  %v3117 = vadd.f32 %v3046, %v3064
  %v3118 = vadd.f32 %v3047, %v3064
  %v3119 = vadd.f32 %v3048, %v3064
  %v3120 = vadd.f32 %v3049, %v3064
  %v3121 = vadd.f32 %v3050, %v3064
  %v3122 = vadd.f32 %v3051, %v3064
  %v3123 = vadd.f32 %v3052, %v3064
  %v3124 = vadd.f32 %v3053, %v3064
  %v3125 = vadd.f32 %v3054, %v3064
  %v3126 = vadd.f32 %v3055, %v3064
  %v3127 = vadd.f32 %v3056, %v3064
  %v3128 = vadd.f32 %v3057, %v3064
  %v3129 = vadd.f32 %v3058, %v3064
  %v3130 = vpack.c.bf16 %v3067, %v3066
  %v3131 = vpack.c.bf16 %v3069, %v3068
  %v3132 = vpack.c.bf16 %v3071, %v3070
  %v3133 = vpack.c.bf16 %v3073, %v3072
  %v3134 = vpack.c.bf16 %v3075, %v3074
  %v3135 = vpack.c.bf16 %v3077, %v3076
  %v3136 = vpack.c.bf16 %v3079, %v3078
  %v3137 = vpack.c.bf16 %v3081, %v3080
  %v3138 = vpack.c.bf16 %v3083, %v3082
  %v3139 = vpack.c.bf16 %v3085, %v3084
  %v3140 = vpack.c.bf16 %v3087, %v3086
  %v3141 = vpack.c.bf16 %v3089, %v3088
  %v3142 = vpack.c.bf16 %v3091, %v3090
  %v3143 = vpack.c.bf16 %v3093, %v3092
  %v3144 = vpack.c.bf16 %v3095, %v3094
  %v3145 = vpack.c.bf16 %v3097, %v3096
  %v3146 = vpack.c.bf16 %v3099, %v3098
  %v3147 = vpack.c.bf16 %v3101, %v3100
  %v3148 = vpack.c.bf16 %v3103, %v3102
  %v3149 = vpack.c.bf16 %v3105, %v3104
  %v3150 = vpack.c.bf16 %v3107, %v3106
  %v3151 = vpack.c.bf16 %v3109, %v3108
  %v3152 = vpack.c.bf16 %v3111, %v3110
  %v3153 = vpack.c.bf16 %v3113, %v3112
  %v3154 = vpack.c.bf16 %v3115, %v3114
  %v3155 = vpack.c.bf16 %v3117, %v3116
  %v3156 = vpack.c.bf16 %v3119, %v3118
  %v3157 = vpack.c.bf16 %v3121, %v3120
  %v3158 = vpack.c.bf16 %v3123, %v3122
  %v3159 = vpack.c.bf16 %v3125, %v3124
  %v3160 = vpack.c.bf16 %v3127, %v3126
  %v3161 = vpack.c.bf16 %v3129, %v3128
  %v3194 = vunpack.c.l.b16 %v3130
  %v3195 = vunpack.c.h.b16 %v3130
  %v3196 = vunpack.c.l.b16 %v3131
  %v3197 = vunpack.c.h.b16 %v3131
  %v3198 = vunpack.c.l.b16 %v3132
  %v3199 = vunpack.c.h.b16 %v3132
  %v3200 = vunpack.c.l.b16 %v3133
  %v3201 = vunpack.c.h.b16 %v3133
  %v3202 = vunpack.c.l.b16 %v3134
  %v3203 = vunpack.c.h.b16 %v3134
  %v3204 = vunpack.c.l.b16 %v3135
  %v3205 = vunpack.c.h.b16 %v3135
  %v3206 = vunpack.c.l.b16 %v3136
  %v3207 = vunpack.c.h.b16 %v3136
  %v3208 = vunpack.c.l.b16 %v3137
  %v3209 = vunpack.c.h.b16 %v3137
  %v3210 = vunpack.c.l.b16 %v3138
  %v3211 = vunpack.c.h.b16 %v3138
  %v3212 = vunpack.c.l.b16 %v3139
  %v3213 = vunpack.c.h.b16 %v3139
  %v3214 = vunpack.c.l.b16 %v3140
  %v3215 = vunpack.c.h.b16 %v3140
  %v3216 = vunpack.c.l.b16 %v3141
  %v3217 = vunpack.c.h.b16 %v3141
  %v3218 = vunpack.c.l.b16 %v3142
  %v3219 = vunpack.c.h.b16 %v3142
  %v3220 = vunpack.c.l.b16 %v3143
  %v3221 = vunpack.c.h.b16 %v3143
  %v3222 = vunpack.c.l.b16 %v3144
  %v3223 = vunpack.c.h.b16 %v3144
  %v3224 = vunpack.c.l.b16 %v3145
  %v3225 = vunpack.c.h.b16 %v3145
  %v3226 = vunpack.c.l.b16 %v3146
  %v3227 = vunpack.c.h.b16 %v3146
  %v3228 = vunpack.c.l.b16 %v3147
  %v3229 = vunpack.c.h.b16 %v3147
  %v3230 = vunpack.c.l.b16 %v3148
  %v3231 = vunpack.c.h.b16 %v3148
  %v3232 = vunpack.c.l.b16 %v3149
  %v3233 = vunpack.c.h.b16 %v3149
  %v3234 = vunpack.c.l.b16 %v3150
  %v3235 = vunpack.c.h.b16 %v3150
  %v3236 = vunpack.c.l.b16 %v3151
  %v3237 = vunpack.c.h.b16 %v3151
  %v3238 = vunpack.c.l.b16 %v3152
  %v3239 = vunpack.c.h.b16 %v3152
  %v3240 = vunpack.c.l.b16 %v3153
  %v3241 = vunpack.c.h.b16 %v3153
  %v3242 = vunpack.c.l.b16 %v3154
  %v3243 = vunpack.c.h.b16 %v3154
  %v3244 = vunpack.c.l.b16 %v3155
  %v3245 = vunpack.c.h.b16 %v3155
  %v3246 = vunpack.c.l.b16 %v3156
  %v3247 = vunpack.c.h.b16 %v3156
  %v3248 = vunpack.c.l.b16 %v3157
  %v3249 = vunpack.c.h.b16 %v3157
  %v3250 = vunpack.c.l.b16 %v3158
  %v3251 = vunpack.c.h.b16 %v3158
  %v3252 = vunpack.c.l.b16 %v3159
  %v3253 = vunpack.c.h.b16 %v3159
  %v3254 = vunpack.c.l.b16 %v3160
  %v3255 = vunpack.c.h.b16 %v3160
  %v3256 = vunpack.c.l.b16 %v3161
  %v3257 = vunpack.c.h.b16 %v3161
  %v3258 = vpack.c.b16 %v3194, %v3194
  %v3259 = vpack.c.b16 %v3195, %v3195
  %v3260 = vpack.c.b16 %v3196, %v3196
  %v3261 = vpack.c.b16 %v3197, %v3197
  %v3262 = vpack.c.b16 %v3198, %v3198
  %v3263 = vpack.c.b16 %v3199, %v3199
  %v3264 = vpack.c.b16 %v3200, %v3200
  %v3265 = vpack.c.b16 %v3201, %v3201
  %v3266 = vpack.c.b16 %v3202, %v3202
  %v3267 = vpack.c.b16 %v3203, %v3203
  %v3268 = vpack.c.b16 %v3204, %v3204
  %v3269 = vpack.c.b16 %v3205, %v3205
  %v3270 = vpack.c.b16 %v3206, %v3206
  %v3271 = vpack.c.b16 %v3207, %v3207
  %v3272 = vpack.c.b16 %v3208, %v3208
  %v3273 = vpack.c.b16 %v3209, %v3209
  %v3274 = vpack.c.b16 %v3210, %v3210
  %v3275 = vpack.c.b16 %v3211, %v3211
  %v3276 = vpack.c.b16 %v3212, %v3212
  %v3277 = vpack.c.b16 %v3213, %v3213
  %v3278 = vpack.c.b16 %v3214, %v3214
  %v3279 = vpack.c.b16 %v3215, %v3215
  %v3280 = vpack.c.b16 %v3216, %v3216
  %v3281 = vpack.c.b16 %v3217, %v3217
  %v3282 = vpack.c.b16 %v3218, %v3218
  %v3283 = vpack.c.b16 %v3219, %v3219
  %v3284 = vpack.c.b16 %v3220, %v3220
  %v3285 = vpack.c.b16 %v3221, %v3221
  %v3286 = vpack.c.b16 %v3222, %v3222
  %v3287 = vpack.c.b16 %v3223, %v3223
  %v3288 = vpack.c.b16 %v3224, %v3224
  %v3289 = vpack.c.b16 %v3225, %v3225
  %v3290 = vpack.c.b16 %v3226, %v3226
  %v3291 = vpack.c.b16 %v3227, %v3227
  %v3292 = vpack.c.b16 %v3228, %v3228
  %v3293 = vpack.c.b16 %v3229, %v3229
  %v3294 = vpack.c.b16 %v3230, %v3230
  %v3295 = vpack.c.b16 %v3231, %v3231
  %v3296 = vpack.c.b16 %v3232, %v3232
  %v3297 = vpack.c.b16 %v3233, %v3233
  %v3298 = vpack.c.b16 %v3234, %v3234
  %v3299 = vpack.c.b16 %v3235, %v3235
  %v3300 = vpack.c.b16 %v3236, %v3236
  %v3301 = vpack.c.b16 %v3237, %v3237
  %v3302 = vpack.c.b16 %v3238, %v3238
  %v3303 = vpack.c.b16 %v3239, %v3239
  %v3304 = vpack.c.b16 %v3240, %v3240
  %v3305 = vpack.c.b16 %v3241, %v3241
  %v3306 = vpack.c.b16 %v3242, %v3242
  %v3307 = vpack.c.b16 %v3243, %v3243
  %v3308 = vpack.c.b16 %v3244, %v3244
  %v3309 = vpack.c.b16 %v3245, %v3245
  %v3310 = vpack.c.b16 %v3246, %v3246
  %v3311 = vpack.c.b16 %v3247, %v3247
  %v3312 = vpack.c.b16 %v3248, %v3248
  %v3313 = vpack.c.b16 %v3249, %v3249
  %v3314 = vpack.c.b16 %v3250, %v3250
  %v3315 = vpack.c.b16 %v3251, %v3251
  %v3316 = vpack.c.b16 %v3252, %v3252
  %v3317 = vpack.c.b16 %v3253, %v3253
  %v3318 = vpack.c.b16 %v3254, %v3254
  %v3319 = vpack.c.b16 %v3255, %v3255
  %v3320 = vpack.c.b16 %v3256, %v3256
  %v3321 = vpack.c.b16 %v3257, %v3257
  %3386 = vst [vmem:[%s7] sm:$0xf] %v3258
  %3387 = vst [vmem:[%s7 + $0x4] sm:$0xf] %v3259
  %3388 = vst [vmem:[%s7 + $0x8] sm:$0xf] %v3260
  %3389 = vst [vmem:[%s7 + $0xc] sm:$0xf] %v3261
  %3390 = vst [vmem:[%s7 + $0x10] sm:$0xf] %v3262
  %3391 = vst [vmem:[%s7 + $0x14] sm:$0xf] %v3263
  %3392 = vst [vmem:[%s7 + $0x18] sm:$0xf] %v3264
  %3393 = vst [vmem:[%s7 + $0x1c] sm:$0xf] %v3265
  %3394 = vst [vmem:[%s7 + $0x20] sm:$0xf] %v3266
  %3395 = vst [vmem:[%s7 + $0x24] sm:$0xf] %v3267
  %3396 = vst [vmem:[%s7 + $0x28] sm:$0xf] %v3268
  %3397 = vst [vmem:[%s7 + $0x2c] sm:$0xf] %v3269
  %3398 = vst [vmem:[%s7 + $0x30] sm:$0xf] %v3270
  %3399 = vst [vmem:[%s7 + $0x34] sm:$0xf] %v3271
  %3400 = vst [vmem:[%s7 + $0x38] sm:$0xf] %v3272
  %3401 = vst [vmem:[%s7 + $0x3c] sm:$0xf] %v3273
  %3402 = vst [vmem:[%s7 + $0x40] sm:$0xf] %v3274
  %3403 = vst [vmem:[%s7 + $0x44] sm:$0xf] %v3275
  %3404 = vst [vmem:[%s7 + $0x48] sm:$0xf] %v3276
  %3405 = vst [vmem:[%s7 + $0x4c] sm:$0xf] %v3277
  %3406 = vst [vmem:[%s7 + $0x50] sm:$0xf] %v3278
  %3407 = vst [vmem:[%s7 + $0x54] sm:$0xf] %v3279
  %3408 = vst [vmem:[%s7 + $0x58] sm:$0xf] %v3280
  %3409 = vst [vmem:[%s7 + $0x5c] sm:$0xf] %v3281
  %3410 = vst [vmem:[%s7 + $0x60] sm:$0xf] %v3282
  %3411 = vst [vmem:[%s7 + $0x64] sm:$0xf] %v3283
  %3412 = vst [vmem:[%s7 + $0x68] sm:$0xf] %v3284
  %3413 = vst [vmem:[%s7 + $0x6c] sm:$0xf] %v3285
  %3414 = vst [vmem:[%s7 + $0x70] sm:$0xf] %v3286
  %3415 = vst [vmem:[%s7 + $0x74] sm:$0xf] %v3287
  %3416 = vst [vmem:[%s7 + $0x78] sm:$0xf] %v3288
  %3417 = vst [vmem:[%s7 + $0x7c] sm:$0xf] %v3289
  %3418 = vst [vmem:[%s7 + $0x80] sm:$0xf] %v3290
  %3419 = vst [vmem:[%s7 + $0x84] sm:$0xf] %v3291
  %3420 = vst [vmem:[%s7 + $0x88] sm:$0xf] %v3292
  %3421 = vst [vmem:[%s7 + $0x8c] sm:$0xf] %v3293
  %3422 = vst [vmem:[%s7 + $0x90] sm:$0xf] %v3294
  %3423 = vst [vmem:[%s7 + $0x94] sm:$0xf] %v3295
  %3424 = vst [vmem:[%s7 + $0x98] sm:$0xf] %v3296
  %3425 = vst [vmem:[%s7 + $0x9c] sm:$0xf] %v3297
  %3426 = vst [vmem:[%s7 + $0xa0] sm:$0xf] %v3298
  %3427 = vst [vmem:[%s7 + $0xa4] sm:$0xf] %v3299
  %3428 = vst [vmem:[%s7 + $0xa8] sm:$0xf] %v3300
  %3429 = vst [vmem:[%s7 + $0xac] sm:$0xf] %v3301
  %3430 = vst [vmem:[%s7 + $0xb0] sm:$0xf] %v3302
  %3431 = vst [vmem:[%s7 + $0xb4] sm:$0xf] %v3303
  %3432 = vst [vmem:[%s7 + $0xb8] sm:$0xf] %v3304
  %3433 = vst [vmem:[%s7 + $0xbc] sm:$0xf] %v3305
  %3434 = vst [vmem:[%s7 + $0xc0] sm:$0xf] %v3306
  %3435 = vst [vmem:[%s7 + $0xc4] sm:$0xf] %v3307
  %3436 = vst [vmem:[%s7 + $0xc8] sm:$0xf] %v3308
  %3437 = vst [vmem:[%s7 + $0xcc] sm:$0xf] %v3309
  %3438 = vst [vmem:[%s7 + $0xd0] sm:$0xf] %v3310
  %3439 = vst [vmem:[%s7 + $0xd4] sm:$0xf] %v3311
  %3440 = vst [vmem:[%s7 + $0xd8] sm:$0xf] %v3312
  %3441 = vst [vmem:[%s7 + $0xdc] sm:$0xf] %v3313
  %3442 = vst [vmem:[%s7 + $0xe0] sm:$0xf] %v3314
  %3443 = vst [vmem:[%s7 + $0xe4] sm:$0xf] %v3315
  %3444 = vst [vmem:[%s7 + $0xe8] sm:$0xf] %v3316
  %3445 = vst [vmem:[%s7 + $0xec] sm:$0xf] %v3317
  %3446 = vst [vmem:[%s7 + $0xf0] sm:$0xf] %v3318
  %3447 = vst [vmem:[%s7 + $0xf4] sm:$0xf] %v3319
  %3448 = vst [vmem:[%s7 + $0xf8] sm:$0xf] %v3320
  %3449 = vst [vmem:[%s7 + $0xfc] sm:$0xf] %v3321
  // Predicated region
  $region30: #{basic_stage.7} parent=0 // pred_check
    _
  $region31: #{basic_stage.7} parent=0 // pred_check_branch
    %3451 = sbr.rel (0) target = $region33
  $region32: #{basic_stage.7} parent=0 // pred_region
    _
  $region33: #{basic_stage.7} parent=0 // pred_fallthru
    _
  // Predicated region
  $region34: #{basic_stage.7} parent=0 // pred_check
    _
  $region35: #{basic_stage.7} parent=0 // pred_check_branch
    %3453 = sbr.rel (0) target = $region37
  $region36: #{basic_stage.7} parent=0 // pred_region
    _
  $region37: #{basic_stage.7} parent=0 // pred_fallthru
    _

// kernel: basic_stage.13
$region0: #{basic_stage.13}
  #allocation0 [shape = 'u32[]', space=smem, size = 0x4, offset = 0x4, fixed_abs, tag = 'smem constant byte address 0x4 - core index']
  #allocation1 [shape = 'u32[144,128]{1,0:T(1,128)}', space=vmem, size = 0x12000, scoped, tag = 'internal scratch']
  %s0 = inlined_call_operand.vmem [shape: bf16[2,8,2,8,256], index: 0, kind: input, shape index: {}]
  %s1 = inlined_call_operand.vmem [shape: bf16[1152,128], index: 1, kind: input, shape index: {}]
  %s2 = inlined_call_operand.vmem [shape: f32[1,128], index: 2, kind: input, shape index: {}]
  %s3 = inlined_call_operand.hbm [shape: f32[2,8,8,128], index: 3, kind: output, shape index: {}]
  %s4 = sld [smem:[#allocation0]]
  $region45: #{basic_stage.13} parent=0
    _
  %s6 = ssub.s32 1, %s4
  %s7 = scalar_select 0, %s6, %s4
  $region1: #{basic_stage.13} parent=0
    #allocation2 [shape = 'u8[65536]{0}', space=vmem, size = 0x10000, scoped, tag = 'output window, operand 0']
    #allocation3 [shape = 's32[2]{0}', space=sflag, size = 0x8, scoped, tag = 'scoped memory for basic_stage.13']
    %8 = vsyncpa [#allocation3], 0
    %s9 = scalar_lea.sflag [#allocation3], 1
    %10 = vsyncpa %s9, 0
    loop: start=0, step=1, limit=4
    $region2: #{basic_stage.13} parent=1 // loop_pre_header
      _
    $region3: #{basic_stage.13} parent=1 // loop_header
      %s12 = sphi 0, %s16
      %p13 = scmp.ge.s32.totalorder %s12, 4
      %s22 = sphi 0, %s24
      %s25 = sphi 0, %s22
      %s26 = sphi 0, %s25
      %s42 = sphi 0, %s26
      %s46 = sphi 0, %s46
      %s48 = sphi 0, %s46
      %s49 = sphi 0, %s48
      %s63 = sphi 0, %s49
      %s67 = sphi 0, %s67
      %s69 = sphi 0, %s67
      %s70 = sphi 0, %s69
      %s84 = sphi 0, %s70
      %s90 = sphi 0, %s92
      %s93 = sphi 0, %s90
      %s94 = sphi 0, %s93
      %s110 = sphi 0, %s94
    $region4: #{basic_stage.13} parent=1 // loop_header_branch
      %15 = sbr.rel (%p13) target = $region8
    $region5: #{basic_stage.13} parent=1 // loop_body
      %s17 = ssub.s32 %s12, 1
      %s18 = ssub.s32 %s12, 2
      %s19 = sadd.s32 %s12, 1
      %s20 = ssub.s32 %s12, %s19
      %p21 = scmp.eq.s32.totalorder %s20, 0
      %s23 = sadd.s32 %s22, 1
      %s24 = scalar_select %p21, %s22, %s23
      %p27 = pneg %p21
      %p28 = scmp.eq.s32.totalorder %s12, 1
      %p29 = por %p27, %p28
      %p30 = scmp.ne.s32.totalorder %s22, %s25
      %p31 = scmp.eq.s32.totalorder %s12, 0
      %p32 = por %p30, %p31
      %p33 = scmp.ne.s32.totalorder %s22, %s25
      %p34 = scmp.eq.s32.totalorder %s17, 1
      %p35 = por %p33, %p34
      %p36 = scmp.ne.s32.totalorder %s25, %s26
      %p37 = scmp.eq.s32.totalorder %s17, 0
      %p38 = por %p36, %p37
      %p39 = scmp.ne.s32.totalorder %s25, %s26
      %p40 = scmp.eq.s32.totalorder %s18, 1
      %p41 = por %p39, %p40
      %p43 = scmp.ne.s32.totalorder %s26, %s42
      %p44 = scmp.eq.s32.totalorder %s18, 0
      %p45 = por %p43, %p44
      %s47 = sadd.s32 %s46, 1
      %p50 = scmp.eq.s32.totalorder %s12, 1
      %p51 = scmp.ne.s32.totalorder %s46, %s48
      %p52 = scmp.eq.s32.totalorder %s12, 0
      %p53 = por %p51, %p52
      %p54 = scmp.ne.s32.totalorder %s46, %s48
      %p55 = scmp.eq.s32.totalorder %s17, 1
      %p56 = por %p54, %p55
      %p57 = scmp.ne.s32.totalorder %s48, %s49
      %p58 = scmp.eq.s32.totalorder %s17, 0
      %p59 = por %p57, %p58
      %p60 = scmp.ne.s32.totalorder %s48, %s49
      %p61 = scmp.eq.s32.totalorder %s18, 1
      %p62 = por %p60, %p61
      %p64 = scmp.ne.s32.totalorder %s49, %s63
      %p65 = scmp.eq.s32.totalorder %s18, 0
      %p66 = por %p64, %p65
      %s68 = sadd.s32 %s67, 1
      %p71 = scmp.eq.s32.totalorder %s12, 1
      %p72 = scmp.ne.s32.totalorder %s67, %s69
      %p73 = scmp.eq.s32.totalorder %s12, 0
      %p74 = por %p72, %p73
      %p75 = scmp.ne.s32.totalorder %s67, %s69
      %p76 = scmp.eq.s32.totalorder %s17, 1
      %p77 = por %p75, %p76
      %p78 = scmp.ne.s32.totalorder %s69, %s70
      %p79 = scmp.eq.s32.totalorder %s17, 0
      %p80 = por %p78, %p79
      %p81 = scmp.ne.s32.totalorder %s69, %s70
      %p82 = scmp.eq.s32.totalorder %s18, 1
      %p83 = por %p81, %p82
      %p85 = scmp.ne.s32.totalorder %s70, %s84
      %p86 = scmp.eq.s32.totalorder %s18, 0
      %p87 = por %p85, %p86
      %s88 = ssub.s32 %s12, %s19
      %p89 = scmp.eq.s32.totalorder %s88, 0
      %s91 = sadd.s32 %s90, 1
      %s92 = scalar_select %p89, %s90, %s91
      %p95 = pneg %p89
      %p96 = scmp.eq.s32.totalorder %s12, 1
      %p97 = por %p95, %p96
      %p98 = scmp.ne.s32.totalorder %s90, %s93
      %p99 = scmp.eq.s32.totalorder %s12, 0
      %p100 = por %p98, %p99
      %p101 = scmp.ne.s32.totalorder %s90, %s93
      %p102 = scmp.eq.s32.totalorder %s17, 1
      %p103 = por %p101, %p102
      %p104 = scmp.ne.s32.totalorder %s93, %s94
      %p105 = scmp.eq.s32.totalorder %s17, 0
      %p106 = por %p104, %p105
      %p107 = scmp.ne.s32.totalorder %s93, %s94
      %p108 = scmp.eq.s32.totalorder %s18, 1
      %p109 = por %p107, %p108
      %p111 = scmp.ne.s32.totalorder %s94, %s110
      %p112 = scmp.eq.s32.totalorder %s18, 0
      %p113 = por %p111, %p112
      %p114 = scmp.le.s32.totalorder 1, %s12
      %p115 = scmp.lt.s32.totalorder %s12, 3
      %p116 = pnand %p114, %p115
      %p117 = pneg %p116
      // Predicated region
      $region9: #{basic_stage.13} parent=5 // pred_check
        _
      $region10: #{basic_stage.13} parent=5 // pred_check_branch
        %119 = sbr.rel (%p116) target = $region12
      $region11: #{basic_stage.13} parent=5 // pred_region
        %s120 = ssub.s32 %s12, 1
        // Predicated region
        $region13: #{basic_stage.13} parent=11 // pred_check
          %p121 = pneg %p59
        $region14: #{basic_stage.13} parent=11 // pred_check_branch
          %123 = sbr.rel (%p121) target = $region16
        $region15: #{basic_stage.13} parent=11 // pred_region
          _
        $region16: #{basic_stage.13} parent=11 // pred_fallthru
          _
        // Predicated region
        $region17: #{basic_stage.13} parent=11 // pred_check
          %p124 = pneg %p80
        $region18: #{basic_stage.13} parent=11 // pred_check_branch
          %126 = sbr.rel (%p124) target = $region20
        $region19: #{basic_stage.13} parent=11 // pred_region
          _
        $region20: #{basic_stage.13} parent=11 // pred_fallthru
          _
      $region12: #{basic_stage.13} parent=5 // pred_fallthru
        _
      %p127 = scmp.lt.s32.totalorder %s12, 2
      // Predicated region
      $region21: #{basic_stage.13} parent=5 // pred_check
        %p128 = pneg %p127
      $region22: #{basic_stage.13} parent=5 // pred_check_branch
        %130 = sbr.rel (%p128) target = $region24
      $region23: #{basic_stage.13} parent=5 // pred_region
        // Predicated region
        $region25: #{basic_stage.13} parent=23 // pred_check
          %p131 = pneg %p32
        $region26: #{basic_stage.13} parent=23 // pred_check_branch
          %133 = sbr.rel (%p131) target = $region28
        $region27: #{basic_stage.13} parent=23 // pred_region
          %p134 = scmp.lt.s32.totalorder %s12, 1
          %s135 = scalar_select %p134, %s12, 1
          %s136 = smul.addr %s135, 32
          %s137 = smul.addr %s136, 4
          %s138 = scalar_lea.vmem %s0, %s137
        $region28: #{basic_stage.13} parent=23 // pred_fallthru
          _
      $region24: #{basic_stage.13} parent=5 // pred_fallthru
        _
      %p139 = scmp.le.s32.totalorder 1, %s12
      %p140 = scmp.lt.s32.totalorder %s12, 3
      %p141 = pnand %p139, %p140
      %p142 = pneg %p141
      // Predicated region
      $region29: #{basic_stage.13} parent=5 // pred_check
        _
      $region30: #{basic_stage.13} parent=5 // pred_check_branch
        %144 = sbr.rel (%p141) target = $region32
      $region31: #{basic_stage.13} parent=5 // pred_region
        %s145 = ssub.s32 %s12, 1
        %p146 = scmp.lt.s32.totalorder %s17, 1
        %s147 = scalar_select %p146, %s17, 1
        %s148 = smul.addr %s147, 32
        %s149 = smul.addr %s148, 4
        %s150 = scalar_lea.vmem %s0, %s149
        %p151 = pneg %p38
        %p152 = pneg %p35
        %p153 = pneg %p59
        %p154 = pneg %p56
        %p155 = pneg %p80
        %p156 = pneg %p77
        %p157 = pneg %p106
        %p158 = pneg %p103
        %s159 = sand.u32 %s93, 1
        %s160 = scalar_lea.sflag [#allocation3], %s159
        %s161 = sand.u32 %s93, 1
        %s162 = smul.addr %s161, 64
        %s163 = scalar_lea.vmem [#allocation2], %s162
        %p164 = scmp.lt.s32.totalorder %s17, 1
        %s165 = scalar_select %p164, %s17, 1
        %s166 = smul.addr %s165, 32
        %s167 = smul.addr %s166, 4
        %s168 = scalar_lea.vmem %s0, %s167
        %v170 = vld [vmem:[%s168] sm:$0xff]
        %v171 = vld [vmem:[%s168 + $0x8] sm:$0xff]
        %v172 = vld [vmem:[%s168 + $0x10] sm:$0xff]
        %v173 = vld [vmem:[%s168 + $0x18] sm:$0xff]
        %v174 = vld [vmem:[%s168 + $0x20] sm:$0xff]
        %v175 = vld [vmem:[%s168 + $0x28] sm:$0xff]
        %v176 = vld [vmem:[%s168 + $0x30] sm:$0xff]
        %v177 = vld [vmem:[%s168 + $0x38] sm:$0xff]
        %v178 = vld [vmem:[%s168 + $0x40] sm:$0xff]
        %v179 = vld [vmem:[%s168 + $0x48] sm:$0xff]
        %v180 = vld [vmem:[%s168 + $0x50] sm:$0xff]
        %v181 = vld [vmem:[%s168 + $0x58] sm:$0xff]
        %v182 = vld [vmem:[%s168 + $0x60] sm:$0xff]
        %v183 = vld [vmem:[%s168 + $0x68] sm:$0xff]
        %v184 = vld [vmem:[%s168 + $0x70] sm:$0xff]
        %v185 = vld [vmem:[%s168 + $0x78] sm:$0xff]
        %v186 = vunpack.c.l.bf16 %v170
        %v187 = vunpack.c.h.bf16 %v170
        %v188 = vunpack.c.l.bf16 %v171
        %v189 = vunpack.c.h.bf16 %v171
        %v190 = vunpack.c.l.bf16 %v172
        %v191 = vunpack.c.h.bf16 %v172
        %v192 = vunpack.c.l.bf16 %v173
        %v193 = vunpack.c.h.bf16 %v173
        %v194 = vunpack.c.l.bf16 %v174
        %v195 = vunpack.c.h.bf16 %v174
        %v196 = vunpack.c.l.bf16 %v175
        %v197 = vunpack.c.h.bf16 %v175
        %v198 = vunpack.c.l.bf16 %v176
        %v199 = vunpack.c.h.bf16 %v176
        %v200 = vunpack.c.l.bf16 %v177
        %v201 = vunpack.c.h.bf16 %v177
        %v202 = vunpack.c.l.bf16 %v178
        %v203 = vunpack.c.h.bf16 %v178
        %v204 = vunpack.c.l.bf16 %v179
        %v205 = vunpack.c.h.bf16 %v179
        %v206 = vunpack.c.l.bf16 %v180
        %v207 = vunpack.c.h.bf16 %v180
        %v208 = vunpack.c.l.bf16 %v181
        %v209 = vunpack.c.h.bf16 %v181
        %v210 = vunpack.c.l.bf16 %v182
        %v211 = vunpack.c.h.bf16 %v182
        %v212 = vunpack.c.l.bf16 %v183
        %v213 = vunpack.c.h.bf16 %v183
        %v214 = vunpack.c.l.bf16 %v184
        %v215 = vunpack.c.h.bf16 %v184
        %v216 = vunpack.c.l.bf16 %v185
        %v217 = vunpack.c.h.bf16 %v185
        %v226 = vrot.slane 0.0, 7
        %v227 = vrot.slane %v189, 7
        %v228 = vrot.slane %v193, 7
        %v229 = vrot.slane %v197, 7
        %v230 = vrot.slane %v201, 7
        %v231 = vrot.slane %v205, 7
        %v232 = vrot.slane %v209, 7
        %v233 = vrot.slane %v213, 7
        %vm242 = vcmask 1040384
        %v243 = vsel %vm242, 0.0, %v226
        %v244 = vsel %vm242, 0.0, %v227
        %v245 = vsel %vm242, 0.0, %v228
        %v246 = vsel %vm242, 0.0, %v229
        %v247 = vsel %vm242, 0.0, %v230
        %v248 = vsel %vm242, 0.0, %v231
        %v249 = vsel %vm242, 0.0, %v232
        %v250 = vsel %vm242, 0.0, %v233
        %v259 = vrot.slane %v187, 7
        %v260 = vrot.slane %v191, 7
        %v261 = vrot.slane %v195, 7
        %v262 = vrot.slane %v199, 7
        %v263 = vrot.slane %v203, 7
        %v264 = vrot.slane %v207, 7
        %v265 = vrot.slane %v211, 7
        %v266 = vrot.slane %v215, 7
        %v275 = vsel %vm242, 0.0, %v259
        %v276 = vsel %vm242, 0.0, %v260
        %v277 = vsel %vm242, 0.0, %v261
        %v278 = vsel %vm242, 0.0, %v262
        %v279 = vsel %vm242, 0.0, %v263
        %v280 = vsel %vm242, 0.0, %v264
        %v281 = vsel %vm242, 0.0, %v265
        %v282 = vsel %vm242, 0.0, %v266
        %v284 = vrot.slane %v217, 7
        %v286 = vsel %vm242, 0.0, %v284
        %v287 = vpack.c.bf16 %v244, %v243
        %v288 = vpack.c.bf16 %v188, 0.0
        %v289 = vpack.c.bf16 %v189, 0.0
        %v290 = vpack.c.bf16 %v276, %v275
        %v291 = vpack.c.bf16 %v190, %v186
        %v292 = vpack.c.bf16 %v191, %v187
        %v293 = vpack.c.bf16 %v245, %v244
        %v294 = vpack.c.bf16 %v192, %v188
        %v295 = vpack.c.bf16 %v193, %v189
        %v296 = vpack.c.bf16 %v246, %v245
        %v297 = vpack.c.bf16 %v196, %v192
        %v298 = vpack.c.bf16 %v197, %v193
        %v299 = vpack.c.bf16 %v278, %v277
        %v300 = vpack.c.bf16 %v198, %v194
        %v301 = vpack.c.bf16 %v199, %v195
        %v302 = vpack.c.bf16 %v247, %v246
        %v303 = vpack.c.bf16 %v200, %v196
        %v304 = vpack.c.bf16 %v201, %v197
        %v305 = vpack.c.bf16 %v248, %v247
        %v306 = vpack.c.bf16 %v204, %v200
        %v307 = vpack.c.bf16 %v205, %v201
        %v308 = vpack.c.bf16 %v280, %v279
        %v309 = vpack.c.bf16 %v206, %v202
        %v310 = vpack.c.bf16 %v207, %v203
        %v311 = vpack.c.bf16 %v249, %v248
        %v312 = vpack.c.bf16 %v208, %v204
        %v313 = vpack.c.bf16 %v209, %v205
        %v314 = vpack.c.bf16 %v250, %v249
        %v315 = vpack.c.bf16 %v212, %v208
        %v316 = vpack.c.bf16 %v213, %v209
        %v317 = vpack.c.bf16 %v282, %v281
        %v318 = vpack.c.bf16 %v214, %v210
        %v319 = vpack.c.bf16 %v215, %v211
        %v320 = vpack.c.bf16 %v286, %v250
        %v321 = vpack.c.bf16 %v216, %v212
        %v322 = vpack.c.bf16 %v217, %v213
        %v323 = vld [vmem:[%s1] sm:$0xf]
        %v324 = vld [vmem:[%s1 + $0x4] sm:$0xf]
        %v325 = vld [vmem:[%s1 + $0x8] sm:$0xf]
        %v326 = vld [vmem:[%s1 + $0xc] sm:$0xf]
        %v327 = vld [vmem:[%s1 + $0x10] sm:$0xf]
        %v328 = vld [vmem:[%s1 + $0x14] sm:$0xf]
        %v329 = vld [vmem:[%s1 + $0x18] sm:$0xf]
        %v330 = vld [vmem:[%s1 + $0x1c] sm:$0xf]
        %v331 = vld [vmem:[%s1 + $0x20] sm:$0xf]
        %v332 = vld [vmem:[%s1 + $0x24] sm:$0xf]
        %v333 = vld [vmem:[%s1 + $0x28] sm:$0xf]
        %v334 = vld [vmem:[%s1 + $0x2c] sm:$0xf]
        %v335 = vld [vmem:[%s1 + $0x30] sm:$0xf]
        %v336 = vld [vmem:[%s1 + $0x34] sm:$0xf]
        %v337 = vld [vmem:[%s1 + $0x38] sm:$0xf]
        %v338 = vld [vmem:[%s1 + $0x3c] sm:$0xf]
        %v339 = vld [vmem:[%s1 + $0x40] sm:$0xf]
        %v340 = vld [vmem:[%s1 + $0x44] sm:$0xf]
        %v341 = vld [vmem:[%s1 + $0x48] sm:$0xf]
        %v342 = vld [vmem:[%s1 + $0x4c] sm:$0xf]
        %v343 = vld [vmem:[%s1 + $0x50] sm:$0xf]
        %v344 = vld [vmem:[%s1 + $0x54] sm:$0xf]
        %v345 = vld [vmem:[%s1 + $0x58] sm:$0xf]
        %v346 = vld [vmem:[%s1 + $0x5c] sm:$0xf]
        %v347 = vld [vmem:[%s1 + $0x60] sm:$0xf]
        %v348 = vld [vmem:[%s1 + $0x64] sm:$0xf]
        %v349 = vld [vmem:[%s1 + $0x68] sm:$0xf]
        %v350 = vld [vmem:[%s1 + $0x6c] sm:$0xf]
        %v351 = vld [vmem:[%s1 + $0x70] sm:$0xf]
        %v352 = vld [vmem:[%s1 + $0x74] sm:$0xf]
        %v353 = vld [vmem:[%s1 + $0x78] sm:$0xf]
        %v354 = vld [vmem:[%s1 + $0x7c] sm:$0xf]
        %v355 = vld [vmem:[%s1 + $0x80] sm:$0xf]
        %v356 = vld [vmem:[%s1 + $0x84] sm:$0xf]
        %v357 = vld [vmem:[%s1 + $0x88] sm:$0xf]
        %v358 = vld [vmem:[%s1 + $0x8c] sm:$0xf]
        %v359 = vld [vmem:[%s1 + $0x90] sm:$0xf]
        %v360 = vld [vmem:[%s1 + $0x94] sm:$0xf]
        %v361 = vld [vmem:[%s1 + $0x98] sm:$0xf]
        %v362 = vld [vmem:[%s1 + $0x9c] sm:$0xf]
        %v363 = vld [vmem:[%s1 + $0xa0] sm:$0xf]
        %v364 = vld [vmem:[%s1 + $0xa4] sm:$0xf]
        %v365 = vld [vmem:[%s1 + $0xa8] sm:$0xf]
        %v366 = vld [vmem:[%s1 + $0xac] sm:$0xf]
        %v367 = vld [vmem:[%s1 + $0xb0] sm:$0xf]
        %v368 = vld [vmem:[%s1 + $0xb4] sm:$0xf]
        %v369 = vld [vmem:[%s1 + $0xb8] sm:$0xf]
        %v370 = vld [vmem:[%s1 + $0xbc] sm:$0xf]
        %v371 = vld [vmem:[%s1 + $0xc0] sm:$0xf]
        %v372 = vld [vmem:[%s1 + $0xc4] sm:$0xf]
        %v373 = vld [vmem:[%s1 + $0xc8] sm:$0xf]
        %v374 = vld [vmem:[%s1 + $0xcc] sm:$0xf]
        %v375 = vld [vmem:[%s1 + $0xd0] sm:$0xf]
        %v376 = vld [vmem:[%s1 + $0xd4] sm:$0xf]
        %v377 = vld [vmem:[%s1 + $0xd8] sm:$0xf]
        %v378 = vld [vmem:[%s1 + $0xdc] sm:$0xf]
        %v379 = vld [vmem:[%s1 + $0xe0] sm:$0xf]
        %v380 = vld [vmem:[%s1 + $0xe4] sm:$0xf]
        %v381 = vld [vmem:[%s1 + $0xe8] sm:$0xf]
        %v382 = vld [vmem:[%s1 + $0xec] sm:$0xf]
        %v383 = vld [vmem:[%s1 + $0xf0] sm:$0xf]
        %v384 = vld [vmem:[%s1 + $0xf4] sm:$0xf]
        %v385 = vld [vmem:[%s1 + $0xf8] sm:$0xf]
        %v386 = vld [vmem:[%s1 + $0xfc] sm:$0xf]
        %v387 = vld [vmem:[%s1 + $0x100] sm:$0xf]
        %v388 = vld [vmem:[%s1 + $0x104] sm:$0xf]
        %v389 = vld [vmem:[%s1 + $0x108] sm:$0xf]
        %v390 = vld [vmem:[%s1 + $0x10c] sm:$0xf]
        %v391 = vld [vmem:[%s1 + $0x110] sm:$0xf]
        %v392 = vld [vmem:[%s1 + $0x114] sm:$0xf]
        %v393 = vld [vmem:[%s1 + $0x118] sm:$0xf]
        %v394 = vld [vmem:[%s1 + $0x11c] sm:$0xf]
        %v395 = vld [vmem:[%s1 + $0x120] sm:$0xf]
        %v396 = vld [vmem:[%s1 + $0x124] sm:$0xf]
        %v397 = vld [vmem:[%s1 + $0x128] sm:$0xf]
        %v398 = vld [vmem:[%s1 + $0x12c] sm:$0xf]
        %v399 = vld [vmem:[%s1 + $0x130] sm:$0xf]
        %v400 = vld [vmem:[%s1 + $0x134] sm:$0xf]
        %v401 = vld [vmem:[%s1 + $0x138] sm:$0xf]
        %v402 = vld [vmem:[%s1 + $0x13c] sm:$0xf]
        %v403 = vld [vmem:[%s1 + $0x140] sm:$0xf]
        %v404 = vld [vmem:[%s1 + $0x144] sm:$0xf]
        %v405 = vld [vmem:[%s1 + $0x148] sm:$0xf]
        %v406 = vld [vmem:[%s1 + $0x14c] sm:$0xf]
        %v407 = vld [vmem:[%s1 + $0x150] sm:$0xf]
        %v408 = vld [vmem:[%s1 + $0x154] sm:$0xf]
        %v409 = vld [vmem:[%s1 + $0x158] sm:$0xf]
        %v410 = vld [vmem:[%s1 + $0x15c] sm:$0xf]
        %v411 = vld [vmem:[%s1 + $0x160] sm:$0xf]
        %v412 = vld [vmem:[%s1 + $0x164] sm:$0xf]
        %v413 = vld [vmem:[%s1 + $0x168] sm:$0xf]
        %v414 = vld [vmem:[%s1 + $0x16c] sm:$0xf]
        %v415 = vld [vmem:[%s1 + $0x170] sm:$0xf]
        %v416 = vld [vmem:[%s1 + $0x174] sm:$0xf]
        %v417 = vld [vmem:[%s1 + $0x178] sm:$0xf]
        %v418 = vld [vmem:[%s1 + $0x17c] sm:$0xf]
        %v419 = vld [vmem:[%s1 + $0x180] sm:$0xf]
        %v420 = vld [vmem:[%s1 + $0x184] sm:$0xf]
        %v421 = vld [vmem:[%s1 + $0x188] sm:$0xf]
        %v422 = vld [vmem:[%s1 + $0x18c] sm:$0xf]
        %v423 = vld [vmem:[%s1 + $0x190] sm:$0xf]
        %v424 = vld [vmem:[%s1 + $0x194] sm:$0xf]
        %v425 = vld [vmem:[%s1 + $0x198] sm:$0xf]
        %v426 = vld [vmem:[%s1 + $0x19c] sm:$0xf]
        %v427 = vld [vmem:[%s1 + $0x1a0] sm:$0xf]
        %v428 = vld [vmem:[%s1 + $0x1a4] sm:$0xf]
        %v429 = vld [vmem:[%s1 + $0x1a8] sm:$0xf]
        %v430 = vld [vmem:[%s1 + $0x1ac] sm:$0xf]
        %v431 = vld [vmem:[%s1 + $0x1b0] sm:$0xf]
        %v432 = vld [vmem:[%s1 + $0x1b4] sm:$0xf]
        %v433 = vld [vmem:[%s1 + $0x1b8] sm:$0xf]
        %v434 = vld [vmem:[%s1 + $0x1bc] sm:$0xf]
        %v435 = vld [vmem:[%s1 + $0x1c0] sm:$0xf]
        %v436 = vld [vmem:[%s1 + $0x1c4] sm:$0xf]
        %v437 = vld [vmem:[%s1 + $0x1c8] sm:$0xf]
        %v438 = vld [vmem:[%s1 + $0x1cc] sm:$0xf]
        %v439 = vld [vmem:[%s1 + $0x1d0] sm:$0xf]
        %v440 = vld [vmem:[%s1 + $0x1d4] sm:$0xf]
        %v441 = vld [vmem:[%s1 + $0x1d8] sm:$0xf]
        %v442 = vld [vmem:[%s1 + $0x1dc] sm:$0xf]
        %v443 = vld [vmem:[%s1 + $0x1e0] sm:$0xf]
        %v444 = vld [vmem:[%s1 + $0x1e4] sm:$0xf]
        %v445 = vld [vmem:[%s1 + $0x1e8] sm:$0xf]
        %v446 = vld [vmem:[%s1 + $0x1ec] sm:$0xf]
        %v447 = vld [vmem:[%s1 + $0x1f0] sm:$0xf]
        %v448 = vld [vmem:[%s1 + $0x1f4] sm:$0xf]
        %v449 = vld [vmem:[%s1 + $0x1f8] sm:$0xf]
        %v450 = vld [vmem:[%s1 + $0x1fc] sm:$0xf]
        %v451 = vld [vmem:[%s1 + $0x200] sm:$0xf]
        %v452 = vld [vmem:[%s1 + $0x204] sm:$0xf]
        %v453 = vld [vmem:[%s1 + $0x208] sm:$0xf]
        %v454 = vld [vmem:[%s1 + $0x20c] sm:$0xf]
        %v455 = vld [vmem:[%s1 + $0x210] sm:$0xf]
        %v456 = vld [vmem:[%s1 + $0x214] sm:$0xf]
        %v457 = vld [vmem:[%s1 + $0x218] sm:$0xf]
        %v458 = vld [vmem:[%s1 + $0x21c] sm:$0xf]
        %v459 = vld [vmem:[%s1 + $0x220] sm:$0xf]
        %v460 = vld [vmem:[%s1 + $0x224] sm:$0xf]
        %v461 = vld [vmem:[%s1 + $0x228] sm:$0xf]
        %v462 = vld [vmem:[%s1 + $0x22c] sm:$0xf]
        %v463 = vld [vmem:[%s1 + $0x230] sm:$0xf]
        %v464 = vld [vmem:[%s1 + $0x234] sm:$0xf]
        %v465 = vld [vmem:[%s1 + $0x238] sm:$0xf]
        %v466 = vld [vmem:[%s1 + $0x23c] sm:$0xf]
        %v467 = vld [vmem:[%s2] sm:$0x1]
        %v469 = vlaneseq
        %v470 = vshrl.u32 %v469, 7
        %v471 = vsub.s32 0, %v470
        %v472 = vrot.slane %v467, %v471
        %v618 = vunpack.c.l.b16 %v323
        %v619 = vunpack.c.l.b16 %v324
        %v620 = vunpack.c.l.b16 %v325
        %v621 = vunpack.c.l.b16 %v326
        %v622 = vunpack.c.l.b16 %v327
        %v623 = vunpack.c.l.b16 %v328
        %v624 = vunpack.c.l.b16 %v329
        %v625 = vunpack.c.l.b16 %v330
        %v626 = vunpack.c.l.b16 %v331
        %v627 = vunpack.c.l.b16 %v332
        %v628 = vunpack.c.l.b16 %v333
        %v629 = vunpack.c.l.b16 %v334
        %v630 = vunpack.c.l.b16 %v335
        %v631 = vunpack.c.l.b16 %v336
        %v632 = vunpack.c.l.b16 %v337
        %v633 = vunpack.c.l.b16 %v338
        %v634 = vunpack.c.l.b16 %v339
        %v635 = vunpack.c.l.b16 %v340
        %v636 = vunpack.c.l.b16 %v341
        %v637 = vunpack.c.l.b16 %v342
        %v638 = vunpack.c.l.b16 %v343
        %v639 = vunpack.c.l.b16 %v344
        %v640 = vunpack.c.l.b16 %v345
        %v641 = vunpack.c.l.b16 %v346
        %v642 = vunpack.c.l.b16 %v347
        %v643 = vunpack.c.l.b16 %v348
        %v644 = vunpack.c.l.b16 %v349
        %v645 = vunpack.c.l.b16 %v350
        %v646 = vunpack.c.l.b16 %v351
        %v647 = vunpack.c.l.b16 %v352
        %v648 = vunpack.c.l.b16 %v353
        %v649 = vunpack.c.l.b16 %v354
        %v650 = vunpack.c.l.b16 %v355
        %v651 = vunpack.c.l.b16 %v356
        %v652 = vunpack.c.l.b16 %v357
        %v653 = vunpack.c.l.b16 %v358
        %v654 = vunpack.c.l.b16 %v359
        %v655 = vunpack.c.l.b16 %v360
        %v656 = vunpack.c.l.b16 %v361
        %v657 = vunpack.c.l.b16 %v362
        %v658 = vunpack.c.l.b16 %v363
        %v659 = vunpack.c.l.b16 %v364
        %v660 = vunpack.c.l.b16 %v365
        %v661 = vunpack.c.l.b16 %v366
        %v662 = vunpack.c.l.b16 %v367
        %v663 = vunpack.c.l.b16 %v368
        %v664 = vunpack.c.l.b16 %v369
        %v665 = vunpack.c.l.b16 %v370
        %v666 = vunpack.c.l.b16 %v371
        %v667 = vunpack.c.l.b16 %v372
        %v668 = vunpack.c.l.b16 %v373
        %v669 = vunpack.c.l.b16 %v374
        %v670 = vunpack.c.l.b16 %v375
        %v671 = vunpack.c.l.b16 %v376
        %v672 = vunpack.c.l.b16 %v377
        %v673 = vunpack.c.l.b16 %v378
        %v674 = vunpack.c.l.b16 %v379
        %v675 = vunpack.c.l.b16 %v380
        %v676 = vunpack.c.l.b16 %v381
        %v677 = vunpack.c.l.b16 %v382
        %v678 = vunpack.c.l.b16 %v383
        %v679 = vunpack.c.l.b16 %v384
        %v680 = vunpack.c.l.b16 %v385
        %v681 = vunpack.c.l.b16 %v386
        %v682 = vunpack.c.l.b16 %v387
        %v683 = vunpack.c.l.b16 %v388
        %v684 = vunpack.c.l.b16 %v389
        %v685 = vunpack.c.l.b16 %v390
        %v686 = vunpack.c.l.b16 %v391
        %v687 = vunpack.c.l.b16 %v392
        %v688 = vunpack.c.l.b16 %v393
        %v689 = vunpack.c.l.b16 %v394
        %v690 = vunpack.c.l.b16 %v395
        %v691 = vunpack.c.l.b16 %v396
        %v692 = vunpack.c.l.b16 %v397
        %v693 = vunpack.c.l.b16 %v398
        %v694 = vunpack.c.l.b16 %v399
        %v695 = vunpack.c.l.b16 %v400
        %v696 = vunpack.c.l.b16 %v401
        %v697 = vunpack.c.l.b16 %v402
        %v698 = vunpack.c.l.b16 %v403
        %v699 = vunpack.c.l.b16 %v404
        %v700 = vunpack.c.l.b16 %v405
        %v701 = vunpack.c.l.b16 %v406
        %v702 = vunpack.c.l.b16 %v407
        %v703 = vunpack.c.l.b16 %v408
        %v704 = vunpack.c.l.b16 %v409
        %v705 = vunpack.c.l.b16 %v410
        %v706 = vunpack.c.l.b16 %v411
        %v707 = vunpack.c.l.b16 %v412
        %v708 = vunpack.c.l.b16 %v413
        %v709 = vunpack.c.l.b16 %v414
        %v710 = vunpack.c.l.b16 %v415
        %v711 = vunpack.c.l.b16 %v416
        %v712 = vunpack.c.l.b16 %v417
        %v713 = vunpack.c.l.b16 %v418
        %v714 = vunpack.c.l.b16 %v419
        %v715 = vunpack.c.l.b16 %v420
        %v716 = vunpack.c.l.b16 %v421
        %v717 = vunpack.c.l.b16 %v422
        %v718 = vunpack.c.l.b16 %v423
        %v719 = vunpack.c.l.b16 %v424
        %v720 = vunpack.c.l.b16 %v425
        %v721 = vunpack.c.l.b16 %v426
        %v722 = vunpack.c.l.b16 %v427
        %v723 = vunpack.c.l.b16 %v428
        %v724 = vunpack.c.l.b16 %v429
        %v725 = vunpack.c.l.b16 %v430
        %v726 = vunpack.c.l.b16 %v431
        %v727 = vunpack.c.l.b16 %v432
        %v728 = vunpack.c.l.b16 %v433
        %v729 = vunpack.c.l.b16 %v434
        %v730 = vunpack.c.l.b16 %v435
        %v731 = vunpack.c.l.b16 %v436
        %v732 = vunpack.c.l.b16 %v437
        %v733 = vunpack.c.l.b16 %v438
        %v734 = vunpack.c.l.b16 %v439
        %v735 = vunpack.c.l.b16 %v440
        %v736 = vunpack.c.l.b16 %v441
        %v737 = vunpack.c.l.b16 %v442
        %v738 = vunpack.c.l.b16 %v443
        %v739 = vunpack.c.l.b16 %v444
        %v740 = vunpack.c.l.b16 %v445
        %v741 = vunpack.c.l.b16 %v446
        %v742 = vunpack.c.l.b16 %v447
        %v743 = vunpack.c.l.b16 %v448
        %v744 = vunpack.c.l.b16 %v449
        %v745 = vunpack.c.l.b16 %v450
        %v746 = vunpack.c.l.b16 %v451
        %v747 = vunpack.c.l.b16 %v452
        %v748 = vunpack.c.l.b16 %v453
        %v749 = vunpack.c.l.b16 %v454
        %v750 = vunpack.c.l.b16 %v455
        %v751 = vunpack.c.l.b16 %v456
        %v752 = vunpack.c.l.b16 %v457
        %v753 = vunpack.c.l.b16 %v458
        %v754 = vunpack.c.l.b16 %v459
        %v755 = vunpack.c.l.b16 %v460
        %v756 = vunpack.c.l.b16 %v461
        %v757 = vunpack.c.l.b16 %v462
        %v758 = vunpack.c.l.b16 %v463
        %v759 = vunpack.c.l.b16 %v464
        %v760 = vunpack.c.l.b16 %v465
        %v761 = vunpack.c.l.b16 %v466
        %v762 = vpack.c.b16 %v619, %v618
        %v763 = vpack.c.b16 %v621, %v620
        %v764 = vpack.c.b16 %v623, %v622
        %v765 = vpack.c.b16 %v625, %v624
        %v766 = vpack.c.b16 %v627, %v626
        %v767 = vpack.c.b16 %v629, %v628
        %v768 = vpack.c.b16 %v631, %v630
        %v769 = vpack.c.b16 %v633, %v632
        %v770 = vpack.c.b16 %v635, %v634
        %v771 = vpack.c.b16 %v637, %v636
        %v772 = vpack.c.b16 %v639, %v638
        %v773 = vpack.c.b16 %v641, %v640
        %v774 = vpack.c.b16 %v643, %v642
        %v775 = vpack.c.b16 %v645, %v644
        %v776 = vpack.c.b16 %v647, %v646
        %v777 = vpack.c.b16 %v649, %v648
        %v778 = vpack.c.b16 %v651, %v650
        %v779 = vpack.c.b16 %v653, %v652
        %v780 = vpack.c.b16 %v655, %v654
        %v781 = vpack.c.b16 %v657, %v656
        %v782 = vpack.c.b16 %v659, %v658
        %v783 = vpack.c.b16 %v661, %v660
        %v784 = vpack.c.b16 %v663, %v662
        %v785 = vpack.c.b16 %v665, %v664
        %v786 = vpack.c.b16 %v667, %v666
        %v787 = vpack.c.b16 %v669, %v668
        %v788 = vpack.c.b16 %v671, %v670
        %v789 = vpack.c.b16 %v673, %v672
        %v790 = vpack.c.b16 %v675, %v674
        %v791 = vpack.c.b16 %v677, %v676
        %v792 = vpack.c.b16 %v679, %v678
        %v793 = vpack.c.b16 %v681, %v680
        %v794 = vpack.c.b16 %v683, %v682
        %v795 = vpack.c.b16 %v685, %v684
        %v796 = vpack.c.b16 %v687, %v686
        %v797 = vpack.c.b16 %v689, %v688
        %v798 = vpack.c.b16 %v691, %v690
        %v799 = vpack.c.b16 %v693, %v692
        %v800 = vpack.c.b16 %v695, %v694
        %v801 = vpack.c.b16 %v697, %v696
        %v802 = vpack.c.b16 %v699, %v698
        %v803 = vpack.c.b16 %v701, %v700
        %v804 = vpack.c.b16 %v703, %v702
        %v805 = vpack.c.b16 %v705, %v704
        %v806 = vpack.c.b16 %v707, %v706
        %v807 = vpack.c.b16 %v709, %v708
        %v808 = vpack.c.b16 %v711, %v710
        %v809 = vpack.c.b16 %v713, %v712
        %v810 = vpack.c.b16 %v715, %v714
        %v811 = vpack.c.b16 %v717, %v716
        %v812 = vpack.c.b16 %v719, %v718
        %v813 = vpack.c.b16 %v721, %v720
        %v814 = vpack.c.b16 %v723, %v722
        %v815 = vpack.c.b16 %v725, %v724
        %v816 = vpack.c.b16 %v727, %v726
        %v817 = vpack.c.b16 %v729, %v728
        %v818 = vpack.c.b16 %v731, %v730
        %v819 = vpack.c.b16 %v733, %v732
        %v820 = vpack.c.b16 %v735, %v734
        %v821 = vpack.c.b16 %v737, %v736
        %v822 = vpack.c.b16 %v739, %v738
        %v823 = vpack.c.b16 %v741, %v740
        %v824 = vpack.c.b16 %v743, %v742
        %v825 = vpack.c.b16 %v745, %v744
        %v826 = vpack.c.b16 %v747, %v746
        %v827 = vpack.c.b16 %v749, %v748
        %v828 = vpack.c.b16 %v751, %v750
        %v829 = vpack.c.b16 %v753, %v752
        %v830 = vpack.c.b16 %v755, %v754
        %v831 = vpack.c.b16 %v757, %v756
        %v832 = vpack.c.b16 %v759, %v758
        %v833 = vpack.c.b16 %v761, %v760
        %906 = vmatprep.subr.bf16.mxu0 0
        %907 = vmatpush1.bf16.msra.mxu0 %v769
        %908 = vmatprep.subr.bf16.mxu0 0
        %909 = vmatpush1.bf16.msra.mxu0 %v768
        %910 = vmatprep.subr.bf16.mxu0 0
        %911 = vmatpush1.bf16.msra.mxu0 %v767
        %912 = vmatprep.subr.bf16.mxu0 0
        %913 = vmatpush1.bf16.msra.mxu0 %v766
        %914 = vmatprep.subr.bf16.mxu0 0
        %915 = vmatpush1.bf16.msra.mxu0 %v765
        %916 = vmatprep.subr.bf16.mxu0 0
        %917 = vmatpush1.bf16.msra.mxu0 %v764
        %918 = vmatprep.subr.bf16.mxu0 0
        %919 = vmatpush1.bf16.msra.mxu0 %v763
        %920 = vmatprep.subr.bf16.mxu0 0
        %921 = vmatpush1.bf16.msra.mxu0 %v762
        %922 = vmatprep.subr.bf16.mxu0 0
        %923 = vmatpush2.bf16.msra.mxu0 %v777
        %924 = vmatprep.subr.bf16.mxu0 0
        %925 = vmatpush2.bf16.msra.mxu0 %v776
        %926 = vmatprep.subr.bf16.mxu0 0
        %927 = vmatpush2.bf16.msra.mxu0 %v775
        %928 = vmatprep.subr.bf16.mxu0 0
        %929 = vmatpush2.bf16.msra.mxu0 %v774
        %930 = vmatprep.subr.bf16.mxu0 0
        %931 = vmatpush2.bf16.msra.mxu0 %v773
        %932 = vmatprep.subr.bf16.mxu0 0
        %933 = vmatpush2.bf16.msra.mxu0 %v772
        %934 = vmatprep.subr.bf16.mxu0 0
        %935 = vmatpush2.bf16.msra.mxu0 %v771
        %936 = vmatprep.subr.bf16.mxu0 0
        %937 = vmatpush2.bf16.msra.mxu0 %v770
        %938 = vmatprep.mubr.bf16.mxu0 %v288
        %939 = vmatmul.mubr.bf16.gmra.mxu0 %v287
        %v940 = vpop.f32.mrf.mxu0
        %v941 = vadd.f32 %v472, %v940
        %v942 = vpop.f32.mrf.mxu0
        %v943 = vpop.f32.mrf.mxu0
        %v944 = vadd.f32 %v472, %v943
        %v945 = vpop.f32.mrf.mxu0
        %946 = vmatprep.mubr.bf16.mxu0 %v297
        %947 = vmatmul.mubr.bf16.gmra.mxu0 %v296
        %v948 = vpop.f32.mrf.mxu0
        %v949 = vadd.f32 %v472, %v948
        %v950 = vpop.f32.mrf.mxu0
        %v951 = vpop.f32.mrf.mxu0
        %v952 = vadd.f32 %v472, %v951
        %v953 = vpop.f32.mrf.mxu0
        %954 = vmatprep.mubr.bf16.mxu0 %v306
        %955 = vmatmul.mubr.bf16.gmra.mxu0 %v305
        %v956 = vpop.f32.mrf.mxu0
        %v957 = vadd.f32 %v472, %v956
        %v958 = vpop.f32.mrf.mxu0
        %v959 = vpop.f32.mrf.mxu0
        %v960 = vadd.f32 %v472, %v959
        %v961 = vpop.f32.mrf.mxu0
        %962 = vmatprep.mubr.bf16.mxu0 %v315
        %963 = vmatmul.mubr.bf16.gmra.mxu0 %v314
        %v964 = vpop.f32.mrf.mxu0
        %v965 = vadd.f32 %v472, %v964
        %v966 = vpop.f32.mrf.mxu0
        %v967 = vpop.f32.mrf.mxu0
        %v968 = vadd.f32 %v472, %v967
        %v969 = vpop.f32.mrf.mxu0
        %970 = vdwg.mxu0
        %971 = vmatprep.subr.bf16.mxu0 0
        %972 = vmatpush1.bf16.msra.mxu0 %v785
        %973 = vmatprep.subr.bf16.mxu0 0
        %974 = vmatpush1.bf16.msra.mxu0 %v784
        %975 = vmatprep.subr.bf16.mxu0 0
        %976 = vmatpush1.bf16.msra.mxu0 %v783
        %977 = vmatprep.subr.bf16.mxu0 0
        %978 = vmatpush1.bf16.msra.mxu0 %v782
        %979 = vmatprep.subr.bf16.mxu0 0
        %980 = vmatpush1.bf16.msra.mxu0 %v781
        %981 = vmatprep.subr.bf16.mxu0 0
        %982 = vmatpush1.bf16.msra.mxu0 %v780
        %983 = vmatprep.subr.bf16.mxu0 0
        %984 = vmatpush1.bf16.msra.mxu0 %v779
        %985 = vmatprep.subr.bf16.mxu0 0
        %986 = vmatpush1.bf16.msra.mxu0 %v778
        %987 = vmatprep.subr.bf16.mxu0 0
        %988 = vmatpush2.bf16.msra.mxu0 %v793
        %989 = vmatprep.subr.bf16.mxu0 0
        %990 = vmatpush2.bf16.msra.mxu0 %v792
        %991 = vmatprep.subr.bf16.mxu0 0
        %992 = vmatpush2.bf16.msra.mxu0 %v791
        %993 = vmatprep.subr.bf16.mxu0 0
        %994 = vmatpush2.bf16.msra.mxu0 %v790
        %995 = vmatprep.subr.bf16.mxu0 0
        %996 = vmatpush2.bf16.msra.mxu0 %v789
        %997 = vmatprep.subr.bf16.mxu0 0
        %998 = vmatpush2.bf16.msra.mxu0 %v788
        %999 = vmatprep.subr.bf16.mxu0 0
        %1000 = vmatpush2.bf16.msra.mxu0 %v787
        %1001 = vmatprep.subr.bf16.mxu0 0
        %1002 = vmatpush2.bf16.msra.mxu0 %v786
        %1003 = vmatprep.mubr.bf16.mxu0 %v290
        %1004 = vmatmul.mubr.bf16.gmra.mxu0 %v289
        %v1005 = vpop.f32.mrf.mxu0
        %v1006 = vadd.f32 %v941, %v1005
        %v1007 = vpop.f32.mrf.mxu0
        %v1008 = vpop.f32.mrf.mxu0
        %v1009 = vadd.f32 %v944, %v1008
        %v1010 = vpop.f32.mrf.mxu0
        %1011 = vmatprep.mubr.bf16.mxu0 %v299
        %1012 = vmatmul.mubr.bf16.gmra.mxu0 %v298
        %v1013 = vpop.f32.mrf.mxu0
        %v1014 = vadd.f32 %v949, %v1013
        %v1015 = vpop.f32.mrf.mxu0
        %v1016 = vpop.f32.mrf.mxu0
        %v1017 = vadd.f32 %v952, %v1016
        %v1018 = vpop.f32.mrf.mxu0
        %1019 = vmatprep.mubr.bf16.mxu0 %v308
        %1020 = vmatmul.mubr.bf16.gmra.mxu0 %v307
        %v1021 = vpop.f32.mrf.mxu0
        %v1022 = vadd.f32 %v957, %v1021
        %v1023 = vpop.f32.mrf.mxu0
        %v1024 = vpop.f32.mrf.mxu0
        %v1025 = vadd.f32 %v960, %v1024
        %v1026 = vpop.f32.mrf.mxu0
        %1027 = vmatprep.mubr.bf16.mxu0 %v317
        %1028 = vmatmul.mubr.bf16.gmra.mxu0 %v316
        %v1029 = vpop.f32.mrf.mxu0
        %v1030 = vadd.f32 %v965, %v1029
        %v1031 = vpop.f32.mrf.mxu0
        %v1032 = vpop.f32.mrf.mxu0
        %v1033 = vadd.f32 %v968, %v1032
        %v1034 = vpop.f32.mrf.mxu0
        %1035 = vdwg.mxu0
        %1036 = vmatprep.subr.bf16.mxu0 0
        %1037 = vmatpush1.bf16.msra.mxu0 %v801
        %1038 = vmatprep.subr.bf16.mxu0 0
        %1039 = vmatpush1.bf16.msra.mxu0 %v800
        %1040 = vmatprep.subr.bf16.mxu0 0
        %1041 = vmatpush1.bf16.msra.mxu0 %v799
        %1042 = vmatprep.subr.bf16.mxu0 0
        %1043 = vmatpush1.bf16.msra.mxu0 %v798
        %1044 = vmatprep.subr.bf16.mxu0 0
        %1045 = vmatpush1.bf16.msra.mxu0 %v797
        %1046 = vmatprep.subr.bf16.mxu0 0
        %1047 = vmatpush1.bf16.msra.mxu0 %v796
        %1048 = vmatprep.subr.bf16.mxu0 0
        %1049 = vmatpush1.bf16.msra.mxu0 %v795
        %1050 = vmatprep.subr.bf16.mxu0 0
        %1051 = vmatpush1.bf16.msra.mxu0 %v794
        %1052 = vmatprep.subr.bf16.mxu0 0
        %1053 = vmatpush2.bf16.msra.mxu0 %v809
        %1054 = vmatprep.subr.bf16.mxu0 0
        %1055 = vmatpush2.bf16.msra.mxu0 %v808
        %1056 = vmatprep.subr.bf16.mxu0 0
        %1057 = vmatpush2.bf16.msra.mxu0 %v807
        %1058 = vmatprep.subr.bf16.mxu0 0
        %1059 = vmatpush2.bf16.msra.mxu0 %v806
        %1060 = vmatprep.subr.bf16.mxu0 0
        %1061 = vmatpush2.bf16.msra.mxu0 %v805
        %1062 = vmatprep.subr.bf16.mxu0 0
        %1063 = vmatpush2.bf16.msra.mxu0 %v804
        %1064 = vmatprep.subr.bf16.mxu0 0
        %1065 = vmatpush2.bf16.msra.mxu0 %v803
        %1066 = vmatprep.subr.bf16.mxu0 0
        %1067 = vmatpush2.bf16.msra.mxu0 %v802
        %1068 = vmatprep.mubr.bf16.mxu0 %v292
        %1069 = vmatmul.mubr.bf16.gmra.mxu0 %v291
        %v1070 = vpop.f32.mrf.mxu0
        %v1071 = vadd.f32 %v1006, %v1070
        %v1072 = vpop.f32.mrf.mxu0
        %v1073 = vpop.f32.mrf.mxu0
        %v1074 = vadd.f32 %v1009, %v1073
        %v1075 = vpop.f32.mrf.mxu0
        %1076 = vmatprep.mubr.bf16.mxu0 %v301
        %1077 = vmatmul.mubr.bf16.gmra.mxu0 %v300
        %v1078 = vpop.f32.mrf.mxu0
        %v1079 = vadd.f32 %v1014, %v1078
        %v1080 = vpop.f32.mrf.mxu0
        %v1081 = vpop.f32.mrf.mxu0
        %v1082 = vadd.f32 %v1017, %v1081
        %v1083 = vpop.f32.mrf.mxu0
        %1084 = vmatprep.mubr.bf16.mxu0 %v310
        %1085 = vmatmul.mubr.bf16.gmra.mxu0 %v309
        %v1086 = vpop.f32.mrf.mxu0
        %v1087 = vadd.f32 %v1022, %v1086
        %v1088 = vpop.f32.mrf.mxu0
        %v1089 = vpop.f32.mrf.mxu0
        %v1090 = vadd.f32 %v1025, %v1089
        %v1091 = vpop.f32.mrf.mxu0
        %1092 = vmatprep.mubr.bf16.mxu0 %v319
        %1093 = vmatmul.mubr.bf16.gmra.mxu0 %v318
        %v1094 = vpop.f32.mrf.mxu0
        %v1095 = vadd.f32 %v1030, %v1094
        %v1096 = vpop.f32.mrf.mxu0
        %v1097 = vpop.f32.mrf.mxu0
        %v1098 = vadd.f32 %v1033, %v1097
        %v1099 = vpop.f32.mrf.mxu0
        %1100 = vdwg.mxu0
        %1101 = vmatprep.subr.bf16.mxu0 0
        %1102 = vmatpush1.bf16.msra.mxu0 %v817
        %1103 = vmatprep.subr.bf16.mxu0 0
        %1104 = vmatpush1.bf16.msra.mxu0 %v816
        %1105 = vmatprep.subr.bf16.mxu0 0
        %1106 = vmatpush1.bf16.msra.mxu0 %v815
        %1107 = vmatprep.subr.bf16.mxu0 0
        %1108 = vmatpush1.bf16.msra.mxu0 %v814
        %1109 = vmatprep.subr.bf16.mxu0 0
        %1110 = vmatpush1.bf16.msra.mxu0 %v813
        %1111 = vmatprep.subr.bf16.mxu0 0
        %1112 = vmatpush1.bf16.msra.mxu0 %v812
        %1113 = vmatprep.subr.bf16.mxu0 0
        %1114 = vmatpush1.bf16.msra.mxu0 %v811
        %1115 = vmatprep.subr.bf16.mxu0 0
        %1116 = vmatpush1.bf16.msra.mxu0 %v810
        %1117 = vmatprep.subr.bf16.mxu0 0
        %1118 = vmatpush2.bf16.msra.mxu0 %v825
        %1119 = vmatprep.subr.bf16.mxu0 0
        %1120 = vmatpush2.bf16.msra.mxu0 %v824
        %1121 = vmatprep.subr.bf16.mxu0 0
        %1122 = vmatpush2.bf16.msra.mxu0 %v823
        %1123 = vmatprep.subr.bf16.mxu0 0
        %1124 = vmatpush2.bf16.msra.mxu0 %v822
        %1125 = vmatprep.subr.bf16.mxu0 0
        %1126 = vmatpush2.bf16.msra.mxu0 %v821
        %1127 = vmatprep.subr.bf16.mxu0 0
        %1128 = vmatpush2.bf16.msra.mxu0 %v820
        %1129 = vmatprep.subr.bf16.mxu0 0
        %1130 = vmatpush2.bf16.msra.mxu0 %v819
        %1131 = vmatprep.subr.bf16.mxu0 0
        %1132 = vmatpush2.bf16.msra.mxu0 %v818
        %1133 = vmatprep.mubr.bf16.mxu0 %v294
        %1134 = vmatmul.mubr.bf16.gmra.mxu0 %v293
        %v1135 = vpop.f32.mrf.mxu0
        %v1136 = vadd.f32 %v1071, %v1135
        %v1137 = vpop.f32.mrf.mxu0
        %v1138 = vpop.f32.mrf.mxu0
        %v1139 = vadd.f32 %v1074, %v1138
        %v1140 = vpop.f32.mrf.mxu0
        %1141 = vmatprep.mubr.bf16.mxu0 %v303
        %1142 = vmatmul.mubr.bf16.gmra.mxu0 %v302
        %v1143 = vpop.f32.mrf.mxu0
        %v1144 = vadd.f32 %v1079, %v1143
        %v1145 = vpop.f32.mrf.mxu0
        %v1146 = vpop.f32.mrf.mxu0
        %v1147 = vadd.f32 %v1082, %v1146
        %v1148 = vpop.f32.mrf.mxu0
        %1149 = vmatprep.mubr.bf16.mxu0 %v312
        %1150 = vmatmul.mubr.bf16.gmra.mxu0 %v311
        %v1151 = vpop.f32.mrf.mxu0
        %v1152 = vadd.f32 %v1087, %v1151
        %v1153 = vpop.f32.mrf.mxu0
        %v1154 = vpop.f32.mrf.mxu0
        %v1155 = vadd.f32 %v1090, %v1154
        %v1156 = vpop.f32.mrf.mxu0
        %1157 = vmatprep.mubr.bf16.mxu0 %v321
        %1158 = vmatmul.mubr.bf16.gmra.mxu0 %v320
        %v1159 = vpop.f32.mrf.mxu0
        %v1160 = vadd.f32 %v1095, %v1159
        %v1161 = vpop.f32.mrf.mxu0
        %v1162 = vpop.f32.mrf.mxu0
        %v1163 = vadd.f32 %v1098, %v1162
        %v1164 = vpop.f32.mrf.mxu0
        %1165 = vdwg.mxu0
        %1166 = vmatprep.subr.bf16.mxu0 0
        %1167 = vmatpush1.bf16.msra.mxu0 %v833
        %1168 = vmatprep.subr.bf16.mxu0 0
        %1169 = vmatpush1.bf16.msra.mxu0 %v832
        %1170 = vmatprep.subr.bf16.mxu0 0
        %1171 = vmatpush1.bf16.msra.mxu0 %v831
        %1172 = vmatprep.subr.bf16.mxu0 0
        %1173 = vmatpush1.bf16.msra.mxu0 %v830
        %1174 = vmatprep.subr.bf16.mxu0 0
        %1175 = vmatpush1.bf16.msra.mxu0 %v829
        %1176 = vmatprep.subr.bf16.mxu0 0
        %1177 = vmatpush1.bf16.msra.mxu0 %v828
        %1178 = vmatprep.subr.bf16.mxu0 0
        %1179 = vmatpush1.bf16.msra.mxu0 %v827
        %1180 = vmatprep.subr.bf16.mxu0 0
        %1181 = vmatpush1.bf16.msra.mxu0 %v826
        %1182 = vmatprep.subr.bf16.mxu0 0
        %1183 = vmatpush2.bf16.msra.mxu0 0
        %1184 = vmatprep.subr.bf16.mxu0 0
        %1185 = vmatpush2.bf16.msra.mxu0 0
        %1186 = vmatprep.subr.bf16.mxu0 0
        %1187 = vmatpush2.bf16.msra.mxu0 0
        %1188 = vmatprep.subr.bf16.mxu0 0
        %1189 = vmatpush2.bf16.msra.mxu0 0
        %1190 = vmatprep.subr.bf16.mxu0 0
        %1191 = vmatpush2.bf16.msra.mxu0 0
        %1192 = vmatprep.subr.bf16.mxu0 0
        %1193 = vmatpush2.bf16.msra.mxu0 0
        %1194 = vmatprep.subr.bf16.mxu0 0
        %1195 = vmatpush2.bf16.msra.mxu0 0
        %1196 = vmatprep.subr.bf16.mxu0 0
        %1197 = vmatpush2.bf16.msra.mxu0 0
        %1198 = vmatprep.mubr.bf16.mxu0 0
        %1199 = vmatmul.mubr.bf16.gmra.mxu0 %v295
        %v1200 = vpop.f32.mrf.mxu0
        %v1201 = vadd.f32 %v1136, %v1200
        %v1202 = vpop.f32.mrf.mxu0
        %v1203 = vpop.f32.mrf.mxu0
        %v1204 = vadd.f32 %v1139, %v1203
        %v1205 = vpop.f32.mrf.mxu0
        %1206 = vmatprep.mubr.bf16.mxu0 0
        %1207 = vmatmul.mubr.bf16.gmra.mxu0 %v304
        %v1208 = vpop.f32.mrf.mxu0
        %v1209 = vadd.f32 %v1144, %v1208
        %v1210 = vpop.f32.mrf.mxu0
        %v1211 = vpop.f32.mrf.mxu0
        %v1212 = vadd.f32 %v1147, %v1211
        %v1213 = vpop.f32.mrf.mxu0
        %1214 = vmatprep.mubr.bf16.mxu0 0
        %1215 = vmatmul.mubr.bf16.gmra.mxu0 %v313
        %v1216 = vpop.f32.mrf.mxu0
        %v1217 = vadd.f32 %v1152, %v1216
        %v1218 = vpop.f32.mrf.mxu0
        %v1219 = vpop.f32.mrf.mxu0
        %v1220 = vadd.f32 %v1155, %v1219
        %v1221 = vpop.f32.mrf.mxu0
        %1222 = vmatprep.mubr.bf16.mxu0 0
        %1223 = vmatmul.mubr.bf16.gmra.mxu0 %v322
        %v1224 = vpop.f32.mrf.mxu0
        %v1225 = vadd.f32 %v1160, %v1224
        %v1226 = vpop.f32.mrf.mxu0
        %v1227 = vpop.f32.mrf.mxu0
        %v1228 = vadd.f32 %v1163, %v1227
        %v1229 = vpop.f32.mrf.mxu0
        %1230 = vdwg.mxu0
        %1231 = vst [vmem:[%s163] sm:$0xff] %v1201
        %1232 = vst [vmem:[%s163 + $0x8] sm:$0xff] %v1204
        %1233 = vst [vmem:[%s163 + $0x10] sm:$0xff] %v1209
        %1234 = vst [vmem:[%s163 + $0x18] sm:$0xff] %v1212
        %1235 = vst [vmem:[%s163 + $0x20] sm:$0xff] %v1217
        %1236 = vst [vmem:[%s163 + $0x28] sm:$0xff] %v1220
        %1237 = vst [vmem:[%s163 + $0x30] sm:$0xff] %v1225
        %1238 = vst [vmem:[%s163 + $0x38] sm:$0xff] %v1228
        %s1239 = sand.u32 %s93, 1
        %s1240 = scalar_lea.sflag [#allocation3], %s1239
        %s1241 = sand.u32 %s93, 1
        %s1242 = smul.addr %s1241, 64
        %s1243 = scalar_lea.vmem [#allocation2], %s1242
        // Predicated region
        $region33: #{basic_stage.13} parent=31 // pred_check
          %p1244 = pneg %p103
        $region34: #{basic_stage.13} parent=31 // pred_check_branch
          %1246 = sbr.rel (%p1244) target = $region36
        $region35: #{basic_stage.13} parent=31 // pred_region
          %s1248 = ssub.s32 1024, 1024
          %1249 = vsyncadd %s1240, %s1248
          %s1250 = smul.addr %s17, 8
          %s1251 = smul.addr %s1250, 128
          %s1252 = scalar_lea.hbm %s3, %s1251
          %s1253 = sshll.u32 %s1243, 4
          %s1254 = int_to_ptr.vmem [resolvable:$true] %s1253
          %1259 = dma.vmem_to_hbm [thread:$0]  %s1254, 1024, %s1252, %s1240, 128, 128, 8
        $region36: #{basic_stage.13} parent=31 // pred_fallthru
          _
      $region32: #{basic_stage.13} parent=5 // pred_fallthru
        _
      %p1260 = scmp.le.s32.totalorder 2, %s12
      // Predicated region
      $region37: #{basic_stage.13} parent=5 // pred_check
        %p1261 = pneg %p1260
      $region38: #{basic_stage.13} parent=5 // pred_check_branch
        %1263 = sbr.rel (%p1261) target = $region40
      $region39: #{basic_stage.13} parent=5 // pred_region
        %s1264 = ssub.s32 %s12, 2
        // Predicated region
        $region41: #{basic_stage.13} parent=39 // pred_check
          %p1265 = pneg %p109
        $region42: #{basic_stage.13} parent=39 // pred_check_branch
          %1267 = sbr.rel (%p1265) target = $region44
        $region43: #{basic_stage.13} parent=39 // pred_region
          %s1268 = sand.u32 %s94, 1
          %s1269 = scalar_lea.sflag [#allocation3], %s1268
          %s1270 = sand.u32 %s94, 1
          %s1271 = smul.addr %s1270, 64
          %s1272 = scalar_lea.vmem [#allocation2], %s1271
          %1273 = dma.done %s1269, 1024
        $region44: #{basic_stage.13} parent=39 // pred_fallthru
          _
      $region40: #{basic_stage.13} parent=5 // pred_fallthru
        _
    $region6: #{basic_stage.13} parent=1 // loop_footer
      %s16 = sadd.s32 1, %s12
    $region7: #{basic_stage.13} parent=1 // loop_footer_branch
      %11 = sbr.rel target = $region3
    $region8: #{basic_stage.13} parent=1 // loop_exit
      _
    %1274 = vsyncpa [#allocation3], 1
    %s1275 = scalar_lea.sflag [#allocation3], 1
    %1276 = vsyncpa %s1275, 1

</llo_original>
